<compile_context>
chip_gen: v7x
topology: tpu7x:2x2x1
jax: 0.10.0
libtpu: 0.0.40
codegen_flags: <defaults>
</compile_context>

<pallas_src>
import functools

import jax
import jax.numpy as jnp
from jax import lax
from jax.experimental import pallas as pl
from jax.experimental.pallas import tpu as pltpu

LEAKY_SLOPE = 0.01      # nn.LeakyReLU default
BN_EPS = 1e-5           # nn.BatchNorm2d default
LANE = 128              # TPU lane width -> pad output channels to this

VMEM = pltpu.MemorySpace.VMEM


# ----------------------------------------------------------------------------
# small helpers
# ----------------------------------------------------------------------------
def _vmem_specs(n):
    return [pl.BlockSpec(memory_space=VMEM)] * n


def _round_up(n, m):
    return ((n + m - 1) // m) * m


def _pad_last(x, n):
    pad = n - x.shape[-1]
    if pad == 0:
        return x
    return jnp.pad(x, [(0, 0)] * (x.ndim - 1) + [(0, pad)])


def _leaky(x):
    return jnp.where(x >= 0, x, LEAKY_SLOPE * x)


def _bn_rows(y, gamma, beta):
    """Train-mode BatchNorm over the rows of a (M, C) slab (biased variance)."""
    m = y.shape[0]
    mean = jnp.sum(y, axis=0, keepdims=True) / m
    xc = y - mean
    var = jnp.sum(xc * xc, axis=0, keepdims=True) / m
    return xc * lax.rsqrt(var + BN_EPS) * gamma + beta


# ----------------------------------------------------------------------------
# Pallas kernels (fused matmul epilogues)
# ----------------------------------------------------------------------------
def _linear_kernel(a_ref, w_ref, b_ref, o_ref):
    o_ref[...] = (jnp.dot(a_ref[...], w_ref[...],
                          preferred_element_type=jnp.float32) + b_ref[...])


def _conv_bn_lrelu_kernel(a_ref, w_ref, b_ref, g_ref, be_ref, o_ref,
                          *, pre_leaky_a):
    """[LeakyReLU on A] -> A @ W + bias -> BatchNorm -> LeakyReLU."""
    a = a_ref[...]
    if pre_leaky_a:
        a = _leaky(a)          # elementwise, commutes with im2col
    y = jnp.dot(a, w_ref[...], preferred_element_type=jnp.float32) + b_ref[...]
    y = _bn_rows(y, g_ref[...], be_ref[...])
    o_ref[...] = _leaky(y)


def _conv_res_bn_kernel(a_ref, w_ref, b_ref, r_ref, g_ref, be_ref, o_ref):
    """A @ W + bias + residual -> BatchNorm (the Sequential's trailing BN)."""
    y = (jnp.dot(a_ref[...], w_ref[...], preferred_element_type=jnp.float32)
         + b_ref[...] + r_ref[...])
    o_ref[...] = _bn_rows(y, g_ref[...], be_ref[...])


def _deconv_bn_kernel(c_ref, w_ref, g_ref, be_ref, o_ref,
                      *, pre_tanh, post_leaky):
    """4-phase ConvTranspose matmuls -> [tanh] -> BatchNorm -> [LeakyReLU].

    c_ref: (4, M, K) bf16 phase cols;  w_ref: (4, K, Npad) bf16 phase weights
    o_ref: (4*M, Npad) f32, phase-major row order.  BN statistics are shared
    across the 4 phases (== all output pixels), matching BatchNorm2d.
    """
    p, m, _ = c_ref.shape
    n = o_ref.shape[-1]
    y = jnp.einsum("pmk,pkn->pmn", c_ref[...], w_ref[...],
                   preferred_element_type=jnp.float32)
    y = y.reshape(p * m, n)
    if pre_tanh:
        y = jnp.tanh(y)
    y = _bn_rows(y, g_ref[...], be_ref[...])
    if post_leaky:
        y = _leaky(y)
    o_ref[...] = y


# ----------------------------------------------------------------------------
# JAX glue: im2col / phase extraction + fused-kernel wrappers
# ----------------------------------------------------------------------------
def linear(x, w, b):
    m, n = x.shape[0], w.shape[1]
    return pl.pallas_call(
        _linear_kernel,
        out_shape=jax.ShapeDtypeStruct((m, n), jnp.float32),
        in_specs=_vmem_specs(3),
        out_specs=pl.BlockSpec(memory_space=VMEM),
    )(x.astype(jnp.bfloat16), w, b)


def _conv3x3_cols(x):
    """im2col (SAME, k=3) of an NHWC tensor -> (B*H*W, 9*C) bf16."""
    b, h, w, c = x.shape
    xp = jnp.pad(x, ((0, 0), (1, 1), (1, 1), (0, 0)))
    taps = [xp[:, dy:dy + h, dx:dx + w, :] for dy in range(3) for dx in range(3)]
    cols = jnp.concatenate(taps, axis=-1)
    return cols.reshape(b * h * w, 9 * c).astype(jnp.bfloat16)


def resblock_fused(x, p, post_gamma, post_beta):
    """x + Conv1x1(LeakyReLU(BN(Conv3x3(LeakyReLU(x))))) followed by the
    Sequential's trailing BatchNorm2d — two fused pallas_calls."""
    b, h, w, c = x.shape
    m = b * h * w
    npad = p["c1_w"].shape[1]

    cols = _conv3x3_cols(x)                 # leading LeakyReLU fused in-kernel
    k1 = functools.partial(_conv_bn_lrelu_kernel, pre_leaky_a=True)
    a = pl.pallas_call(
        k1,
        out_shape=jax.ShapeDtypeStruct((m, npad), jnp.float32),
        in_specs=_vmem_specs(5),
        out_specs=pl.BlockSpec(memory_space=VMEM),
    )(cols, p["c1_w"], p["c1_b"], p["bn_g"], p["bn_b"])

    a = a[:, :c].astype(jnp.bfloat16)       # real mid-channels for the 1x1 conv
    res = _pad_last(x.reshape(m, c), npad)  # lane-padded f32 residual
    y = pl.pallas_call(
        _conv_res_bn_kernel,
        out_shape=jax.ShapeDtypeStruct((m, npad), jnp.float32),
        in_specs=_vmem_specs(6),
        out_specs=pl.BlockSpec(memory_space=VMEM),
    )(a, p["c2_w"], p["c2_b"], res, post_gamma, post_beta)
    return y[:, :c].reshape(b, h, w, c)


def _deconv_phase_cols(x):
    """Phase-parity cols for ConvTranspose2d(k=4, s=2, p=1).

    Output pixel (2*jy+py, 2*jx+px) only sees a 2x2 window of the pad-1 input,
    so the deconv is 4 small matmuls (one per parity phase) with no
    zero-dilated input.  Returns (4, B*H*W, 4*C) bf16, phase p = py*2+px,
    tap t = dy*2+dx.
    """
    b, h, w, c = x.shape
    xp = jnp.pad(x, ((0, 0), (1, 1), (1, 1), (0, 0)))
    cols = []
    for py in (0, 1):
        for px in (0, 1):
            taps = [xp[:, py + dy:py + dy + h, px + dx:px + dx + w, :]
                    for dy in (0, 1) for dx in (0, 1)]
            cols.append(jnp.concatenate(taps, axis=-1).reshape(b * h * w, 4 * c))
    return jnp.stack(cols, axis=0).astype(jnp.bfloat16)


def deconv_phase_weights(wt, npad):
    """PyTorch-layout ConvTranspose2d weight (Cin, Cout, 4, 4) ->
    (4, 4*Cin, npad) per-phase 2x2 matmul weights (zero lane padding)."""
    phases = []
    for py in (0, 1):
        for px in (0, 1):
            taps = []
            for dy in (0, 1):
                for dx in (0, 1):
                    ky = (3 - 2 * dy) if py == 0 else (2 - 2 * dy)
                    kx = (3 - 2 * dx) if px == 0 else (2 - 2 * dx)
                    taps.append(wt[:, :, ky, kx])          # (Cin, Cout)
            phases.append(_pad_last(jnp.concatenate(taps, axis=0), npad))
    return jnp.stack(phases, axis=0)                       # (4, 4*Cin, npad)


def deconv_bn_fused(x, w_phases, gamma, beta, cout, *, pre_tanh, post_leaky):
    """ConvTranspose2d(k4,s2,p1, no bias) + [tanh] + BatchNorm + [LeakyReLU]
    in a single pallas_call; phases reassembled spatially in glue."""
    b, h, w, c = x.shape
    m = b * h * w
    npad = w_phases.shape[-1]
    cols = _deconv_phase_cols(x)
    kern = functools.partial(_deconv_bn_kernel, pre_tanh=pre_tanh,
                             post_leaky=post_leaky)
    y = pl.pallas_call(
        kern,
        out_shape=jax.ShapeDtypeStruct((4 * m, npad), jnp.float32),
        in_specs=_vmem_specs(4),
        out_specs=pl.BlockSpec(memory_space=VMEM),
    )(cols, w_phases, gamma, beta)
    # (phase-major rows) -> (B, 2H, 2W, cout)
    y = y[:, :cout].reshape(2, 2, b, h, w, cout)           # (py, px, B, H, W, C)
    y = y.transpose(2, 3, 0, 4, 1, 5)                      # (B, H, py, W, px, C)
    return y.reshape(b, 2 * h, 2 * w, cout)


# ----------------------------------------------------------------------------
# Parameter construction (deterministic, synthetic — shapes from __init__)
# ----------------------------------------------------------------------------
def make_params(key, d, z):
    f = 4
    npad = _round_up(d, LANE)          # all layer widths here pad to 128 lanes
    keys = iter(jax.random.split(key, 32))

    def nk():
        return next(keys)

    def conv_w(shape):                 # weights_init: N(0, 0.02) for Conv*
        return 0.02 * jax.random.normal(nk(), shape, jnp.float32)

    def bn_gamma(c):                   # weights_init: N(1, 0.02) for BatchNorm*
        g = 1.0 + 0.02 * jax.random.normal(nk(), (c,), jnp.float32)
        return _pad_last(g, npad).reshape(1, npad)

    def bn_beta():
        return jnp.zeros((1, npad), jnp.float32)

    def small(shape):
        return 0.01 * jax.random.normal(nk(), shape, jnp.float32)

    def bias_pad(c):
        return _pad_last(small((c,)), npad).reshape(1, npad)

    def resblock_params():
        return dict(
            c1_w=_pad_last(conv_w((9 * d, d)), npad).astype(jnp.bfloat16),
            c1_b=bias_pad(d),
            bn_g=bn_gamma(d), bn_b=bn_beta(),
            c2_w=_pad_last(conv_w((d, d)), npad).astype(jnp.bfloat16),
            c2_b=bias_pad(d),
        )

    p = {}
    p["fc_w"] = (0.1 * jax.random.normal(nk(), (z, d * f * f), jnp.float32)
                 ).astype(jnp.bfloat16)
    p["fc_b"] = small((d * f * f,)).reshape(1, d * f * f)
    p["rb1"] = resblock_params()
    p["bn_a_g"] = bn_gamma(d); p["bn_a_b"] = bn_beta()
    p["rb2"] = resblock_params()
    p["bn_b_g"] = bn_gamma(d); p["bn_b_b"] = bn_beta()
    p["dc1_w"] = deconv_phase_weights(conv_w((d, d // 2, 4, 4)),
                                      npad).astype(jnp.bfloat16)
    p["bn_c_g"] = bn_gamma(d // 2); p["bn_c_b"] = bn_beta()
    p["dc2_w"] = deconv_phase_weights(conv_w((d // 2, d // 4, 4, 4)),
                                      npad).astype(jnp.bfloat16)
    p["bn_d_g"] = bn_gamma(d // 4); p["bn_d_b"] = bn_beta()
    p["dc3_w"] = deconv_phase_weights(conv_w((d // 4, 3, 4, 4)),
                                      npad).astype(jnp.bfloat16)
    p["gx_g"] = _pad_last(jnp.ones((3,), jnp.float32), npad).reshape(1, npad)
    p["gx_b"] = bn_beta()
    return p


# ----------------------------------------------------------------------------
# Forward pass (GAN.forward)
# ----------------------------------------------------------------------------
def gan_forward(params, x):
    f = 4
    b = x.shape[0]
    h = linear(x, params["fc_w"], params["fc_b"])           # fc: (B, d*16)
    d = h.shape[1] // (f * f)
    # view(-1, d, f, f) is NCHW -> convert to NHWC for the kernels
    h = h.reshape(b, d, f, f).transpose(0, 2, 3, 1)         # (B, 4, 4, d)

    # ResBlock(d, d, bn=True) + BatchNorm2d(d) (trailing BN fused), twice
    h = resblock_fused(h, params["rb1"], params["bn_a_g"], params["bn_a_b"])
    h = resblock_fused(h, params["rb2"], params["bn_b_g"], params["bn_b_b"])

    # ConvTranspose + BN + LeakyReLU stages (each a single fused kernel)
    h = deconv_bn_fused(h, params["dc1_w"], params["bn_c_g"], params["bn_c_b"],
                        d // 2, pre_tanh=False, post_leaky=True)   # (B, 8, 8, d/2)
    h = deconv_bn_fused(h, params["dc2_w"], params["bn_d_g"], params["bn_d_b"],
                        d // 4, pre_tanh=False, post_leaky=True)   # (B, 16, 16, d/4)
    # final ConvTranspose + tanh + gx_bn fused
    h = deconv_bn_fused(h, params["dc3_w"], params["gx_g"], params["gx_b"],
                        3, pre_tanh=True, post_leaky=False)        # (B, 32, 32, 3)
    return h.transpose(0, 3, 1, 2)                           # NCHW (B, 3, 32, 32)


if __name__ == "__main__":
    d, z, B = 16, 32, 2
    key = jax.random.PRNGKey(0)
    kp, kx = jax.random.split(key)
    params = make_params(kp, d, z)
    x = jax.random.normal(kx, (B, z), jnp.float32)           # GAN.forward input: (B, z)

    fwd = jax.jit(gan_forward)
    out = jax.block_until_ready(fwd(params, x))

    assert out.shape == (B, 3, 32, 32), out.shape
    assert bool(jnp.all(jnp.isfinite(out)))
    print("KERNEL_OK")
</pallas_src>

<mosaic_0001>
module attributes {stable_mosaic.version = 11 : i64} {
  func.func @_linear_kernel(%arg0: memref<2x32xbf16, #tpu.memory_space<vmem>>, %arg1: memref<32x256xbf16, #tpu.memory_space<vmem>>, %arg2: memref<1x256xf32, #tpu.memory_space<vmem>>, %arg3: memref<2x256xf32, #tpu.memory_space<vmem>>) attributes {dimension_semantics = [], scalar_prefetch = 0 : i64, scratch_operands = 0 : i64, tpu.core_type = #tpu.core_type<tc>} {
    %c0 = arith.constant 0 : index
    %c0_0 = arith.constant 0 : index
    %0 = vector.load %arg0[%c0, %c0_0] : memref<2x32xbf16, #tpu.memory_space<vmem>>, vector<2x32xbf16>
    %c0_1 = arith.constant 0 : index
    %c0_2 = arith.constant 0 : index
    %1 = vector.load %arg1[%c0_1, %c0_2] : memref<32x256xbf16, #tpu.memory_space<vmem>>, vector<32x256xbf16>
    %cst = arith.constant dense<0.000000e+00> : vector<2x256xf32>
    %2 = tpu.matmul %0, %1, %cst {dimension_numbers = #tpu.dot_dimension_numbers<[1], [0], [0], [1], [0, 0, 1, 1], [], []>} : vector<2x32xbf16>, vector<32x256xbf16>, vector<2x256xf32> -> vector<2x256xf32>
    %c0_3 = arith.constant 0 : index
    %c0_4 = arith.constant 0 : index
    %3 = vector.load %arg2[%c0_3, %c0_4] : memref<1x256xf32, #tpu.memory_space<vmem>>, vector<1x256xf32>
    %4 = vector.broadcast %3 : vector<1x256xf32> to vector<2x256xf32>
    %5 = arith.addf %2, %4 : vector<2x256xf32>
    %c0_5 = arith.constant 0 : index
    %c0_6 = arith.constant 0 : index
    %6 = vector.load %arg3[%c0_5, %c0_6] : memref<2x256xf32, #tpu.memory_space<vmem>>, vector<2x256xf32>
    tpu.vector_store %arg3[%c0_5, %c0_6], %5 {strides = array<i32>} : memref<2x256xf32, #tpu.memory_space<vmem>>, vector<2x256xf32>,
    return
  }
}

module attributes {stable_mosaic.version = 11 : i64} {
  func.func @_conv_bn_lrelu_kernel(%arg0: memref<32x144xbf16, #tpu.memory_space<vmem>>, %arg1: memref<144x128xbf16, #tpu.memory_space<vmem>>, %arg2: memref<1x128xf32, #tpu.memory_space<vmem>>, %arg3: memref<1x128xf32, #tpu.memory_space<vmem>>, %arg4: memref<1x128xf32, #tpu.memory_space<vmem>>, %arg5: memref<32x128xf32, #tpu.memory_space<vmem>>) attributes {dimension_semantics = [], scalar_prefetch = 0 : i64, scratch_operands = 0 : i64, tpu.core_type = #tpu.core_type<tc>} {
    %c0 = arith.constant 0 : index
    %c0_0 = arith.constant 0 : index
    %0 = vector.load %arg0[%c0, %c0_0] : memref<32x144xbf16, #tpu.memory_space<vmem>>, vector<32x144xbf16>
    %cst = arith.constant 0.000000e+00 : bf16
    %1 = vector.broadcast %cst : bf16 to vector<32x144xbf16>
    %2 = arith.cmpf oge, %0, %1 : vector<32x144xbf16>
    %cst_1 = arith.constant 1.000980e-02 : bf16
    %3 = vector.broadcast %cst_1 : bf16 to vector<32x144xbf16>
    %4 = arith.mulf %3, %0 : vector<32x144xbf16>
    %5 = arith.select %2, %0, %4 : vector<32x144xi1>, vector<32x144xbf16>
    %c0_2 = arith.constant 0 : index
    %c0_3 = arith.constant 0 : index
    %6 = vector.load %arg1[%c0_2, %c0_3] : memref<144x128xbf16, #tpu.memory_space<vmem>>, vector<144x128xbf16>
    %cst_4 = arith.constant dense<0.000000e+00> : vector<32x128xf32>
    %7 = tpu.matmul %5, %6, %cst_4 {dimension_numbers = #tpu.dot_dimension_numbers<[1], [0], [0], [1], [0, 0, 1, 1], [], []>} : vector<32x144xbf16>, vector<144x128xbf16>, vector<32x128xf32> -> vector<32x128xf32>
    %c0_5 = arith.constant 0 : index
    %c0_6 = arith.constant 0 : index
    %8 = vector.load %arg2[%c0_5, %c0_6] : memref<1x128xf32, #tpu.memory_space<vmem>>, vector<1x128xf32>
    %9 = vector.broadcast %8 : vector<1x128xf32> to vector<32x128xf32>
    %10 = arith.addf %7, %9 : vector<32x128xf32>
    %c0_7 = arith.constant 0 : index
    %c0_8 = arith.constant 0 : index
    %11 = vector.load %arg3[%c0_7, %c0_8] : memref<1x128xf32, #tpu.memory_space<vmem>>, vector<1x128xf32>
    %c0_9 = arith.constant 0 : index
    %c0_10 = arith.constant 0 : index
    %12 = vector.load %arg4[%c0_9, %c0_10] : memref<1x128xf32, #tpu.memory_space<vmem>>, vector<1x128xf32>
    %cst_11 = arith.constant dense<0.000000e+00> : vector<128xf32>
    %13 = vector.multi_reduction <add>, %10, %cst_11 [0] : vector<32x128xf32> to vector<128xf32>
    %14 = vector.shape_cast %13 : vector<128xf32> to vector<1x128xf32>
    %cst_12 = arith.constant 3.200000e+01 : f32
    %15 = vector.broadcast %cst_12 : f32 to vector<1x128xf32>
    %16 = arith.divf %14, %15 : vector<1x128xf32>
    %17 = vector.broadcast %16 : vector<1x128xf32> to vector<32x128xf32>
    %18 = arith.subf %10, %17 : vector<32x128xf32>
    %19 = arith.mulf %18, %18 : vector<32x128xf32>
    %cst_13 = arith.constant dense<0.000000e+00> : vector<128xf32>
    %20 = vector.multi_reduction <add>, %19, %cst_13 [0] : vector<32x128xf32> to vector<128xf32>
    %21 = vector.shape_cast %20 : vector<128xf32> to vector<1x128xf32>
    %cst_14 = arith.constant 3.200000e+01 : f32
    %22 = vector.broadcast %cst_14 : f32 to vector<1x128xf32>
    %23 = arith.divf %21, %22 : vector<1x128xf32>
    %cst_15 = arith.constant 9.99999974E-6 : f32
    %24 = vector.broadcast %cst_15 : f32 to vector<1x128xf32>
    %25 = arith.addf %23, %24 : vector<1x128xf32>
    %26 = math.rsqrt %25 : vector<1x128xf32>
    %27 = vector.broadcast %26 : vector<1x128xf32> to vector<32x128xf32>
    %28 = arith.mulf %18, %27 : vector<32x128xf32>
    %29 = vector.broadcast %11 : vector<1x128xf32> to vector<32x128xf32>
    %30 = arith.mulf %28, %29 : vector<32x128xf32>
    %31 = vector.broadcast %12 : vector<1x128xf32> to vector<32x128xf32>
    %32 = arith.addf %30, %31 : vector<32x128xf32>
    %cst_16 = arith.constant 0.000000e+00 : f32
    %33 = vector.broadcast %cst_16 : f32 to vector<32x128xf32>
    %34 = arith.cmpf oge, %32, %33 : vector<32x128xf32>
    %cst_17 = arith.constant 0.00999999977 : f32
    %35 = vector.broadcast %cst_17 : f32 to vector<32x128xf32>
    %36 = arith.mulf %35, %32 : vector<32x128xf32>
    %37 = arith.select %34, %32, %36 : vector<32x128xi1>, vector<32x128xf32>
    %c0_18 = arith.constant 0 : index
    %c0_19 = arith.constant 0 : index
    %38 = vector.load %arg5[%c0_18, %c0_19] : memref<32x128xf32, #tpu.memory_space<vmem>>, vector<32x128xf32>
    tpu.vector_store %arg5[%c0_18, %c0_19], %37 {strides = array<i32>} : memref<32x128xf32, #tpu.memory_space<vmem>>, vector<32x128xf32>,
    return
  }
}

module attributes {stable_mosaic.version = 11 : i64} {
  func.func @_conv_res_bn_kernel(%arg0: memref<32x16xbf16, #tpu.memory_space<vmem>>, %arg1: memref<16x128xbf16, #tpu.memory_space<vmem>>, %arg2: memref<1x128xf32, #tpu.memory_space<vmem>>, %arg3: memref<32x128xf32, #tpu.memory_space<vmem>>, %arg4: memref<1x128xf32, #tpu.memory_space<vmem>>, %arg5: memref<1x128xf32, #tpu.memory_space<vmem>>, %arg6: memref<32x128xf32, #tpu.memory_space<vmem>>) attributes {dimension_semantics = [], scalar_prefetch = 0 : i64, scratch_operands = 0 : i64, tpu.core_type = #tpu.core_type<tc>} {
    %c0 = arith.constant 0 : index
    %c0_0 = arith.constant 0 : index
    %0 = vector.load %arg0[%c0, %c0_0] : memref<32x16xbf16, #tpu.memory_space<vmem>>, vector<32x16xbf16>
    %c0_1 = arith.constant 0 : index
    %c0_2 = arith.constant 0 : index
    %1 = vector.load %arg1[%c0_1, %c0_2] : memref<16x128xbf16, #tpu.memory_space<vmem>>, vector<16x128xbf16>
    %cst = arith.constant dense<0.000000e+00> : vector<32x128xf32>
    %2 = tpu.matmul %0, %1, %cst {dimension_numbers = #tpu.dot_dimension_numbers<[1], [0], [0], [1], [0, 0, 1, 1], [], []>} : vector<32x16xbf16>, vector<16x128xbf16>, vector<32x128xf32> -> vector<32x128xf32>
    %c0_3 = arith.constant 0 : index
    %c0_4 = arith.constant 0 : index
    %3 = vector.load %arg2[%c0_3, %c0_4] : memref<1x128xf32, #tpu.memory_space<vmem>>, vector<1x128xf32>
    %4 = vector.broadcast %3 : vector<1x128xf32> to vector<32x128xf32>
    %5 = arith.addf %2, %4 : vector<32x128xf32>
    %c0_5 = arith.constant 0 : index
    %c0_6 = arith.constant 0 : index
    %6 = vector.load %arg3[%c0_5, %c0_6] : memref<32x128xf32, #tpu.memory_space<vmem>>, vector<32x128xf32>
    %7 = arith.addf %5, %6 : vector<32x128xf32>
    %c0_7 = arith.constant 0 : index
    %c0_8 = arith.constant 0 : index
    %8 = vector.load %arg4[%c0_7, %c0_8] : memref<1x128xf32, #tpu.memory_space<vmem>>, vector<1x128xf32>
    %c0_9 = arith.constant 0 : index
    %c0_10 = arith.constant 0 : index
    %9 = vector.load %arg5[%c0_9, %c0_10] : memref<1x128xf32, #tpu.memory_space<vmem>>, vector<1x128xf32>
    %cst_11 = arith.constant dense<0.000000e+00> : vector<128xf32>
    %10 = vector.multi_reduction <add>, %7, %cst_11 [0] : vector<32x128xf32> to vector<128xf32>
    %11 = vector.shape_cast %10 : vector<128xf32> to vector<1x128xf32>
    %cst_12 = arith.constant 3.200000e+01 : f32
    %12 = vector.broadcast %cst_12 : f32 to vector<1x128xf32>
    %13 = arith.divf %11, %12 : vector<1x128xf32>
    %14 = vector.broadcast %13 : vector<1x128xf32> to vector<32x128xf32>
    %15 = arith.subf %7, %14 : vector<32x128xf32>
    %16 = arith.mulf %15, %15 : vector<32x128xf32>
    %cst_13 = arith.constant dense<0.000000e+00> : vector<128xf32>
    %17 = vector.multi_reduction <add>, %16, %cst_13 [0] : vector<32x128xf32> to vector<128xf32>
    %18 = vector.shape_cast %17 : vector<128xf32> to vector<1x128xf32>
    %cst_14 = arith.constant 3.200000e+01 : f32
    %19 = vector.broadcast %cst_14 : f32 to vector<1x128xf32>
    %20 = arith.divf %18, %19 : vector<1x128xf32>
    %cst_15 = arith.constant 9.99999974E-6 : f32
    %21 = vector.broadcast %cst_15 : f32 to vector<1x128xf32>
    %22 = arith.addf %20, %21 : vector<1x128xf32>
    %23 = math.rsqrt %22 : vector<1x128xf32>
    %24 = vector.broadcast %23 : vector<1x128xf32> to vector<32x128xf32>
    %25 = arith.mulf %15, %24 : vector<32x128xf32>
    %26 = vector.broadcast %8 : vector<1x128xf32> to vector<32x128xf32>
    %27 = arith.mulf %25, %26 : vector<32x128xf32>
    %28 = vector.broadcast %9 : vector<1x128xf32> to vector<32x128xf32>
    %29 = arith.addf %27, %28 : vector<32x128xf32>
    %c0_16 = arith.constant 0 : index
    %c0_17 = arith.constant 0 : index
    %30 = vector.load %arg6[%c0_16, %c0_17] : memref<32x128xf32, #tpu.memory_space<vmem>>, vector<32x128xf32>
    tpu.vector_store %arg6[%c0_16, %c0_17], %29 {strides = array<i32>} : memref<32x128xf32, #tpu.memory_space<vmem>>, vector<32x128xf32>,
    return
  }
}

module attributes {stable_mosaic.version = 11 : i64} {
  func.func @_deconv_bn_kernel(%arg0: memref<4x32x64xbf16, #tpu.memory_space<vmem>>, %arg1: memref<4x64x128xbf16, #tpu.memory_space<vmem>>, %arg2: memref<1x128xf32, #tpu.memory_space<vmem>>, %arg3: memref<1x128xf32, #tpu.memory_space<vmem>>, %arg4: memref<128x128xf32, #tpu.memory_space<vmem>>) attributes {dimension_semantics = [], scalar_prefetch = 0 : i64, scratch_operands = 0 : i64, tpu.core_type = #tpu.core_type<tc>} {
    %c0 = arith.constant 0 : index
    %c0_0 = arith.constant 0 : index
    %c0_1 = arith.constant 0 : index
    %0 = vector.load %arg0[%c0, %c0_0, %c0_1] : memref<4x32x64xbf16, #tpu.memory_space<vmem>>, vector<4x32x64xbf16>
    %c0_2 = arith.constant 0 : index
    %c0_3 = arith.constant 0 : index
    %c0_4 = arith.constant 0 : index
    %1 = vector.load %arg1[%c0_2, %c0_3, %c0_4] : memref<4x64x128xbf16, #tpu.memory_space<vmem>>, vector<4x64x128xbf16>
    "tpu.trace_start"() <{level = 10 : i32, message = "pmk,pkn->pmn"}> : () -> ()
    %cst = arith.constant dense<0.000000e+00> : vector<4x32x128xf32>
    %2 = tpu.matmul %0, %1, %cst {dimension_numbers = #tpu.dot_dimension_numbers<[2], [1], [1], [2], [0, 0, 0, 1, 1, 2], [0], [0]>} : vector<4x32x64xbf16>, vector<4x64x128xbf16>, vector<4x32x128xf32> -> vector<4x32x128xf32>
    "tpu.trace_stop"() : () -> ()
    %3 = vector.shape_cast %2 : vector<4x32x128xf32> to vector<128x128xf32>
    %c0_5 = arith.constant 0 : index
    %c0_6 = arith.constant 0 : index
    %4 = vector.load %arg2[%c0_5, %c0_6] : memref<1x128xf32, #tpu.memory_space<vmem>>, vector<1x128xf32>
    %c0_7 = arith.constant 0 : index
    %c0_8 = arith.constant 0 : index
    %5 = vector.load %arg3[%c0_7, %c0_8] : memref<1x128xf32, #tpu.memory_space<vmem>>, vector<1x128xf32>
    %cst_9 = arith.constant dense<0.000000e+00> : vector<128xf32>
    %6 = vector.multi_reduction <add>, %3, %cst_9 [0] : vector<128x128xf32> to vector<128xf32>
    %7 = vector.shape_cast %6 : vector<128xf32> to vector<1x128xf32>
    %cst_10 = arith.constant 1.280000e+02 : f32
    %8 = vector.broadcast %cst_10 : f32 to vector<1x128xf32>
    %9 = arith.divf %7, %8 : vector<1x128xf32>
    %10 = vector.broadcast %9 : vector<1x128xf32> to vector<128x128xf32>
    %11 = arith.subf %3, %10 : vector<128x128xf32>
    %12 = arith.mulf %11, %11 : vector<128x128xf32>
    %cst_11 = arith.constant dense<0.000000e+00> : vector<128xf32>
    %13 = vector.multi_reduction <add>, %12, %cst_11 [0] : vector<128x128xf32> to vector<128xf32>
    %14 = vector.shape_cast %13 : vector<128xf32> to vector<1x128xf32>
    %cst_12 = arith.constant 1.280000e+02 : f32
    %15 = vector.broadcast %cst_12 : f32 to vector<1x128xf32>
    %16 = arith.divf %14, %15 : vector<1x128xf32>
    %cst_13 = arith.constant 9.99999974E-6 : f32
    %17 = vector.broadcast %cst_13 : f32 to vector<1x128xf32>
    %18 = arith.addf %16, %17 : vector<1x128xf32>
    %19 = math.rsqrt %18 : vector<1x128xf32>
    %20 = vector.broadcast %19 : vector<1x128xf32> to vector<128x128xf32>
    %21 = arith.mulf %11, %20 : vector<128x128xf32>
    %22 = vector.broadcast %4 : vector<1x128xf32> to vector<128x128xf32>
    %23 = arith.mulf %21, %22 : vector<128x128xf32>
    %24 = vector.broadcast %5 : vector<1x128xf32> to vector<128x128xf32>
    %25 = arith.addf %23, %24 : vector<128x128xf32>
    %cst_14 = arith.constant 0.000000e+00 : f32
    %26 = vector.broadcast %cst_14 : f32 to vector<128x128xf32>
    %27 = arith.cmpf oge, %25, %26 : vector<128x128xf32>
    %cst_15 = arith.constant 0.00999999977 : f32
    %28 = vector.broadcast %cst_15 : f32 to vector<128x128xf32>
    %29 = arith.mulf %28, %25 : vector<128x128xf32>
    %30 = arith.select %27, %25, %29 : vector<128x128xi1>, vector<128x128xf32>
    %c0_16 = arith.constant 0 : index
    %c0_17 = arith.constant 0 : index
    %31 = vector.load %arg4[%c0_16, %c0_17] : memref<128x128xf32, #tpu.memory_space<vmem>>, vector<128x128xf32>
    tpu.vector_store %arg4[%c0_16, %c0_17], %30 {strides = array<i32>} : memref<128x128xf32, #tpu.memory_space<vmem>>, vector<128x128xf32>,
    return
  }
}

module attributes {stable_mosaic.version = 11 : i64} {
  func.func @_deconv_bn_kernel(%arg0: memref<4x128x32xbf16, #tpu.memory_space<vmem>>, %arg1: memref<4x32x128xbf16, #tpu.memory_space<vmem>>, %arg2: memref<1x128xf32, #tpu.memory_space<vmem>>, %arg3: memref<1x128xf32, #tpu.memory_space<vmem>>, %arg4: memref<512x128xf32, #tpu.memory_space<vmem>>) attributes {dimension_semantics = [], scalar_prefetch = 0 : i64, scratch_operands = 0 : i64, tpu.core_type = #tpu.core_type<tc>} {
    %c0 = arith.constant 0 : index
    %c0_0 = arith.constant 0 : index
    %c0_1 = arith.constant 0 : index
    %0 = vector.load %arg0[%c0, %c0_0, %c0_1] : memref<4x128x32xbf16, #tpu.memory_space<vmem>>, vector<4x128x32xbf16>
    %c0_2 = arith.constant 0 : index
    %c0_3 = arith.constant 0 : index
    %c0_4 = arith.constant 0 : index
    %1 = vector.load %arg1[%c0_2, %c0_3, %c0_4] : memref<4x32x128xbf16, #tpu.memory_space<vmem>>, vector<4x32x128xbf16>
    "tpu.trace_start"() <{level = 10 : i32, message = "pmk,pkn->pmn"}> : () -> ()
    %cst = arith.constant dense<0.000000e+00> : vector<4x128x128xf32>
    %2 = tpu.matmul %0, %1, %cst {dimension_numbers = #tpu.dot_dimension_numbers<[2], [1], [1], [2], [0, 0, 0, 1, 1, 2], [0], [0]>} : vector<4x128x32xbf16>, vector<4x32x128xbf16>, vector<4x128x128xf32> -> vector<4x128x128xf32>
    "tpu.trace_stop"() : () -> ()
    %3 = vector.shape_cast %2 : vector<4x128x128xf32> to vector<512x128xf32>
    %c0_5 = arith.constant 0 : index
    %c0_6 = arith.constant 0 : index
    %4 = vector.load %arg2[%c0_5, %c0_6] : memref<1x128xf32, #tpu.memory_space<vmem>>, vector<1x128xf32>
    %c0_7 = arith.constant 0 : index
    %c0_8 = arith.constant 0 : index
    %5 = vector.load %arg3[%c0_7, %c0_8] : memref<1x128xf32, #tpu.memory_space<vmem>>, vector<1x128xf32>
    %cst_9 = arith.constant dense<0.000000e+00> : vector<128xf32>
    %6 = vector.multi_reduction <add>, %3, %cst_9 [0] : vector<512x128xf32> to vector<128xf32>
    %7 = vector.shape_cast %6 : vector<128xf32> to vector<1x128xf32>
    %cst_10 = arith.constant 5.120000e+02 : f32
    %8 = vector.broadcast %cst_10 : f32 to vector<1x128xf32>
    %9 = arith.divf %7, %8 : vector<1x128xf32>
    %10 = vector.broadcast %9 : vector<1x128xf32> to vector<512x128xf32>
    %11 = arith.subf %3, %10 : vector<512x128xf32>
    %12 = arith.mulf %11, %11 : vector<512x128xf32>
    %cst_11 = arith.constant dense<0.000000e+00> : vector<128xf32>
    %13 = vector.multi_reduction <add>, %12, %cst_11 [0] : vector<512x128xf32> to vector<128xf32>
    %14 = vector.shape_cast %13 : vector<128xf32> to vector<1x128xf32>
    %cst_12 = arith.constant 5.120000e+02 : f32
    %15 = vector.broadcast %cst_12 : f32 to vector<1x128xf32>
    %16 = arith.divf %14, %15 : vector<1x128xf32>
    %cst_13 = arith.constant 9.99999974E-6 : f32
    %17 = vector.broadcast %cst_13 : f32 to vector<1x128xf32>
    %18 = arith.addf %16, %17 : vector<1x128xf32>
    %19 = math.rsqrt %18 : vector<1x128xf32>
    %20 = vector.broadcast %19 : vector<1x128xf32> to vector<512x128xf32>
    %21 = arith.mulf %11, %20 : vector<512x128xf32>
    %22 = vector.broadcast %4 : vector<1x128xf32> to vector<512x128xf32>
    %23 = arith.mulf %21, %22 : vector<512x128xf32>
    %24 = vector.broadcast %5 : vector<1x128xf32> to vector<512x128xf32>
    %25 = arith.addf %23, %24 : vector<512x128xf32>
    %cst_14 = arith.constant 0.000000e+00 : f32
    %26 = vector.broadcast %cst_14 : f32 to vector<512x128xf32>
    %27 = arith.cmpf oge, %25, %26 : vector<512x128xf32>
    %cst_15 = arith.constant 0.00999999977 : f32
    %28 = vector.broadcast %cst_15 : f32 to vector<512x128xf32>
    %29 = arith.mulf %28, %25 : vector<512x128xf32>
    %30 = arith.select %27, %25, %29 : vector<512x128xi1>, vector<512x128xf32>
    %c0_16 = arith.constant 0 : index
    %c0_17 = arith.constant 0 : index
    %31 = vector.load %arg4[%c0_16, %c0_17] : memref<512x128xf32, #tpu.memory_space<vmem>>, vector<512x128xf32>
    tpu.vector_store %arg4[%c0_16, %c0_17], %30 {strides = array<i32>} : memref<512x128xf32, #tpu.memory_space<vmem>>, vector<512x128xf32>,
    return
  }
}

module attributes {stable_mosaic.version = 11 : i64} {
  func.func @_deconv_bn_kernel(%arg0: memref<4x512x16xbf16, #tpu.memory_space<vmem>>, %arg1: memref<4x16x128xbf16, #tpu.memory_space<vmem>>, %arg2: memref<1x128xf32, #tpu.memory_space<vmem>>, %arg3: memref<1x128xf32, #tpu.memory_space<vmem>>, %arg4: memref<2048x128xf32, #tpu.memory_space<vmem>>) attributes {dimension_semantics = [], scalar_prefetch = 0 : i64, scratch_operands = 0 : i64, tpu.core_type = #tpu.core_type<tc>} {
    %c0 = arith.constant 0 : index
    %c0_0 = arith.constant 0 : index
    %c0_1 = arith.constant 0 : index
    %0 = vector.load %arg0[%c0, %c0_0, %c0_1] : memref<4x512x16xbf16, #tpu.memory_space<vmem>>, vector<4x512x16xbf16>
    %c0_2 = arith.constant 0 : index
    %c0_3 = arith.constant 0 : index
    %c0_4 = arith.constant 0 : index
    %1 = vector.load %arg1[%c0_2, %c0_3, %c0_4] : memref<4x16x128xbf16, #tpu.memory_space<vmem>>, vector<4x16x128xbf16>
    "tpu.trace_start"() <{level = 10 : i32, message = "pmk,pkn->pmn"}> : () -> ()
    %cst = arith.constant dense<0.000000e+00> : vector<4x512x128xf32>
    %2 = tpu.matmul %0, %1, %cst {dimension_numbers = #tpu.dot_dimension_numbers<[2], [1], [1], [2], [0, 0, 0, 1, 1, 2], [0], [0]>} : vector<4x512x16xbf16>, vector<4x16x128xbf16>, vector<4x512x128xf32> -> vector<4x512x128xf32>
    "tpu.trace_stop"() : () -> ()
    %3 = vector.shape_cast %2 : vector<4x512x128xf32> to vector<2048x128xf32>
    %4 = math.tanh %3 : vector<2048x128xf32>
    %c0_5 = arith.constant 0 : index
    %c0_6 = arith.constant 0 : index
    %5 = vector.load %arg2[%c0_5, %c0_6] : memref<1x128xf32, #tpu.memory_space<vmem>>, vector<1x128xf32>
    %c0_7 = arith.constant 0 : index
    %c0_8 = arith.constant 0 : index
    %6 = vector.load %arg3[%c0_7, %c0_8] : memref<1x128xf32, #tpu.memory_space<vmem>>, vector<1x128xf32>
    %cst_9 = arith.constant dense<0.000000e+00> : vector<128xf32>
    %7 = vector.multi_reduction <add>, %4, %cst_9 [0] : vector<2048x128xf32> to vector<128xf32>
    %8 = vector.shape_cast %7 : vector<128xf32> to vector<1x128xf32>
    %cst_10 = arith.constant 2.048000e+03 : f32
    %9 = vector.broadcast %cst_10 : f32 to vector<1x128xf32>
    %10 = arith.divf %8, %9 : vector<1x128xf32>
    %11 = vector.broadcast %10 : vector<1x128xf32> to vector<2048x128xf32>
    %12 = arith.subf %4, %11 : vector<2048x128xf32>
    %13 = arith.mulf %12, %12 : vector<2048x128xf32>
    %cst_11 = arith.constant dense<0.000000e+00> : vector<128xf32>
    %14 = vector.multi_reduction <add>, %13, %cst_11 [0] : vector<2048x128xf32> to vector<128xf32>
    %15 = vector.shape_cast %14 : vector<128xf32> to vector<1x128xf32>
    %cst_12 = arith.constant 2.048000e+03 : f32
    %16 = vector.broadcast %cst_12 : f32 to vector<1x128xf32>
    %17 = arith.divf %15, %16 : vector<1x128xf32>
    %cst_13 = arith.constant 9.99999974E-6 : f32
    %18 = vector.broadcast %cst_13 : f32 to vector<1x128xf32>
    %19 = arith.addf %17, %18 : vector<1x128xf32>
    %20 = math.rsqrt %19 : vector<1x128xf32>
    %21 = vector.broadcast %20 : vector<1x128xf32> to vector<2048x128xf32>
    %22 = arith.mulf %12, %21 : vector<2048x128xf32>
    %23 = vector.broadcast %5 : vector<1x128xf32> to vector<2048x128xf32>
    %24 = arith.mulf %22, %23 : vector<2048x128xf32>
    %25 = vector.broadcast %6 : vector<1x128xf32> to vector<2048x128xf32>
    %26 = arith.addf %24, %25 : vector<2048x128xf32>
    %c0_14 = arith.constant 0 : index
    %c0_15 = arith.constant 0 : index
    %27 = vector.load %arg4[%c0_14, %c0_15] : memref<2048x128xf32, #tpu.memory_space<vmem>>, vector<2048x128xf32>
    tpu.vector_store %arg4[%c0_14, %c0_15], %26 {strides = array<i32>} : memref<2048x128xf32, #tpu.memory_space<vmem>>, vector<2048x128xf32>,
    return
  }
}

</mosaic_0001>

<llo_original>
// kernel: gan_forward.9
$region0: #{gan_forward.9}
  #allocation0 [shape = 'u32[]', space=smem, size = 0x4, offset = 0x4, fixed_abs, tag = 'smem constant byte address 0x4 - core index']
  #allocation1 [shape = 'u32[144,128]{1,0:T(1,128)}', space=vmem, size = 0x12000, scoped, tag = 'internal scratch']
  %s0 = inlined_call_operand.vmem [shape: bf16[32,144], index: 0, kind: input, shape index: {}]
  %s1 = inlined_call_operand.hbm [shape: bf16[144,128], index: 1, kind: input, shape index: {}]
  %s2 = inlined_call_operand.hbm [shape: f32[1,128], index: 2, kind: input, shape index: {}]
  %s3 = inlined_call_operand.hbm [shape: f32[1,128], index: 3, kind: input, shape index: {}]
  %s4 = inlined_call_operand.hbm [shape: f32[1,128], index: 4, kind: input, shape index: {}]
  %s5 = inlined_call_operand.vmem [shape: f32[32,128], index: 5, kind: output, shape index: {}]
  %s6 = sld [smem:[#allocation0]]
  $region46: #{gan_forward.9} parent=0
    _
  %s8 = ssub.s32 1, %s6
  %s9 = scalar_select 0, %s8, %s6
  $region1: #{gan_forward.9} parent=0
    #allocation2 [shape = 'u8[36864]{0}', space=vmem, size = 0x9000, scoped, tag = 'input window, operand 1, single buffered']
    #allocation3 [shape = 's32[1]{0}', space=sflag, size = 0x4, scoped, tag = 'scoped memory for gan_forward.9']
    #allocation4 [shape = 'u8[512]{0}', space=vmem, size = 0x400, scoped, tag = 'input window, operand 2, single buffered']
    #allocation5 [shape = 's32[1]{0}', space=sflag, size = 0x4, scoped, tag = 'scoped memory for gan_forward.9']
    #allocation6 [shape = 'u8[512]{0}', space=vmem, size = 0x400, scoped, tag = 'input window, operand 3, single buffered']
    #allocation7 [shape = 'u8[512]{0}', space=vmem, size = 0x400, scoped, tag = 'input window, operand 4, single buffered']
    #allocation8 [shape = 's32[1]{0}', space=sflag, size = 0x4, scoped, tag = 'scoped memory for gan_forward.9']
    %10 = vsyncpa [#allocation3], 0
    %11 = vsyncpa [#allocation5], 0
    %12 = vsyncpa [#allocation8], 0
    // Predicated region
    $region2: #{gan_forward.9} parent=1 // pred_check
      _
    $region3: #{gan_forward.9} parent=1 // pred_check_branch
      %14 = sbr.rel (0) target = $region5
    $region4: #{gan_forward.9} parent=1 // pred_region
      _
    $region5: #{gan_forward.9} parent=1 // pred_fallthru
      _
    // Predicated region
    $region6: #{gan_forward.9} parent=1 // pred_check
      _
    $region7: #{gan_forward.9} parent=1 // pred_check_branch
      %16 = sbr.rel (0) target = $region9
    $region8: #{gan_forward.9} parent=1 // pred_region
      %s18 = ssub.s32 1152, 1152
      %19 = vsyncadd [#allocation3], %s18
      %s20 = sshll.u32 [#allocation2], 4
      %s21 = int_to_ptr.vmem [resolvable:$true] %s20
      %26 = dma.hbm_to_vmem [thread:$0]  %s1, 1152, %s21, [#allocation3], 64, 64, 4
    $region9: #{gan_forward.9} parent=1 // pred_fallthru
      _
    // Predicated region
    $region10: #{gan_forward.9} parent=1 // pred_check
      _
    $region11: #{gan_forward.9} parent=1 // pred_check_branch
      %28 = sbr.rel (0) target = $region13
    $region12: #{gan_forward.9} parent=1 // pred_region
      %s30 = ssub.s32 16, 16
      %31 = vsyncadd [#allocation5], %s30
      %s33 = sshll.u32 [#allocation4], 4
      %s34 = int_to_ptr.vmem [resolvable:$true] %s33
      %36 = dma.hbm_to_vmem [thread:$0]  %s2, 16, %s34, [#allocation5]
    $region13: #{gan_forward.9} parent=1 // pred_fallthru
      _
    // Predicated region
    $region14: #{gan_forward.9} parent=1 // pred_check
      _
    $region15: #{gan_forward.9} parent=1 // pred_check_branch
      %38 = sbr.rel (0) target = $region17
    $region16: #{gan_forward.9} parent=1 // pred_region
      %s40 = ssub.s32 16, 16
      %41 = vsyncadd [#allocation5], %s40
      %s43 = sshll.u32 [#allocation6], 4
      %s44 = int_to_ptr.vmem [resolvable:$true] %s43
      %46 = dma.hbm_to_vmem [thread:$0]  %s3, 16, %s44, [#allocation5]
    $region17: #{gan_forward.9} parent=1 // pred_fallthru
      _
    // Predicated region
    $region18: #{gan_forward.9} parent=1 // pred_check
      _
    $region19: #{gan_forward.9} parent=1 // pred_check_branch
      %48 = sbr.rel (0) target = $region21
    $region20: #{gan_forward.9} parent=1 // pred_region
      %s50 = ssub.s32 16, 16
      %51 = vsyncadd [#allocation8], %s50
      %s53 = sshll.u32 [#allocation7], 4
      %s54 = int_to_ptr.vmem [resolvable:$true] %s53
      %56 = dma.hbm_to_vmem [thread:$0]  %s4, 16, %s54, [#allocation8]
    $region21: #{gan_forward.9} parent=1 // pred_fallthru
      _
    // Predicated region
    $region22: #{gan_forward.9} parent=1 // pred_check
      _
    $region23: #{gan_forward.9} parent=1 // pred_check_branch
      %58 = sbr.rel (0) target = $region25
    $region24: #{gan_forward.9} parent=1 // pred_region
      %59 = dma.done [#allocation3], 1152
    $region25: #{gan_forward.9} parent=1 // pred_fallthru
      _
    // Predicated region
    $region26: #{gan_forward.9} parent=1 // pred_check
      _
    $region27: #{gan_forward.9} parent=1 // pred_check_branch
      %61 = sbr.rel (0) target = $region29
    $region28: #{gan_forward.9} parent=1 // pred_region
      %62 = dma.done [#allocation5], 16
    $region29: #{gan_forward.9} parent=1 // pred_fallthru
      _
    // Predicated region
    $region30: #{gan_forward.9} parent=1 // pred_check
      _
    $region31: #{gan_forward.9} parent=1 // pred_check_branch
      %64 = sbr.rel (0) target = $region33
    $region32: #{gan_forward.9} parent=1 // pred_region
      %65 = dma.done [#allocation5], 16
    $region33: #{gan_forward.9} parent=1 // pred_fallthru
      _
    // Predicated region
    $region34: #{gan_forward.9} parent=1 // pred_check
      _
    $region35: #{gan_forward.9} parent=1 // pred_check_branch
      %67 = sbr.rel (0) target = $region37
    $region36: #{gan_forward.9} parent=1 // pred_region
      %68 = dma.done [#allocation8], 16
    $region37: #{gan_forward.9} parent=1 // pred_fallthru
      _
    %v71 = vld [vmem:[%s0] sm:$0xff]
    %v72 = vld [vmem:[%s0 + $0x8] sm:$0xff]
    %v73 = vld [vmem:[%s0 + $0x10] sm:$0xff]
    %v74 = vld [vmem:[%s0 + $0x18] sm:$0xff]
    %vm75 = vcmp.ge.bf16.partialorder %v71, 0
    %vm76 = vcmp.ge.bf16.partialorder %v72, 0
    %vm77 = vcmp.ge.bf16.partialorder %v73, 0
    %vm78 = vcmp.ge.bf16.partialorder %v74, 0
    %v79 = vmul.bf16 %v71, 1009007652
    %v80 = vmul.bf16 %v72, 1009007652
    %v81 = vmul.bf16 %v73, 1009007652
    %v82 = vmul.bf16 %v74, 1009007652
    %v83 = vsel %vm75, %v71, %v79
    %v84 = vsel %vm76, %v72, %v80
    %v85 = vsel %vm77, %v73, %v81
    %v86 = vsel %vm78, %v74, %v82
    %v87 = vld [vmem:[#allocation2] sm:$0xf]
    %v88 = vld [vmem:[#allocation2 + $0x4] sm:$0xf]
    %v89 = vld [vmem:[#allocation2 + $0x8] sm:$0xf]
    %v90 = vld [vmem:[#allocation2 + $0xc] sm:$0xf]
    %v91 = vld [vmem:[#allocation2 + $0x10] sm:$0xf]
    %v92 = vld [vmem:[#allocation2 + $0x14] sm:$0xf]
    %v93 = vld [vmem:[#allocation2 + $0x18] sm:$0xf]
    %v94 = vld [vmem:[#allocation2 + $0x1c] sm:$0xf]
    %v95 = vld [vmem:[#allocation2 + $0x20] sm:$0xf]
    %v96 = vld [vmem:[#allocation2 + $0x24] sm:$0xf]
    %v97 = vld [vmem:[#allocation2 + $0x28] sm:$0xf]
    %v98 = vld [vmem:[#allocation2 + $0x2c] sm:$0xf]
    %v99 = vld [vmem:[#allocation2 + $0x30] sm:$0xf]
    %v100 = vld [vmem:[#allocation2 + $0x34] sm:$0xf]
    %v101 = vld [vmem:[#allocation2 + $0x38] sm:$0xf]
    %v102 = vld [vmem:[#allocation2 + $0x3c] sm:$0xf]
    %v103 = vld [vmem:[#allocation2 + $0x40] sm:$0xf]
    %v104 = vld [vmem:[#allocation2 + $0x44] sm:$0xf]
    %v105 = vld [vmem:[#allocation4] sm:$0x1]
    %v107 = vlaneseq
    %v108 = vshrl.u32 %v107, 7
    %v109 = vsub.s32 0, %v108
    %v110 = vrot.slane %v105, %v109
    %v116 = vunpack.c.l.b16 %v83
    %v117 = vunpack.c.h.b16 %v83
    %v118 = vunpack.c.l.b16 %v84
    %v119 = vunpack.c.h.b16 %v84
    %v120 = vunpack.c.l.b16 %v85
    %v121 = vunpack.c.h.b16 %v85
    %v122 = vunpack.c.l.b16 %v86
    %v123 = vunpack.c.h.b16 %v86
    %v124 = vpack.c.b16 %v118, %v116
    %v125 = vpack.c.b16 %v119, %v117
    %v126 = vpack.c.b16 %v122, %v120
    %v127 = vpack.c.b16 %v123, %v121
    %v148 = vunpack.c.l.b16 %v87
    %v149 = vunpack.c.l.b16 %v88
    %v150 = vunpack.c.l.b16 %v89
    %v151 = vunpack.c.l.b16 %v90
    %v152 = vunpack.c.l.b16 %v91
    %v153 = vunpack.c.l.b16 %v92
    %v154 = vunpack.c.l.b16 %v93
    %v155 = vunpack.c.l.b16 %v94
    %v156 = vunpack.c.l.b16 %v95
    %v157 = vunpack.c.l.b16 %v96
    %v158 = vunpack.c.l.b16 %v97
    %v159 = vunpack.c.l.b16 %v98
    %v160 = vunpack.c.l.b16 %v99
    %v161 = vunpack.c.l.b16 %v100
    %v162 = vunpack.c.l.b16 %v101
    %v163 = vunpack.c.l.b16 %v102
    %v164 = vunpack.c.l.b16 %v103
    %v165 = vunpack.c.l.b16 %v104
    %v166 = vpack.c.b16 %v149, %v148
    %v167 = vpack.c.b16 %v151, %v150
    %v168 = vpack.c.b16 %v153, %v152
    %v169 = vpack.c.b16 %v155, %v154
    %v170 = vpack.c.b16 %v157, %v156
    %v171 = vpack.c.b16 %v159, %v158
    %v172 = vpack.c.b16 %v161, %v160
    %v173 = vpack.c.b16 %v163, %v162
    %v174 = vpack.c.b16 %v165, %v164
    %vm184 = vcmask 130048
    %v186 = vsel %vm184, %v125, 0
    %v189 = vsel %vm184, %v127, 0
    %191 = vmatprep.subr.bf16.mxu0 0
    %192 = vmatpush1.bf16.msra.mxu0 %v166
    %193 = vmatprep.subr.bf16.mxu0 0
    %194 = vmatpush1.bf16.msra.mxu0 %v167
    %195 = vmatprep.subr.bf16.mxu0 0
    %196 = vmatpush1.bf16.msra.mxu0 %v168
    %197 = vmatprep.subr.bf16.mxu0 0
    %198 = vmatpush1.bf16.msra.mxu0 %v169
    %199 = vmatprep.subr.bf16.mxu0 0
    %200 = vmatpush1.bf16.msra.mxu0 %v170
    %201 = vmatprep.subr.bf16.mxu0 0
    %202 = vmatpush1.bf16.msra.mxu0 %v171
    %203 = vmatprep.subr.bf16.mxu0 0
    %204 = vmatpush1.bf16.msra.mxu0 %v172
    %205 = vmatprep.subr.bf16.mxu0 0
    %206 = vmatpush1.bf16.msra.mxu0 %v173
    %207 = vmatprep.subr.bf16.mxu0 0
    %208 = vmatpush1.bf16.msra.mxu0 %v174
    %209 = vmatprep.subr.bf16.mxu0 0
    %210 = vmatpush1.bf16.msra.mxu0 0
    %211 = vmatprep.subr.bf16.mxu0 0
    %212 = vmatpush1.bf16.msra.mxu0 0
    %213 = vmatprep.subr.bf16.mxu0 0
    %214 = vmatpush1.bf16.msra.mxu0 0
    %215 = vmatprep.subr.bf16.mxu0 0
    %216 = vmatpush1.bf16.msra.mxu0 0
    %217 = vmatprep.subr.bf16.mxu0 0
    %218 = vmatpush1.bf16.msra.mxu0 0
    %219 = vmatprep.subr.bf16.mxu0 0
    %220 = vmatpush1.bf16.msra.mxu0 0
    %221 = vmatprep.subr.bf16.mxu0 0
    %222 = vmatpush1.bf16.msra.mxu0 0
    %223 = vmatprep.mubr.bf16.mxu0 %v186
    %224 = vmatmul.mubr.bf16.gmra.mrb[0].mxu0 %v124
    %v225 = vpop.f32.mrb[0].mxu0
    %v226 = vadd.f32 %v110, %v225
    %v227 = vpop.f32.mrb[0].mxu0
    %v228 = vpop.f32.mrb[0].mxu0
    %v229 = vadd.f32 %v110, %v228
    %v230 = vpop.f32.mrb[0].mxu0
    %231 = vmatprep.mubr.bf16.mxu0 %v189
    %232 = vmatmul.mubr.bf16.gmra.mrb[0].mxu0 %v126
    %v233 = vpop.f32.mrb[0].mxu0
    %v234 = vadd.f32 %v110, %v233
    %v235 = vpop.f32.mrb[0].mxu0
    %v236 = vpop.f32.mrb[0].mxu0
    %v237 = vadd.f32 %v110, %v236
    %v238 = vpop.f32.mrb[0].mxu0
    %239 = vdwg.mxu0
    %v240 = vld [vmem:[#allocation6] sm:$0x1]
    %v241 = vld [vmem:[#allocation7] sm:$0x1]
    %v242 = vadd.f32 %v226, %v229
    %v243 = vadd.f32 %v242, %v234
    %v244 = vadd.f32 %v243, %v237
    %v245 = vrot.slane %v244, 4
    %v246 = vadd.f32 %v244, %v245
    %v247 = vrot.slane %v246, 2
    %v248 = vadd.f32 %v246, %v247
    %v249 = vrot.slane %v248, 1
    %v250 = vadd.f32 %v248, %v249
    %v251 = vrcp.pop 32.0
    %v252 = vmul.f32 %v250, %v251
    %v253 = vsub.f32 %v226, %v252
    %v254 = vsub.f32 %v229, %v252
    %v255 = vsub.f32 %v234, %v252
    %v256 = vsub.f32 %v237, %v252
    %v257 = vmul.f32 %v253, %v253
    %v258 = vmul.f32 %v254, %v254
    %v259 = vmul.f32 %v255, %v255
    %v260 = vmul.f32 %v256, %v256
    %v261 = vadd.f32 %v257, %v258
    %v262 = vadd.f32 %v261, %v259
    %v263 = vadd.f32 %v262, %v260
    %v264 = vrot.slane %v263, 4
    %v265 = vadd.f32 %v263, %v264
    %v266 = vrot.slane %v265, 2
    %v267 = vadd.f32 %v265, %v266
    %v268 = vrot.slane %v267, 1
    %v269 = vadd.f32 %v267, %v268
    %v270 = vmul.f32 %v269, %v251
    %v271 = vadd.f32 %v270, 1e-05
    %v272 = vrsqrt.pop %v271
    %v273 = vmul.f32 %v253, %v272
    %v274 = vmul.f32 %v254, %v272
    %v275 = vmul.f32 %v255, %v272
    %v276 = vmul.f32 %v256, %v272
    %v278 = vlaneseq
    %v279 = vshrl.u32 %v278, 7
    %v280 = vsub.s32 0, %v279
    %v281 = vrot.slane %v240, %v280
    %v283 = vmul.f32 %v273, %v281
    %v284 = vmul.f32 %v274, %v281
    %v285 = vmul.f32 %v275, %v281
    %v286 = vmul.f32 %v276, %v281
    %v288 = vlaneseq
    %v289 = vshrl.u32 %v288, 7
    %v290 = vsub.s32 0, %v289
    %v291 = vrot.slane %v241, %v290
    %v293 = vadd.f32 %v283, %v291
    %v294 = vadd.f32 %v284, %v291
    %v295 = vadd.f32 %v285, %v291
    %v296 = vadd.f32 %v286, %v291
    %vm297 = vcmp.ge.f32.partialorder %v293, 0.0
    %vm298 = vcmp.ge.f32.partialorder %v294, 0.0
    %vm299 = vcmp.ge.f32.partialorder %v295, 0.0
    %vm300 = vcmp.ge.f32.partialorder %v296, 0.0
    %v301 = vmul.f32 %v293, 0.01
    %v302 = vmul.f32 %v294, 0.01
    %v303 = vmul.f32 %v295, 0.01
    %v304 = vmul.f32 %v296, 0.01
    %v305 = vsel %vm297, %v293, %v301
    %v306 = vsel %vm298, %v294, %v302
    %v307 = vsel %vm299, %v295, %v303
    %v308 = vsel %vm300, %v296, %v304
    %309 = vst [vmem:[%s5] sm:$0xff] %v305
    %310 = vst [vmem:[%s5 + $0x8] sm:$0xff] %v306
    %311 = vst [vmem:[%s5 + $0x10] sm:$0xff] %v307
    %312 = vst [vmem:[%s5 + $0x18] sm:$0xff] %v308
    // Predicated region
    $region38: #{gan_forward.9} parent=1 // pred_check
      _
    $region39: #{gan_forward.9} parent=1 // pred_check_branch
      %314 = sbr.rel (0) target = $region41
    $region40: #{gan_forward.9} parent=1 // pred_region
      _
    $region41: #{gan_forward.9} parent=1 // pred_fallthru
      _
    // Predicated region
    $region42: #{gan_forward.9} parent=1 // pred_check
      _
    $region43: #{gan_forward.9} parent=1 // pred_check_branch
      %316 = sbr.rel (0) target = $region45
    $region44: #{gan_forward.9} parent=1 // pred_region
      _
    $region45: #{gan_forward.9} parent=1 // pred_fallthru
      _
    %317 = vsyncpa [#allocation3], 1
    %318 = vsyncpa [#allocation5], 1
    %319 = vsyncpa [#allocation8], 1

// kernel: gan_forward.8
$region0: #{gan_forward.8}
  #allocation0 [shape = 'u32[]', space=smem, size = 0x4, offset = 0x4, fixed_abs, tag = 'smem constant byte address 0x4 - core index']
  #allocation1 [shape = 'u32[144,128]{1,0:T(1,128)}', space=vmem, size = 0x12000, scoped, tag = 'internal scratch']
  %s0 = inlined_call_operand.vmem [shape: bf16[2,32], index: 0, kind: input, shape index: {}]
  %s1 = inlined_call_operand.hbm [shape: bf16[32,256], index: 1, kind: input, shape index: {}]
  %s2 = inlined_call_operand.hbm [shape: f32[1,256], index: 2, kind: input, shape index: {}]
  %s3 = inlined_call_operand.vmem [shape: f32[2,256], index: 3, kind: output, shape index: {}]
  %s4 = sld [smem:[#allocation0]]
  $region30: #{gan_forward.8} parent=0
    _
  %s6 = ssub.s32 1, %s4
  %s7 = scalar_select 0, %s6, %s4
  $region1: #{gan_forward.8} parent=0
    #allocation2 [shape = 'u8[16384]{0}', space=vmem, size = 0x4000, scoped, tag = 'input window, operand 1, single buffered']
    #allocation3 [shape = 's32[1]{0}', space=sflag, size = 0x4, scoped, tag = 'scoped memory for gan_forward.8']
    #allocation4 [shape = 'u8[1024]{0}', space=vmem, size = 0x400, scoped, tag = 'input window, operand 2, single buffered']
    #allocation5 [shape = 's32[1]{0}', space=sflag, size = 0x4, scoped, tag = 'scoped memory for gan_forward.8']
    %8 = vsyncpa [#allocation3], 0
    %9 = vsyncpa [#allocation5], 0
    // Predicated region
    $region2: #{gan_forward.8} parent=1 // pred_check
      _
    $region3: #{gan_forward.8} parent=1 // pred_check_branch
      %11 = sbr.rel (0) target = $region5
    $region4: #{gan_forward.8} parent=1 // pred_region
      _
    $region5: #{gan_forward.8} parent=1 // pred_fallthru
      _
    // Predicated region
    $region6: #{gan_forward.8} parent=1 // pred_check
      _
    $region7: #{gan_forward.8} parent=1 // pred_check_branch
      %13 = sbr.rel (0) target = $region9
    $region8: #{gan_forward.8} parent=1 // pred_region
      %s15 = ssub.s32 512, 512
      %16 = vsyncadd [#allocation3], %s15
      %s17 = sshll.u32 [#allocation2], 4
      %s18 = int_to_ptr.vmem [resolvable:$true] %s17
      %23 = dma.hbm_to_vmem [thread:$0]  %s1, 512, %s18, [#allocation3], 128, 128, 8
    $region9: #{gan_forward.8} parent=1 // pred_fallthru
      _
    // Predicated region
    $region10: #{gan_forward.8} parent=1 // pred_check
      _
    $region11: #{gan_forward.8} parent=1 // pred_check_branch
      %25 = sbr.rel (0) target = $region13
    $region12: #{gan_forward.8} parent=1 // pred_region
      %s27 = ssub.s32 32, 32
      %28 = vsyncadd [#allocation5], %s27
      %s30 = sshll.u32 [#allocation4], 4
      %s31 = int_to_ptr.vmem [resolvable:$true] %s30
      %33 = dma.hbm_to_vmem [thread:$0]  %s2, 32, %s31, [#allocation5]
    $region13: #{gan_forward.8} parent=1 // pred_fallthru
      _
    // Predicated region
    $region14: #{gan_forward.8} parent=1 // pred_check
      _
    $region15: #{gan_forward.8} parent=1 // pred_check_branch
      %35 = sbr.rel (0) target = $region17
    $region16: #{gan_forward.8} parent=1 // pred_region
      %36 = dma.done [#allocation3], 512
    $region17: #{gan_forward.8} parent=1 // pred_fallthru
      _
    // Predicated region
    $region18: #{gan_forward.8} parent=1 // pred_check
      _
    $region19: #{gan_forward.8} parent=1 // pred_check_branch
      %38 = sbr.rel (0) target = $region21
    $region20: #{gan_forward.8} parent=1 // pred_region
      %39 = dma.done [#allocation5], 32
    $region21: #{gan_forward.8} parent=1 // pred_fallthru
      _
    %v41 = vld [vmem:[%s0] sm:$0x1]
    %v42 = vld [vmem:[#allocation2] sm:$0xff]
    %v43 = vld [vmem:[#allocation2 + $0x8] sm:$0xff]
    %v44 = vld [vmem:[#allocation2 + $0x10] sm:$0xff]
    %v45 = vld [vmem:[#allocation2 + $0x18] sm:$0xff]
    %v46 = vld [vmem:[#allocation4] sm:$0x3]
    %v48 = vlaneseq
    %v49 = vshrl.u32 %v48, 7
    %v50 = vsub.s32 0, %v49
    %v51 = vrot.slane %v46, %v50
    %v52 = vlaneseq
    %v53 = vshrl.u32 %v52, 7
    %v54 = vsub.s32 1, %v53
    %v55 = vrot.slane %v46, %v54
    %v62 = vunpack.c.l.b16 %v42
    %v63 = vunpack.c.h.b16 %v42
    %v64 = vunpack.c.l.b16 %v43
    %v65 = vunpack.c.h.b16 %v43
    %v66 = vunpack.c.l.b16 %v44
    %v67 = vunpack.c.h.b16 %v44
    %v68 = vunpack.c.l.b16 %v45
    %v69 = vunpack.c.h.b16 %v45
    %v70 = vpack.c.b16 %v64, %v62
    %v71 = vpack.c.b16 %v65, %v63
    %v72 = vpack.c.b16 %v68, %v66
    %v73 = vpack.c.b16 %v69, %v67
    %vm78 = vcmask 261120
    %v80 = vsel %vm78, %v41, 0
    %82 = vmatprep.subr.bf16.mxu0 %v71
    %83 = vmatpush1.bf16.msra.mxu0 %v70
    %84 = vmatprep.subr.bf16.mxu0 %v73
    %85 = vmatpush1.bf16.msra.mxu0 %v72
    %86 = vmatprep.subr.bf16.mxu0 0
    %87 = vmatpush1.bf16.msra.mxu0 0
    %88 = vmatprep.subr.bf16.mxu0 0
    %89 = vmatpush1.bf16.msra.mxu0 0
    %90 = vmatprep.subr.bf16.mxu0 0
    %91 = vmatpush1.bf16.msra.mxu0 0
    %92 = vmatprep.subr.bf16.mxu0 0
    %93 = vmatpush1.bf16.msra.mxu0 0
    %94 = vmatprep.subr.bf16.mxu0 0
    %95 = vmatpush1.bf16.msra.mxu0 0
    %96 = vmatprep.subr.bf16.mxu0 0
    %97 = vmatpush1.bf16.msra.mxu0 0
    %98 = vmatprep.subr.bf16.mxu0 0
    %99 = vmatpush1.bf16.msra.mxu0 0
    %100 = vmatprep.subr.bf16.mxu0 0
    %101 = vmatpush1.bf16.msra.mxu0 0
    %102 = vmatprep.subr.bf16.mxu0 0
    %103 = vmatpush1.bf16.msra.mxu0 0
    %104 = vmatprep.subr.bf16.mxu0 0
    %105 = vmatpush1.bf16.msra.mxu0 0
    %106 = vmatprep.subr.bf16.mxu0 0
    %107 = vmatpush1.bf16.msra.mxu0 0
    %108 = vmatprep.subr.bf16.mxu0 0
    %109 = vmatpush1.bf16.msra.mxu0 0
    %110 = vmatprep.subr.bf16.mxu0 0
    %111 = vmatpush1.bf16.msra.mxu0 0
    %112 = vmatprep.subr.bf16.mxu0 0
    %113 = vmatpush1.bf16.msra.mxu0 0
    %114 = vmatprep.mubr.bf16.mxu0 0
    %115 = vmatmul.mubr.bf16.gmra.mrb[0].mxu0 %v80
    %v116 = vpop.f32.mrb[0].mxu0
    %v117 = vadd.f32 %v51, %v116
    %v118 = vpop.f32.mrb[0].mxu0
    %v119 = vadd.f32 %v55, %v118
    %v120 = vpop.f32.mrb[0].mxu0
    %v121 = vpop.f32.mrb[0].mxu0
    %122 = vdwg.mxu0
    %v125 = vcombine.low %v117, %v119
    %v127 = vunpack.c.l.s4 1983009808
    %v128 = vunpack.c.0.s8 %v127
    %v129 = vlaneseq
    %v130 = vshrl.u32 %v129, 7
    %v131 = vsub.s32 %v128, %v130
    %v132 = vrot.slane %v125, %v131
    %134 = vst [vmem:[%s3] sm:$0xf] %v132
    // Predicated region
    $region22: #{gan_forward.8} parent=1 // pred_check
      _
    $region23: #{gan_forward.8} parent=1 // pred_check_branch
      %136 = sbr.rel (0) target = $region25
    $region24: #{gan_forward.8} parent=1 // pred_region
      _
    $region25: #{gan_forward.8} parent=1 // pred_fallthru
      _
    // Predicated region
    $region26: #{gan_forward.8} parent=1 // pred_check
      _
    $region27: #{gan_forward.8} parent=1 // pred_check_branch
      %138 = sbr.rel (0) target = $region29
    $region28: #{gan_forward.8} parent=1 // pred_region
      _
    $region29: #{gan_forward.8} parent=1 // pred_fallthru
      _
    %139 = vsyncpa [#allocation3], 1
    %140 = vsyncpa [#allocation5], 1

// kernel: gan_forward.10
$region0: #{gan_forward.10}
  #allocation0 [shape = 'u32[]', space=smem, size = 0x4, offset = 0x4, fixed_abs, tag = 'smem constant byte address 0x4 - core index']
  #allocation1 [shape = 'u32[144,128]{1,0:T(1,128)}', space=vmem, size = 0x12000, scoped, tag = 'internal scratch']
  %s0 = inlined_call_operand.vmem [shape: bf16[32,16], index: 0, kind: input, shape index: {}]
  %s1 = inlined_call_operand.hbm [shape: bf16[16,128], index: 1, kind: input, shape index: {}]
  %s2 = inlined_call_operand.hbm [shape: f32[1,128], index: 2, kind: input, shape index: {}]
  %s3 = inlined_call_operand.vmem [shape: f32[32,128], index: 3, kind: input, shape index: {}]
  %s4 = inlined_call_operand.hbm [shape: f32[1,128], index: 4, kind: input, shape index: {}]
  %s5 = inlined_call_operand.hbm [shape: f32[1,128], index: 5, kind: input, shape index: {}]
  %s6 = inlined_call_operand.vmem [shape: f32[32,128], index: 6, kind: output, shape index: {}]
  %s7 = sld [smem:[#allocation0]]
  $region50: #{gan_forward.10} parent=0
    _
  %s9 = ssub.s32 1, %s7
  %s10 = scalar_select 0, %s9, %s7
  $region1: #{gan_forward.10} parent=0
    #allocation2 [shape = 'u8[4096]{0}', space=vmem, size = 0x1000, scoped, tag = 'input window, operand 1, single buffered']
    #allocation3 [shape = 's32[1]{0}', space=sflag, size = 0x4, scoped, tag = 'scoped memory for gan_forward.10']
    #allocation4 [shape = 'u8[512]{0}', space=vmem, size = 0x400, scoped, tag = 'input window, operand 2, single buffered']
    #allocation5 [shape = 's32[1]{0}', space=sflag, size = 0x4, scoped, tag = 'scoped memory for gan_forward.10']
    #allocation6 [shape = 'u8[512]{0}', space=vmem, size = 0x400, scoped, tag = 'input window, operand 4, single buffered']
    #allocation7 [shape = 'u8[512]{0}', space=vmem, size = 0x400, scoped, tag = 'input window, operand 5, single buffered']
    #allocation8 [shape = 's32[1]{0}', space=sflag, size = 0x4, scoped, tag = 'scoped memory for gan_forward.10']
    %11 = vsyncpa [#allocation3], 0
    %12 = vsyncpa [#allocation5], 0
    %13 = vsyncpa [#allocation8], 0
    // Predicated region
    $region2: #{gan_forward.10} parent=1 // pred_check
      _
    $region3: #{gan_forward.10} parent=1 // pred_check_branch
      %15 = sbr.rel (0) target = $region5
    $region4: #{gan_forward.10} parent=1 // pred_region
      _
    $region5: #{gan_forward.10} parent=1 // pred_fallthru
      _
    // Predicated region
    $region6: #{gan_forward.10} parent=1 // pred_check
      _
    $region7: #{gan_forward.10} parent=1 // pred_check_branch
      %17 = sbr.rel (0) target = $region9
    $region8: #{gan_forward.10} parent=1 // pred_region
      %s19 = ssub.s32 128, 128
      %20 = vsyncadd [#allocation3], %s19
      %s21 = sshll.u32 [#allocation2], 4
      %s22 = int_to_ptr.vmem [resolvable:$true] %s21
      %27 = dma.hbm_to_vmem [thread:$0]  %s1, 128, %s22, [#allocation3], 64, 64, 4
    $region9: #{gan_forward.10} parent=1 // pred_fallthru
      _
    // Predicated region
    $region10: #{gan_forward.10} parent=1 // pred_check
      _
    $region11: #{gan_forward.10} parent=1 // pred_check_branch
      %29 = sbr.rel (0) target = $region13
    $region12: #{gan_forward.10} parent=1 // pred_region
      %s31 = ssub.s32 16, 16
      %32 = vsyncadd [#allocation5], %s31
      %s34 = sshll.u32 [#allocation4], 4
      %s35 = int_to_ptr.vmem [resolvable:$true] %s34
      %37 = dma.hbm_to_vmem [thread:$0]  %s2, 16, %s35, [#allocation5]
    $region13: #{gan_forward.10} parent=1 // pred_fallthru
      _
    // Predicated region
    $region14: #{gan_forward.10} parent=1 // pred_check
      _
    $region15: #{gan_forward.10} parent=1 // pred_check_branch
      %39 = sbr.rel (0) target = $region17
    $region16: #{gan_forward.10} parent=1 // pred_region
      _
    $region17: #{gan_forward.10} parent=1 // pred_fallthru
      _
    // Predicated region
    $region18: #{gan_forward.10} parent=1 // pred_check
      _
    $region19: #{gan_forward.10} parent=1 // pred_check_branch
      %41 = sbr.rel (0) target = $region21
    $region20: #{gan_forward.10} parent=1 // pred_region
      %s43 = ssub.s32 16, 16
      %44 = vsyncadd [#allocation5], %s43
      %s46 = sshll.u32 [#allocation6], 4
      %s47 = int_to_ptr.vmem [resolvable:$true] %s46
      %49 = dma.hbm_to_vmem [thread:$0]  %s4, 16, %s47, [#allocation5]
    $region21: #{gan_forward.10} parent=1 // pred_fallthru
      _
    // Predicated region
    $region22: #{gan_forward.10} parent=1 // pred_check
      _
    $region23: #{gan_forward.10} parent=1 // pred_check_branch
      %51 = sbr.rel (0) target = $region25
    $region24: #{gan_forward.10} parent=1 // pred_region
      %s53 = ssub.s32 16, 16
      %54 = vsyncadd [#allocation8], %s53
      %s56 = sshll.u32 [#allocation7], 4
      %s57 = int_to_ptr.vmem [resolvable:$true] %s56
      %59 = dma.hbm_to_vmem [thread:$0]  %s5, 16, %s57, [#allocation8]
    $region25: #{gan_forward.10} parent=1 // pred_fallthru
      _
    // Predicated region
    $region26: #{gan_forward.10} parent=1 // pred_check
      _
    $region27: #{gan_forward.10} parent=1 // pred_check_branch
      %61 = sbr.rel (0) target = $region29
    $region28: #{gan_forward.10} parent=1 // pred_region
      %62 = dma.done [#allocation3], 128
    $region29: #{gan_forward.10} parent=1 // pred_fallthru
      _
    // Predicated region
    $region30: #{gan_forward.10} parent=1 // pred_check
      _
    $region31: #{gan_forward.10} parent=1 // pred_check_branch
      %64 = sbr.rel (0) target = $region33
    $region32: #{gan_forward.10} parent=1 // pred_region
      %65 = dma.done [#allocation5], 16
    $region33: #{gan_forward.10} parent=1 // pred_fallthru
      _
    // Predicated region
    $region34: #{gan_forward.10} parent=1 // pred_check
      _
    $region35: #{gan_forward.10} parent=1 // pred_check_branch
      %67 = sbr.rel (0) target = $region37
    $region36: #{gan_forward.10} parent=1 // pred_region
      %68 = dma.done [#allocation5], 16
    $region37: #{gan_forward.10} parent=1 // pred_fallthru
      _
    // Predicated region
    $region38: #{gan_forward.10} parent=1 // pred_check
      _
    $region39: #{gan_forward.10} parent=1 // pred_check_branch
      %70 = sbr.rel (0) target = $region41
    $region40: #{gan_forward.10} parent=1 // pred_region
      %71 = dma.done [#allocation8], 16
    $region41: #{gan_forward.10} parent=1 // pred_fallthru
      _
    %v73 = vld [vmem:[%s0] sm:$0xf]
    %v74 = vld [vmem:[%s0 + $0x4] sm:$0xf]
    %v75 = vld [vmem:[%s0 + $0x8] sm:$0xf]
    %v76 = vld [vmem:[%s0 + $0xc] sm:$0xf]
    %v77 = vld [vmem:[#allocation2] sm:$0xf]
    %v78 = vld [vmem:[#allocation2 + $0x4] sm:$0xf]
    %v79 = vld [vmem:[#allocation4] sm:$0x1]
    %v81 = vlaneseq
    %v82 = vshrl.u32 %v81, 7
    %v83 = vsub.s32 0, %v82
    %v84 = vrot.slane %v79, %v83
    %v90 = vunpack.c.l.b16 %v73
    %v91 = vunpack.c.l.b16 %v74
    %v92 = vunpack.c.l.b16 %v75
    %v93 = vunpack.c.l.b16 %v76
    %v94 = vpack.c.b16 %v91, %v90
    %v95 = vpack.c.b16 %v93, %v92
    %v98 = vunpack.c.l.b16 %v77
    %v99 = vunpack.c.l.b16 %v78
    %v100 = vpack.c.b16 %v99, %v98
    %vm102 = vcmask 130048
    %v104 = vsel %vm102, %v94, 0
    %v107 = vsel %vm102, %v95, 0
    %109 = vmatprep.subr.bf16.mxu0 0
    %110 = vmatpush1.bf16.msra.mxu0 %v100
    %111 = vmatprep.subr.bf16.mxu0 0
    %112 = vmatpush1.bf16.msra.mxu0 0
    %113 = vmatprep.subr.bf16.mxu0 0
    %114 = vmatpush1.bf16.msra.mxu0 0
    %115 = vmatprep.subr.bf16.mxu0 0
    %116 = vmatpush1.bf16.msra.mxu0 0
    %117 = vmatprep.subr.bf16.mxu0 0
    %118 = vmatpush1.bf16.msra.mxu0 0
    %119 = vmatprep.subr.bf16.mxu0 0
    %120 = vmatpush1.bf16.msra.mxu0 0
    %121 = vmatprep.subr.bf16.mxu0 0
    %122 = vmatpush1.bf16.msra.mxu0 0
    %123 = vmatprep.subr.bf16.mxu0 0
    %124 = vmatpush1.bf16.msra.mxu0 0
    %125 = vmatprep.subr.bf16.mxu0 0
    %126 = vmatpush1.bf16.msra.mxu0 0
    %127 = vmatprep.subr.bf16.mxu0 0
    %128 = vmatpush1.bf16.msra.mxu0 0
    %129 = vmatprep.subr.bf16.mxu0 0
    %130 = vmatpush1.bf16.msra.mxu0 0
    %131 = vmatprep.subr.bf16.mxu0 0
    %132 = vmatpush1.bf16.msra.mxu0 0
    %133 = vmatprep.subr.bf16.mxu0 0
    %134 = vmatpush1.bf16.msra.mxu0 0
    %135 = vmatprep.subr.bf16.mxu0 0
    %136 = vmatpush1.bf16.msra.mxu0 0
    %137 = vmatprep.subr.bf16.mxu0 0
    %138 = vmatpush1.bf16.msra.mxu0 0
    %139 = vmatprep.subr.bf16.mxu0 0
    %140 = vmatpush1.bf16.msra.mxu0 0
    %141 = vmatprep.mubr.bf16.mxu0 0
    %142 = vmatmul.mubr.bf16.gmra.mrb[0].mxu0 %v104
    %v143 = vpop.f32.mrb[0].mxu0
    %v144 = vadd.f32 %v84, %v143
    %v145 = vpop.f32.mrb[0].mxu0
    %v146 = vpop.f32.mrb[0].mxu0
    %v147 = vadd.f32 %v84, %v146
    %v148 = vpop.f32.mrb[0].mxu0
    %149 = vmatprep.mubr.bf16.mxu0 0
    %150 = vmatmul.mubr.bf16.gmra.mrb[0].mxu0 %v107
    %v151 = vpop.f32.mrb[0].mxu0
    %v152 = vadd.f32 %v84, %v151
    %v153 = vpop.f32.mrb[0].mxu0
    %v154 = vpop.f32.mrb[0].mxu0
    %v155 = vadd.f32 %v84, %v154
    %v156 = vpop.f32.mrb[0].mxu0
    %157 = vdwg.mxu0
    %v158 = vld [vmem:[%s3] sm:$0xff]
    %v159 = vld [vmem:[%s3 + $0x8] sm:$0xff]
    %v160 = vld [vmem:[%s3 + $0x10] sm:$0xff]
    %v161 = vld [vmem:[%s3 + $0x18] sm:$0xff]
    %v162 = vadd.f32 %v144, %v158
    %v163 = vadd.f32 %v147, %v159
    %v164 = vadd.f32 %v152, %v160
    %v165 = vadd.f32 %v155, %v161
    %v166 = vld [vmem:[#allocation6] sm:$0x1]
    %v167 = vld [vmem:[#allocation7] sm:$0x1]
    %v168 = vadd.f32 %v162, %v163
    %v169 = vadd.f32 %v168, %v164
    %v170 = vadd.f32 %v169, %v165
    %v171 = vrot.slane %v170, 4
    %v172 = vadd.f32 %v170, %v171
    %v173 = vrot.slane %v172, 2
    %v174 = vadd.f32 %v172, %v173
    %v175 = vrot.slane %v174, 1
    %v176 = vadd.f32 %v174, %v175
    %v177 = vrcp.pop 32.0
    %v178 = vmul.f32 %v176, %v177
    %v179 = vsub.f32 %v162, %v178
    %v180 = vsub.f32 %v163, %v178
    %v181 = vsub.f32 %v164, %v178
    %v182 = vsub.f32 %v165, %v178
    %v183 = vmul.f32 %v179, %v179
    %v184 = vmul.f32 %v180, %v180
    %v185 = vmul.f32 %v181, %v181
    %v186 = vmul.f32 %v182, %v182
    %v187 = vadd.f32 %v183, %v184
    %v188 = vadd.f32 %v187, %v185
    %v189 = vadd.f32 %v188, %v186
    %v190 = vrot.slane %v189, 4
    %v191 = vadd.f32 %v189, %v190
    %v192 = vrot.slane %v191, 2
    %v193 = vadd.f32 %v191, %v192
    %v194 = vrot.slane %v193, 1
    %v195 = vadd.f32 %v193, %v194
    %v196 = vmul.f32 %v195, %v177
    %v197 = vadd.f32 %v196, 1e-05
    %v198 = vrsqrt.pop %v197
    %v199 = vmul.f32 %v179, %v198
    %v200 = vmul.f32 %v180, %v198
    %v201 = vmul.f32 %v181, %v198
    %v202 = vmul.f32 %v182, %v198
    %v204 = vlaneseq
    %v205 = vshrl.u32 %v204, 7
    %v206 = vsub.s32 0, %v205
    %v207 = vrot.slane %v166, %v206
    %v209 = vmul.f32 %v199, %v207
    %v210 = vmul.f32 %v200, %v207
    %v211 = vmul.f32 %v201, %v207
    %v212 = vmul.f32 %v202, %v207
    %v214 = vlaneseq
    %v215 = vshrl.u32 %v214, 7
    %v216 = vsub.s32 0, %v215
    %v217 = vrot.slane %v167, %v216
    %v219 = vadd.f32 %v209, %v217
    %v220 = vadd.f32 %v210, %v217
    %v221 = vadd.f32 %v211, %v217
    %v222 = vadd.f32 %v212, %v217
    %223 = vst [vmem:[%s6] sm:$0xff] %v219
    %224 = vst [vmem:[%s6 + $0x8] sm:$0xff] %v220
    %225 = vst [vmem:[%s6 + $0x10] sm:$0xff] %v221
    %226 = vst [vmem:[%s6 + $0x18] sm:$0xff] %v222
    // Predicated region
    $region42: #{gan_forward.10} parent=1 // pred_check
      _
    $region43: #{gan_forward.10} parent=1 // pred_check_branch
      %228 = sbr.rel (0) target = $region45
    $region44: #{gan_forward.10} parent=1 // pred_region
      _
    $region45: #{gan_forward.10} parent=1 // pred_fallthru
      _
    // Predicated region
    $region46: #{gan_forward.10} parent=1 // pred_check
      _
    $region47: #{gan_forward.10} parent=1 // pred_check_branch
      %230 = sbr.rel (0) target = $region49
    $region48: #{gan_forward.10} parent=1 // pred_region
      _
    $region49: #{gan_forward.10} parent=1 // pred_fallthru
      _
    %231 = vsyncpa [#allocation3], 1
    %232 = vsyncpa [#allocation5], 1
    %233 = vsyncpa [#allocation8], 1

// kernel: gan_forward.13
$region0: #{gan_forward.13}
  #allocation0 [shape = 'u32[]', space=smem, size = 0x4, offset = 0x4, fixed_abs, tag = 'smem constant byte address 0x4 - core index']
  #allocation1 [shape = 'u32[144,128]{1,0:T(1,128)}', space=vmem, size = 0x12000, scoped, tag = 'internal scratch']
  %s0 = inlined_call_operand.vmem [shape: bf16[4,32,64], index: 0, kind: input, shape index: {}]
  %s1 = inlined_call_operand.hbm [shape: bf16[4,64,128], index: 1, kind: input, shape index: {}]
  %s2 = inlined_call_operand.hbm [shape: f32[1,128], index: 2, kind: input, shape index: {}]
  %s3 = inlined_call_operand.hbm [shape: f32[1,128], index: 3, kind: input, shape index: {}]
  %s4 = inlined_call_operand.vmem [shape: f32[128,128], index: 4, kind: output, shape index: {}]
  %s5 = sld [smem:[#allocation0]]
  $region38: #{gan_forward.13} parent=0
    _
  %s7 = ssub.s32 1, %s5
  %s8 = scalar_select 0, %s7, %s5
  $region1: #{gan_forward.13} parent=0
    #allocation2 [shape = 'u8[65536]{0}', space=vmem, size = 0x10000, scoped, tag = 'input window, operand 1, single buffered']
    #allocation3 [shape = 's32[1]{0}', space=sflag, size = 0x4, scoped, tag = 'scoped memory for gan_forward.13']
    #allocation4 [shape = 'u8[512]{0}', space=vmem, size = 0x400, scoped, tag = 'input window, operand 2, single buffered']
    #allocation5 [shape = 's32[1]{0}', space=sflag, size = 0x4, scoped, tag = 'scoped memory for gan_forward.13']
    #allocation6 [shape = 'u8[512]{0}', space=vmem, size = 0x400, scoped, tag = 'input window, operand 3, single buffered']
    %9 = vsyncpa [#allocation3], 0
    %10 = vsyncpa [#allocation5], 0
    // Predicated region
    $region2: #{gan_forward.13} parent=1 // pred_check
      _
    $region3: #{gan_forward.13} parent=1 // pred_check_branch
      %12 = sbr.rel (0) target = $region5
    $region4: #{gan_forward.13} parent=1 // pred_region
      _
    $region5: #{gan_forward.13} parent=1 // pred_fallthru
      _
    // Predicated region
    $region6: #{gan_forward.13} parent=1 // pred_check
      _
    $region7: #{gan_forward.13} parent=1 // pred_check_branch
      %14 = sbr.rel (0) target = $region9
    $region8: #{gan_forward.13} parent=1 // pred_region
      %s16 = ssub.s32 2048, 2048
      %17 = vsyncadd [#allocation3], %s16
      %s18 = sshll.u32 [#allocation2], 4
      %s19 = int_to_ptr.vmem [resolvable:$true] %s18
      %24 = dma.hbm_to_vmem [thread:$0]  %s1, 2048, %s19, [#allocation3], 64, 64, 4
    $region9: #{gan_forward.13} parent=1 // pred_fallthru
      _
    // Predicated region
    $region10: #{gan_forward.13} parent=1 // pred_check
      _
    $region11: #{gan_forward.13} parent=1 // pred_check_branch
      %26 = sbr.rel (0) target = $region13
    $region12: #{gan_forward.13} parent=1 // pred_region
      %s28 = ssub.s32 16, 16
      %29 = vsyncadd [#allocation5], %s28
      %s31 = sshll.u32 [#allocation4], 4
      %s32 = int_to_ptr.vmem [resolvable:$true] %s31
      %34 = dma.hbm_to_vmem [thread:$0]  %s2, 16, %s32, [#allocation5]
    $region13: #{gan_forward.13} parent=1 // pred_fallthru
      _
    // Predicated region
    $region14: #{gan_forward.13} parent=1 // pred_check
      _
    $region15: #{gan_forward.13} parent=1 // pred_check_branch
      %36 = sbr.rel (0) target = $region17
    $region16: #{gan_forward.13} parent=1 // pred_region
      %s38 = ssub.s32 16, 16
      %39 = vsyncadd [#allocation5], %s38
      %s41 = sshll.u32 [#allocation6], 4
      %s42 = int_to_ptr.vmem [resolvable:$true] %s41
      %44 = dma.hbm_to_vmem [thread:$0]  %s3, 16, %s42, [#allocation5]
    $region17: #{gan_forward.13} parent=1 // pred_fallthru
      _
    // Predicated region
    $region18: #{gan_forward.13} parent=1 // pred_check
      _
    $region19: #{gan_forward.13} parent=1 // pred_check_branch
      %46 = sbr.rel (0) target = $region21
    $region20: #{gan_forward.13} parent=1 // pred_region
      %47 = dma.done [#allocation3], 2048
    $region21: #{gan_forward.13} parent=1 // pred_fallthru
      _
    // Predicated region
    $region22: #{gan_forward.13} parent=1 // pred_check
      _
    $region23: #{gan_forward.13} parent=1 // pred_check_branch
      %49 = sbr.rel (0) target = $region25
    $region24: #{gan_forward.13} parent=1 // pred_region
      %50 = dma.done [#allocation5], 16
    $region25: #{gan_forward.13} parent=1 // pred_fallthru
      _
    // Predicated region
    $region26: #{gan_forward.13} parent=1 // pred_check
      _
    $region27: #{gan_forward.13} parent=1 // pred_check_branch
      %52 = sbr.rel (0) target = $region29
    $region28: #{gan_forward.13} parent=1 // pred_region
      %53 = dma.done [#allocation5], 16
    $region29: #{gan_forward.13} parent=1 // pred_fallthru
      _
    %v55 = vld [vmem:[%s0] sm:$0xf]
    %v56 = vld [vmem:[%s0 + $0x4] sm:$0xf]
    %v57 = vld [vmem:[%s0 + $0x8] sm:$0xf]
    %v58 = vld [vmem:[%s0 + $0xc] sm:$0xf]
    %v59 = vld [vmem:[%s0 + $0x10] sm:$0xf]
    %v60 = vld [vmem:[%s0 + $0x14] sm:$0xf]
    %v61 = vld [vmem:[%s0 + $0x18] sm:$0xf]
    %v62 = vld [vmem:[%s0 + $0x1c] sm:$0xf]
    %v63 = vld [vmem:[%s0 + $0x20] sm:$0xf]
    %v64 = vld [vmem:[%s0 + $0x24] sm:$0xf]
    %v65 = vld [vmem:[%s0 + $0x28] sm:$0xf]
    %v66 = vld [vmem:[%s0 + $0x2c] sm:$0xf]
    %v67 = vld [vmem:[%s0 + $0x30] sm:$0xf]
    %v68 = vld [vmem:[%s0 + $0x34] sm:$0xf]
    %v69 = vld [vmem:[%s0 + $0x38] sm:$0xf]
    %v70 = vld [vmem:[%s0 + $0x3c] sm:$0xf]
    %v71 = vld [vmem:[#allocation2] sm:$0xf]
    %v72 = vld [vmem:[#allocation2 + $0x4] sm:$0xf]
    %v73 = vld [vmem:[#allocation2 + $0x8] sm:$0xf]
    %v74 = vld [vmem:[#allocation2 + $0xc] sm:$0xf]
    %v75 = vld [vmem:[#allocation2 + $0x10] sm:$0xf]
    %v76 = vld [vmem:[#allocation2 + $0x14] sm:$0xf]
    %v77 = vld [vmem:[#allocation2 + $0x18] sm:$0xf]
    %v78 = vld [vmem:[#allocation2 + $0x1c] sm:$0xf]
    %v79 = vld [vmem:[#allocation2 + $0x20] sm:$0xf]
    %v80 = vld [vmem:[#allocation2 + $0x24] sm:$0xf]
    %v81 = vld [vmem:[#allocation2 + $0x28] sm:$0xf]
    %v82 = vld [vmem:[#allocation2 + $0x2c] sm:$0xf]
    %v83 = vld [vmem:[#allocation2 + $0x30] sm:$0xf]
    %v84 = vld [vmem:[#allocation2 + $0x34] sm:$0xf]
    %v85 = vld [vmem:[#allocation2 + $0x38] sm:$0xf]
    %v86 = vld [vmem:[#allocation2 + $0x3c] sm:$0xf]
    %v87 = vld [vmem:[#allocation2 + $0x40] sm:$0xf]
    %v88 = vld [vmem:[#allocation2 + $0x44] sm:$0xf]
    %v89 = vld [vmem:[#allocation2 + $0x48] sm:$0xf]
    %v90 = vld [vmem:[#allocation2 + $0x4c] sm:$0xf]
    %v91 = vld [vmem:[#allocation2 + $0x50] sm:$0xf]
    %v92 = vld [vmem:[#allocation2 + $0x54] sm:$0xf]
    %v93 = vld [vmem:[#allocation2 + $0x58] sm:$0xf]
    %v94 = vld [vmem:[#allocation2 + $0x5c] sm:$0xf]
    %v95 = vld [vmem:[#allocation2 + $0x60] sm:$0xf]
    %v96 = vld [vmem:[#allocation2 + $0x64] sm:$0xf]
    %v97 = vld [vmem:[#allocation2 + $0x68] sm:$0xf]
    %v98 = vld [vmem:[#allocation2 + $0x6c] sm:$0xf]
    %v99 = vld [vmem:[#allocation2 + $0x70] sm:$0xf]
    %v100 = vld [vmem:[#allocation2 + $0x74] sm:$0xf]
    %v101 = vld [vmem:[#allocation2 + $0x78] sm:$0xf]
    %v102 = vld [vmem:[#allocation2 + $0x7c] sm:$0xf]
    %v107 = vunpack.c.l.b16 %v55
    %v108 = vunpack.c.l.b16 %v56
    %v109 = vunpack.c.l.b16 %v57
    %v110 = vunpack.c.l.b16 %v58
    %v111 = vpack.c.b16 %v108, %v107
    %v112 = vpack.c.b16 %v110, %v109
    %v121 = vunpack.c.l.b16 %v71
    %v122 = vunpack.c.l.b16 %v72
    %v123 = vunpack.c.l.b16 %v73
    %v124 = vunpack.c.l.b16 %v74
    %v125 = vunpack.c.l.b16 %v75
    %v126 = vunpack.c.l.b16 %v76
    %v127 = vunpack.c.l.b16 %v77
    %v128 = vunpack.c.l.b16 %v78
    %v129 = vpack.c.b16 %v122, %v121
    %v130 = vpack.c.b16 %v124, %v123
    %v131 = vpack.c.b16 %v126, %v125
    %v132 = vpack.c.b16 %v128, %v127
    %vm137 = vcmask 523264
    %v139 = vsel %vm137, %v111, 0
    %v142 = vsel %vm137, %v112, 0
    %144 = vmatprep.subr.bf16.mxu0 0
    %145 = vmatpush1.bf16.msra.mxu0 %v129
    %146 = vmatprep.subr.bf16.mxu0 0
    %147 = vmatpush1.bf16.msra.mxu0 %v130
    %148 = vmatprep.subr.bf16.mxu0 0
    %149 = vmatpush1.bf16.msra.mxu0 %v131
    %150 = vmatprep.subr.bf16.mxu0 0
    %151 = vmatpush1.bf16.msra.mxu0 %v132
    %152 = vmatprep.subr.bf16.mxu0 0
    %153 = vmatpush1.bf16.msra.mxu0 0
    %154 = vmatprep.subr.bf16.mxu0 0
    %155 = vmatpush1.bf16.msra.mxu0 0
    %156 = vmatprep.subr.bf16.mxu0 0
    %157 = vmatpush1.bf16.msra.mxu0 0
    %158 = vmatprep.subr.bf16.mxu0 0
    %159 = vmatpush1.bf16.msra.mxu0 0
    %160 = vmatprep.subr.bf16.mxu0 0
    %161 = vmatpush1.bf16.msra.mxu0 0
    %162 = vmatprep.subr.bf16.mxu0 0
    %163 = vmatpush1.bf16.msra.mxu0 0
    %164 = vmatprep.subr.bf16.mxu0 0
    %165 = vmatpush1.bf16.msra.mxu0 0
    %166 = vmatprep.subr.bf16.mxu0 0
    %167 = vmatpush1.bf16.msra.mxu0 0
    %168 = vmatprep.subr.bf16.mxu0 0
    %169 = vmatpush1.bf16.msra.mxu0 0
    %170 = vmatprep.subr.bf16.mxu0 0
    %171 = vmatpush1.bf16.msra.mxu0 0
    %172 = vmatprep.subr.bf16.mxu0 0
    %173 = vmatpush1.bf16.msra.mxu0 0
    %174 = vmatprep.subr.bf16.mxu0 0
    %175 = vmatpush1.bf16.msra.mxu0 0
    %176 = vmatprep.mubr.bf16.mxu0 0
    %177 = vmatmul.mubr.bf16.gmra.mrb[0].mxu0 %v139
    %v178 = vpop.f32.mrb[0].mxu0
    %v179 = vadd.f32 0.0, %v178
    %v180 = vpop.f32.mrb[0].mxu0
    %v181 = vpop.f32.mrb[0].mxu0
    %v182 = vadd.f32 0.0, %v181
    %v183 = vpop.f32.mrb[0].mxu0
    %184 = vmatprep.mubr.bf16.mxu0 0
    %185 = vmatmul.mubr.bf16.gmra.mrb[0].mxu0 %v142
    %v186 = vpop.f32.mrb[0].mxu0
    %v187 = vadd.f32 0.0, %v186
    %v188 = vpop.f32.mrb[0].mxu0
    %v189 = vpop.f32.mrb[0].mxu0
    %v190 = vadd.f32 0.0, %v189
    %v191 = vpop.f32.mrb[0].mxu0
    %192 = vdwg.mxu0
    %v197 = vunpack.c.l.b16 %v59
    %v198 = vunpack.c.l.b16 %v60
    %v199 = vunpack.c.l.b16 %v61
    %v200 = vunpack.c.l.b16 %v62
    %v201 = vpack.c.b16 %v198, %v197
    %v202 = vpack.c.b16 %v200, %v199
    %v211 = vunpack.c.l.b16 %v79
    %v212 = vunpack.c.l.b16 %v80
    %v213 = vunpack.c.l.b16 %v81
    %v214 = vunpack.c.l.b16 %v82
    %v215 = vunpack.c.l.b16 %v83
    %v216 = vunpack.c.l.b16 %v84
    %v217 = vunpack.c.l.b16 %v85
    %v218 = vunpack.c.l.b16 %v86
    %v219 = vpack.c.b16 %v212, %v211
    %v220 = vpack.c.b16 %v214, %v213
    %v221 = vpack.c.b16 %v216, %v215
    %v222 = vpack.c.b16 %v218, %v217
    %v228 = vsel %vm137, %v201, 0
    %v231 = vsel %vm137, %v202, 0
    %233 = vmatprep.subr.bf16.mxu0 0
    %234 = vmatpush1.bf16.msra.mxu0 %v219
    %235 = vmatprep.subr.bf16.mxu0 0
    %236 = vmatpush1.bf16.msra.mxu0 %v220
    %237 = vmatprep.subr.bf16.mxu0 0
    %238 = vmatpush1.bf16.msra.mxu0 %v221
    %239 = vmatprep.subr.bf16.mxu0 0
    %240 = vmatpush1.bf16.msra.mxu0 %v222
    %241 = vmatprep.subr.bf16.mxu0 0
    %242 = vmatpush1.bf16.msra.mxu0 0
    %243 = vmatprep.subr.bf16.mxu0 0
    %244 = vmatpush1.bf16.msra.mxu0 0
    %245 = vmatprep.subr.bf16.mxu0 0
    %246 = vmatpush1.bf16.msra.mxu0 0
    %247 = vmatprep.subr.bf16.mxu0 0
    %248 = vmatpush1.bf16.msra.mxu0 0
    %249 = vmatprep.subr.bf16.mxu0 0
    %250 = vmatpush1.bf16.msra.mxu0 0
    %251 = vmatprep.subr.bf16.mxu0 0
    %252 = vmatpush1.bf16.msra.mxu0 0
    %253 = vmatprep.subr.bf16.mxu0 0
    %254 = vmatpush1.bf16.msra.mxu0 0
    %255 = vmatprep.subr.bf16.mxu0 0
    %256 = vmatpush1.bf16.msra.mxu0 0
    %257 = vmatprep.subr.bf16.mxu0 0
    %258 = vmatpush1.bf16.msra.mxu0 0
    %259 = vmatprep.subr.bf16.mxu0 0
    %260 = vmatpush1.bf16.msra.mxu0 0
    %261 = vmatprep.subr.bf16.mxu0 0
    %262 = vmatpush1.bf16.msra.mxu0 0
    %263 = vmatprep.subr.bf16.mxu0 0
    %264 = vmatpush1.bf16.msra.mxu0 0
    %265 = vmatprep.mubr.bf16.mxu0 0
    %266 = vmatmul.mubr.bf16.gmra.mrb[0].mxu0 %v228
    %v267 = vpop.f32.mrb[0].mxu0
    %v268 = vadd.f32 0.0, %v267
    %v269 = vpop.f32.mrb[0].mxu0
    %v270 = vpop.f32.mrb[0].mxu0
    %v271 = vadd.f32 0.0, %v270
    %v272 = vpop.f32.mrb[0].mxu0
    %273 = vmatprep.mubr.bf16.mxu0 0
    %274 = vmatmul.mubr.bf16.gmra.mrb[0].mxu0 %v231
    %v275 = vpop.f32.mrb[0].mxu0
    %v276 = vadd.f32 0.0, %v275
    %v277 = vpop.f32.mrb[0].mxu0
    %v278 = vpop.f32.mrb[0].mxu0
    %v279 = vadd.f32 0.0, %v278
    %v280 = vpop.f32.mrb[0].mxu0
    %281 = vdwg.mxu0
    %v286 = vunpack.c.l.b16 %v63
    %v287 = vunpack.c.l.b16 %v64
    %v288 = vunpack.c.l.b16 %v65
    %v289 = vunpack.c.l.b16 %v66
    %v290 = vpack.c.b16 %v287, %v286
    %v291 = vpack.c.b16 %v289, %v288
    %v300 = vunpack.c.l.b16 %v87
    %v301 = vunpack.c.l.b16 %v88
    %v302 = vunpack.c.l.b16 %v89
    %v303 = vunpack.c.l.b16 %v90
    %v304 = vunpack.c.l.b16 %v91
    %v305 = vunpack.c.l.b16 %v92
    %v306 = vunpack.c.l.b16 %v93
    %v307 = vunpack.c.l.b16 %v94
    %v308 = vpack.c.b16 %v301, %v300
    %v309 = vpack.c.b16 %v303, %v302
    %v310 = vpack.c.b16 %v305, %v304
    %v311 = vpack.c.b16 %v307, %v306
    %v317 = vsel %vm137, %v290, 0
    %v320 = vsel %vm137, %v291, 0
    %322 = vmatprep.subr.bf16.mxu0 0
    %323 = vmatpush1.bf16.msra.mxu0 %v308
    %324 = vmatprep.subr.bf16.mxu0 0
    %325 = vmatpush1.bf16.msra.mxu0 %v309
    %326 = vmatprep.subr.bf16.mxu0 0
    %327 = vmatpush1.bf16.msra.mxu0 %v310
    %328 = vmatprep.subr.bf16.mxu0 0
    %329 = vmatpush1.bf16.msra.mxu0 %v311
    %330 = vmatprep.subr.bf16.mxu0 0
    %331 = vmatpush1.bf16.msra.mxu0 0
    %332 = vmatprep.subr.bf16.mxu0 0
    %333 = vmatpush1.bf16.msra.mxu0 0
    %334 = vmatprep.subr.bf16.mxu0 0
    %335 = vmatpush1.bf16.msra.mxu0 0
    %336 = vmatprep.subr.bf16.mxu0 0
    %337 = vmatpush1.bf16.msra.mxu0 0
    %338 = vmatprep.subr.bf16.mxu0 0
    %339 = vmatpush1.bf16.msra.mxu0 0
    %340 = vmatprep.subr.bf16.mxu0 0
    %341 = vmatpush1.bf16.msra.mxu0 0
    %342 = vmatprep.subr.bf16.mxu0 0
    %343 = vmatpush1.bf16.msra.mxu0 0
    %344 = vmatprep.subr.bf16.mxu0 0
    %345 = vmatpush1.bf16.msra.mxu0 0
    %346 = vmatprep.subr.bf16.mxu0 0
    %347 = vmatpush1.bf16.msra.mxu0 0
    %348 = vmatprep.subr.bf16.mxu0 0
    %349 = vmatpush1.bf16.msra.mxu0 0
    %350 = vmatprep.subr.bf16.mxu0 0
    %351 = vmatpush1.bf16.msra.mxu0 0
    %352 = vmatprep.subr.bf16.mxu0 0
    %353 = vmatpush1.bf16.msra.mxu0 0
    %354 = vmatprep.mubr.bf16.mxu0 0
    %355 = vmatmul.mubr.bf16.gmra.mrb[0].mxu0 %v317
    %v356 = vpop.f32.mrb[0].mxu0
    %v357 = vadd.f32 0.0, %v356
    %v358 = vpop.f32.mrb[0].mxu0
    %v359 = vpop.f32.mrb[0].mxu0
    %v360 = vadd.f32 0.0, %v359
    %v361 = vpop.f32.mrb[0].mxu0
    %362 = vmatprep.mubr.bf16.mxu0 0
    %363 = vmatmul.mubr.bf16.gmra.mrb[0].mxu0 %v320
    %v364 = vpop.f32.mrb[0].mxu0
    %v365 = vadd.f32 0.0, %v364
    %v366 = vpop.f32.mrb[0].mxu0
    %v367 = vpop.f32.mrb[0].mxu0
    %v368 = vadd.f32 0.0, %v367
    %v369 = vpop.f32.mrb[0].mxu0
    %370 = vdwg.mxu0
    %v375 = vunpack.c.l.b16 %v67
    %v376 = vunpack.c.l.b16 %v68
    %v377 = vunpack.c.l.b16 %v69
    %v378 = vunpack.c.l.b16 %v70
    %v379 = vpack.c.b16 %v376, %v375
    %v380 = vpack.c.b16 %v378, %v377
    %v389 = vunpack.c.l.b16 %v95
    %v390 = vunpack.c.l.b16 %v96
    %v391 = vunpack.c.l.b16 %v97
    %v392 = vunpack.c.l.b16 %v98
    %v393 = vunpack.c.l.b16 %v99
    %v394 = vunpack.c.l.b16 %v100
    %v395 = vunpack.c.l.b16 %v101
    %v396 = vunpack.c.l.b16 %v102
    %v397 = vpack.c.b16 %v390, %v389
    %v398 = vpack.c.b16 %v392, %v391
    %v399 = vpack.c.b16 %v394, %v393
    %v400 = vpack.c.b16 %v396, %v395
    %v406 = vsel %vm137, %v379, 0
    %v409 = vsel %vm137, %v380, 0
    %411 = vmatprep.subr.bf16.mxu0 0
    %412 = vmatpush1.bf16.msra.mxu0 %v397
    %413 = vmatprep.subr.bf16.mxu0 0
    %414 = vmatpush1.bf16.msra.mxu0 %v398
    %415 = vmatprep.subr.bf16.mxu0 0
    %416 = vmatpush1.bf16.msra.mxu0 %v399
    %417 = vmatprep.subr.bf16.mxu0 0
    %418 = vmatpush1.bf16.msra.mxu0 %v400
    %419 = vmatprep.subr.bf16.mxu0 0
    %420 = vmatpush1.bf16.msra.mxu0 0
    %421 = vmatprep.subr.bf16.mxu0 0
    %422 = vmatpush1.bf16.msra.mxu0 0
    %423 = vmatprep.subr.bf16.mxu0 0
    %424 = vmatpush1.bf16.msra.mxu0 0
    %425 = vmatprep.subr.bf16.mxu0 0
    %426 = vmatpush1.bf16.msra.mxu0 0
    %427 = vmatprep.subr.bf16.mxu0 0
    %428 = vmatpush1.bf16.msra.mxu0 0
    %429 = vmatprep.subr.bf16.mxu0 0
    %430 = vmatpush1.bf16.msra.mxu0 0
    %431 = vmatprep.subr.bf16.mxu0 0
    %432 = vmatpush1.bf16.msra.mxu0 0
    %433 = vmatprep.subr.bf16.mxu0 0
    %434 = vmatpush1.bf16.msra.mxu0 0
    %435 = vmatprep.subr.bf16.mxu0 0
    %436 = vmatpush1.bf16.msra.mxu0 0
    %437 = vmatprep.subr.bf16.mxu0 0
    %438 = vmatpush1.bf16.msra.mxu0 0
    %439 = vmatprep.subr.bf16.mxu0 0
    %440 = vmatpush1.bf16.msra.mxu0 0
    %441 = vmatprep.subr.bf16.mxu0 0
    %442 = vmatpush1.bf16.msra.mxu0 0
    %443 = vmatprep.mubr.bf16.mxu0 0
    %444 = vmatmul.mubr.bf16.gmra.mrb[0].mxu0 %v406
    %v445 = vpop.f32.mrb[0].mxu0
    %v446 = vadd.f32 0.0, %v445
    %v447 = vpop.f32.mrb[0].mxu0
    %v448 = vpop.f32.mrb[0].mxu0
    %v449 = vadd.f32 0.0, %v448
    %v450 = vpop.f32.mrb[0].mxu0
    %451 = vmatprep.mubr.bf16.mxu0 0
    %452 = vmatmul.mubr.bf16.gmra.mrb[0].mxu0 %v409
    %v453 = vpop.f32.mrb[0].mxu0
    %v454 = vadd.f32 0.0, %v453
    %v455 = vpop.f32.mrb[0].mxu0
    %v456 = vpop.f32.mrb[0].mxu0
    %v457 = vadd.f32 0.0, %v456
    %v458 = vpop.f32.mrb[0].mxu0
    %459 = vdwg.mxu0
    %v460 = vld [vmem:[#allocation4] sm:$0x1]
    %v461 = vld [vmem:[#allocation6] sm:$0x1]
    %v462 = vadd.f32 %v179, %v182
    %v463 = vadd.f32 %v462, %v187
    %v464 = vadd.f32 %v463, %v190
    %v465 = vadd.f32 %v464, %v268
    %v466 = vadd.f32 %v465, %v271
    %v467 = vadd.f32 %v466, %v276
    %v468 = vadd.f32 %v467, %v279
    %v469 = vadd.f32 %v468, %v357
    %v470 = vadd.f32 %v469, %v360
    %v471 = vadd.f32 %v470, %v365
    %v472 = vadd.f32 %v471, %v368
    %v473 = vadd.f32 %v472, %v446
    %v474 = vadd.f32 %v473, %v449
    %v475 = vadd.f32 %v474, %v454
    %v476 = vadd.f32 %v475, %v457
    %v477 = vrot.slane %v476, 4
    %v478 = vadd.f32 %v476, %v477
    %v479 = vrot.slane %v478, 2
    %v480 = vadd.f32 %v478, %v479
    %v481 = vrot.slane %v480, 1
    %v482 = vadd.f32 %v480, %v481
    %v483 = vrcp.pop 128.0
    %v484 = vmul.f32 %v482, %v483
    %v485 = vsub.f32 %v179, %v484
    %v486 = vsub.f32 %v182, %v484
    %v487 = vsub.f32 %v187, %v484
    %v488 = vsub.f32 %v190, %v484
    %v489 = vsub.f32 %v268, %v484
    %v490 = vsub.f32 %v271, %v484
    %v491 = vsub.f32 %v276, %v484
    %v492 = vsub.f32 %v279, %v484
    %v493 = vsub.f32 %v357, %v484
    %v494 = vsub.f32 %v360, %v484
    %v495 = vsub.f32 %v365, %v484
    %v496 = vsub.f32 %v368, %v484
    %v497 = vsub.f32 %v446, %v484
    %v498 = vsub.f32 %v449, %v484
    %v499 = vsub.f32 %v454, %v484
    %v500 = vsub.f32 %v457, %v484
    %v501 = vmul.f32 %v485, %v485
    %v502 = vmul.f32 %v486, %v486
    %v503 = vmul.f32 %v487, %v487
    %v504 = vmul.f32 %v488, %v488
    %v505 = vmul.f32 %v489, %v489
    %v506 = vmul.f32 %v490, %v490
    %v507 = vmul.f32 %v491, %v491
    %v508 = vmul.f32 %v492, %v492
    %v509 = vmul.f32 %v493, %v493
    %v510 = vmul.f32 %v494, %v494
    %v511 = vmul.f32 %v495, %v495
    %v512 = vmul.f32 %v496, %v496
    %v513 = vmul.f32 %v497, %v497
    %v514 = vmul.f32 %v498, %v498
    %v515 = vmul.f32 %v499, %v499
    %v516 = vmul.f32 %v500, %v500
    %v517 = vadd.f32 %v501, %v502
    %v518 = vadd.f32 %v517, %v503
    %v519 = vadd.f32 %v518, %v504
    %v520 = vadd.f32 %v519, %v505
    %v521 = vadd.f32 %v520, %v506
    %v522 = vadd.f32 %v521, %v507
    %v523 = vadd.f32 %v522, %v508
    %v524 = vadd.f32 %v523, %v509
    %v525 = vadd.f32 %v524, %v510
    %v526 = vadd.f32 %v525, %v511
    %v527 = vadd.f32 %v526, %v512
    %v528 = vadd.f32 %v527, %v513
    %v529 = vadd.f32 %v528, %v514
    %v530 = vadd.f32 %v529, %v515
    %v531 = vadd.f32 %v530, %v516
    %v532 = vrot.slane %v531, 4
    %v533 = vadd.f32 %v531, %v532
    %v534 = vrot.slane %v533, 2
    %v535 = vadd.f32 %v533, %v534
    %v536 = vrot.slane %v535, 1
    %v537 = vadd.f32 %v535, %v536
    %v538 = vmul.f32 %v537, %v483
    %v539 = vadd.f32 %v538, 1e-05
    %v540 = vrsqrt.pop %v539
    %v541 = vmul.f32 %v485, %v540
    %v542 = vmul.f32 %v486, %v540
    %v543 = vmul.f32 %v487, %v540
    %v544 = vmul.f32 %v488, %v540
    %v545 = vmul.f32 %v489, %v540
    %v546 = vmul.f32 %v490, %v540
    %v547 = vmul.f32 %v491, %v540
    %v548 = vmul.f32 %v492, %v540
    %v549 = vmul.f32 %v493, %v540
    %v550 = vmul.f32 %v494, %v540
    %v551 = vmul.f32 %v495, %v540
    %v552 = vmul.f32 %v496, %v540
    %v553 = vmul.f32 %v497, %v540
    %v554 = vmul.f32 %v498, %v540
    %v555 = vmul.f32 %v499, %v540
    %v556 = vmul.f32 %v500, %v540
    %v558 = vlaneseq
    %v559 = vshrl.u32 %v558, 7
    %v560 = vsub.s32 0, %v559
    %v561 = vrot.slane %v460, %v560
    %v563 = vmul.f32 %v541, %v561
    %v564 = vmul.f32 %v542, %v561
    %v565 = vmul.f32 %v543, %v561
    %v566 = vmul.f32 %v544, %v561
    %v567 = vmul.f32 %v545, %v561
    %v568 = vmul.f32 %v546, %v561
    %v569 = vmul.f32 %v547, %v561
    %v570 = vmul.f32 %v548, %v561
    %v571 = vmul.f32 %v549, %v561
    %v572 = vmul.f32 %v550, %v561
    %v573 = vmul.f32 %v551, %v561
    %v574 = vmul.f32 %v552, %v561
    %v575 = vmul.f32 %v553, %v561
    %v576 = vmul.f32 %v554, %v561
    %v577 = vmul.f32 %v555, %v561
    %v578 = vmul.f32 %v556, %v561
    %v580 = vlaneseq
    %v581 = vshrl.u32 %v580, 7
    %v582 = vsub.s32 0, %v581
    %v583 = vrot.slane %v461, %v582
    %v585 = vadd.f32 %v563, %v583
    %v586 = vadd.f32 %v564, %v583
    %v587 = vadd.f32 %v565, %v583
    %v588 = vadd.f32 %v566, %v583
    %v589 = vadd.f32 %v567, %v583
    %v590 = vadd.f32 %v568, %v583
    %v591 = vadd.f32 %v569, %v583
    %v592 = vadd.f32 %v570, %v583
    %v593 = vadd.f32 %v571, %v583
    %v594 = vadd.f32 %v572, %v583
    %v595 = vadd.f32 %v573, %v583
    %v596 = vadd.f32 %v574, %v583
    %v597 = vadd.f32 %v575, %v583
    %v598 = vadd.f32 %v576, %v583
    %v599 = vadd.f32 %v577, %v583
    %v600 = vadd.f32 %v578, %v583
    %vm601 = vcmp.ge.f32.partialorder %v585, 0.0
    %vm602 = vcmp.ge.f32.partialorder %v586, 0.0
    %vm603 = vcmp.ge.f32.partialorder %v587, 0.0
    %vm604 = vcmp.ge.f32.partialorder %v588, 0.0
    %vm605 = vcmp.ge.f32.partialorder %v589, 0.0
    %vm606 = vcmp.ge.f32.partialorder %v590, 0.0
    %vm607 = vcmp.ge.f32.partialorder %v591, 0.0
    %vm608 = vcmp.ge.f32.partialorder %v592, 0.0
    %vm609 = vcmp.ge.f32.partialorder %v593, 0.0
    %vm610 = vcmp.ge.f32.partialorder %v594, 0.0
    %vm611 = vcmp.ge.f32.partialorder %v595, 0.0
    %vm612 = vcmp.ge.f32.partialorder %v596, 0.0
    %vm613 = vcmp.ge.f32.partialorder %v597, 0.0
    %vm614 = vcmp.ge.f32.partialorder %v598, 0.0
    %vm615 = vcmp.ge.f32.partialorder %v599, 0.0
    %vm616 = vcmp.ge.f32.partialorder %v600, 0.0
    %v617 = vmul.f32 %v585, 0.01
    %v618 = vmul.f32 %v586, 0.01
    %v619 = vmul.f32 %v587, 0.01
    %v620 = vmul.f32 %v588, 0.01
    %v621 = vmul.f32 %v589, 0.01
    %v622 = vmul.f32 %v590, 0.01
    %v623 = vmul.f32 %v591, 0.01
    %v624 = vmul.f32 %v592, 0.01
    %v625 = vmul.f32 %v593, 0.01
    %v626 = vmul.f32 %v594, 0.01
    %v627 = vmul.f32 %v595, 0.01
    %v628 = vmul.f32 %v596, 0.01
    %v629 = vmul.f32 %v597, 0.01
    %v630 = vmul.f32 %v598, 0.01
    %v631 = vmul.f32 %v599, 0.01
    %v632 = vmul.f32 %v600, 0.01
    %v633 = vsel %vm601, %v585, %v617
    %v634 = vsel %vm602, %v586, %v618
    %v635 = vsel %vm603, %v587, %v619
    %v636 = vsel %vm604, %v588, %v620
    %v637 = vsel %vm605, %v589, %v621
    %v638 = vsel %vm606, %v590, %v622
    %v639 = vsel %vm607, %v591, %v623
    %v640 = vsel %vm608, %v592, %v624
    %v641 = vsel %vm609, %v593, %v625
    %v642 = vsel %vm610, %v594, %v626
    %v643 = vsel %vm611, %v595, %v627
    %v644 = vsel %vm612, %v596, %v628
    %v645 = vsel %vm613, %v597, %v629
    %v646 = vsel %vm614, %v598, %v630
    %v647 = vsel %vm615, %v599, %v631
    %v648 = vsel %vm616, %v600, %v632
    %649 = vst [vmem:[%s4] sm:$0xff] %v633
    %650 = vst [vmem:[%s4 + $0x8] sm:$0xff] %v634
    %651 = vst [vmem:[%s4 + $0x10] sm:$0xff] %v635
    %652 = vst [vmem:[%s4 + $0x18] sm:$0xff] %v636
    %653 = vst [vmem:[%s4 + $0x20] sm:$0xff] %v637
    %654 = vst [vmem:[%s4 + $0x28] sm:$0xff] %v638
    %655 = vst [vmem:[%s4 + $0x30] sm:$0xff] %v639
    %656 = vst [vmem:[%s4 + $0x38] sm:$0xff] %v640
    %657 = vst [vmem:[%s4 + $0x40] sm:$0xff] %v641
    %658 = vst [vmem:[%s4 + $0x48] sm:$0xff] %v642
    %659 = vst [vmem:[%s4 + $0x50] sm:$0xff] %v643
    %660 = vst [vmem:[%s4 + $0x58] sm:$0xff] %v644
    %661 = vst [vmem:[%s4 + $0x60] sm:$0xff] %v645
    %662 = vst [vmem:[%s4 + $0x68] sm:$0xff] %v646
    %663 = vst [vmem:[%s4 + $0x70] sm:$0xff] %v647
    %664 = vst [vmem:[%s4 + $0x78] sm:$0xff] %v648
    // Predicated region
    $region30: #{gan_forward.13} parent=1 // pred_check
      _
    $region31: #{gan_forward.13} parent=1 // pred_check_branch
      %666 = sbr.rel (0) target = $region33
    $region32: #{gan_forward.13} parent=1 // pred_region
      _
    $region33: #{gan_forward.13} parent=1 // pred_fallthru
      _
    // Predicated region
    $region34: #{gan_forward.13} parent=1 // pred_check
      _
    $region35: #{gan_forward.13} parent=1 // pred_check_branch
      %668 = sbr.rel (0) target = $region37
    $region36: #{gan_forward.13} parent=1 // pred_region
      _
    $region37: #{gan_forward.13} parent=1 // pred_fallthru
      _
    %669 = vsyncpa [#allocation3], 1
    %670 = vsyncpa [#allocation5], 1

// kernel: gan_forward.14
$region0: #{gan_forward.14}
  #allocation0 [shape = 'u32[]', space=smem, size = 0x4, offset = 0x4, fixed_abs, tag = 'smem constant byte address 0x4 - core index']
  #allocation1 [shape = 'u32[144,128]{1,0:T(1,128)}', space=vmem, size = 0x12000, scoped, tag = 'internal scratch']
  %s0 = inlined_call_operand.vmem [shape: bf16[4,128,32], index: 0, kind: input, shape index: {}]
  %s1 = inlined_call_operand.vmem [shape: bf16[4,32,128], index: 1, kind: input, shape index: {}]
  %s2 = inlined_call_operand.vmem [shape: f32[1,128], index: 2, kind: input, shape index: {}]
  %s3 = inlined_call_operand.vmem [shape: f32[1,128], index: 3, kind: input, shape index: {}]
  %s4 = inlined_call_operand.vmem [shape: f32[512,128], index: 4, kind: output, shape index: {}]
  %s5 = sld [smem:[#allocation0]]
  $region26: #{gan_forward.14} parent=0
    _
  %s7 = ssub.s32 1, %s5
  %s8 = scalar_select 0, %s7, %s5
  // Predicated region
  $region2: #{gan_forward.14} parent=0 // pred_check
    _
  $region3: #{gan_forward.14} parent=0 // pred_check_branch
    %10 = sbr.rel (0) target = $region5
  $region4: #{gan_forward.14} parent=0 // pred_region
    _
  $region5: #{gan_forward.14} parent=0 // pred_fallthru
    _
  // Predicated region
  $region6: #{gan_forward.14} parent=0 // pred_check
    _
  $region7: #{gan_forward.14} parent=0 // pred_check_branch
    %12 = sbr.rel (0) target = $region9
  $region8: #{gan_forward.14} parent=0 // pred_region
    _
  $region9: #{gan_forward.14} parent=0 // pred_fallthru
    _
  // Predicated region
  $region10: #{gan_forward.14} parent=0 // pred_check
    _
  $region11: #{gan_forward.14} parent=0 // pred_check_branch
    %14 = sbr.rel (0) target = $region13
  $region12: #{gan_forward.14} parent=0 // pred_region
    _
  $region13: #{gan_forward.14} parent=0 // pred_fallthru
    _
  // Predicated region
  $region14: #{gan_forward.14} parent=0 // pred_check
    _
  $region15: #{gan_forward.14} parent=0 // pred_check_branch
    %16 = sbr.rel (0) target = $region17
  $region16: #{gan_forward.14} parent=0 // pred_region
    _
  $region17: #{gan_forward.14} parent=0 // pred_fallthru
    _
  %v18 = vld [vmem:[%s0] sm:$0xf]
  %v19 = vld [vmem:[%s0 + $0x4] sm:$0xf]
  %v20 = vld [vmem:[%s0 + $0x8] sm:$0xf]
  %v21 = vld [vmem:[%s0 + $0xc] sm:$0xf]
  %v22 = vld [vmem:[%s0 + $0x10] sm:$0xf]
  %v23 = vld [vmem:[%s0 + $0x14] sm:$0xf]
  %v24 = vld [vmem:[%s0 + $0x18] sm:$0xf]
  %v25 = vld [vmem:[%s0 + $0x1c] sm:$0xf]
  %v26 = vld [vmem:[%s0 + $0x20] sm:$0xf]
  %v27 = vld [vmem:[%s0 + $0x24] sm:$0xf]
  %v28 = vld [vmem:[%s0 + $0x28] sm:$0xf]
  %v29 = vld [vmem:[%s0 + $0x2c] sm:$0xf]
  %v30 = vld [vmem:[%s0 + $0x30] sm:$0xf]
  %v31 = vld [vmem:[%s0 + $0x34] sm:$0xf]
  %v32 = vld [vmem:[%s0 + $0x38] sm:$0xf]
  %v33 = vld [vmem:[%s0 + $0x3c] sm:$0xf]
  %v34 = vld [vmem:[%s0 + $0x40] sm:$0xf]
  %v35 = vld [vmem:[%s0 + $0x44] sm:$0xf]
  %v36 = vld [vmem:[%s0 + $0x48] sm:$0xf]
  %v37 = vld [vmem:[%s0 + $0x4c] sm:$0xf]
  %v38 = vld [vmem:[%s0 + $0x50] sm:$0xf]
  %v39 = vld [vmem:[%s0 + $0x54] sm:$0xf]
  %v40 = vld [vmem:[%s0 + $0x58] sm:$0xf]
  %v41 = vld [vmem:[%s0 + $0x5c] sm:$0xf]
  %v42 = vld [vmem:[%s0 + $0x60] sm:$0xf]
  %v43 = vld [vmem:[%s0 + $0x64] sm:$0xf]
  %v44 = vld [vmem:[%s0 + $0x68] sm:$0xf]
  %v45 = vld [vmem:[%s0 + $0x6c] sm:$0xf]
  %v46 = vld [vmem:[%s0 + $0x70] sm:$0xf]
  %v47 = vld [vmem:[%s0 + $0x74] sm:$0xf]
  %v48 = vld [vmem:[%s0 + $0x78] sm:$0xf]
  %v49 = vld [vmem:[%s0 + $0x7c] sm:$0xf]
  %v50 = vld [vmem:[%s0 + $0x80] sm:$0xf]
  %v51 = vld [vmem:[%s0 + $0x84] sm:$0xf]
  %v52 = vld [vmem:[%s0 + $0x88] sm:$0xf]
  %v53 = vld [vmem:[%s0 + $0x8c] sm:$0xf]
  %v54 = vld [vmem:[%s0 + $0x90] sm:$0xf]
  %v55 = vld [vmem:[%s0 + $0x94] sm:$0xf]
  %v56 = vld [vmem:[%s0 + $0x98] sm:$0xf]
  %v57 = vld [vmem:[%s0 + $0x9c] sm:$0xf]
  %v58 = vld [vmem:[%s0 + $0xa0] sm:$0xf]
  %v59 = vld [vmem:[%s0 + $0xa4] sm:$0xf]
  %v60 = vld [vmem:[%s0 + $0xa8] sm:$0xf]
  %v61 = vld [vmem:[%s0 + $0xac] sm:$0xf]
  %v62 = vld [vmem:[%s0 + $0xb0] sm:$0xf]
  %v63 = vld [vmem:[%s0 + $0xb4] sm:$0xf]
  %v64 = vld [vmem:[%s0 + $0xb8] sm:$0xf]
  %v65 = vld [vmem:[%s0 + $0xbc] sm:$0xf]
  %v66 = vld [vmem:[%s0 + $0xc0] sm:$0xf]
  %v67 = vld [vmem:[%s0 + $0xc4] sm:$0xf]
  %v68 = vld [vmem:[%s0 + $0xc8] sm:$0xf]
  %v69 = vld [vmem:[%s0 + $0xcc] sm:$0xf]
  %v70 = vld [vmem:[%s0 + $0xd0] sm:$0xf]
  %v71 = vld [vmem:[%s0 + $0xd4] sm:$0xf]
  %v72 = vld [vmem:[%s0 + $0xd8] sm:$0xf]
  %v73 = vld [vmem:[%s0 + $0xdc] sm:$0xf]
  %v74 = vld [vmem:[%s0 + $0xe0] sm:$0xf]
  %v75 = vld [vmem:[%s0 + $0xe4] sm:$0xf]
  %v76 = vld [vmem:[%s0 + $0xe8] sm:$0xf]
  %v77 = vld [vmem:[%s0 + $0xec] sm:$0xf]
  %v78 = vld [vmem:[%s0 + $0xf0] sm:$0xf]
  %v79 = vld [vmem:[%s0 + $0xf4] sm:$0xf]
  %v80 = vld [vmem:[%s0 + $0xf8] sm:$0xf]
  %v81 = vld [vmem:[%s0 + $0xfc] sm:$0xf]
  %v82 = vld [vmem:[%s1] sm:$0xf]
  %v83 = vld [vmem:[%s1 + $0x4] sm:$0xf]
  %v84 = vld [vmem:[%s1 + $0x8] sm:$0xf]
  %v85 = vld [vmem:[%s1 + $0xc] sm:$0xf]
  %v86 = vld [vmem:[%s1 + $0x10] sm:$0xf]
  %v87 = vld [vmem:[%s1 + $0x14] sm:$0xf]
  %v88 = vld [vmem:[%s1 + $0x18] sm:$0xf]
  %v89 = vld [vmem:[%s1 + $0x1c] sm:$0xf]
  %v90 = vld [vmem:[%s1 + $0x20] sm:$0xf]
  %v91 = vld [vmem:[%s1 + $0x24] sm:$0xf]
  %v92 = vld [vmem:[%s1 + $0x28] sm:$0xf]
  %v93 = vld [vmem:[%s1 + $0x2c] sm:$0xf]
  %v94 = vld [vmem:[%s1 + $0x30] sm:$0xf]
  %v95 = vld [vmem:[%s1 + $0x34] sm:$0xf]
  %v96 = vld [vmem:[%s1 + $0x38] sm:$0xf]
  %v97 = vld [vmem:[%s1 + $0x3c] sm:$0xf]
  %v114 = vunpack.c.l.b16 %v18
  %v115 = vunpack.c.l.b16 %v19
  %v116 = vunpack.c.l.b16 %v20
  %v117 = vunpack.c.l.b16 %v21
  %v118 = vunpack.c.l.b16 %v22
  %v119 = vunpack.c.l.b16 %v23
  %v120 = vunpack.c.l.b16 %v24
  %v121 = vunpack.c.l.b16 %v25
  %v122 = vunpack.c.l.b16 %v26
  %v123 = vunpack.c.l.b16 %v27
  %v124 = vunpack.c.l.b16 %v28
  %v125 = vunpack.c.l.b16 %v29
  %v126 = vunpack.c.l.b16 %v30
  %v127 = vunpack.c.l.b16 %v31
  %v128 = vunpack.c.l.b16 %v32
  %v129 = vunpack.c.l.b16 %v33
  %v130 = vpack.c.b16 %v115, %v114
  %v131 = vpack.c.b16 %v117, %v116
  %v132 = vpack.c.b16 %v119, %v118
  %v133 = vpack.c.b16 %v121, %v120
  %v134 = vpack.c.b16 %v123, %v122
  %v135 = vpack.c.b16 %v125, %v124
  %v136 = vpack.c.b16 %v127, %v126
  %v137 = vpack.c.b16 %v129, %v128
  %v142 = vunpack.c.l.b16 %v82
  %v143 = vunpack.c.l.b16 %v83
  %v144 = vunpack.c.l.b16 %v84
  %v145 = vunpack.c.l.b16 %v85
  %v146 = vpack.c.b16 %v143, %v142
  %v147 = vpack.c.b16 %v145, %v144
  %vm150 = vcmask 261120
  %v152 = vsel %vm150, %v130, 0
  %v155 = vsel %vm150, %v131, 0
  %v158 = vsel %vm150, %v132, 0
  %v161 = vsel %vm150, %v133, 0
  %v164 = vsel %vm150, %v134, 0
  %v167 = vsel %vm150, %v135, 0
  %v170 = vsel %vm150, %v136, 0
  %v173 = vsel %vm150, %v137, 0
  %175 = vmatprep.subr.bf16.mxu0 0
  %176 = vmatpush1.bf16.msra.mxu0 %v146
  %177 = vmatprep.subr.bf16.mxu0 0
  %178 = vmatpush1.bf16.msra.mxu0 %v147
  %179 = vmatprep.subr.bf16.mxu0 0
  %180 = vmatpush1.bf16.msra.mxu0 0
  %181 = vmatprep.subr.bf16.mxu0 0
  %182 = vmatpush1.bf16.msra.mxu0 0
  %183 = vmatprep.subr.bf16.mxu0 0
  %184 = vmatpush1.bf16.msra.mxu0 0
  %185 = vmatprep.subr.bf16.mxu0 0
  %186 = vmatpush1.bf16.msra.mxu0 0
  %187 = vmatprep.subr.bf16.mxu0 0
  %188 = vmatpush1.bf16.msra.mxu0 0
  %189 = vmatprep.subr.bf16.mxu0 0
  %190 = vmatpush1.bf16.msra.mxu0 0
  %191 = vmatprep.subr.bf16.mxu0 0
  %192 = vmatpush1.bf16.msra.mxu0 0
  %193 = vmatprep.subr.bf16.mxu0 0
  %194 = vmatpush1.bf16.msra.mxu0 0
  %195 = vmatprep.subr.bf16.mxu0 0
  %196 = vmatpush1.bf16.msra.mxu0 0
  %197 = vmatprep.subr.bf16.mxu0 0
  %198 = vmatpush1.bf16.msra.mxu0 0
  %199 = vmatprep.subr.bf16.mxu0 0
  %200 = vmatpush1.bf16.msra.mxu0 0
  %201 = vmatprep.subr.bf16.mxu0 0
  %202 = vmatpush1.bf16.msra.mxu0 0
  %203 = vmatprep.subr.bf16.mxu0 0
  %204 = vmatpush1.bf16.msra.mxu0 0
  %205 = vmatprep.subr.bf16.mxu0 0
  %206 = vmatpush1.bf16.msra.mxu0 0
  %207 = vmatprep.mubr.bf16.mxu0 0
  %208 = vmatmul.mubr.bf16.gmra.mrb[0].mxu0 %v152
  %v209 = vpop.f32.mrb[0].mxu0
  %v210 = vadd.f32 0.0, %v209
  %v211 = vpop.f32.mrb[0].mxu0
  %v212 = vpop.f32.mrb[0].mxu0
  %v213 = vadd.f32 0.0, %v212
  %v214 = vpop.f32.mrb[0].mxu0
  %215 = vmatprep.mubr.bf16.mxu0 0
  %216 = vmatmul.mubr.bf16.gmra.mrb[0].mxu0 %v155
  %v217 = vpop.f32.mrb[0].mxu0
  %v218 = vadd.f32 0.0, %v217
  %v219 = vpop.f32.mrb[0].mxu0
  %v220 = vpop.f32.mrb[0].mxu0
  %v221 = vadd.f32 0.0, %v220
  %v222 = vpop.f32.mrb[0].mxu0
  %223 = vmatprep.mubr.bf16.mxu0 0
  %224 = vmatmul.mubr.bf16.gmra.mrb[0].mxu0 %v158
  %v225 = vpop.f32.mrb[0].mxu0
  %v226 = vadd.f32 0.0, %v225
  %v227 = vpop.f32.mrb[0].mxu0
  %v228 = vpop.f32.mrb[0].mxu0
  %v229 = vadd.f32 0.0, %v228
  %v230 = vpop.f32.mrb[0].mxu0
  %231 = vmatprep.mubr.bf16.mxu0 0
  %232 = vmatmul.mubr.bf16.gmra.mrb[0].mxu0 %v161
  %v233 = vpop.f32.mrb[0].mxu0
  %v234 = vadd.f32 0.0, %v233
  %v235 = vpop.f32.mrb[0].mxu0
  %v236 = vpop.f32.mrb[0].mxu0
  %v237 = vadd.f32 0.0, %v236
  %v238 = vpop.f32.mrb[0].mxu0
  %239 = vmatprep.mubr.bf16.mxu0 0
  %240 = vmatmul.mubr.bf16.gmra.mrb[0].mxu0 %v164
  %v241 = vpop.f32.mrb[0].mxu0
  %v242 = vadd.f32 0.0, %v241
  %v243 = vpop.f32.mrb[0].mxu0
  %v244 = vpop.f32.mrb[0].mxu0
  %v245 = vadd.f32 0.0, %v244
  %v246 = vpop.f32.mrb[0].mxu0
  %247 = vmatprep.mubr.bf16.mxu0 0
  %248 = vmatmul.mubr.bf16.gmra.mrb[0].mxu0 %v167
  %v249 = vpop.f32.mrb[0].mxu0
  %v250 = vadd.f32 0.0, %v249
  %v251 = vpop.f32.mrb[0].mxu0
  %v252 = vpop.f32.mrb[0].mxu0
  %v253 = vadd.f32 0.0, %v252
  %v254 = vpop.f32.mrb[0].mxu0
  %255 = vmatprep.mubr.bf16.mxu0 0
  %256 = vmatmul.mubr.bf16.gmra.mrb[0].mxu0 %v170
  %v257 = vpop.f32.mrb[0].mxu0
  %v258 = vadd.f32 0.0, %v257
  %v259 = vpop.f32.mrb[0].mxu0
  %v260 = vpop.f32.mrb[0].mxu0
  %v261 = vadd.f32 0.0, %v260
  %v262 = vpop.f32.mrb[0].mxu0
  %263 = vmatprep.mubr.bf16.mxu0 0
  %264 = vmatmul.mubr.bf16.gmra.mrb[0].mxu0 %v173
  %v265 = vpop.f32.mrb[0].mxu0
  %v266 = vadd.f32 0.0, %v265
  %v267 = vpop.f32.mrb[0].mxu0
  %v268 = vpop.f32.mrb[0].mxu0
  %v269 = vadd.f32 0.0, %v268
  %v270 = vpop.f32.mrb[0].mxu0
  %271 = vdwg.mxu0
  %v288 = vunpack.c.l.b16 %v34
  %v289 = vunpack.c.l.b16 %v35
  %v290 = vunpack.c.l.b16 %v36
  %v291 = vunpack.c.l.b16 %v37
  %v292 = vunpack.c.l.b16 %v38
  %v293 = vunpack.c.l.b16 %v39
  %v294 = vunpack.c.l.b16 %v40
  %v295 = vunpack.c.l.b16 %v41
  %v296 = vunpack.c.l.b16 %v42
  %v297 = vunpack.c.l.b16 %v43
  %v298 = vunpack.c.l.b16 %v44
  %v299 = vunpack.c.l.b16 %v45
  %v300 = vunpack.c.l.b16 %v46
  %v301 = vunpack.c.l.b16 %v47
  %v302 = vunpack.c.l.b16 %v48
  %v303 = vunpack.c.l.b16 %v49
  %v304 = vpack.c.b16 %v289, %v288
  %v305 = vpack.c.b16 %v291, %v290
  %v306 = vpack.c.b16 %v293, %v292
  %v307 = vpack.c.b16 %v295, %v294
  %v308 = vpack.c.b16 %v297, %v296
  %v309 = vpack.c.b16 %v299, %v298
  %v310 = vpack.c.b16 %v301, %v300
  %v311 = vpack.c.b16 %v303, %v302
  %v316 = vunpack.c.l.b16 %v86
  %v317 = vunpack.c.l.b16 %v87
  %v318 = vunpack.c.l.b16 %v88
  %v319 = vunpack.c.l.b16 %v89
  %v320 = vpack.c.b16 %v317, %v316
  %v321 = vpack.c.b16 %v319, %v318
  %v325 = vsel %vm150, %v304, 0
  %v328 = vsel %vm150, %v305, 0
  %v331 = vsel %vm150, %v306, 0
  %v334 = vsel %vm150, %v307, 0
  %v337 = vsel %vm150, %v308, 0
  %v340 = vsel %vm150, %v309, 0
  %v343 = vsel %vm150, %v310, 0
  %v346 = vsel %vm150, %v311, 0
  %348 = vmatprep.subr.bf16.mxu0 0
  %349 = vmatpush1.bf16.msra.mxu0 %v320
  %350 = vmatprep.subr.bf16.mxu0 0
  %351 = vmatpush1.bf16.msra.mxu0 %v321
  %352 = vmatprep.subr.bf16.mxu0 0
  %353 = vmatpush1.bf16.msra.mxu0 0
  %354 = vmatprep.subr.bf16.mxu0 0
  %355 = vmatpush1.bf16.msra.mxu0 0
  %356 = vmatprep.subr.bf16.mxu0 0
  %357 = vmatpush1.bf16.msra.mxu0 0
  %358 = vmatprep.subr.bf16.mxu0 0
  %359 = vmatpush1.bf16.msra.mxu0 0
  %360 = vmatprep.subr.bf16.mxu0 0
  %361 = vmatpush1.bf16.msra.mxu0 0
  %362 = vmatprep.subr.bf16.mxu0 0
  %363 = vmatpush1.bf16.msra.mxu0 0
  %364 = vmatprep.subr.bf16.mxu0 0
  %365 = vmatpush1.bf16.msra.mxu0 0
  %366 = vmatprep.subr.bf16.mxu0 0
  %367 = vmatpush1.bf16.msra.mxu0 0
  %368 = vmatprep.subr.bf16.mxu0 0
  %369 = vmatpush1.bf16.msra.mxu0 0
  %370 = vmatprep.subr.bf16.mxu0 0
  %371 = vmatpush1.bf16.msra.mxu0 0
  %372 = vmatprep.subr.bf16.mxu0 0
  %373 = vmatpush1.bf16.msra.mxu0 0
  %374 = vmatprep.subr.bf16.mxu0 0
  %375 = vmatpush1.bf16.msra.mxu0 0
  %376 = vmatprep.subr.bf16.mxu0 0
  %377 = vmatpush1.bf16.msra.mxu0 0
  %378 = vmatprep.subr.bf16.mxu0 0
  %379 = vmatpush1.bf16.msra.mxu0 0
  %380 = vmatprep.mubr.bf16.mxu0 0
  %381 = vmatmul.mubr.bf16.gmra.mrb[0].mxu0 %v325
  %v382 = vpop.f32.mrb[0].mxu0
  %v383 = vadd.f32 0.0, %v382
  %v384 = vpop.f32.mrb[0].mxu0
  %v385 = vpop.f32.mrb[0].mxu0
  %v386 = vadd.f32 0.0, %v385
  %v387 = vpop.f32.mrb[0].mxu0
  %388 = vmatprep.mubr.bf16.mxu0 0
  %389 = vmatmul.mubr.bf16.gmra.mrb[0].mxu0 %v328
  %v390 = vpop.f32.mrb[0].mxu0
  %v391 = vadd.f32 0.0, %v390
  %v392 = vpop.f32.mrb[0].mxu0
  %v393 = vpop.f32.mrb[0].mxu0
  %v394 = vadd.f32 0.0, %v393
  %v395 = vpop.f32.mrb[0].mxu0
  %396 = vmatprep.mubr.bf16.mxu0 0
  %397 = vmatmul.mubr.bf16.gmra.mrb[0].mxu0 %v331
  %v398 = vpop.f32.mrb[0].mxu0
  %v399 = vadd.f32 0.0, %v398
  %v400 = vpop.f32.mrb[0].mxu0
  %v401 = vpop.f32.mrb[0].mxu0
  %v402 = vadd.f32 0.0, %v401
  %v403 = vpop.f32.mrb[0].mxu0
  %404 = vmatprep.mubr.bf16.mxu0 0
  %405 = vmatmul.mubr.bf16.gmra.mrb[0].mxu0 %v334
  %v406 = vpop.f32.mrb[0].mxu0
  %v407 = vadd.f32 0.0, %v406
  %v408 = vpop.f32.mrb[0].mxu0
  %v409 = vpop.f32.mrb[0].mxu0
  %v410 = vadd.f32 0.0, %v409
  %v411 = vpop.f32.mrb[0].mxu0
  %412 = vmatprep.mubr.bf16.mxu0 0
  %413 = vmatmul.mubr.bf16.gmra.mrb[0].mxu0 %v337
  %v414 = vpop.f32.mrb[0].mxu0
  %v415 = vadd.f32 0.0, %v414
  %v416 = vpop.f32.mrb[0].mxu0
  %v417 = vpop.f32.mrb[0].mxu0
  %v418 = vadd.f32 0.0, %v417
  %v419 = vpop.f32.mrb[0].mxu0
  %420 = vmatprep.mubr.bf16.mxu0 0
  %421 = vmatmul.mubr.bf16.gmra.mrb[0].mxu0 %v340
  %v422 = vpop.f32.mrb[0].mxu0
  %v423 = vadd.f32 0.0, %v422
  %v424 = vpop.f32.mrb[0].mxu0
  %v425 = vpop.f32.mrb[0].mxu0
  %v426 = vadd.f32 0.0, %v425
  %v427 = vpop.f32.mrb[0].mxu0
  %428 = vmatprep.mubr.bf16.mxu0 0
  %429 = vmatmul.mubr.bf16.gmra.mrb[0].mxu0 %v343
  %v430 = vpop.f32.mrb[0].mxu0
  %v431 = vadd.f32 0.0, %v430
  %v432 = vpop.f32.mrb[0].mxu0
  %v433 = vpop.f32.mrb[0].mxu0
  %v434 = vadd.f32 0.0, %v433
  %v435 = vpop.f32.mrb[0].mxu0
  %436 = vmatprep.mubr.bf16.mxu0 0
  %437 = vmatmul.mubr.bf16.gmra.mrb[0].mxu0 %v346
  %v438 = vpop.f32.mrb[0].mxu0
  %v439 = vadd.f32 0.0, %v438
  %v440 = vpop.f32.mrb[0].mxu0
  %v441 = vpop.f32.mrb[0].mxu0
  %v442 = vadd.f32 0.0, %v441
  %v443 = vpop.f32.mrb[0].mxu0
  %444 = vdwg.mxu0
  %v461 = vunpack.c.l.b16 %v50
  %v462 = vunpack.c.l.b16 %v51
  %v463 = vunpack.c.l.b16 %v52
  %v464 = vunpack.c.l.b16 %v53
  %v465 = vunpack.c.l.b16 %v54
  %v466 = vunpack.c.l.b16 %v55
  %v467 = vunpack.c.l.b16 %v56
  %v468 = vunpack.c.l.b16 %v57
  %v469 = vunpack.c.l.b16 %v58
  %v470 = vunpack.c.l.b16 %v59
  %v471 = vunpack.c.l.b16 %v60
  %v472 = vunpack.c.l.b16 %v61
  %v473 = vunpack.c.l.b16 %v62
  %v474 = vunpack.c.l.b16 %v63
  %v475 = vunpack.c.l.b16 %v64
  %v476 = vunpack.c.l.b16 %v65
  %v477 = vpack.c.b16 %v462, %v461
  %v478 = vpack.c.b16 %v464, %v463
  %v479 = vpack.c.b16 %v466, %v465
  %v480 = vpack.c.b16 %v468, %v467
  %v481 = vpack.c.b16 %v470, %v469
  %v482 = vpack.c.b16 %v472, %v471
  %v483 = vpack.c.b16 %v474, %v473
  %v484 = vpack.c.b16 %v476, %v475
  %v489 = vunpack.c.l.b16 %v90
  %v490 = vunpack.c.l.b16 %v91
  %v491 = vunpack.c.l.b16 %v92
  %v492 = vunpack.c.l.b16 %v93
  %v493 = vpack.c.b16 %v490, %v489
  %v494 = vpack.c.b16 %v492, %v491
  %v498 = vsel %vm150, %v477, 0
  %v501 = vsel %vm150, %v478, 0
  %v504 = vsel %vm150, %v479, 0
  %v507 = vsel %vm150, %v480, 0
  %v510 = vsel %vm150, %v481, 0
  %v513 = vsel %vm150, %v482, 0
  %v516 = vsel %vm150, %v483, 0
  %v519 = vsel %vm150, %v484, 0
  %521 = vmatprep.subr.bf16.mxu0 0
  %522 = vmatpush1.bf16.msra.mxu0 %v493
  %523 = vmatprep.subr.bf16.mxu0 0
  %524 = vmatpush1.bf16.msra.mxu0 %v494
  %525 = vmatprep.subr.bf16.mxu0 0
  %526 = vmatpush1.bf16.msra.mxu0 0
  %527 = vmatprep.subr.bf16.mxu0 0
  %528 = vmatpush1.bf16.msra.mxu0 0
  %529 = vmatprep.subr.bf16.mxu0 0
  %530 = vmatpush1.bf16.msra.mxu0 0
  %531 = vmatprep.subr.bf16.mxu0 0
  %532 = vmatpush1.bf16.msra.mxu0 0
  %533 = vmatprep.subr.bf16.mxu0 0
  %534 = vmatpush1.bf16.msra.mxu0 0
  %535 = vmatprep.subr.bf16.mxu0 0
  %536 = vmatpush1.bf16.msra.mxu0 0
  %537 = vmatprep.subr.bf16.mxu0 0
  %538 = vmatpush1.bf16.msra.mxu0 0
  %539 = vmatprep.subr.bf16.mxu0 0
  %540 = vmatpush1.bf16.msra.mxu0 0
  %541 = vmatprep.subr.bf16.mxu0 0
  %542 = vmatpush1.bf16.msra.mxu0 0
  %543 = vmatprep.subr.bf16.mxu0 0
  %544 = vmatpush1.bf16.msra.mxu0 0
  %545 = vmatprep.subr.bf16.mxu0 0
  %546 = vmatpush1.bf16.msra.mxu0 0
  %547 = vmatprep.subr.bf16.mxu0 0
  %548 = vmatpush1.bf16.msra.mxu0 0
  %549 = vmatprep.subr.bf16.mxu0 0
  %550 = vmatpush1.bf16.msra.mxu0 0
  %551 = vmatprep.subr.bf16.mxu0 0
  %552 = vmatpush1.bf16.msra.mxu0 0
  %553 = vmatprep.mubr.bf16.mxu0 0
  %554 = vmatmul.mubr.bf16.gmra.mrb[0].mxu0 %v498
  %v555 = vpop.f32.mrb[0].mxu0
  %v556 = vadd.f32 0.0, %v555
  %v557 = vpop.f32.mrb[0].mxu0
  %v558 = vpop.f32.mrb[0].mxu0
  %v559 = vadd.f32 0.0, %v558
  %v560 = vpop.f32.mrb[0].mxu0
  %561 = vmatprep.mubr.bf16.mxu0 0
  %562 = vmatmul.mubr.bf16.gmra.mrb[0].mxu0 %v501
  %v563 = vpop.f32.mrb[0].mxu0
  %v564 = vadd.f32 0.0, %v563
  %v565 = vpop.f32.mrb[0].mxu0
  %v566 = vpop.f32.mrb[0].mxu0
  %v567 = vadd.f32 0.0, %v566
  %v568 = vpop.f32.mrb[0].mxu0
  %569 = vmatprep.mubr.bf16.mxu0 0
  %570 = vmatmul.mubr.bf16.gmra.mrb[0].mxu0 %v504
  %v571 = vpop.f32.mrb[0].mxu0
  %v572 = vadd.f32 0.0, %v571
  %v573 = vpop.f32.mrb[0].mxu0
  %v574 = vpop.f32.mrb[0].mxu0
  %v575 = vadd.f32 0.0, %v574
  %v576 = vpop.f32.mrb[0].mxu0
  %577 = vmatprep.mubr.bf16.mxu0 0
  %578 = vmatmul.mubr.bf16.gmra.mrb[0].mxu0 %v507
  %v579 = vpop.f32.mrb[0].mxu0
  %v580 = vadd.f32 0.0, %v579
  %v581 = vpop.f32.mrb[0].mxu0
  %v582 = vpop.f32.mrb[0].mxu0
  %v583 = vadd.f32 0.0, %v582
  %v584 = vpop.f32.mrb[0].mxu0
  %585 = vmatprep.mubr.bf16.mxu0 0
  %586 = vmatmul.mubr.bf16.gmra.mrb[0].mxu0 %v510
  %v587 = vpop.f32.mrb[0].mxu0
  %v588 = vadd.f32 0.0, %v587
  %v589 = vpop.f32.mrb[0].mxu0
  %v590 = vpop.f32.mrb[0].mxu0
  %v591 = vadd.f32 0.0, %v590
  %v592 = vpop.f32.mrb[0].mxu0
  %593 = vmatprep.mubr.bf16.mxu0 0
  %594 = vmatmul.mubr.bf16.gmra.mrb[0].mxu0 %v513
  %v595 = vpop.f32.mrb[0].mxu0
  %v596 = vadd.f32 0.0, %v595
  %v597 = vpop.f32.mrb[0].mxu0
  %v598 = vpop.f32.mrb[0].mxu0
  %v599 = vadd.f32 0.0, %v598
  %v600 = vpop.f32.mrb[0].mxu0
  %601 = vmatprep.mubr.bf16.mxu0 0
  %602 = vmatmul.mubr.bf16.gmra.mrb[0].mxu0 %v516
  %v603 = vpop.f32.mrb[0].mxu0
  %v604 = vadd.f32 0.0, %v603
  %v605 = vpop.f32.mrb[0].mxu0
  %v606 = vpop.f32.mrb[0].mxu0
  %v607 = vadd.f32 0.0, %v606
  %v608 = vpop.f32.mrb[0].mxu0
  %609 = vmatprep.mubr.bf16.mxu0 0
  %610 = vmatmul.mubr.bf16.gmra.mrb[0].mxu0 %v519
  %v611 = vpop.f32.mrb[0].mxu0
  %v612 = vadd.f32 0.0, %v611
  %v613 = vpop.f32.mrb[0].mxu0
  %v614 = vpop.f32.mrb[0].mxu0
  %v615 = vadd.f32 0.0, %v614
  %v616 = vpop.f32.mrb[0].mxu0
  %617 = vdwg.mxu0
  %v634 = vunpack.c.l.b16 %v66
  %v635 = vunpack.c.l.b16 %v67
  %v636 = vunpack.c.l.b16 %v68
  %v637 = vunpack.c.l.b16 %v69
  %v638 = vunpack.c.l.b16 %v70
  %v639 = vunpack.c.l.b16 %v71
  %v640 = vunpack.c.l.b16 %v72
  %v641 = vunpack.c.l.b16 %v73
  %v642 = vunpack.c.l.b16 %v74
  %v643 = vunpack.c.l.b16 %v75
  %v644 = vunpack.c.l.b16 %v76
  %v645 = vunpack.c.l.b16 %v77
  %v646 = vunpack.c.l.b16 %v78
  %v647 = vunpack.c.l.b16 %v79
  %v648 = vunpack.c.l.b16 %v80
  %v649 = vunpack.c.l.b16 %v81
  %v650 = vpack.c.b16 %v635, %v634
  %v651 = vpack.c.b16 %v637, %v636
  %v652 = vpack.c.b16 %v639, %v638
  %v653 = vpack.c.b16 %v641, %v640
  %v654 = vpack.c.b16 %v643, %v642
  %v655 = vpack.c.b16 %v645, %v644
  %v656 = vpack.c.b16 %v647, %v646
  %v657 = vpack.c.b16 %v649, %v648
  %v662 = vunpack.c.l.b16 %v94
  %v663 = vunpack.c.l.b16 %v95
  %v664 = vunpack.c.l.b16 %v96
  %v665 = vunpack.c.l.b16 %v97
  %v666 = vpack.c.b16 %v663, %v662
  %v667 = vpack.c.b16 %v665, %v664
  %v671 = vsel %vm150, %v650, 0
  %v674 = vsel %vm150, %v651, 0
  %v677 = vsel %vm150, %v652, 0
  %v680 = vsel %vm150, %v653, 0
  %v683 = vsel %vm150, %v654, 0
  %v686 = vsel %vm150, %v655, 0
  %v689 = vsel %vm150, %v656, 0
  %v692 = vsel %vm150, %v657, 0
  %694 = vmatprep.subr.bf16.mxu0 0
  %695 = vmatpush1.bf16.msra.mxu0 %v666
  %696 = vmatprep.subr.bf16.mxu0 0
  %697 = vmatpush1.bf16.msra.mxu0 %v667
  %698 = vmatprep.subr.bf16.mxu0 0
  %699 = vmatpush1.bf16.msra.mxu0 0
  %700 = vmatprep.subr.bf16.mxu0 0
  %701 = vmatpush1.bf16.msra.mxu0 0
  %702 = vmatprep.subr.bf16.mxu0 0
  %703 = vmatpush1.bf16.msra.mxu0 0
  %704 = vmatprep.subr.bf16.mxu0 0
  %705 = vmatpush1.bf16.msra.mxu0 0
  %706 = vmatprep.subr.bf16.mxu0 0
  %707 = vmatpush1.bf16.msra.mxu0 0
  %708 = vmatprep.subr.bf16.mxu0 0
  %709 = vmatpush1.bf16.msra.mxu0 0
  %710 = vmatprep.subr.bf16.mxu0 0
  %711 = vmatpush1.bf16.msra.mxu0 0
  %712 = vmatprep.subr.bf16.mxu0 0
  %713 = vmatpush1.bf16.msra.mxu0 0
  %714 = vmatprep.subr.bf16.mxu0 0
  %715 = vmatpush1.bf16.msra.mxu0 0
  %716 = vmatprep.subr.bf16.mxu0 0
  %717 = vmatpush1.bf16.msra.mxu0 0
  %718 = vmatprep.subr.bf16.mxu0 0
  %719 = vmatpush1.bf16.msra.mxu0 0
  %720 = vmatprep.subr.bf16.mxu0 0
  %721 = vmatpush1.bf16.msra.mxu0 0
  %722 = vmatprep.subr.bf16.mxu0 0
  %723 = vmatpush1.bf16.msra.mxu0 0
  %724 = vmatprep.subr.bf16.mxu0 0
  %725 = vmatpush1.bf16.msra.mxu0 0
  %726 = vmatprep.mubr.bf16.mxu0 0
  %727 = vmatmul.mubr.bf16.gmra.mrb[0].mxu0 %v671
  %v728 = vpop.f32.mrb[0].mxu0
  %v729 = vadd.f32 0.0, %v728
  %v730 = vpop.f32.mrb[0].mxu0
  %v731 = vpop.f32.mrb[0].mxu0
  %v732 = vadd.f32 0.0, %v731
  %v733 = vpop.f32.mrb[0].mxu0
  %734 = vmatprep.mubr.bf16.mxu0 0
  %735 = vmatmul.mubr.bf16.gmra.mrb[0].mxu0 %v674
  %v736 = vpop.f32.mrb[0].mxu0
  %v737 = vadd.f32 0.0, %v736
  %v738 = vpop.f32.mrb[0].mxu0
  %v739 = vpop.f32.mrb[0].mxu0
  %v740 = vadd.f32 0.0, %v739
  %v741 = vpop.f32.mrb[0].mxu0
  %742 = vmatprep.mubr.bf16.mxu0 0
  %743 = vmatmul.mubr.bf16.gmra.mrb[0].mxu0 %v677
  %v744 = vpop.f32.mrb[0].mxu0
  %v745 = vadd.f32 0.0, %v744
  %v746 = vpop.f32.mrb[0].mxu0
  %v747 = vpop.f32.mrb[0].mxu0
  %v748 = vadd.f32 0.0, %v747
  %v749 = vpop.f32.mrb[0].mxu0
  %750 = vmatprep.mubr.bf16.mxu0 0
  %751 = vmatmul.mubr.bf16.gmra.mrb[0].mxu0 %v680
  %v752 = vpop.f32.mrb[0].mxu0
  %v753 = vadd.f32 0.0, %v752
  %v754 = vpop.f32.mrb[0].mxu0
  %v755 = vpop.f32.mrb[0].mxu0
  %v756 = vadd.f32 0.0, %v755
  %v757 = vpop.f32.mrb[0].mxu0
  %758 = vmatprep.mubr.bf16.mxu0 0
  %759 = vmatmul.mubr.bf16.gmra.mrb[0].mxu0 %v683
  %v760 = vpop.f32.mrb[0].mxu0
  %v761 = vadd.f32 0.0, %v760
  %v762 = vpop.f32.mrb[0].mxu0
  %v763 = vpop.f32.mrb[0].mxu0
  %v764 = vadd.f32 0.0, %v763
  %v765 = vpop.f32.mrb[0].mxu0
  %766 = vmatprep.mubr.bf16.mxu0 0
  %767 = vmatmul.mubr.bf16.gmra.mrb[0].mxu0 %v686
  %v768 = vpop.f32.mrb[0].mxu0
  %v769 = vadd.f32 0.0, %v768
  %v770 = vpop.f32.mrb[0].mxu0
  %v771 = vpop.f32.mrb[0].mxu0
  %v772 = vadd.f32 0.0, %v771
  %v773 = vpop.f32.mrb[0].mxu0
  %774 = vmatprep.mubr.bf16.mxu0 0
  %775 = vmatmul.mubr.bf16.gmra.mrb[0].mxu0 %v689
  %v776 = vpop.f32.mrb[0].mxu0
  %v777 = vadd.f32 0.0, %v776
  %v778 = vpop.f32.mrb[0].mxu0
  %v779 = vpop.f32.mrb[0].mxu0
  %v780 = vadd.f32 0.0, %v779
  %v781 = vpop.f32.mrb[0].mxu0
  %782 = vmatprep.mubr.bf16.mxu0 0
  %783 = vmatmul.mubr.bf16.gmra.mrb[0].mxu0 %v692
  %v784 = vpop.f32.mrb[0].mxu0
  %v785 = vadd.f32 0.0, %v784
  %v786 = vpop.f32.mrb[0].mxu0
  %v787 = vpop.f32.mrb[0].mxu0
  %v788 = vadd.f32 0.0, %v787
  %v789 = vpop.f32.mrb[0].mxu0
  %790 = vdwg.mxu0
  %v791 = vld [vmem:[%s2] sm:$0x1]
  %v792 = vld [vmem:[%s3] sm:$0x1]
  %v793 = vadd.f32 %v210, %v213
  %v794 = vadd.f32 %v793, %v218
  %v795 = vadd.f32 %v794, %v221
  %v796 = vadd.f32 %v795, %v226
  %v797 = vadd.f32 %v796, %v229
  %v798 = vadd.f32 %v797, %v234
  %v799 = vadd.f32 %v798, %v237
  %v800 = vadd.f32 %v799, %v242
  %v801 = vadd.f32 %v800, %v245
  %v802 = vadd.f32 %v801, %v250
  %v803 = vadd.f32 %v802, %v253
  %v804 = vadd.f32 %v803, %v258
  %v805 = vadd.f32 %v804, %v261
  %v806 = vadd.f32 %v805, %v266
  %v807 = vadd.f32 %v806, %v269
  %v808 = vadd.f32 %v807, %v383
  %v809 = vadd.f32 %v808, %v386
  %v810 = vadd.f32 %v809, %v391
  %v811 = vadd.f32 %v810, %v394
  %v812 = vadd.f32 %v811, %v399
  %v813 = vadd.f32 %v812, %v402
  %v814 = vadd.f32 %v813, %v407
  %v815 = vadd.f32 %v814, %v410
  %v816 = vadd.f32 %v815, %v415
  %v817 = vadd.f32 %v816, %v418
  %v818 = vadd.f32 %v817, %v423
  %v819 = vadd.f32 %v818, %v426
  %v820 = vadd.f32 %v819, %v431
  %v821 = vadd.f32 %v820, %v434
  %v822 = vadd.f32 %v821, %v439
  %v823 = vadd.f32 %v822, %v442
  %v824 = vadd.f32 %v823, %v556
  %v825 = vadd.f32 %v824, %v559
  %v826 = vadd.f32 %v825, %v564
  %v827 = vadd.f32 %v826, %v567
  %v828 = vadd.f32 %v827, %v572
  %v829 = vadd.f32 %v828, %v575
  %v830 = vadd.f32 %v829, %v580
  %v831 = vadd.f32 %v830, %v583
  %v832 = vadd.f32 %v831, %v588
  %v833 = vadd.f32 %v832, %v591
  %v834 = vadd.f32 %v833, %v596
  %v835 = vadd.f32 %v834, %v599
  %v836 = vadd.f32 %v835, %v604
  %v837 = vadd.f32 %v836, %v607
  %v838 = vadd.f32 %v837, %v612
  %v839 = vadd.f32 %v838, %v615
  %v840 = vadd.f32 %v839, %v729
  %v841 = vadd.f32 %v840, %v732
  %v842 = vadd.f32 %v841, %v737
  %v843 = vadd.f32 %v842, %v740
  %v844 = vadd.f32 %v843, %v745
  %v845 = vadd.f32 %v844, %v748
  %v846 = vadd.f32 %v845, %v753
  %v847 = vadd.f32 %v846, %v756
  %v848 = vadd.f32 %v847, %v761
  %v849 = vadd.f32 %v848, %v764
  %v850 = vadd.f32 %v849, %v769
  %v851 = vadd.f32 %v850, %v772
  %v852 = vadd.f32 %v851, %v777
  %v853 = vadd.f32 %v852, %v780
  %v854 = vadd.f32 %v853, %v785
  %v855 = vadd.f32 %v854, %v788
  %v856 = vrot.slane %v855, 4
  %v857 = vadd.f32 %v855, %v856
  %v858 = vrot.slane %v857, 2
  %v859 = vadd.f32 %v857, %v858
  %v860 = vrot.slane %v859, 1
  %v861 = vadd.f32 %v859, %v860
  %v862 = vrcp.pop 512.0
  %v863 = vmul.f32 %v861, %v862
  %v864 = vsub.f32 %v210, %v863
  %v865 = vsub.f32 %v213, %v863
  %v866 = vsub.f32 %v218, %v863
  %v867 = vsub.f32 %v221, %v863
  %v868 = vsub.f32 %v226, %v863
  %v869 = vsub.f32 %v229, %v863
  %v870 = vsub.f32 %v234, %v863
  %v871 = vsub.f32 %v237, %v863
  %v872 = vsub.f32 %v242, %v863
  %v873 = vsub.f32 %v245, %v863
  %v874 = vsub.f32 %v250, %v863
  %v875 = vsub.f32 %v253, %v863
  %v876 = vsub.f32 %v258, %v863
  %v877 = vsub.f32 %v261, %v863
  %v878 = vsub.f32 %v266, %v863
  %v879 = vsub.f32 %v269, %v863
  %v880 = vsub.f32 %v383, %v863
  %v881 = vsub.f32 %v386, %v863
  %v882 = vsub.f32 %v391, %v863
  %v883 = vsub.f32 %v394, %v863
  %v884 = vsub.f32 %v399, %v863
  %v885 = vsub.f32 %v402, %v863
  %v886 = vsub.f32 %v407, %v863
  %v887 = vsub.f32 %v410, %v863
  %v888 = vsub.f32 %v415, %v863
  %v889 = vsub.f32 %v418, %v863
  %v890 = vsub.f32 %v423, %v863
  %v891 = vsub.f32 %v426, %v863
  %v892 = vsub.f32 %v431, %v863
  %v893 = vsub.f32 %v434, %v863
  %v894 = vsub.f32 %v439, %v863
  %v895 = vsub.f32 %v442, %v863
  %v896 = vsub.f32 %v556, %v863
  %v897 = vsub.f32 %v559, %v863
  %v898 = vsub.f32 %v564, %v863
  %v899 = vsub.f32 %v567, %v863
  %v900 = vsub.f32 %v572, %v863
  %v901 = vsub.f32 %v575, %v863
  %v902 = vsub.f32 %v580, %v863
  %v903 = vsub.f32 %v583, %v863
  %v904 = vsub.f32 %v588, %v863
  %v905 = vsub.f32 %v591, %v863
  %v906 = vsub.f32 %v596, %v863
  %v907 = vsub.f32 %v599, %v863
  %v908 = vsub.f32 %v604, %v863
  %v909 = vsub.f32 %v607, %v863
  %v910 = vsub.f32 %v612, %v863
  %v911 = vsub.f32 %v615, %v863
  %v912 = vsub.f32 %v729, %v863
  %v913 = vsub.f32 %v732, %v863
  %v914 = vsub.f32 %v737, %v863
  %v915 = vsub.f32 %v740, %v863
  %v916 = vsub.f32 %v745, %v863
  %v917 = vsub.f32 %v748, %v863
  %v918 = vsub.f32 %v753, %v863
  %v919 = vsub.f32 %v756, %v863
  %v920 = vsub.f32 %v761, %v863
  %v921 = vsub.f32 %v764, %v863
  %v922 = vsub.f32 %v769, %v863
  %v923 = vsub.f32 %v772, %v863
  %v924 = vsub.f32 %v777, %v863
  %v925 = vsub.f32 %v780, %v863
  %v926 = vsub.f32 %v785, %v863
  %v927 = vsub.f32 %v788, %v863
  %v928 = vmul.f32 %v864, %v864
  %v929 = vmul.f32 %v865, %v865
  %v930 = vmul.f32 %v866, %v866
  %v931 = vmul.f32 %v867, %v867
  %v932 = vmul.f32 %v868, %v868
  %v933 = vmul.f32 %v869, %v869
  %v934 = vmul.f32 %v870, %v870
  %v935 = vmul.f32 %v871, %v871
  %v936 = vmul.f32 %v872, %v872
  %v937 = vmul.f32 %v873, %v873
  %v938 = vmul.f32 %v874, %v874
  %v939 = vmul.f32 %v875, %v875
  %v940 = vmul.f32 %v876, %v876
  %v941 = vmul.f32 %v877, %v877
  %v942 = vmul.f32 %v878, %v878
  %v943 = vmul.f32 %v879, %v879
  %v944 = vmul.f32 %v880, %v880
  %v945 = vmul.f32 %v881, %v881
  %v946 = vmul.f32 %v882, %v882
  %v947 = vmul.f32 %v883, %v883
  %v948 = vmul.f32 %v884, %v884
  %v949 = vmul.f32 %v885, %v885
  %v950 = vmul.f32 %v886, %v886
  %v951 = vmul.f32 %v887, %v887
  %v952 = vmul.f32 %v888, %v888
  %v953 = vmul.f32 %v889, %v889
  %v954 = vmul.f32 %v890, %v890
  %v955 = vmul.f32 %v891, %v891
  %v956 = vmul.f32 %v892, %v892
  %v957 = vmul.f32 %v893, %v893
  %v958 = vmul.f32 %v894, %v894
  %v959 = vmul.f32 %v895, %v895
  %v960 = vmul.f32 %v896, %v896
  %v961 = vmul.f32 %v897, %v897
  %v962 = vmul.f32 %v898, %v898
  %v963 = vmul.f32 %v899, %v899
  %v964 = vmul.f32 %v900, %v900
  %v965 = vmul.f32 %v901, %v901
  %v966 = vmul.f32 %v902, %v902
  %v967 = vmul.f32 %v903, %v903
  %v968 = vmul.f32 %v904, %v904
  %v969 = vmul.f32 %v905, %v905
  %v970 = vmul.f32 %v906, %v906
  %v971 = vmul.f32 %v907, %v907
  %v972 = vmul.f32 %v908, %v908
  %v973 = vmul.f32 %v909, %v909
  %v974 = vmul.f32 %v910, %v910
  %v975 = vmul.f32 %v911, %v911
  %v976 = vmul.f32 %v912, %v912
  %v977 = vmul.f32 %v913, %v913
  %v978 = vmul.f32 %v914, %v914
  %v979 = vmul.f32 %v915, %v915
  %v980 = vmul.f32 %v916, %v916
  %v981 = vmul.f32 %v917, %v917
  %v982 = vmul.f32 %v918, %v918
  %v983 = vmul.f32 %v919, %v919
  %v984 = vmul.f32 %v920, %v920
  %v985 = vmul.f32 %v921, %v921
  %v986 = vmul.f32 %v922, %v922
  %v987 = vmul.f32 %v923, %v923
  %v988 = vmul.f32 %v924, %v924
  %v989 = vmul.f32 %v925, %v925
  %v990 = vmul.f32 %v926, %v926
  %v991 = vmul.f32 %v927, %v927
  %v992 = vadd.f32 %v928, %v929
  %v993 = vadd.f32 %v992, %v930
  %v994 = vadd.f32 %v993, %v931
  %v995 = vadd.f32 %v994, %v932
  %v996 = vadd.f32 %v995, %v933
  %v997 = vadd.f32 %v996, %v934
  %v998 = vadd.f32 %v997, %v935
  %v999 = vadd.f32 %v998, %v936
  %v1000 = vadd.f32 %v999, %v937
  %v1001 = vadd.f32 %v1000, %v938
  %v1002 = vadd.f32 %v1001, %v939
  %v1003 = vadd.f32 %v1002, %v940
  %v1004 = vadd.f32 %v1003, %v941
  %v1005 = vadd.f32 %v1004, %v942
  %v1006 = vadd.f32 %v1005, %v943
  %v1007 = vadd.f32 %v1006, %v944
  %v1008 = vadd.f32 %v1007, %v945
  %v1009 = vadd.f32 %v1008, %v946
  %v1010 = vadd.f32 %v1009, %v947
  %v1011 = vadd.f32 %v1010, %v948
  %v1012 = vadd.f32 %v1011, %v949
  %v1013 = vadd.f32 %v1012, %v950
  %v1014 = vadd.f32 %v1013, %v951
  %v1015 = vadd.f32 %v1014, %v952
  %v1016 = vadd.f32 %v1015, %v953
  %v1017 = vadd.f32 %v1016, %v954
  %v1018 = vadd.f32 %v1017, %v955
  %v1019 = vadd.f32 %v1018, %v956
  %v1020 = vadd.f32 %v1019, %v957
  %v1021 = vadd.f32 %v1020, %v958
  %v1022 = vadd.f32 %v1021, %v959
  %v1023 = vadd.f32 %v1022, %v960
  %v1024 = vadd.f32 %v1023, %v961
  %v1025 = vadd.f32 %v1024, %v962
  %v1026 = vadd.f32 %v1025, %v963
  %v1027 = vadd.f32 %v1026, %v964
  %v1028 = vadd.f32 %v1027, %v965
  %v1029 = vadd.f32 %v1028, %v966
  %v1030 = vadd.f32 %v1029, %v967
  %v1031 = vadd.f32 %v1030, %v968
  %v1032 = vadd.f32 %v1031, %v969
  %v1033 = vadd.f32 %v1032, %v970
  %v1034 = vadd.f32 %v1033, %v971
  %v1035 = vadd.f32 %v1034, %v972
  %v1036 = vadd.f32 %v1035, %v973
  %v1037 = vadd.f32 %v1036, %v974
  %v1038 = vadd.f32 %v1037, %v975
  %v1039 = vadd.f32 %v1038, %v976
  %v1040 = vadd.f32 %v1039, %v977
  %v1041 = vadd.f32 %v1040, %v978
  %v1042 = vadd.f32 %v1041, %v979
  %v1043 = vadd.f32 %v1042, %v980
  %v1044 = vadd.f32 %v1043, %v981
  %v1045 = vadd.f32 %v1044, %v982
  %v1046 = vadd.f32 %v1045, %v983
  %v1047 = vadd.f32 %v1046, %v984
  %v1048 = vadd.f32 %v1047, %v985
  %v1049 = vadd.f32 %v1048, %v986
  %v1050 = vadd.f32 %v1049, %v987
  %v1051 = vadd.f32 %v1050, %v988
  %v1052 = vadd.f32 %v1051, %v989
  %v1053 = vadd.f32 %v1052, %v990
  %v1054 = vadd.f32 %v1053, %v991
  %v1055 = vrot.slane %v1054, 4
  %v1056 = vadd.f32 %v1054, %v1055
  %v1057 = vrot.slane %v1056, 2
  %v1058 = vadd.f32 %v1056, %v1057
  %v1059 = vrot.slane %v1058, 1
  %v1060 = vadd.f32 %v1058, %v1059
  %v1061 = vmul.f32 %v1060, %v862
  %v1062 = vadd.f32 %v1061, 1e-05
  %v1063 = vrsqrt.pop %v1062
  %v1064 = vmul.f32 %v864, %v1063
  %v1065 = vmul.f32 %v865, %v1063
  %v1066 = vmul.f32 %v866, %v1063
  %v1067 = vmul.f32 %v867, %v1063
  %v1068 = vmul.f32 %v868, %v1063
  %v1069 = vmul.f32 %v869, %v1063
  %v1070 = vmul.f32 %v870, %v1063
  %v1071 = vmul.f32 %v871, %v1063
  %v1072 = vmul.f32 %v872, %v1063
  %v1073 = vmul.f32 %v873, %v1063
  %v1074 = vmul.f32 %v874, %v1063
  %v1075 = vmul.f32 %v875, %v1063
  %v1076 = vmul.f32 %v876, %v1063
  %v1077 = vmul.f32 %v877, %v1063
  %v1078 = vmul.f32 %v878, %v1063
  %v1079 = vmul.f32 %v879, %v1063
  %v1080 = vmul.f32 %v880, %v1063
  %v1081 = vmul.f32 %v881, %v1063
  %v1082 = vmul.f32 %v882, %v1063
  %v1083 = vmul.f32 %v883, %v1063
  %v1084 = vmul.f32 %v884, %v1063
  %v1085 = vmul.f32 %v885, %v1063
  %v1086 = vmul.f32 %v886, %v1063
  %v1087 = vmul.f32 %v887, %v1063
  %v1088 = vmul.f32 %v888, %v1063
  %v1089 = vmul.f32 %v889, %v1063
  %v1090 = vmul.f32 %v890, %v1063
  %v1091 = vmul.f32 %v891, %v1063
  %v1092 = vmul.f32 %v892, %v1063
  %v1093 = vmul.f32 %v893, %v1063
  %v1094 = vmul.f32 %v894, %v1063
  %v1095 = vmul.f32 %v895, %v1063
  %v1096 = vmul.f32 %v896, %v1063
  %v1097 = vmul.f32 %v897, %v1063
  %v1098 = vmul.f32 %v898, %v1063
  %v1099 = vmul.f32 %v899, %v1063
  %v1100 = vmul.f32 %v900, %v1063
  %v1101 = vmul.f32 %v901, %v1063
  %v1102 = vmul.f32 %v902, %v1063
  %v1103 = vmul.f32 %v903, %v1063
  %v1104 = vmul.f32 %v904, %v1063
  %v1105 = vmul.f32 %v905, %v1063
  %v1106 = vmul.f32 %v906, %v1063
  %v1107 = vmul.f32 %v907, %v1063
  %v1108 = vmul.f32 %v908, %v1063
  %v1109 = vmul.f32 %v909, %v1063
  %v1110 = vmul.f32 %v910, %v1063
  %v1111 = vmul.f32 %v911, %v1063
  %v1112 = vmul.f32 %v912, %v1063
  %v1113 = vmul.f32 %v913, %v1063
  %v1114 = vmul.f32 %v914, %v1063
  %v1115 = vmul.f32 %v915, %v1063
  %v1116 = vmul.f32 %v916, %v1063
  %v1117 = vmul.f32 %v917, %v1063
  %v1118 = vmul.f32 %v918, %v1063
  %v1119 = vmul.f32 %v919, %v1063
  %v1120 = vmul.f32 %v920, %v1063
  %v1121 = vmul.f32 %v921, %v1063
  %v1122 = vmul.f32 %v922, %v1063
  %v1123 = vmul.f32 %v923, %v1063
  %v1124 = vmul.f32 %v924, %v1063
  %v1125 = vmul.f32 %v925, %v1063
  %v1126 = vmul.f32 %v926, %v1063
  %v1127 = vmul.f32 %v927, %v1063
  %v1129 = vlaneseq
  %v1130 = vshrl.u32 %v1129, 7
  %v1131 = vsub.s32 0, %v1130
  %v1132 = vrot.slane %v791, %v1131
  %v1134 = vmul.f32 %v1064, %v1132
  %v1135 = vmul.f32 %v1065, %v1132
  %v1136 = vmul.f32 %v1066, %v1132
  %v1137 = vmul.f32 %v1067, %v1132
  %v1138 = vmul.f32 %v1068, %v1132
  %v1139 = vmul.f32 %v1069, %v1132
  %v1140 = vmul.f32 %v1070, %v1132
  %v1141 = vmul.f32 %v1071, %v1132
  %v1142 = vmul.f32 %v1072, %v1132
  %v1143 = vmul.f32 %v1073, %v1132
  %v1144 = vmul.f32 %v1074, %v1132
  %v1145 = vmul.f32 %v1075, %v1132
  %v1146 = vmul.f32 %v1076, %v1132
  %v1147 = vmul.f32 %v1077, %v1132
  %v1148 = vmul.f32 %v1078, %v1132
  %v1149 = vmul.f32 %v1079, %v1132
  %v1150 = vmul.f32 %v1080, %v1132
  %v1151 = vmul.f32 %v1081, %v1132
  %v1152 = vmul.f32 %v1082, %v1132
  %v1153 = vmul.f32 %v1083, %v1132
  %v1154 = vmul.f32 %v1084, %v1132
  %v1155 = vmul.f32 %v1085, %v1132
  %v1156 = vmul.f32 %v1086, %v1132
  %v1157 = vmul.f32 %v1087, %v1132
  %v1158 = vmul.f32 %v1088, %v1132
  %v1159 = vmul.f32 %v1089, %v1132
  %v1160 = vmul.f32 %v1090, %v1132
  %v1161 = vmul.f32 %v1091, %v1132
  %v1162 = vmul.f32 %v1092, %v1132
  %v1163 = vmul.f32 %v1093, %v1132
  %v1164 = vmul.f32 %v1094, %v1132
  %v1165 = vmul.f32 %v1095, %v1132
  %v1166 = vmul.f32 %v1096, %v1132
  %v1167 = vmul.f32 %v1097, %v1132
  %v1168 = vmul.f32 %v1098, %v1132
  %v1169 = vmul.f32 %v1099, %v1132
  %v1170 = vmul.f32 %v1100, %v1132
  %v1171 = vmul.f32 %v1101, %v1132
  %v1172 = vmul.f32 %v1102, %v1132
  %v1173 = vmul.f32 %v1103, %v1132
  %v1174 = vmul.f32 %v1104, %v1132
  %v1175 = vmul.f32 %v1105, %v1132
  %v1176 = vmul.f32 %v1106, %v1132
  %v1177 = vmul.f32 %v1107, %v1132
  %v1178 = vmul.f32 %v1108, %v1132
  %v1179 = vmul.f32 %v1109, %v1132
  %v1180 = vmul.f32 %v1110, %v1132
  %v1181 = vmul.f32 %v1111, %v1132
  %v1182 = vmul.f32 %v1112, %v1132
  %v1183 = vmul.f32 %v1113, %v1132
  %v1184 = vmul.f32 %v1114, %v1132
  %v1185 = vmul.f32 %v1115, %v1132
  %v1186 = vmul.f32 %v1116, %v1132
  %v1187 = vmul.f32 %v1117, %v1132
  %v1188 = vmul.f32 %v1118, %v1132
  %v1189 = vmul.f32 %v1119, %v1132
  %v1190 = vmul.f32 %v1120, %v1132
  %v1191 = vmul.f32 %v1121, %v1132
  %v1192 = vmul.f32 %v1122, %v1132
  %v1193 = vmul.f32 %v1123, %v1132
  %v1194 = vmul.f32 %v1124, %v1132
  %v1195 = vmul.f32 %v1125, %v1132
  %v1196 = vmul.f32 %v1126, %v1132
  %v1197 = vmul.f32 %v1127, %v1132
  %v1199 = vlaneseq
  %v1200 = vshrl.u32 %v1199, 7
  %v1201 = vsub.s32 0, %v1200
  %v1202 = vrot.slane %v792, %v1201
  %v1204 = vadd.f32 %v1134, %v1202
  %v1205 = vadd.f32 %v1135, %v1202
  %v1206 = vadd.f32 %v1136, %v1202
  %v1207 = vadd.f32 %v1137, %v1202
  %v1208 = vadd.f32 %v1138, %v1202
  %v1209 = vadd.f32 %v1139, %v1202
  %v1210 = vadd.f32 %v1140, %v1202
  %v1211 = vadd.f32 %v1141, %v1202
  %v1212 = vadd.f32 %v1142, %v1202
  %v1213 = vadd.f32 %v1143, %v1202
  %v1214 = vadd.f32 %v1144, %v1202
  %v1215 = vadd.f32 %v1145, %v1202
  %v1216 = vadd.f32 %v1146, %v1202
  %v1217 = vadd.f32 %v1147, %v1202
  %v1218 = vadd.f32 %v1148, %v1202
  %v1219 = vadd.f32 %v1149, %v1202
  %v1220 = vadd.f32 %v1150, %v1202
  %v1221 = vadd.f32 %v1151, %v1202
  %v1222 = vadd.f32 %v1152, %v1202
  %v1223 = vadd.f32 %v1153, %v1202
  %v1224 = vadd.f32 %v1154, %v1202
  %v1225 = vadd.f32 %v1155, %v1202
  %v1226 = vadd.f32 %v1156, %v1202
  %v1227 = vadd.f32 %v1157, %v1202
  %v1228 = vadd.f32 %v1158, %v1202
  %v1229 = vadd.f32 %v1159, %v1202
  %v1230 = vadd.f32 %v1160, %v1202
  %v1231 = vadd.f32 %v1161, %v1202
  %v1232 = vadd.f32 %v1162, %v1202
  %v1233 = vadd.f32 %v1163, %v1202
  %v1234 = vadd.f32 %v1164, %v1202
  %v1235 = vadd.f32 %v1165, %v1202
  %v1236 = vadd.f32 %v1166, %v1202
  %v1237 = vadd.f32 %v1167, %v1202
  %v1238 = vadd.f32 %v1168, %v1202
  %v1239 = vadd.f32 %v1169, %v1202
  %v1240 = vadd.f32 %v1170, %v1202
  %v1241 = vadd.f32 %v1171, %v1202
  %v1242 = vadd.f32 %v1172, %v1202
  %v1243 = vadd.f32 %v1173, %v1202
  %v1244 = vadd.f32 %v1174, %v1202
  %v1245 = vadd.f32 %v1175, %v1202
  %v1246 = vadd.f32 %v1176, %v1202
  %v1247 = vadd.f32 %v1177, %v1202
  %v1248 = vadd.f32 %v1178, %v1202
  %v1249 = vadd.f32 %v1179, %v1202
  %v1250 = vadd.f32 %v1180, %v1202
  %v1251 = vadd.f32 %v1181, %v1202
  %v1252 = vadd.f32 %v1182, %v1202
  %v1253 = vadd.f32 %v1183, %v1202
  %v1254 = vadd.f32 %v1184, %v1202
  %v1255 = vadd.f32 %v1185, %v1202
  %v1256 = vadd.f32 %v1186, %v1202
  %v1257 = vadd.f32 %v1187, %v1202
  %v1258 = vadd.f32 %v1188, %v1202
  %v1259 = vadd.f32 %v1189, %v1202
  %v1260 = vadd.f32 %v1190, %v1202
  %v1261 = vadd.f32 %v1191, %v1202
  %v1262 = vadd.f32 %v1192, %v1202
  %v1263 = vadd.f32 %v1193, %v1202
  %v1264 = vadd.f32 %v1194, %v1202
  %v1265 = vadd.f32 %v1195, %v1202
  %v1266 = vadd.f32 %v1196, %v1202
  %v1267 = vadd.f32 %v1197, %v1202
  %vm1268 = vcmp.ge.f32.partialorder %v1204, 0.0
  %vm1269 = vcmp.ge.f32.partialorder %v1205, 0.0
  %vm1270 = vcmp.ge.f32.partialorder %v1206, 0.0
  %vm1271 = vcmp.ge.f32.partialorder %v1207, 0.0
  %vm1272 = vcmp.ge.f32.partialorder %v1208, 0.0
  %vm1273 = vcmp.ge.f32.partialorder %v1209, 0.0
  %vm1274 = vcmp.ge.f32.partialorder %v1210, 0.0
  %vm1275 = vcmp.ge.f32.partialorder %v1211, 0.0
  %vm1276 = vcmp.ge.f32.partialorder %v1212, 0.0
  %vm1277 = vcmp.ge.f32.partialorder %v1213, 0.0
  %vm1278 = vcmp.ge.f32.partialorder %v1214, 0.0
  %vm1279 = vcmp.ge.f32.partialorder %v1215, 0.0
  %vm1280 = vcmp.ge.f32.partialorder %v1216, 0.0
  %vm1281 = vcmp.ge.f32.partialorder %v1217, 0.0
  %vm1282 = vcmp.ge.f32.partialorder %v1218, 0.0
  %vm1283 = vcmp.ge.f32.partialorder %v1219, 0.0
  %vm1284 = vcmp.ge.f32.partialorder %v1220, 0.0
  %vm1285 = vcmp.ge.f32.partialorder %v1221, 0.0
  %vm1286 = vcmp.ge.f32.partialorder %v1222, 0.0
  %vm1287 = vcmp.ge.f32.partialorder %v1223, 0.0
  %vm1288 = vcmp.ge.f32.partialorder %v1224, 0.0
  %vm1289 = vcmp.ge.f32.partialorder %v1225, 0.0
  %vm1290 = vcmp.ge.f32.partialorder %v1226, 0.0
  %vm1291 = vcmp.ge.f32.partialorder %v1227, 0.0
  %vm1292 = vcmp.ge.f32.partialorder %v1228, 0.0
  %vm1293 = vcmp.ge.f32.partialorder %v1229, 0.0
  %vm1294 = vcmp.ge.f32.partialorder %v1230, 0.0
  %vm1295 = vcmp.ge.f32.partialorder %v1231, 0.0
  %vm1296 = vcmp.ge.f32.partialorder %v1232, 0.0
  %vm1297 = vcmp.ge.f32.partialorder %v1233, 0.0
  %vm1298 = vcmp.ge.f32.partialorder %v1234, 0.0
  %vm1299 = vcmp.ge.f32.partialorder %v1235, 0.0
  %vm1300 = vcmp.ge.f32.partialorder %v1236, 0.0
  %vm1301 = vcmp.ge.f32.partialorder %v1237, 0.0
  %vm1302 = vcmp.ge.f32.partialorder %v1238, 0.0
  %vm1303 = vcmp.ge.f32.partialorder %v1239, 0.0
  %vm1304 = vcmp.ge.f32.partialorder %v1240, 0.0
  %vm1305 = vcmp.ge.f32.partialorder %v1241, 0.0
  %vm1306 = vcmp.ge.f32.partialorder %v1242, 0.0
  %vm1307 = vcmp.ge.f32.partialorder %v1243, 0.0
  %vm1308 = vcmp.ge.f32.partialorder %v1244, 0.0
  %vm1309 = vcmp.ge.f32.partialorder %v1245, 0.0
  %vm1310 = vcmp.ge.f32.partialorder %v1246, 0.0
  %vm1311 = vcmp.ge.f32.partialorder %v1247, 0.0
  %vm1312 = vcmp.ge.f32.partialorder %v1248, 0.0
  %vm1313 = vcmp.ge.f32.partialorder %v1249, 0.0
  %vm1314 = vcmp.ge.f32.partialorder %v1250, 0.0
  %vm1315 = vcmp.ge.f32.partialorder %v1251, 0.0
  %vm1316 = vcmp.ge.f32.partialorder %v1252, 0.0
  %vm1317 = vcmp.ge.f32.partialorder %v1253, 0.0
  %vm1318 = vcmp.ge.f32.partialorder %v1254, 0.0
  %vm1319 = vcmp.ge.f32.partialorder %v1255, 0.0
  %vm1320 = vcmp.ge.f32.partialorder %v1256, 0.0
  %vm1321 = vcmp.ge.f32.partialorder %v1257, 0.0
  %vm1322 = vcmp.ge.f32.partialorder %v1258, 0.0
  %vm1323 = vcmp.ge.f32.partialorder %v1259, 0.0
  %vm1324 = vcmp.ge.f32.partialorder %v1260, 0.0
  %vm1325 = vcmp.ge.f32.partialorder %v1261, 0.0
  %vm1326 = vcmp.ge.f32.partialorder %v1262, 0.0
  %vm1327 = vcmp.ge.f32.partialorder %v1263, 0.0
  %vm1328 = vcmp.ge.f32.partialorder %v1264, 0.0
  %vm1329 = vcmp.ge.f32.partialorder %v1265, 0.0
  %vm1330 = vcmp.ge.f32.partialorder %v1266, 0.0
  %vm1331 = vcmp.ge.f32.partialorder %v1267, 0.0
  %v1332 = vmul.f32 %v1204, 0.01
  %v1333 = vmul.f32 %v1205, 0.01
  %v1334 = vmul.f32 %v1206, 0.01
  %v1335 = vmul.f32 %v1207, 0.01
  %v1336 = vmul.f32 %v1208, 0.01
  %v1337 = vmul.f32 %v1209, 0.01
  %v1338 = vmul.f32 %v1210, 0.01
  %v1339 = vmul.f32 %v1211, 0.01
  %v1340 = vmul.f32 %v1212, 0.01
  %v1341 = vmul.f32 %v1213, 0.01
  %v1342 = vmul.f32 %v1214, 0.01
  %v1343 = vmul.f32 %v1215, 0.01
  %v1344 = vmul.f32 %v1216, 0.01
  %v1345 = vmul.f32 %v1217, 0.01
  %v1346 = vmul.f32 %v1218, 0.01
  %v1347 = vmul.f32 %v1219, 0.01
  %v1348 = vmul.f32 %v1220, 0.01
  %v1349 = vmul.f32 %v1221, 0.01
  %v1350 = vmul.f32 %v1222, 0.01
  %v1351 = vmul.f32 %v1223, 0.01
  %v1352 = vmul.f32 %v1224, 0.01
  %v1353 = vmul.f32 %v1225, 0.01
  %v1354 = vmul.f32 %v1226, 0.01
  %v1355 = vmul.f32 %v1227, 0.01
  %v1356 = vmul.f32 %v1228, 0.01
  %v1357 = vmul.f32 %v1229, 0.01
  %v1358 = vmul.f32 %v1230, 0.01
  %v1359 = vmul.f32 %v1231, 0.01
  %v1360 = vmul.f32 %v1232, 0.01
  %v1361 = vmul.f32 %v1233, 0.01
  %v1362 = vmul.f32 %v1234, 0.01
  %v1363 = vmul.f32 %v1235, 0.01
  %v1364 = vmul.f32 %v1236, 0.01
  %v1365 = vmul.f32 %v1237, 0.01
  %v1366 = vmul.f32 %v1238, 0.01
  %v1367 = vmul.f32 %v1239, 0.01
  %v1368 = vmul.f32 %v1240, 0.01
  %v1369 = vmul.f32 %v1241, 0.01
  %v1370 = vmul.f32 %v1242, 0.01
  %v1371 = vmul.f32 %v1243, 0.01
  %v1372 = vmul.f32 %v1244, 0.01
  %v1373 = vmul.f32 %v1245, 0.01
  %v1374 = vmul.f32 %v1246, 0.01
  %v1375 = vmul.f32 %v1247, 0.01
  %v1376 = vmul.f32 %v1248, 0.01
  %v1377 = vmul.f32 %v1249, 0.01
  %v1378 = vmul.f32 %v1250, 0.01
  %v1379 = vmul.f32 %v1251, 0.01
  %v1380 = vmul.f32 %v1252, 0.01
  %v1381 = vmul.f32 %v1253, 0.01
  %v1382 = vmul.f32 %v1254, 0.01
  %v1383 = vmul.f32 %v1255, 0.01
  %v1384 = vmul.f32 %v1256, 0.01
  %v1385 = vmul.f32 %v1257, 0.01
  %v1386 = vmul.f32 %v1258, 0.01
  %v1387 = vmul.f32 %v1259, 0.01
  %v1388 = vmul.f32 %v1260, 0.01
  %v1389 = vmul.f32 %v1261, 0.01
  %v1390 = vmul.f32 %v1262, 0.01
  %v1391 = vmul.f32 %v1263, 0.01
  %v1392 = vmul.f32 %v1264, 0.01
  %v1393 = vmul.f32 %v1265, 0.01
  %v1394 = vmul.f32 %v1266, 0.01
  %v1395 = vmul.f32 %v1267, 0.01
  %v1396 = vsel %vm1268, %v1204, %v1332
  %v1397 = vsel %vm1269, %v1205, %v1333
  %v1398 = vsel %vm1270, %v1206, %v1334
  %v1399 = vsel %vm1271, %v1207, %v1335
  %v1400 = vsel %vm1272, %v1208, %v1336
  %v1401 = vsel %vm1273, %v1209, %v1337
  %v1402 = vsel %vm1274, %v1210, %v1338
  %v1403 = vsel %vm1275, %v1211, %v1339
  %v1404 = vsel %vm1276, %v1212, %v1340
  %v1405 = vsel %vm1277, %v1213, %v1341
  %v1406 = vsel %vm1278, %v1214, %v1342
  %v1407 = vsel %vm1279, %v1215, %v1343
  %v1408 = vsel %vm1280, %v1216, %v1344
  %v1409 = vsel %vm1281, %v1217, %v1345
  %v1410 = vsel %vm1282, %v1218, %v1346
  %v1411 = vsel %vm1283, %v1219, %v1347
  %v1412 = vsel %vm1284, %v1220, %v1348
  %v1413 = vsel %vm1285, %v1221, %v1349
  %v1414 = vsel %vm1286, %v1222, %v1350
  %v1415 = vsel %vm1287, %v1223, %v1351
  %v1416 = vsel %vm1288, %v1224, %v1352
  %v1417 = vsel %vm1289, %v1225, %v1353
  %v1418 = vsel %vm1290, %v1226, %v1354
  %v1419 = vsel %vm1291, %v1227, %v1355
  %v1420 = vsel %vm1292, %v1228, %v1356
  %v1421 = vsel %vm1293, %v1229, %v1357
  %v1422 = vsel %vm1294, %v1230, %v1358
  %v1423 = vsel %vm1295, %v1231, %v1359
  %v1424 = vsel %vm1296, %v1232, %v1360
  %v1425 = vsel %vm1297, %v1233, %v1361
  %v1426 = vsel %vm1298, %v1234, %v1362
  %v1427 = vsel %vm1299, %v1235, %v1363
  %v1428 = vsel %vm1300, %v1236, %v1364
  %v1429 = vsel %vm1301, %v1237, %v1365
  %v1430 = vsel %vm1302, %v1238, %v1366
  %v1431 = vsel %vm1303, %v1239, %v1367
  %v1432 = vsel %vm1304, %v1240, %v1368
  %v1433 = vsel %vm1305, %v1241, %v1369
  %v1434 = vsel %vm1306, %v1242, %v1370
  %v1435 = vsel %vm1307, %v1243, %v1371
  %v1436 = vsel %vm1308, %v1244, %v1372
  %v1437 = vsel %vm1309, %v1245, %v1373
  %v1438 = vsel %vm1310, %v1246, %v1374
  %v1439 = vsel %vm1311, %v1247, %v1375
  %v1440 = vsel %vm1312, %v1248, %v1376
  %v1441 = vsel %vm1313, %v1249, %v1377
  %v1442 = vsel %vm1314, %v1250, %v1378
  %v1443 = vsel %vm1315, %v1251, %v1379
  %v1444 = vsel %vm1316, %v1252, %v1380
  %v1445 = vsel %vm1317, %v1253, %v1381
  %v1446 = vsel %vm1318, %v1254, %v1382
  %v1447 = vsel %vm1319, %v1255, %v1383
  %v1448 = vsel %vm1320, %v1256, %v1384
  %v1449 = vsel %vm1321, %v1257, %v1385
  %v1450 = vsel %vm1322, %v1258, %v1386
  %v1451 = vsel %vm1323, %v1259, %v1387
  %v1452 = vsel %vm1324, %v1260, %v1388
  %v1453 = vsel %vm1325, %v1261, %v1389
  %v1454 = vsel %vm1326, %v1262, %v1390
  %v1455 = vsel %vm1327, %v1263, %v1391
  %v1456 = vsel %vm1328, %v1264, %v1392
  %v1457 = vsel %vm1329, %v1265, %v1393
  %v1458 = vsel %vm1330, %v1266, %v1394
  %v1459 = vsel %vm1331, %v1267, %v1395
  %1460 = vst [vmem:[%s4] sm:$0xff] %v1396
  %1461 = vst [vmem:[%s4 + $0x8] sm:$0xff] %v1397
  %1462 = vst [vmem:[%s4 + $0x10] sm:$0xff] %v1398
  %1463 = vst [vmem:[%s4 + $0x18] sm:$0xff] %v1399
  %1464 = vst [vmem:[%s4 + $0x20] sm:$0xff] %v1400
  %1465 = vst [vmem:[%s4 + $0x28] sm:$0xff] %v1401
  %1466 = vst [vmem:[%s4 + $0x30] sm:$0xff] %v1402
  %1467 = vst [vmem:[%s4 + $0x38] sm:$0xff] %v1403
  %1468 = vst [vmem:[%s4 + $0x40] sm:$0xff] %v1404
  %1469 = vst [vmem:[%s4 + $0x48] sm:$0xff] %v1405
  %1470 = vst [vmem:[%s4 + $0x50] sm:$0xff] %v1406
  %1471 = vst [vmem:[%s4 + $0x58] sm:$0xff] %v1407
  %1472 = vst [vmem:[%s4 + $0x60] sm:$0xff] %v1408
  %1473 = vst [vmem:[%s4 + $0x68] sm:$0xff] %v1409
  %1474 = vst [vmem:[%s4 + $0x70] sm:$0xff] %v1410
  %1475 = vst [vmem:[%s4 + $0x78] sm:$0xff] %v1411
  %1476 = vst [vmem:[%s4 + $0x80] sm:$0xff] %v1412
  %1477 = vst [vmem:[%s4 + $0x88] sm:$0xff] %v1413
  %1478 = vst [vmem:[%s4 + $0x90] sm:$0xff] %v1414
  %1479 = vst [vmem:[%s4 + $0x98] sm:$0xff] %v1415
  %1480 = vst [vmem:[%s4 + $0xa0] sm:$0xff] %v1416
  %1481 = vst [vmem:[%s4 + $0xa8] sm:$0xff] %v1417
  %1482 = vst [vmem:[%s4 + $0xb0] sm:$0xff] %v1418
  %1483 = vst [vmem:[%s4 + $0xb8] sm:$0xff] %v1419
  %1484 = vst [vmem:[%s4 + $0xc0] sm:$0xff] %v1420
  %1485 = vst [vmem:[%s4 + $0xc8] sm:$0xff] %v1421
  %1486 = vst [vmem:[%s4 + $0xd0] sm:$0xff] %v1422
  %1487 = vst [vmem:[%s4 + $0xd8] sm:$0xff] %v1423
  %1488 = vst [vmem:[%s4 + $0xe0] sm:$0xff] %v1424
  %1489 = vst [vmem:[%s4 + $0xe8] sm:$0xff] %v1425
  %1490 = vst [vmem:[%s4 + $0xf0] sm:$0xff] %v1426
  %1491 = vst [vmem:[%s4 + $0xf8] sm:$0xff] %v1427
  %1492 = vst [vmem:[%s4 + $0x100] sm:$0xff] %v1428
  %1493 = vst [vmem:[%s4 + $0x108] sm:$0xff] %v1429
  %1494 = vst [vmem:[%s4 + $0x110] sm:$0xff] %v1430
  %1495 = vst [vmem:[%s4 + $0x118] sm:$0xff] %v1431
  %1496 = vst [vmem:[%s4 + $0x120] sm:$0xff] %v1432
  %1497 = vst [vmem:[%s4 + $0x128] sm:$0xff] %v1433
  %1498 = vst [vmem:[%s4 + $0x130] sm:$0xff] %v1434
  %1499 = vst [vmem:[%s4 + $0x138] sm:$0xff] %v1435
  %1500 = vst [vmem:[%s4 + $0x140] sm:$0xff] %v1436
  %1501 = vst [vmem:[%s4 + $0x148] sm:$0xff] %v1437
  %1502 = vst [vmem:[%s4 + $0x150] sm:$0xff] %v1438
  %1503 = vst [vmem:[%s4 + $0x158] sm:$0xff] %v1439
  %1504 = vst [vmem:[%s4 + $0x160] sm:$0xff] %v1440
  %1505 = vst [vmem:[%s4 + $0x168] sm:$0xff] %v1441
  %1506 = vst [vmem:[%s4 + $0x170] sm:$0xff] %v1442
  %1507 = vst [vmem:[%s4 + $0x178] sm:$0xff] %v1443
  %1508 = vst [vmem:[%s4 + $0x180] sm:$0xff] %v1444
  %1509 = vst [vmem:[%s4 + $0x188] sm:$0xff] %v1445
  %1510 = vst [vmem:[%s4 + $0x190] sm:$0xff] %v1446
  %1511 = vst [vmem:[%s4 + $0x198] sm:$0xff] %v1447
  %1512 = vst [vmem:[%s4 + $0x1a0] sm:$0xff] %v1448
  %1513 = vst [vmem:[%s4 + $0x1a8] sm:$0xff] %v1449
  %1514 = vst [vmem:[%s4 + $0x1b0] sm:$0xff] %v1450
  %1515 = vst [vmem:[%s4 + $0x1b8] sm:$0xff] %v1451
  %1516 = vst [vmem:[%s4 + $0x1c0] sm:$0xff] %v1452
  %1517 = vst [vmem:[%s4 + $0x1c8] sm:$0xff] %v1453
  %1518 = vst [vmem:[%s4 + $0x1d0] sm:$0xff] %v1454
  %1519 = vst [vmem:[%s4 + $0x1d8] sm:$0xff] %v1455
  %1520 = vst [vmem:[%s4 + $0x1e0] sm:$0xff] %v1456
  %1521 = vst [vmem:[%s4 + $0x1e8] sm:$0xff] %v1457
  %1522 = vst [vmem:[%s4 + $0x1f0] sm:$0xff] %v1458
  %1523 = vst [vmem:[%s4 + $0x1f8] sm:$0xff] %v1459
  // Predicated region
  $region18: #{gan_forward.14} parent=0 // pred_check
    _
  $region19: #{gan_forward.14} parent=0 // pred_check_branch
    %1525 = sbr.rel (0) target = $region21
  $region20: #{gan_forward.14} parent=0 // pred_region
    _
  $region21: #{gan_forward.14} parent=0 // pred_fallthru
    _
  // Predicated region
  $region22: #{gan_forward.14} parent=0 // pred_check
    _
  $region23: #{gan_forward.14} parent=0 // pred_check_branch
    %1527 = sbr.rel (0) target = $region25
  $region24: #{gan_forward.14} parent=0 // pred_region
    _
  $region25: #{gan_forward.14} parent=0 // pred_fallthru
    _

// kernel: gan_forward.15
$region0: #{gan_forward.15}
  #allocation0 [shape = 'u32[]', space=smem, size = 0x4, offset = 0x4, fixed_abs, tag = 'smem constant byte address 0x4 - core index']
  #allocation1 [shape = 'u32[144,128]{1,0:T(1,128)}', space=vmem, size = 0x12000, scoped, tag = 'internal scratch']
  %s0 = inlined_call_operand.vmem [shape: bf16[4,512,16], index: 0, kind: input, shape index: {}]
  %s1 = inlined_call_operand.vmem [shape: bf16[4,16,128], index: 1, kind: input, shape index: {}]
  %s2 = inlined_call_operand.vmem [shape: f32[1,128], index: 2, kind: input, shape index: {}]
  %s3 = inlined_call_operand.vmem [shape: f32[1,128], index: 3, kind: input, shape index: {}]
  %s4 = inlined_call_operand.vmem [shape: f32[2048,128], index: 4, kind: output, shape index: {}]
  %s5 = sld [smem:[#allocation0]]
  $region26: #{gan_forward.15} parent=0
    _
  %s7 = ssub.s32 1, %s5
  %s8 = scalar_select 0, %s7, %s5
  // Predicated region
  $region2: #{gan_forward.15} parent=0 // pred_check
    _
  $region3: #{gan_forward.15} parent=0 // pred_check_branch
    %10 = sbr.rel (0) target = $region5
  $region4: #{gan_forward.15} parent=0 // pred_region
    _
  $region5: #{gan_forward.15} parent=0 // pred_fallthru
    _
  // Predicated region
  $region6: #{gan_forward.15} parent=0 // pred_check
    _
  $region7: #{gan_forward.15} parent=0 // pred_check_branch
    %12 = sbr.rel (0) target = $region9
  $region8: #{gan_forward.15} parent=0 // pred_region
    _
  $region9: #{gan_forward.15} parent=0 // pred_fallthru
    _
  // Predicated region
  $region10: #{gan_forward.15} parent=0 // pred_check
    _
  $region11: #{gan_forward.15} parent=0 // pred_check_branch
    %14 = sbr.rel (0) target = $region13
  $region12: #{gan_forward.15} parent=0 // pred_region
    _
  $region13: #{gan_forward.15} parent=0 // pred_fallthru
    _
  // Predicated region
  $region14: #{gan_forward.15} parent=0 // pred_check
    _
  $region15: #{gan_forward.15} parent=0 // pred_check_branch
    %16 = sbr.rel (0) target = $region17
  $region16: #{gan_forward.15} parent=0 // pred_region
    _
  $region17: #{gan_forward.15} parent=0 // pred_fallthru
    _
  %v18 = vld [vmem:[%s0] sm:$0xf]
  %v19 = vld [vmem:[%s0 + $0x4] sm:$0xf]
  %v20 = vld [vmem:[%s0 + $0x8] sm:$0xf]
  %v21 = vld [vmem:[%s0 + $0xc] sm:$0xf]
  %v22 = vld [vmem:[%s0 + $0x10] sm:$0xf]
  %v23 = vld [vmem:[%s0 + $0x14] sm:$0xf]
  %v24 = vld [vmem:[%s0 + $0x18] sm:$0xf]
  %v25 = vld [vmem:[%s0 + $0x1c] sm:$0xf]
  %v26 = vld [vmem:[%s0 + $0x20] sm:$0xf]
  %v27 = vld [vmem:[%s0 + $0x24] sm:$0xf]
  %v28 = vld [vmem:[%s0 + $0x28] sm:$0xf]
  %v29 = vld [vmem:[%s0 + $0x2c] sm:$0xf]
  %v30 = vld [vmem:[%s0 + $0x30] sm:$0xf]
  %v31 = vld [vmem:[%s0 + $0x34] sm:$0xf]
  %v32 = vld [vmem:[%s0 + $0x38] sm:$0xf]
  %v33 = vld [vmem:[%s0 + $0x3c] sm:$0xf]
  %v34 = vld [vmem:[%s0 + $0x40] sm:$0xf]
  %v35 = vld [vmem:[%s0 + $0x44] sm:$0xf]
  %v36 = vld [vmem:[%s0 + $0x48] sm:$0xf]
  %v37 = vld [vmem:[%s0 + $0x4c] sm:$0xf]
  %v38 = vld [vmem:[%s0 + $0x50] sm:$0xf]
  %v39 = vld [vmem:[%s0 + $0x54] sm:$0xf]
  %v40 = vld [vmem:[%s0 + $0x58] sm:$0xf]
  %v41 = vld [vmem:[%s0 + $0x5c] sm:$0xf]
  %v42 = vld [vmem:[%s0 + $0x60] sm:$0xf]
  %v43 = vld [vmem:[%s0 + $0x64] sm:$0xf]
  %v44 = vld [vmem:[%s0 + $0x68] sm:$0xf]
  %v45 = vld [vmem:[%s0 + $0x6c] sm:$0xf]
  %v46 = vld [vmem:[%s0 + $0x70] sm:$0xf]
  %v47 = vld [vmem:[%s0 + $0x74] sm:$0xf]
  %v48 = vld [vmem:[%s0 + $0x78] sm:$0xf]
  %v49 = vld [vmem:[%s0 + $0x7c] sm:$0xf]
  %v50 = vld [vmem:[%s0 + $0x80] sm:$0xf]
  %v51 = vld [vmem:[%s0 + $0x84] sm:$0xf]
  %v52 = vld [vmem:[%s0 + $0x88] sm:$0xf]
  %v53 = vld [vmem:[%s0 + $0x8c] sm:$0xf]
  %v54 = vld [vmem:[%s0 + $0x90] sm:$0xf]
  %v55 = vld [vmem:[%s0 + $0x94] sm:$0xf]
  %v56 = vld [vmem:[%s0 + $0x98] sm:$0xf]
  %v57 = vld [vmem:[%s0 + $0x9c] sm:$0xf]
  %v58 = vld [vmem:[%s0 + $0xa0] sm:$0xf]
  %v59 = vld [vmem:[%s0 + $0xa4] sm:$0xf]
  %v60 = vld [vmem:[%s0 + $0xa8] sm:$0xf]
  %v61 = vld [vmem:[%s0 + $0xac] sm:$0xf]
  %v62 = vld [vmem:[%s0 + $0xb0] sm:$0xf]
  %v63 = vld [vmem:[%s0 + $0xb4] sm:$0xf]
  %v64 = vld [vmem:[%s0 + $0xb8] sm:$0xf]
  %v65 = vld [vmem:[%s0 + $0xbc] sm:$0xf]
  %v66 = vld [vmem:[%s0 + $0xc0] sm:$0xf]
  %v67 = vld [vmem:[%s0 + $0xc4] sm:$0xf]
  %v68 = vld [vmem:[%s0 + $0xc8] sm:$0xf]
  %v69 = vld [vmem:[%s0 + $0xcc] sm:$0xf]
  %v70 = vld [vmem:[%s0 + $0xd0] sm:$0xf]
  %v71 = vld [vmem:[%s0 + $0xd4] sm:$0xf]
  %v72 = vld [vmem:[%s0 + $0xd8] sm:$0xf]
  %v73 = vld [vmem:[%s0 + $0xdc] sm:$0xf]
  %v74 = vld [vmem:[%s0 + $0xe0] sm:$0xf]
  %v75 = vld [vmem:[%s0 + $0xe4] sm:$0xf]
  %v76 = vld [vmem:[%s0 + $0xe8] sm:$0xf]
  %v77 = vld [vmem:[%s0 + $0xec] sm:$0xf]
  %v78 = vld [vmem:[%s0 + $0xf0] sm:$0xf]
  %v79 = vld [vmem:[%s0 + $0xf4] sm:$0xf]
  %v80 = vld [vmem:[%s0 + $0xf8] sm:$0xf]
  %v81 = vld [vmem:[%s0 + $0xfc] sm:$0xf]
  %v82 = vld [vmem:[%s0 + $0x100] sm:$0xf]
  %v83 = vld [vmem:[%s0 + $0x104] sm:$0xf]
  %v84 = vld [vmem:[%s0 + $0x108] sm:$0xf]
  %v85 = vld [vmem:[%s0 + $0x10c] sm:$0xf]
  %v86 = vld [vmem:[%s0 + $0x110] sm:$0xf]
  %v87 = vld [vmem:[%s0 + $0x114] sm:$0xf]
  %v88 = vld [vmem:[%s0 + $0x118] sm:$0xf]
  %v89 = vld [vmem:[%s0 + $0x11c] sm:$0xf]
  %v90 = vld [vmem:[%s0 + $0x120] sm:$0xf]
  %v91 = vld [vmem:[%s0 + $0x124] sm:$0xf]
  %v92 = vld [vmem:[%s0 + $0x128] sm:$0xf]
  %v93 = vld [vmem:[%s0 + $0x12c] sm:$0xf]
  %v94 = vld [vmem:[%s0 + $0x130] sm:$0xf]
  %v95 = vld [vmem:[%s0 + $0x134] sm:$0xf]
  %v96 = vld [vmem:[%s0 + $0x138] sm:$0xf]
  %v97 = vld [vmem:[%s0 + $0x13c] sm:$0xf]
  %v98 = vld [vmem:[%s0 + $0x140] sm:$0xf]
  %v99 = vld [vmem:[%s0 + $0x144] sm:$0xf]
  %v100 = vld [vmem:[%s0 + $0x148] sm:$0xf]
  %v101 = vld [vmem:[%s0 + $0x14c] sm:$0xf]
  %v102 = vld [vmem:[%s0 + $0x150] sm:$0xf]
  %v103 = vld [vmem:[%s0 + $0x154] sm:$0xf]
  %v104 = vld [vmem:[%s0 + $0x158] sm:$0xf]
  %v105 = vld [vmem:[%s0 + $0x15c] sm:$0xf]
  %v106 = vld [vmem:[%s0 + $0x160] sm:$0xf]
  %v107 = vld [vmem:[%s0 + $0x164] sm:$0xf]
  %v108 = vld [vmem:[%s0 + $0x168] sm:$0xf]
  %v109 = vld [vmem:[%s0 + $0x16c] sm:$0xf]
  %v110 = vld [vmem:[%s0 + $0x170] sm:$0xf]
  %v111 = vld [vmem:[%s0 + $0x174] sm:$0xf]
  %v112 = vld [vmem:[%s0 + $0x178] sm:$0xf]
  %v113 = vld [vmem:[%s0 + $0x17c] sm:$0xf]
  %v114 = vld [vmem:[%s0 + $0x180] sm:$0xf]
  %v115 = vld [vmem:[%s0 + $0x184] sm:$0xf]
  %v116 = vld [vmem:[%s0 + $0x188] sm:$0xf]
  %v117 = vld [vmem:[%s0 + $0x18c] sm:$0xf]
  %v118 = vld [vmem:[%s0 + $0x190] sm:$0xf]
  %v119 = vld [vmem:[%s0 + $0x194] sm:$0xf]
  %v120 = vld [vmem:[%s0 + $0x198] sm:$0xf]
  %v121 = vld [vmem:[%s0 + $0x19c] sm:$0xf]
  %v122 = vld [vmem:[%s0 + $0x1a0] sm:$0xf]
  %v123 = vld [vmem:[%s0 + $0x1a4] sm:$0xf]
  %v124 = vld [vmem:[%s0 + $0x1a8] sm:$0xf]
  %v125 = vld [vmem:[%s0 + $0x1ac] sm:$0xf]
  %v126 = vld [vmem:[%s0 + $0x1b0] sm:$0xf]
  %v127 = vld [vmem:[%s0 + $0x1b4] sm:$0xf]
  %v128 = vld [vmem:[%s0 + $0x1b8] sm:$0xf]
  %v129 = vld [vmem:[%s0 + $0x1bc] sm:$0xf]
  %v130 = vld [vmem:[%s0 + $0x1c0] sm:$0xf]
  %v131 = vld [vmem:[%s0 + $0x1c4] sm:$0xf]
  %v132 = vld [vmem:[%s0 + $0x1c8] sm:$0xf]
  %v133 = vld [vmem:[%s0 + $0x1cc] sm:$0xf]
  %v134 = vld [vmem:[%s0 + $0x1d0] sm:$0xf]
  %v135 = vld [vmem:[%s0 + $0x1d4] sm:$0xf]
  %v136 = vld [vmem:[%s0 + $0x1d8] sm:$0xf]
  %v137 = vld [vmem:[%s0 + $0x1dc] sm:$0xf]
  %v138 = vld [vmem:[%s0 + $0x1e0] sm:$0xf]
  %v139 = vld [vmem:[%s0 + $0x1e4] sm:$0xf]
  %v140 = vld [vmem:[%s0 + $0x1e8] sm:$0xf]
  %v141 = vld [vmem:[%s0 + $0x1ec] sm:$0xf]
  %v142 = vld [vmem:[%s0 + $0x1f0] sm:$0xf]
  %v143 = vld [vmem:[%s0 + $0x1f4] sm:$0xf]
  %v144 = vld [vmem:[%s0 + $0x1f8] sm:$0xf]
  %v145 = vld [vmem:[%s0 + $0x1fc] sm:$0xf]
  %v146 = vld [vmem:[%s0 + $0x200] sm:$0xf]
  %v147 = vld [vmem:[%s0 + $0x204] sm:$0xf]
  %v148 = vld [vmem:[%s0 + $0x208] sm:$0xf]
  %v149 = vld [vmem:[%s0 + $0x20c] sm:$0xf]
  %v150 = vld [vmem:[%s0 + $0x210] sm:$0xf]
  %v151 = vld [vmem:[%s0 + $0x214] sm:$0xf]
  %v152 = vld [vmem:[%s0 + $0x218] sm:$0xf]
  %v153 = vld [vmem:[%s0 + $0x21c] sm:$0xf]
  %v154 = vld [vmem:[%s0 + $0x220] sm:$0xf]
  %v155 = vld [vmem:[%s0 + $0x224] sm:$0xf]
  %v156 = vld [vmem:[%s0 + $0x228] sm:$0xf]
  %v157 = vld [vmem:[%s0 + $0x22c] sm:$0xf]
  %v158 = vld [vmem:[%s0 + $0x230] sm:$0xf]
  %v159 = vld [vmem:[%s0 + $0x234] sm:$0xf]
  %v160 = vld [vmem:[%s0 + $0x238] sm:$0xf]
  %v161 = vld [vmem:[%s0 + $0x23c] sm:$0xf]
  %v162 = vld [vmem:[%s0 + $0x240] sm:$0xf]
  %v163 = vld [vmem:[%s0 + $0x244] sm:$0xf]
  %v164 = vld [vmem:[%s0 + $0x248] sm:$0xf]
  %v165 = vld [vmem:[%s0 + $0x24c] sm:$0xf]
  %v166 = vld [vmem:[%s0 + $0x250] sm:$0xf]
  %v167 = vld [vmem:[%s0 + $0x254] sm:$0xf]
  %v168 = vld [vmem:[%s0 + $0x258] sm:$0xf]
  %v169 = vld [vmem:[%s0 + $0x25c] sm:$0xf]
  %v170 = vld [vmem:[%s0 + $0x260] sm:$0xf]
  %v171 = vld [vmem:[%s0 + $0x264] sm:$0xf]
  %v172 = vld [vmem:[%s0 + $0x268] sm:$0xf]
  %v173 = vld [vmem:[%s0 + $0x26c] sm:$0xf]
  %v174 = vld [vmem:[%s0 + $0x270] sm:$0xf]
  %v175 = vld [vmem:[%s0 + $0x274] sm:$0xf]
  %v176 = vld [vmem:[%s0 + $0x278] sm:$0xf]
  %v177 = vld [vmem:[%s0 + $0x27c] sm:$0xf]
  %v178 = vld [vmem:[%s0 + $0x280] sm:$0xf]
  %v179 = vld [vmem:[%s0 + $0x284] sm:$0xf]
  %v180 = vld [vmem:[%s0 + $0x288] sm:$0xf]
  %v181 = vld [vmem:[%s0 + $0x28c] sm:$0xf]
  %v182 = vld [vmem:[%s0 + $0x290] sm:$0xf]
  %v183 = vld [vmem:[%s0 + $0x294] sm:$0xf]
  %v184 = vld [vmem:[%s0 + $0x298] sm:$0xf]
  %v185 = vld [vmem:[%s0 + $0x29c] sm:$0xf]
  %v186 = vld [vmem:[%s0 + $0x2a0] sm:$0xf]
  %v187 = vld [vmem:[%s0 + $0x2a4] sm:$0xf]
  %v188 = vld [vmem:[%s0 + $0x2a8] sm:$0xf]
  %v189 = vld [vmem:[%s0 + $0x2ac] sm:$0xf]
  %v190 = vld [vmem:[%s0 + $0x2b0] sm:$0xf]
  %v191 = vld [vmem:[%s0 + $0x2b4] sm:$0xf]
  %v192 = vld [vmem:[%s0 + $0x2b8] sm:$0xf]
  %v193 = vld [vmem:[%s0 + $0x2bc] sm:$0xf]
  %v194 = vld [vmem:[%s0 + $0x2c0] sm:$0xf]
  %v195 = vld [vmem:[%s0 + $0x2c4] sm:$0xf]
  %v196 = vld [vmem:[%s0 + $0x2c8] sm:$0xf]
  %v197 = vld [vmem:[%s0 + $0x2cc] sm:$0xf]
  %v198 = vld [vmem:[%s0 + $0x2d0] sm:$0xf]
  %v199 = vld [vmem:[%s0 + $0x2d4] sm:$0xf]
  %v200 = vld [vmem:[%s0 + $0x2d8] sm:$0xf]
  %v201 = vld [vmem:[%s0 + $0x2dc] sm:$0xf]
  %v202 = vld [vmem:[%s0 + $0x2e0] sm:$0xf]
  %v203 = vld [vmem:[%s0 + $0x2e4] sm:$0xf]
  %v204 = vld [vmem:[%s0 + $0x2e8] sm:$0xf]
  %v205 = vld [vmem:[%s0 + $0x2ec] sm:$0xf]
  %v206 = vld [vmem:[%s0 + $0x2f0] sm:$0xf]
  %v207 = vld [vmem:[%s0 + $0x2f4] sm:$0xf]
  %v208 = vld [vmem:[%s0 + $0x2f8] sm:$0xf]
  %v209 = vld [vmem:[%s0 + $0x2fc] sm:$0xf]
  %v210 = vld [vmem:[%s0 + $0x300] sm:$0xf]
  %v211 = vld [vmem:[%s0 + $0x304] sm:$0xf]
  %v212 = vld [vmem:[%s0 + $0x308] sm:$0xf]
  %v213 = vld [vmem:[%s0 + $0x30c] sm:$0xf]
  %v214 = vld [vmem:[%s0 + $0x310] sm:$0xf]
  %v215 = vld [vmem:[%s0 + $0x314] sm:$0xf]
  %v216 = vld [vmem:[%s0 + $0x318] sm:$0xf]
  %v217 = vld [vmem:[%s0 + $0x31c] sm:$0xf]
  %v218 = vld [vmem:[%s0 + $0x320] sm:$0xf]
  %v219 = vld [vmem:[%s0 + $0x324] sm:$0xf]
  %v220 = vld [vmem:[%s0 + $0x328] sm:$0xf]
  %v221 = vld [vmem:[%s0 + $0x32c] sm:$0xf]
  %v222 = vld [vmem:[%s0 + $0x330] sm:$0xf]
  %v223 = vld [vmem:[%s0 + $0x334] sm:$0xf]
  %v224 = vld [vmem:[%s0 + $0x338] sm:$0xf]
  %v225 = vld [vmem:[%s0 + $0x33c] sm:$0xf]
  %v226 = vld [vmem:[%s0 + $0x340] sm:$0xf]
  %v227 = vld [vmem:[%s0 + $0x344] sm:$0xf]
  %v228 = vld [vmem:[%s0 + $0x348] sm:$0xf]
  %v229 = vld [vmem:[%s0 + $0x34c] sm:$0xf]
  %v230 = vld [vmem:[%s0 + $0x350] sm:$0xf]
  %v231 = vld [vmem:[%s0 + $0x354] sm:$0xf]
  %v232 = vld [vmem:[%s0 + $0x358] sm:$0xf]
  %v233 = vld [vmem:[%s0 + $0x35c] sm:$0xf]
  %v234 = vld [vmem:[%s0 + $0x360] sm:$0xf]
  %v235 = vld [vmem:[%s0 + $0x364] sm:$0xf]
  %v236 = vld [vmem:[%s0 + $0x368] sm:$0xf]
  %v237 = vld [vmem:[%s0 + $0x36c] sm:$0xf]
  %v238 = vld [vmem:[%s0 + $0x370] sm:$0xf]
  %v239 = vld [vmem:[%s0 + $0x374] sm:$0xf]
  %v240 = vld [vmem:[%s0 + $0x378] sm:$0xf]
  %v241 = vld [vmem:[%s0 + $0x37c] sm:$0xf]
  %v242 = vld [vmem:[%s0 + $0x380] sm:$0xf]
  %v243 = vld [vmem:[%s0 + $0x384] sm:$0xf]
  %v244 = vld [vmem:[%s0 + $0x388] sm:$0xf]
  %v245 = vld [vmem:[%s0 + $0x38c] sm:$0xf]
  %v246 = vld [vmem:[%s0 + $0x390] sm:$0xf]
  %v247 = vld [vmem:[%s0 + $0x394] sm:$0xf]
  %v248 = vld [vmem:[%s0 + $0x398] sm:$0xf]
  %v249 = vld [vmem:[%s0 + $0x39c] sm:$0xf]
  %v250 = vld [vmem:[%s0 + $0x3a0] sm:$0xf]
  %v251 = vld [vmem:[%s0 + $0x3a4] sm:$0xf]
  %v252 = vld [vmem:[%s0 + $0x3a8] sm:$0xf]
  %v253 = vld [vmem:[%s0 + $0x3ac] sm:$0xf]
  %v254 = vld [vmem:[%s0 + $0x3b0] sm:$0xf]
  %v255 = vld [vmem:[%s0 + $0x3b4] sm:$0xf]
  %v256 = vld [vmem:[%s0 + $0x3b8] sm:$0xf]
  %v257 = vld [vmem:[%s0 + $0x3bc] sm:$0xf]
  %v258 = vld [vmem:[%s0 + $0x3c0] sm:$0xf]
  %v259 = vld [vmem:[%s0 + $0x3c4] sm:$0xf]
  %v260 = vld [vmem:[%s0 + $0x3c8] sm:$0xf]
  %v261 = vld [vmem:[%s0 + $0x3cc] sm:$0xf]
  %v262 = vld [vmem:[%s0 + $0x3d0] sm:$0xf]
  %v263 = vld [vmem:[%s0 + $0x3d4] sm:$0xf]
  %v264 = vld [vmem:[%s0 + $0x3d8] sm:$0xf]
  %v265 = vld [vmem:[%s0 + $0x3dc] sm:$0xf]
  %v266 = vld [vmem:[%s0 + $0x3e0] sm:$0xf]
  %v267 = vld [vmem:[%s0 + $0x3e4] sm:$0xf]
  %v268 = vld [vmem:[%s0 + $0x3e8] sm:$0xf]
  %v269 = vld [vmem:[%s0 + $0x3ec] sm:$0xf]
  %v270 = vld [vmem:[%s0 + $0x3f0] sm:$0xf]
  %v271 = vld [vmem:[%s0 + $0x3f4] sm:$0xf]
  %v272 = vld [vmem:[%s0 + $0x3f8] sm:$0xf]
  %v273 = vld [vmem:[%s0 + $0x3fc] sm:$0xf]
  %v274 = vld [vmem:[%s1] sm:$0xf]
  %v275 = vld [vmem:[%s1 + $0x4] sm:$0xf]
  %v276 = vld [vmem:[%s1 + $0x8] sm:$0xf]
  %v277 = vld [vmem:[%s1 + $0xc] sm:$0xf]
  %v278 = vld [vmem:[%s1 + $0x10] sm:$0xf]
  %v279 = vld [vmem:[%s1 + $0x14] sm:$0xf]
  %v280 = vld [vmem:[%s1 + $0x18] sm:$0xf]
  %v281 = vld [vmem:[%s1 + $0x1c] sm:$0xf]
  %v346 = vunpack.c.l.b16 %v18
  %v347 = vunpack.c.l.b16 %v19
  %v348 = vunpack.c.l.b16 %v20
  %v349 = vunpack.c.l.b16 %v21
  %v350 = vunpack.c.l.b16 %v22
  %v351 = vunpack.c.l.b16 %v23
  %v352 = vunpack.c.l.b16 %v24
  %v353 = vunpack.c.l.b16 %v25
  %v354 = vunpack.c.l.b16 %v26
  %v355 = vunpack.c.l.b16 %v27
  %v356 = vunpack.c.l.b16 %v28
  %v357 = vunpack.c.l.b16 %v29
  %v358 = vunpack.c.l.b16 %v30
  %v359 = vunpack.c.l.b16 %v31
  %v360 = vunpack.c.l.b16 %v32
  %v361 = vunpack.c.l.b16 %v33
  %v362 = vunpack.c.l.b16 %v34
  %v363 = vunpack.c.l.b16 %v35
  %v364 = vunpack.c.l.b16 %v36
  %v365 = vunpack.c.l.b16 %v37
  %v366 = vunpack.c.l.b16 %v38
  %v367 = vunpack.c.l.b16 %v39
  %v368 = vunpack.c.l.b16 %v40
  %v369 = vunpack.c.l.b16 %v41
  %v370 = vunpack.c.l.b16 %v42
  %v371 = vunpack.c.l.b16 %v43
  %v372 = vunpack.c.l.b16 %v44
  %v373 = vunpack.c.l.b16 %v45
  %v374 = vunpack.c.l.b16 %v46
  %v375 = vunpack.c.l.b16 %v47
  %v376 = vunpack.c.l.b16 %v48
  %v377 = vunpack.c.l.b16 %v49
  %v378 = vunpack.c.l.b16 %v50
  %v379 = vunpack.c.l.b16 %v51
  %v380 = vunpack.c.l.b16 %v52
  %v381 = vunpack.c.l.b16 %v53
  %v382 = vunpack.c.l.b16 %v54
  %v383 = vunpack.c.l.b16 %v55
  %v384 = vunpack.c.l.b16 %v56
  %v385 = vunpack.c.l.b16 %v57
  %v386 = vunpack.c.l.b16 %v58
  %v387 = vunpack.c.l.b16 %v59
  %v388 = vunpack.c.l.b16 %v60
  %v389 = vunpack.c.l.b16 %v61
  %v390 = vunpack.c.l.b16 %v62
  %v391 = vunpack.c.l.b16 %v63
  %v392 = vunpack.c.l.b16 %v64
  %v393 = vunpack.c.l.b16 %v65
  %v394 = vunpack.c.l.b16 %v66
  %v395 = vunpack.c.l.b16 %v67
  %v396 = vunpack.c.l.b16 %v68
  %v397 = vunpack.c.l.b16 %v69
  %v398 = vunpack.c.l.b16 %v70
  %v399 = vunpack.c.l.b16 %v71
  %v400 = vunpack.c.l.b16 %v72
  %v401 = vunpack.c.l.b16 %v73
  %v402 = vunpack.c.l.b16 %v74
  %v403 = vunpack.c.l.b16 %v75
  %v404 = vunpack.c.l.b16 %v76
  %v405 = vunpack.c.l.b16 %v77
  %v406 = vunpack.c.l.b16 %v78
  %v407 = vunpack.c.l.b16 %v79
  %v408 = vunpack.c.l.b16 %v80
  %v409 = vunpack.c.l.b16 %v81
  %v410 = vpack.c.b16 %v347, %v346
  %v411 = vpack.c.b16 %v349, %v348
  %v412 = vpack.c.b16 %v351, %v350
  %v413 = vpack.c.b16 %v353, %v352
  %v414 = vpack.c.b16 %v355, %v354
  %v415 = vpack.c.b16 %v357, %v356
  %v416 = vpack.c.b16 %v359, %v358
  %v417 = vpack.c.b16 %v361, %v360
  %v418 = vpack.c.b16 %v363, %v362
  %v419 = vpack.c.b16 %v365, %v364
  %v420 = vpack.c.b16 %v367, %v366
  %v421 = vpack.c.b16 %v369, %v368
  %v422 = vpack.c.b16 %v371, %v370
  %v423 = vpack.c.b16 %v373, %v372
  %v424 = vpack.c.b16 %v375, %v374
  %v425 = vpack.c.b16 %v377, %v376
  %v426 = vpack.c.b16 %v379, %v378
  %v427 = vpack.c.b16 %v381, %v380
  %v428 = vpack.c.b16 %v383, %v382
  %v429 = vpack.c.b16 %v385, %v384
  %v430 = vpack.c.b16 %v387, %v386
  %v431 = vpack.c.b16 %v389, %v388
  %v432 = vpack.c.b16 %v391, %v390
  %v433 = vpack.c.b16 %v393, %v392
  %v434 = vpack.c.b16 %v395, %v394
  %v435 = vpack.c.b16 %v397, %v396
  %v436 = vpack.c.b16 %v399, %v398
  %v437 = vpack.c.b16 %v401, %v400
  %v438 = vpack.c.b16 %v403, %v402
  %v439 = vpack.c.b16 %v405, %v404
  %v440 = vpack.c.b16 %v407, %v406
  %v441 = vpack.c.b16 %v409, %v408
  %v444 = vunpack.c.l.b16 %v274
  %v445 = vunpack.c.l.b16 %v275
  %v446 = vpack.c.b16 %v445, %v444
  %vm448 = vcmask 130048
  %v450 = vsel %vm448, %v410, 0
  %v453 = vsel %vm448, %v411, 0
  %v456 = vsel %vm448, %v412, 0
  %v459 = vsel %vm448, %v413, 0
  %v462 = vsel %vm448, %v414, 0
  %v465 = vsel %vm448, %v415, 0
  %v468 = vsel %vm448, %v416, 0
  %v471 = vsel %vm448, %v417, 0
  %v474 = vsel %vm448, %v418, 0
  %v477 = vsel %vm448, %v419, 0
  %v480 = vsel %vm448, %v420, 0
  %v483 = vsel %vm448, %v421, 0
  %v486 = vsel %vm448, %v422, 0
  %v489 = vsel %vm448, %v423, 0
  %v492 = vsel %vm448, %v424, 0
  %v495 = vsel %vm448, %v425, 0
  %v498 = vsel %vm448, %v426, 0
  %v501 = vsel %vm448, %v427, 0
  %v504 = vsel %vm448, %v428, 0
  %v507 = vsel %vm448, %v429, 0
  %v510 = vsel %vm448, %v430, 0
  %v513 = vsel %vm448, %v431, 0
  %v516 = vsel %vm448, %v432, 0
  %v519 = vsel %vm448, %v433, 0
  %v522 = vsel %vm448, %v434, 0
  %v525 = vsel %vm448, %v435, 0
  %v528 = vsel %vm448, %v436, 0
  %v531 = vsel %vm448, %v437, 0
  %v534 = vsel %vm448, %v438, 0
  %v537 = vsel %vm448, %v439, 0
  %v540 = vsel %vm448, %v440, 0
  %v543 = vsel %vm448, %v441, 0
  %545 = vmatprep.subr.bf16.mxu0 0
  %546 = vmatpush1.bf16.msra.mxu0 %v446
  %547 = vmatprep.subr.bf16.mxu0 0
  %548 = vmatpush1.bf16.msra.mxu0 0
  %549 = vmatprep.subr.bf16.mxu0 0
  %550 = vmatpush1.bf16.msra.mxu0 0
  %551 = vmatprep.subr.bf16.mxu0 0
  %552 = vmatpush1.bf16.msra.mxu0 0
  %553 = vmatprep.subr.bf16.mxu0 0
  %554 = vmatpush1.bf16.msra.mxu0 0
  %555 = vmatprep.subr.bf16.mxu0 0
  %556 = vmatpush1.bf16.msra.mxu0 0
  %557 = vmatprep.subr.bf16.mxu0 0
  %558 = vmatpush1.bf16.msra.mxu0 0
  %559 = vmatprep.subr.bf16.mxu0 0
  %560 = vmatpush1.bf16.msra.mxu0 0
  %561 = vmatprep.subr.bf16.mxu0 0
  %562 = vmatpush1.bf16.msra.mxu0 0
  %563 = vmatprep.subr.bf16.mxu0 0
  %564 = vmatpush1.bf16.msra.mxu0 0
  %565 = vmatprep.subr.bf16.mxu0 0
  %566 = vmatpush1.bf16.msra.mxu0 0
  %567 = vmatprep.subr.bf16.mxu0 0
  %568 = vmatpush1.bf16.msra.mxu0 0
  %569 = vmatprep.subr.bf16.mxu0 0
  %570 = vmatpush1.bf16.msra.mxu0 0
  %571 = vmatprep.subr.bf16.mxu0 0
  %572 = vmatpush1.bf16.msra.mxu0 0
  %573 = vmatprep.subr.bf16.mxu0 0
  %574 = vmatpush1.bf16.msra.mxu0 0
  %575 = vmatprep.subr.bf16.mxu0 0
  %576 = vmatpush1.bf16.msra.mxu0 0
  %577 = vmatprep.mubr.bf16.mxu0 0
  %578 = vmatmul.mubr.bf16.gmra.mrb[0].mxu0 %v450
  %v579 = vpop.f32.mrb[0].mxu0
  %v580 = vadd.f32 0.0, %v579
  %v581 = vpop.f32.mrb[0].mxu0
  %v582 = vpop.f32.mrb[0].mxu0
  %v583 = vadd.f32 0.0, %v582
  %v584 = vpop.f32.mrb[0].mxu0
  %585 = vmatprep.mubr.bf16.mxu0 0
  %586 = vmatmul.mubr.bf16.gmra.mrb[0].mxu0 %v453
  %v587 = vpop.f32.mrb[0].mxu0
  %v588 = vadd.f32 0.0, %v587
  %v589 = vpop.f32.mrb[0].mxu0
  %v590 = vpop.f32.mrb[0].mxu0
  %v591 = vadd.f32 0.0, %v590
  %v592 = vpop.f32.mrb[0].mxu0
  %593 = vmatprep.mubr.bf16.mxu0 0
  %594 = vmatmul.mubr.bf16.gmra.mrb[0].mxu0 %v456
  %v595 = vpop.f32.mrb[0].mxu0
  %v596 = vadd.f32 0.0, %v595
  %v597 = vpop.f32.mrb[0].mxu0
  %v598 = vpop.f32.mrb[0].mxu0
  %v599 = vadd.f32 0.0, %v598
  %v600 = vpop.f32.mrb[0].mxu0
  %601 = vmatprep.mubr.bf16.mxu0 0
  %602 = vmatmul.mubr.bf16.gmra.mrb[0].mxu0 %v459
  %v603 = vpop.f32.mrb[0].mxu0
  %v604 = vadd.f32 0.0, %v603
  %v605 = vpop.f32.mrb[0].mxu0
  %v606 = vpop.f32.mrb[0].mxu0
  %v607 = vadd.f32 0.0, %v606
  %v608 = vpop.f32.mrb[0].mxu0
  %609 = vmatprep.mubr.bf16.mxu0 0
  %610 = vmatmul.mubr.bf16.gmra.mrb[0].mxu0 %v462
  %v611 = vpop.f32.mrb[0].mxu0
  %v612 = vadd.f32 0.0, %v611
  %v613 = vpop.f32.mrb[0].mxu0
  %v614 = vpop.f32.mrb[0].mxu0
  %v615 = vadd.f32 0.0, %v614
  %v616 = vpop.f32.mrb[0].mxu0
  %617 = vmatprep.mubr.bf16.mxu0 0
  %618 = vmatmul.mubr.bf16.gmra.mrb[0].mxu0 %v465
  %v619 = vpop.f32.mrb[0].mxu0
  %v620 = vadd.f32 0.0, %v619
  %v621 = vpop.f32.mrb[0].mxu0
  %v622 = vpop.f32.mrb[0].mxu0
  %v623 = vadd.f32 0.0, %v622
  %v624 = vpop.f32.mrb[0].mxu0
  %625 = vmatprep.mubr.bf16.mxu0 0
  %626 = vmatmul.mubr.bf16.gmra.mrb[0].mxu0 %v468
  %v627 = vpop.f32.mrb[0].mxu0
  %v628 = vadd.f32 0.0, %v627
  %v629 = vpop.f32.mrb[0].mxu0
  %v630 = vpop.f32.mrb[0].mxu0
  %v631 = vadd.f32 0.0, %v630
  %v632 = vpop.f32.mrb[0].mxu0
  %633 = vmatprep.mubr.bf16.mxu0 0
  %634 = vmatmul.mubr.bf16.gmra.mrb[0].mxu0 %v471
  %v635 = vpop.f32.mrb[0].mxu0
  %v636 = vadd.f32 0.0, %v635
  %v637 = vpop.f32.mrb[0].mxu0
  %v638 = vpop.f32.mrb[0].mxu0
  %v639 = vadd.f32 0.0, %v638
  %v640 = vpop.f32.mrb[0].mxu0
  %641 = vmatprep.mubr.bf16.mxu0 0
  %642 = vmatmul.mubr.bf16.gmra.mrb[0].mxu0 %v474
  %v643 = vpop.f32.mrb[0].mxu0
  %v644 = vadd.f32 0.0, %v643
  %v645 = vpop.f32.mrb[0].mxu0
  %v646 = vpop.f32.mrb[0].mxu0
  %v647 = vadd.f32 0.0, %v646
  %v648 = vpop.f32.mrb[0].mxu0
  %649 = vmatprep.mubr.bf16.mxu0 0
  %650 = vmatmul.mubr.bf16.gmra.mrb[0].mxu0 %v477
  %v651 = vpop.f32.mrb[0].mxu0
  %v652 = vadd.f32 0.0, %v651
  %v653 = vpop.f32.mrb[0].mxu0
  %v654 = vpop.f32.mrb[0].mxu0
  %v655 = vadd.f32 0.0, %v654
  %v656 = vpop.f32.mrb[0].mxu0
  %657 = vmatprep.mubr.bf16.mxu0 0
  %658 = vmatmul.mubr.bf16.gmra.mrb[0].mxu0 %v480
  %v659 = vpop.f32.mrb[0].mxu0
  %v660 = vadd.f32 0.0, %v659
  %v661 = vpop.f32.mrb[0].mxu0
  %v662 = vpop.f32.mrb[0].mxu0
  %v663 = vadd.f32 0.0, %v662
  %v664 = vpop.f32.mrb[0].mxu0
  %665 = vmatprep.mubr.bf16.mxu0 0
  %666 = vmatmul.mubr.bf16.gmra.mrb[0].mxu0 %v483
  %v667 = vpop.f32.mrb[0].mxu0
  %v668 = vadd.f32 0.0, %v667
  %v669 = vpop.f32.mrb[0].mxu0
  %v670 = vpop.f32.mrb[0].mxu0
  %v671 = vadd.f32 0.0, %v670
  %v672 = vpop.f32.mrb[0].mxu0
  %673 = vmatprep.mubr.bf16.mxu0 0
  %674 = vmatmul.mubr.bf16.gmra.mrb[0].mxu0 %v486
  %v675 = vpop.f32.mrb[0].mxu0
  %v676 = vadd.f32 0.0, %v675
  %v677 = vpop.f32.mrb[0].mxu0
  %v678 = vpop.f32.mrb[0].mxu0
  %v679 = vadd.f32 0.0, %v678
  %v680 = vpop.f32.mrb[0].mxu0
  %681 = vmatprep.mubr.bf16.mxu0 0
  %682 = vmatmul.mubr.bf16.gmra.mrb[0].mxu0 %v489
  %v683 = vpop.f32.mrb[0].mxu0
  %v684 = vadd.f32 0.0, %v683
  %v685 = vpop.f32.mrb[0].mxu0
  %v686 = vpop.f32.mrb[0].mxu0
  %v687 = vadd.f32 0.0, %v686
  %v688 = vpop.f32.mrb[0].mxu0
  %689 = vmatprep.mubr.bf16.mxu0 0
  %690 = vmatmul.mubr.bf16.gmra.mrb[0].mxu0 %v492
  %v691 = vpop.f32.mrb[0].mxu0
  %v692 = vadd.f32 0.0, %v691
  %v693 = vpop.f32.mrb[0].mxu0
  %v694 = vpop.f32.mrb[0].mxu0
  %v695 = vadd.f32 0.0, %v694
  %v696 = vpop.f32.mrb[0].mxu0
  %697 = vmatprep.mubr.bf16.mxu0 0
  %698 = vmatmul.mubr.bf16.gmra.mrb[0].mxu0 %v495
  %v699 = vpop.f32.mrb[0].mxu0
  %v700 = vadd.f32 0.0, %v699
  %v701 = vpop.f32.mrb[0].mxu0
  %v702 = vpop.f32.mrb[0].mxu0
  %v703 = vadd.f32 0.0, %v702
  %v704 = vpop.f32.mrb[0].mxu0
  %705 = vmatprep.mubr.bf16.mxu0 0
  %706 = vmatmul.mubr.bf16.gmra.mrb[0].mxu0 %v498
  %v707 = vpop.f32.mrb[0].mxu0
  %v708 = vadd.f32 0.0, %v707
  %v709 = vpop.f32.mrb[0].mxu0
  %v710 = vpop.f32.mrb[0].mxu0
  %v711 = vadd.f32 0.0, %v710
  %v712 = vpop.f32.mrb[0].mxu0
  %713 = vmatprep.mubr.bf16.mxu0 0
  %714 = vmatmul.mubr.bf16.gmra.mrb[0].mxu0 %v501
  %v715 = vpop.f32.mrb[0].mxu0
  %v716 = vadd.f32 0.0, %v715
  %v717 = vpop.f32.mrb[0].mxu0
  %v718 = vpop.f32.mrb[0].mxu0
  %v719 = vadd.f32 0.0, %v718
  %v720 = vpop.f32.mrb[0].mxu0
  %721 = vmatprep.mubr.bf16.mxu0 0
  %722 = vmatmul.mubr.bf16.gmra.mrb[0].mxu0 %v504
  %v723 = vpop.f32.mrb[0].mxu0
  %v724 = vadd.f32 0.0, %v723
  %v725 = vpop.f32.mrb[0].mxu0
  %v726 = vpop.f32.mrb[0].mxu0
  %v727 = vadd.f32 0.0, %v726
  %v728 = vpop.f32.mrb[0].mxu0
  %729 = vmatprep.mubr.bf16.mxu0 0
  %730 = vmatmul.mubr.bf16.gmra.mrb[0].mxu0 %v507
  %v731 = vpop.f32.mrb[0].mxu0
  %v732 = vadd.f32 0.0, %v731
  %v733 = vpop.f32.mrb[0].mxu0
  %v734 = vpop.f32.mrb[0].mxu0
  %v735 = vadd.f32 0.0, %v734
  %v736 = vpop.f32.mrb[0].mxu0
  %737 = vmatprep.mubr.bf16.mxu0 0
  %738 = vmatmul.mubr.bf16.gmra.mrb[0].mxu0 %v510
  %v739 = vpop.f32.mrb[0].mxu0
  %v740 = vadd.f32 0.0, %v739
  %v741 = vpop.f32.mrb[0].mxu0
  %v742 = vpop.f32.mrb[0].mxu0
  %v743 = vadd.f32 0.0, %v742
  %v744 = vpop.f32.mrb[0].mxu0
  %745 = vmatprep.mubr.bf16.mxu0 0
  %746 = vmatmul.mubr.bf16.gmra.mrb[0].mxu0 %v513
  %v747 = vpop.f32.mrb[0].mxu0
  %v748 = vadd.f32 0.0, %v747
  %v749 = vpop.f32.mrb[0].mxu0
  %v750 = vpop.f32.mrb[0].mxu0
  %v751 = vadd.f32 0.0, %v750
  %v752 = vpop.f32.mrb[0].mxu0
  %753 = vmatprep.mubr.bf16.mxu0 0
  %754 = vmatmul.mubr.bf16.gmra.mrb[0].mxu0 %v516
  %v755 = vpop.f32.mrb[0].mxu0
  %v756 = vadd.f32 0.0, %v755
  %v757 = vpop.f32.mrb[0].mxu0
  %v758 = vpop.f32.mrb[0].mxu0
  %v759 = vadd.f32 0.0, %v758
  %v760 = vpop.f32.mrb[0].mxu0
  %761 = vmatprep.mubr.bf16.mxu0 0
  %762 = vmatmul.mubr.bf16.gmra.mrb[0].mxu0 %v519
  %v763 = vpop.f32.mrb[0].mxu0
  %v764 = vadd.f32 0.0, %v763
  %v765 = vpop.f32.mrb[0].mxu0
  %v766 = vpop.f32.mrb[0].mxu0
  %v767 = vadd.f32 0.0, %v766
  %v768 = vpop.f32.mrb[0].mxu0
  %769 = vmatprep.mubr.bf16.mxu0 0
  %770 = vmatmul.mubr.bf16.gmra.mrb[0].mxu0 %v522
  %v771 = vpop.f32.mrb[0].mxu0
  %v772 = vadd.f32 0.0, %v771
  %v773 = vpop.f32.mrb[0].mxu0
  %v774 = vpop.f32.mrb[0].mxu0
  %v775 = vadd.f32 0.0, %v774
  %v776 = vpop.f32.mrb[0].mxu0
  %777 = vmatprep.mubr.bf16.mxu0 0
  %778 = vmatmul.mubr.bf16.gmra.mrb[0].mxu0 %v525
  %v779 = vpop.f32.mrb[0].mxu0
  %v780 = vadd.f32 0.0, %v779
  %v781 = vpop.f32.mrb[0].mxu0
  %v782 = vpop.f32.mrb[0].mxu0
  %v783 = vadd.f32 0.0, %v782
  %v784 = vpop.f32.mrb[0].mxu0
  %785 = vmatprep.mubr.bf16.mxu0 0
  %786 = vmatmul.mubr.bf16.gmra.mrb[0].mxu0 %v528
  %v787 = vpop.f32.mrb[0].mxu0
  %v788 = vadd.f32 0.0, %v787
  %v789 = vpop.f32.mrb[0].mxu0
  %v790 = vpop.f32.mrb[0].mxu0
  %v791 = vadd.f32 0.0, %v790
  %v792 = vpop.f32.mrb[0].mxu0
  %793 = vmatprep.mubr.bf16.mxu0 0
  %794 = vmatmul.mubr.bf16.gmra.mrb[0].mxu0 %v531
  %v795 = vpop.f32.mrb[0].mxu0
  %v796 = vadd.f32 0.0, %v795
  %v797 = vpop.f32.mrb[0].mxu0
  %v798 = vpop.f32.mrb[0].mxu0
  %v799 = vadd.f32 0.0, %v798
  %v800 = vpop.f32.mrb[0].mxu0
  %801 = vmatprep.mubr.bf16.mxu0 0
  %802 = vmatmul.mubr.bf16.gmra.mrb[0].mxu0 %v534
  %v803 = vpop.f32.mrb[0].mxu0
  %v804 = vadd.f32 0.0, %v803
  %v805 = vpop.f32.mrb[0].mxu0
  %v806 = vpop.f32.mrb[0].mxu0
  %v807 = vadd.f32 0.0, %v806
  %v808 = vpop.f32.mrb[0].mxu0
  %809 = vmatprep.mubr.bf16.mxu0 0
  %810 = vmatmul.mubr.bf16.gmra.mrb[0].mxu0 %v537
  %v811 = vpop.f32.mrb[0].mxu0
  %v812 = vadd.f32 0.0, %v811
  %v813 = vpop.f32.mrb[0].mxu0
  %v814 = vpop.f32.mrb[0].mxu0
  %v815 = vadd.f32 0.0, %v814
  %v816 = vpop.f32.mrb[0].mxu0
  %817 = vmatprep.mubr.bf16.mxu0 0
  %818 = vmatmul.mubr.bf16.gmra.mrb[0].mxu0 %v540
  %v819 = vpop.f32.mrb[0].mxu0
  %v820 = vadd.f32 0.0, %v819
  %v821 = vpop.f32.mrb[0].mxu0
  %v822 = vpop.f32.mrb[0].mxu0
  %v823 = vadd.f32 0.0, %v822
  %v824 = vpop.f32.mrb[0].mxu0
  %825 = vmatprep.mubr.bf16.mxu0 0
  %826 = vmatmul.mubr.bf16.gmra.mrb[0].mxu0 %v543
  %v827 = vpop.f32.mrb[0].mxu0
  %v828 = vadd.f32 0.0, %v827
  %v829 = vpop.f32.mrb[0].mxu0
  %v830 = vpop.f32.mrb[0].mxu0
  %v831 = vadd.f32 0.0, %v830
  %v832 = vpop.f32.mrb[0].mxu0
  %833 = vdwg.mxu0
  %v898 = vunpack.c.l.b16 %v82
  %v899 = vunpack.c.l.b16 %v83
  %v900 = vunpack.c.l.b16 %v84
  %v901 = vunpack.c.l.b16 %v85
  %v902 = vunpack.c.l.b16 %v86
  %v903 = vunpack.c.l.b16 %v87
  %v904 = vunpack.c.l.b16 %v88
  %v905 = vunpack.c.l.b16 %v89
  %v906 = vunpack.c.l.b16 %v90
  %v907 = vunpack.c.l.b16 %v91
  %v908 = vunpack.c.l.b16 %v92
  %v909 = vunpack.c.l.b16 %v93
  %v910 = vunpack.c.l.b16 %v94
  %v911 = vunpack.c.l.b16 %v95
  %v912 = vunpack.c.l.b16 %v96
  %v913 = vunpack.c.l.b16 %v97
  %v914 = vunpack.c.l.b16 %v98
  %v915 = vunpack.c.l.b16 %v99
  %v916 = vunpack.c.l.b16 %v100
  %v917 = vunpack.c.l.b16 %v101
  %v918 = vunpack.c.l.b16 %v102
  %v919 = vunpack.c.l.b16 %v103
  %v920 = vunpack.c.l.b16 %v104
  %v921 = vunpack.c.l.b16 %v105
  %v922 = vunpack.c.l.b16 %v106
  %v923 = vunpack.c.l.b16 %v107
  %v924 = vunpack.c.l.b16 %v108
  %v925 = vunpack.c.l.b16 %v109
  %v926 = vunpack.c.l.b16 %v110
  %v927 = vunpack.c.l.b16 %v111
  %v928 = vunpack.c.l.b16 %v112
  %v929 = vunpack.c.l.b16 %v113
  %v930 = vunpack.c.l.b16 %v114
  %v931 = vunpack.c.l.b16 %v115
  %v932 = vunpack.c.l.b16 %v116
  %v933 = vunpack.c.l.b16 %v117
  %v934 = vunpack.c.l.b16 %v118
  %v935 = vunpack.c.l.b16 %v119
  %v936 = vunpack.c.l.b16 %v120
  %v937 = vunpack.c.l.b16 %v121
  %v938 = vunpack.c.l.b16 %v122
  %v939 = vunpack.c.l.b16 %v123
  %v940 = vunpack.c.l.b16 %v124
  %v941 = vunpack.c.l.b16 %v125
  %v942 = vunpack.c.l.b16 %v126
  %v943 = vunpack.c.l.b16 %v127
  %v944 = vunpack.c.l.b16 %v128
  %v945 = vunpack.c.l.b16 %v129
  %v946 = vunpack.c.l.b16 %v130
  %v947 = vunpack.c.l.b16 %v131
  %v948 = vunpack.c.l.b16 %v132
  %v949 = vunpack.c.l.b16 %v133
  %v950 = vunpack.c.l.b16 %v134
  %v951 = vunpack.c.l.b16 %v135
  %v952 = vunpack.c.l.b16 %v136
  %v953 = vunpack.c.l.b16 %v137
  %v954 = vunpack.c.l.b16 %v138
  %v955 = vunpack.c.l.b16 %v139
  %v956 = vunpack.c.l.b16 %v140
  %v957 = vunpack.c.l.b16 %v141
  %v958 = vunpack.c.l.b16 %v142
  %v959 = vunpack.c.l.b16 %v143
  %v960 = vunpack.c.l.b16 %v144
  %v961 = vunpack.c.l.b16 %v145
  %v962 = vpack.c.b16 %v899, %v898
  %v963 = vpack.c.b16 %v901, %v900
  %v964 = vpack.c.b16 %v903, %v902
  %v965 = vpack.c.b16 %v905, %v904
  %v966 = vpack.c.b16 %v907, %v906
  %v967 = vpack.c.b16 %v909, %v908
  %v968 = vpack.c.b16 %v911, %v910
  %v969 = vpack.c.b16 %v913, %v912
  %v970 = vpack.c.b16 %v915, %v914
  %v971 = vpack.c.b16 %v917, %v916
  %v972 = vpack.c.b16 %v919, %v918
  %v973 = vpack.c.b16 %v921, %v920
  %v974 = vpack.c.b16 %v923, %v922
  %v975 = vpack.c.b16 %v925, %v924
  %v976 = vpack.c.b16 %v927, %v926
  %v977 = vpack.c.b16 %v929, %v928
  %v978 = vpack.c.b16 %v931, %v930
  %v979 = vpack.c.b16 %v933, %v932
  %v980 = vpack.c.b16 %v935, %v934
  %v981 = vpack.c.b16 %v937, %v936
  %v982 = vpack.c.b16 %v939, %v938
  %v983 = vpack.c.b16 %v941, %v940
  %v984 = vpack.c.b16 %v943, %v942
  %v985 = vpack.c.b16 %v945, %v944
  %v986 = vpack.c.b16 %v947, %v946
  %v987 = vpack.c.b16 %v949, %v948
  %v988 = vpack.c.b16 %v951, %v950
  %v989 = vpack.c.b16 %v953, %v952
  %v990 = vpack.c.b16 %v955, %v954
  %v991 = vpack.c.b16 %v957, %v956
  %v992 = vpack.c.b16 %v959, %v958
  %v993 = vpack.c.b16 %v961, %v960
  %v996 = vunpack.c.l.b16 %v276
  %v997 = vunpack.c.l.b16 %v277
  %v998 = vpack.c.b16 %v997, %v996
  %v1001 = vsel %vm448, %v962, 0
  %v1004 = vsel %vm448, %v963, 0
  %v1007 = vsel %vm448, %v964, 0
  %v1010 = vsel %vm448, %v965, 0
  %v1013 = vsel %vm448, %v966, 0
  %v1016 = vsel %vm448, %v967, 0
  %v1019 = vsel %vm448, %v968, 0
  %v1022 = vsel %vm448, %v969, 0
  %v1025 = vsel %vm448, %v970, 0
  %v1028 = vsel %vm448, %v971, 0
  %v1031 = vsel %vm448, %v972, 0
  %v1034 = vsel %vm448, %v973, 0
  %v1037 = vsel %vm448, %v974, 0
  %v1040 = vsel %vm448, %v975, 0
  %v1043 = vsel %vm448, %v976, 0
  %v1046 = vsel %vm448, %v977, 0
  %v1049 = vsel %vm448, %v978, 0
  %v1052 = vsel %vm448, %v979, 0
  %v1055 = vsel %vm448, %v980, 0
  %v1058 = vsel %vm448, %v981, 0
  %v1061 = vsel %vm448, %v982, 0
  %v1064 = vsel %vm448, %v983, 0
  %v1067 = vsel %vm448, %v984, 0
  %v1070 = vsel %vm448, %v985, 0
  %v1073 = vsel %vm448, %v986, 0
  %v1076 = vsel %vm448, %v987, 0
  %v1079 = vsel %vm448, %v988, 0
  %v1082 = vsel %vm448, %v989, 0
  %v1085 = vsel %vm448, %v990, 0
  %v1088 = vsel %vm448, %v991, 0
  %v1091 = vsel %vm448, %v992, 0
  %v1094 = vsel %vm448, %v993, 0
  %1096 = vmatprep.subr.bf16.mxu0 0
  %1097 = vmatpush1.bf16.msra.mxu0 %v998
  %1098 = vmatprep.subr.bf16.mxu0 0
  %1099 = vmatpush1.bf16.msra.mxu0 0
  %1100 = vmatprep.subr.bf16.mxu0 0
  %1101 = vmatpush1.bf16.msra.mxu0 0
  %1102 = vmatprep.subr.bf16.mxu0 0
  %1103 = vmatpush1.bf16.msra.mxu0 0
  %1104 = vmatprep.subr.bf16.mxu0 0
  %1105 = vmatpush1.bf16.msra.mxu0 0
  %1106 = vmatprep.subr.bf16.mxu0 0
  %1107 = vmatpush1.bf16.msra.mxu0 0
  %1108 = vmatprep.subr.bf16.mxu0 0
  %1109 = vmatpush1.bf16.msra.mxu0 0
  %1110 = vmatprep.subr.bf16.mxu0 0
  %1111 = vmatpush1.bf16.msra.mxu0 0
  %1112 = vmatprep.subr.bf16.mxu0 0
  %1113 = vmatpush1.bf16.msra.mxu0 0
  %1114 = vmatprep.subr.bf16.mxu0 0
  %1115 = vmatpush1.bf16.msra.mxu0 0
  %1116 = vmatprep.subr.bf16.mxu0 0
  %1117 = vmatpush1.bf16.msra.mxu0 0
  %1118 = vmatprep.subr.bf16.mxu0 0
  %1119 = vmatpush1.bf16.msra.mxu0 0
  %1120 = vmatprep.subr.bf16.mxu0 0
  %1121 = vmatpush1.bf16.msra.mxu0 0
  %1122 = vmatprep.subr.bf16.mxu0 0
  %1123 = vmatpush1.bf16.msra.mxu0 0
  %1124 = vmatprep.subr.bf16.mxu0 0
  %1125 = vmatpush1.bf16.msra.mxu0 0
  %1126 = vmatprep.subr.bf16.mxu0 0
  %1127 = vmatpush1.bf16.msra.mxu0 0
  %1128 = vmatprep.mubr.bf16.mxu0 0
  %1129 = vmatmul.mubr.bf16.gmra.mrb[0].mxu0 %v1001
  %v1130 = vpop.f32.mrb[0].mxu0
  %v1131 = vadd.f32 0.0, %v1130
  %v1132 = vpop.f32.mrb[0].mxu0
  %v1133 = vpop.f32.mrb[0].mxu0
  %v1134 = vadd.f32 0.0, %v1133
  %v1135 = vpop.f32.mrb[0].mxu0
  %1136 = vmatprep.mubr.bf16.mxu0 0
  %1137 = vmatmul.mubr.bf16.gmra.mrb[0].mxu0 %v1004
  %v1138 = vpop.f32.mrb[0].mxu0
  %v1139 = vadd.f32 0.0, %v1138
  %v1140 = vpop.f32.mrb[0].mxu0
  %v1141 = vpop.f32.mrb[0].mxu0
  %v1142 = vadd.f32 0.0, %v1141
  %v1143 = vpop.f32.mrb[0].mxu0
  %1144 = vmatprep.mubr.bf16.mxu0 0
  %1145 = vmatmul.mubr.bf16.gmra.mrb[0].mxu0 %v1007
  %v1146 = vpop.f32.mrb[0].mxu0
  %v1147 = vadd.f32 0.0, %v1146
  %v1148 = vpop.f32.mrb[0].mxu0
  %v1149 = vpop.f32.mrb[0].mxu0
  %v1150 = vadd.f32 0.0, %v1149
  %v1151 = vpop.f32.mrb[0].mxu0
  %1152 = vmatprep.mubr.bf16.mxu0 0
  %1153 = vmatmul.mubr.bf16.gmra.mrb[0].mxu0 %v1010
  %v1154 = vpop.f32.mrb[0].mxu0
  %v1155 = vadd.f32 0.0, %v1154
  %v1156 = vpop.f32.mrb[0].mxu0
  %v1157 = vpop.f32.mrb[0].mxu0
  %v1158 = vadd.f32 0.0, %v1157
  %v1159 = vpop.f32.mrb[0].mxu0
  %1160 = vmatprep.mubr.bf16.mxu0 0
  %1161 = vmatmul.mubr.bf16.gmra.mrb[0].mxu0 %v1013
  %v1162 = vpop.f32.mrb[0].mxu0
  %v1163 = vadd.f32 0.0, %v1162
  %v1164 = vpop.f32.mrb[0].mxu0
  %v1165 = vpop.f32.mrb[0].mxu0
  %v1166 = vadd.f32 0.0, %v1165
  %v1167 = vpop.f32.mrb[0].mxu0
  %1168 = vmatprep.mubr.bf16.mxu0 0
  %1169 = vmatmul.mubr.bf16.gmra.mrb[0].mxu0 %v1016
  %v1170 = vpop.f32.mrb[0].mxu0
  %v1171 = vadd.f32 0.0, %v1170
  %v1172 = vpop.f32.mrb[0].mxu0
  %v1173 = vpop.f32.mrb[0].mxu0
  %v1174 = vadd.f32 0.0, %v1173
  %v1175 = vpop.f32.mrb[0].mxu0
  %1176 = vmatprep.mubr.bf16.mxu0 0
  %1177 = vmatmul.mubr.bf16.gmra.mrb[0].mxu0 %v1019
  %v1178 = vpop.f32.mrb[0].mxu0
  %v1179 = vadd.f32 0.0, %v1178
  %v1180 = vpop.f32.mrb[0].mxu0
  %v1181 = vpop.f32.mrb[0].mxu0
  %v1182 = vadd.f32 0.0, %v1181
  %v1183 = vpop.f32.mrb[0].mxu0
  %1184 = vmatprep.mubr.bf16.mxu0 0
  %1185 = vmatmul.mubr.bf16.gmra.mrb[0].mxu0 %v1022
  %v1186 = vpop.f32.mrb[0].mxu0
  %v1187 = vadd.f32 0.0, %v1186
  %v1188 = vpop.f32.mrb[0].mxu0
  %v1189 = vpop.f32.mrb[0].mxu0
  %v1190 = vadd.f32 0.0, %v1189
  %v1191 = vpop.f32.mrb[0].mxu0
  %1192 = vmatprep.mubr.bf16.mxu0 0
  %1193 = vmatmul.mubr.bf16.gmra.mrb[0].mxu0 %v1025
  %v1194 = vpop.f32.mrb[0].mxu0
  %v1195 = vadd.f32 0.0, %v1194
  %v1196 = vpop.f32.mrb[0].mxu0
  %v1197 = vpop.f32.mrb[0].mxu0
  %v1198 = vadd.f32 0.0, %v1197
  %v1199 = vpop.f32.mrb[0].mxu0
  %1200 = vmatprep.mubr.bf16.mxu0 0
  %1201 = vmatmul.mubr.bf16.gmra.mrb[0].mxu0 %v1028
  %v1202 = vpop.f32.mrb[0].mxu0
  %v1203 = vadd.f32 0.0, %v1202
  %v1204 = vpop.f32.mrb[0].mxu0
  %v1205 = vpop.f32.mrb[0].mxu0
  %v1206 = vadd.f32 0.0, %v1205
  %v1207 = vpop.f32.mrb[0].mxu0
  %1208 = vmatprep.mubr.bf16.mxu0 0
  %1209 = vmatmul.mubr.bf16.gmra.mrb[0].mxu0 %v1031
  %v1210 = vpop.f32.mrb[0].mxu0
  %v1211 = vadd.f32 0.0, %v1210
  %v1212 = vpop.f32.mrb[0].mxu0
  %v1213 = vpop.f32.mrb[0].mxu0
  %v1214 = vadd.f32 0.0, %v1213
  %v1215 = vpop.f32.mrb[0].mxu0
  %1216 = vmatprep.mubr.bf16.mxu0 0
  %1217 = vmatmul.mubr.bf16.gmra.mrb[0].mxu0 %v1034
  %v1218 = vpop.f32.mrb[0].mxu0
  %v1219 = vadd.f32 0.0, %v1218
  %v1220 = vpop.f32.mrb[0].mxu0
  %v1221 = vpop.f32.mrb[0].mxu0
  %v1222 = vadd.f32 0.0, %v1221
  %v1223 = vpop.f32.mrb[0].mxu0
  %1224 = vmatprep.mubr.bf16.mxu0 0
  %1225 = vmatmul.mubr.bf16.gmra.mrb[0].mxu0 %v1037
  %v1226 = vpop.f32.mrb[0].mxu0
  %v1227 = vadd.f32 0.0, %v1226
  %v1228 = vpop.f32.mrb[0].mxu0
  %v1229 = vpop.f32.mrb[0].mxu0
  %v1230 = vadd.f32 0.0, %v1229
  %v1231 = vpop.f32.mrb[0].mxu0
  %1232 = vmatprep.mubr.bf16.mxu0 0
  %1233 = vmatmul.mubr.bf16.gmra.mrb[0].mxu0 %v1040
  %v1234 = vpop.f32.mrb[0].mxu0
  %v1235 = vadd.f32 0.0, %v1234
  %v1236 = vpop.f32.mrb[0].mxu0
  %v1237 = vpop.f32.mrb[0].mxu0
  %v1238 = vadd.f32 0.0, %v1237
  %v1239 = vpop.f32.mrb[0].mxu0
  %1240 = vmatprep.mubr.bf16.mxu0 0
  %1241 = vmatmul.mubr.bf16.gmra.mrb[0].mxu0 %v1043
  %v1242 = vpop.f32.mrb[0].mxu0
  %v1243 = vadd.f32 0.0, %v1242
  %v1244 = vpop.f32.mrb[0].mxu0
  %v1245 = vpop.f32.mrb[0].mxu0
  %v1246 = vadd.f32 0.0, %v1245
  %v1247 = vpop.f32.mrb[0].mxu0
  %1248 = vmatprep.mubr.bf16.mxu0 0
  %1249 = vmatmul.mubr.bf16.gmra.mrb[0].mxu0 %v1046
  %v1250 = vpop.f32.mrb[0].mxu0
  %v1251 = vadd.f32 0.0, %v1250
  %v1252 = vpop.f32.mrb[0].mxu0
  %v1253 = vpop.f32.mrb[0].mxu0
  %v1254 = vadd.f32 0.0, %v1253
  %v1255 = vpop.f32.mrb[0].mxu0
  %1256 = vmatprep.mubr.bf16.mxu0 0
  %1257 = vmatmul.mubr.bf16.gmra.mrb[0].mxu0 %v1049
  %v1258 = vpop.f32.mrb[0].mxu0
  %v1259 = vadd.f32 0.0, %v1258
  %v1260 = vpop.f32.mrb[0].mxu0
  %v1261 = vpop.f32.mrb[0].mxu0
  %v1262 = vadd.f32 0.0, %v1261
  %v1263 = vpop.f32.mrb[0].mxu0
  %1264 = vmatprep.mubr.bf16.mxu0 0
  %1265 = vmatmul.mubr.bf16.gmra.mrb[0].mxu0 %v1052
  %v1266 = vpop.f32.mrb[0].mxu0
  %v1267 = vadd.f32 0.0, %v1266
  %v1268 = vpop.f32.mrb[0].mxu0
  %v1269 = vpop.f32.mrb[0].mxu0
  %v1270 = vadd.f32 0.0, %v1269
  %v1271 = vpop.f32.mrb[0].mxu0
  %1272 = vmatprep.mubr.bf16.mxu0 0
  %1273 = vmatmul.mubr.bf16.gmra.mrb[0].mxu0 %v1055
  %v1274 = vpop.f32.mrb[0].mxu0
  %v1275 = vadd.f32 0.0, %v1274
  %v1276 = vpop.f32.mrb[0].mxu0
  %v1277 = vpop.f32.mrb[0].mxu0
  %v1278 = vadd.f32 0.0, %v1277
  %v1279 = vpop.f32.mrb[0].mxu0
  %1280 = vmatprep.mubr.bf16.mxu0 0
  %1281 = vmatmul.mubr.bf16.gmra.mrb[0].mxu0 %v1058
  %v1282 = vpop.f32.mrb[0].mxu0
  %v1283 = vadd.f32 0.0, %v1282
  %v1284 = vpop.f32.mrb[0].mxu0
  %v1285 = vpop.f32.mrb[0].mxu0
  %v1286 = vadd.f32 0.0, %v1285
  %v1287 = vpop.f32.mrb[0].mxu0
  %1288 = vmatprep.mubr.bf16.mxu0 0
  %1289 = vmatmul.mubr.bf16.gmra.mrb[0].mxu0 %v1061
  %v1290 = vpop.f32.mrb[0].mxu0
  %v1291 = vadd.f32 0.0, %v1290
  %v1292 = vpop.f32.mrb[0].mxu0
  %v1293 = vpop.f32.mrb[0].mxu0
  %v1294 = vadd.f32 0.0, %v1293
  %v1295 = vpop.f32.mrb[0].mxu0
  %1296 = vmatprep.mubr.bf16.mxu0 0
  %1297 = vmatmul.mubr.bf16.gmra.mrb[0].mxu0 %v1064
  %v1298 = vpop.f32.mrb[0].mxu0
  %v1299 = vadd.f32 0.0, %v1298
  %v1300 = vpop.f32.mrb[0].mxu0
  %v1301 = vpop.f32.mrb[0].mxu0
  %v1302 = vadd.f32 0.0, %v1301
  %v1303 = vpop.f32.mrb[0].mxu0
  %1304 = vmatprep.mubr.bf16.mxu0 0
  %1305 = vmatmul.mubr.bf16.gmra.mrb[0].mxu0 %v1067
  %v1306 = vpop.f32.mrb[0].mxu0
  %v1307 = vadd.f32 0.0, %v1306
  %v1308 = vpop.f32.mrb[0].mxu0
  %v1309 = vpop.f32.mrb[0].mxu0
  %v1310 = vadd.f32 0.0, %v1309
  %v1311 = vpop.f32.mrb[0].mxu0
  %1312 = vmatprep.mubr.bf16.mxu0 0
  %1313 = vmatmul.mubr.bf16.gmra.mrb[0].mxu0 %v1070
  %v1314 = vpop.f32.mrb[0].mxu0
  %v1315 = vadd.f32 0.0, %v1314
  %v1316 = vpop.f32.mrb[0].mxu0
  %v1317 = vpop.f32.mrb[0].mxu0
  %v1318 = vadd.f32 0.0, %v1317
  %v1319 = vpop.f32.mrb[0].mxu0
  %1320 = vmatprep.mubr.bf16.mxu0 0
  %1321 = vmatmul.mubr.bf16.gmra.mrb[0].mxu0 %v1073
  %v1322 = vpop.f32.mrb[0].mxu0
  %v1323 = vadd.f32 0.0, %v1322
  %v1324 = vpop.f32.mrb[0].mxu0
  %v1325 = vpop.f32.mrb[0].mxu0
  %v1326 = vadd.f32 0.0, %v1325
  %v1327 = vpop.f32.mrb[0].mxu0
  %1328 = vmatprep.mubr.bf16.mxu0 0
  %1329 = vmatmul.mubr.bf16.gmra.mrb[0].mxu0 %v1076
  %v1330 = vpop.f32.mrb[0].mxu0
  %v1331 = vadd.f32 0.0, %v1330
  %v1332 = vpop.f32.mrb[0].mxu0
  %v1333 = vpop.f32.mrb[0].mxu0
  %v1334 = vadd.f32 0.0, %v1333
  %v1335 = vpop.f32.mrb[0].mxu0
  %1336 = vmatprep.mubr.bf16.mxu0 0
  %1337 = vmatmul.mubr.bf16.gmra.mrb[0].mxu0 %v1079
  %v1338 = vpop.f32.mrb[0].mxu0
  %v1339 = vadd.f32 0.0, %v1338
  %v1340 = vpop.f32.mrb[0].mxu0
  %v1341 = vpop.f32.mrb[0].mxu0
  %v1342 = vadd.f32 0.0, %v1341
  %v1343 = vpop.f32.mrb[0].mxu0
  %1344 = vmatprep.mubr.bf16.mxu0 0
  %1345 = vmatmul.mubr.bf16.gmra.mrb[0].mxu0 %v1082
  %v1346 = vpop.f32.mrb[0].mxu0
  %v1347 = vadd.f32 0.0, %v1346
  %v1348 = vpop.f32.mrb[0].mxu0
  %v1349 = vpop.f32.mrb[0].mxu0
  %v1350 = vadd.f32 0.0, %v1349
  %v1351 = vpop.f32.mrb[0].mxu0
  %1352 = vmatprep.mubr.bf16.mxu0 0
  %1353 = vmatmul.mubr.bf16.gmra.mrb[0].mxu0 %v1085
  %v1354 = vpop.f32.mrb[0].mxu0
  %v1355 = vadd.f32 0.0, %v1354
  %v1356 = vpop.f32.mrb[0].mxu0
  %v1357 = vpop.f32.mrb[0].mxu0
  %v1358 = vadd.f32 0.0, %v1357
  %v1359 = vpop.f32.mrb[0].mxu0
  %1360 = vmatprep.mubr.bf16.mxu0 0
  %1361 = vmatmul.mubr.bf16.gmra.mrb[0].mxu0 %v1088
  %v1362 = vpop.f32.mrb[0].mxu0
  %v1363 = vadd.f32 0.0, %v1362
  %v1364 = vpop.f32.mrb[0].mxu0
  %v1365 = vpop.f32.mrb[0].mxu0
  %v1366 = vadd.f32 0.0, %v1365
  %v1367 = vpop.f32.mrb[0].mxu0
  %1368 = vmatprep.mubr.bf16.mxu0 0
  %1369 = vmatmul.mubr.bf16.gmra.mrb[0].mxu0 %v1091
  %v1370 = vpop.f32.mrb[0].mxu0
  %v1371 = vadd.f32 0.0, %v1370
  %v1372 = vpop.f32.mrb[0].mxu0
  %v1373 = vpop.f32.mrb[0].mxu0
  %v1374 = vadd.f32 0.0, %v1373
  %v1375 = vpop.f32.mrb[0].mxu0
  %1376 = vmatprep.mubr.bf16.mxu0 0
  %1377 = vmatmul.mubr.bf16.gmra.mrb[0].mxu0 %v1094
  %v1378 = vpop.f32.mrb[0].mxu0
  %v1379 = vadd.f32 0.0, %v1378
  %v1380 = vpop.f32.mrb[0].mxu0
  %v1381 = vpop.f32.mrb[0].mxu0
  %v1382 = vadd.f32 0.0, %v1381
  %v1383 = vpop.f32.mrb[0].mxu0
  %1384 = vdwg.mxu0
  %v1449 = vunpack.c.l.b16 %v146
  %v1450 = vunpack.c.l.b16 %v147
  %v1451 = vunpack.c.l.b16 %v148
  %v1452 = vunpack.c.l.b16 %v149
  %v1453 = vunpack.c.l.b16 %v150
  %v1454 = vunpack.c.l.b16 %v151
  %v1455 = vunpack.c.l.b16 %v152
  %v1456 = vunpack.c.l.b16 %v153
  %v1457 = vunpack.c.l.b16 %v154
  %v1458 = vunpack.c.l.b16 %v155
  %v1459 = vunpack.c.l.b16 %v156
  %v1460 = vunpack.c.l.b16 %v157
  %v1461 = vunpack.c.l.b16 %v158
  %v1462 = vunpack.c.l.b16 %v159
  %v1463 = vunpack.c.l.b16 %v160
  %v1464 = vunpack.c.l.b16 %v161
  %v1465 = vunpack.c.l.b16 %v162
  %v1466 = vunpack.c.l.b16 %v163
  %v1467 = vunpack.c.l.b16 %v164
  %v1468 = vunpack.c.l.b16 %v165
  %v1469 = vunpack.c.l.b16 %v166
  %v1470 = vunpack.c.l.b16 %v167
  %v1471 = vunpack.c.l.b16 %v168
  %v1472 = vunpack.c.l.b16 %v169
  %v1473 = vunpack.c.l.b16 %v170
  %v1474 = vunpack.c.l.b16 %v171
  %v1475 = vunpack.c.l.b16 %v172
  %v1476 = vunpack.c.l.b16 %v173
  %v1477 = vunpack.c.l.b16 %v174
  %v1478 = vunpack.c.l.b16 %v175
  %v1479 = vunpack.c.l.b16 %v176
  %v1480 = vunpack.c.l.b16 %v177
  %v1481 = vunpack.c.l.b16 %v178
  %v1482 = vunpack.c.l.b16 %v179
  %v1483 = vunpack.c.l.b16 %v180
  %v1484 = vunpack.c.l.b16 %v181
  %v1485 = vunpack.c.l.b16 %v182
  %v1486 = vunpack.c.l.b16 %v183
  %v1487 = vunpack.c.l.b16 %v184
  %v1488 = vunpack.c.l.b16 %v185
  %v1489 = vunpack.c.l.b16 %v186
  %v1490 = vunpack.c.l.b16 %v187
  %v1491 = vunpack.c.l.b16 %v188
  %v1492 = vunpack.c.l.b16 %v189
  %v1493 = vunpack.c.l.b16 %v190
  %v1494 = vunpack.c.l.b16 %v191
  %v1495 = vunpack.c.l.b16 %v192
  %v1496 = vunpack.c.l.b16 %v193
  %v1497 = vunpack.c.l.b16 %v194
  %v1498 = vunpack.c.l.b16 %v195
  %v1499 = vunpack.c.l.b16 %v196
  %v1500 = vunpack.c.l.b16 %v197
  %v1501 = vunpack.c.l.b16 %v198
  %v1502 = vunpack.c.l.b16 %v199
  %v1503 = vunpack.c.l.b16 %v200
  %v1504 = vunpack.c.l.b16 %v201
  %v1505 = vunpack.c.l.b16 %v202
  %v1506 = vunpack.c.l.b16 %v203
  %v1507 = vunpack.c.l.b16 %v204
  %v1508 = vunpack.c.l.b16 %v205
  %v1509 = vunpack.c.l.b16 %v206
  %v1510 = vunpack.c.l.b16 %v207
  %v1511 = vunpack.c.l.b16 %v208
  %v1512 = vunpack.c.l.b16 %v209
  %v1513 = vpack.c.b16 %v1450, %v1449
  %v1514 = vpack.c.b16 %v1452, %v1451
  %v1515 = vpack.c.b16 %v1454, %v1453
  %v1516 = vpack.c.b16 %v1456, %v1455
  %v1517 = vpack.c.b16 %v1458, %v1457
  %v1518 = vpack.c.b16 %v1460, %v1459
  %v1519 = vpack.c.b16 %v1462, %v1461
  %v1520 = vpack.c.b16 %v1464, %v1463
  %v1521 = vpack.c.b16 %v1466, %v1465
  %v1522 = vpack.c.b16 %v1468, %v1467
  %v1523 = vpack.c.b16 %v1470, %v1469
  %v1524 = vpack.c.b16 %v1472, %v1471
  %v1525 = vpack.c.b16 %v1474, %v1473
  %v1526 = vpack.c.b16 %v1476, %v1475
  %v1527 = vpack.c.b16 %v1478, %v1477
  %v1528 = vpack.c.b16 %v1480, %v1479
  %v1529 = vpack.c.b16 %v1482, %v1481
  %v1530 = vpack.c.b16 %v1484, %v1483
  %v1531 = vpack.c.b16 %v1486, %v1485
  %v1532 = vpack.c.b16 %v1488, %v1487
  %v1533 = vpack.c.b16 %v1490, %v1489
  %v1534 = vpack.c.b16 %v1492, %v1491
  %v1535 = vpack.c.b16 %v1494, %v1493
  %v1536 = vpack.c.b16 %v1496, %v1495
  %v1537 = vpack.c.b16 %v1498, %v1497
  %v1538 = vpack.c.b16 %v1500, %v1499
  %v1539 = vpack.c.b16 %v1502, %v1501
  %v1540 = vpack.c.b16 %v1504, %v1503
  %v1541 = vpack.c.b16 %v1506, %v1505
  %v1542 = vpack.c.b16 %v1508, %v1507
  %v1543 = vpack.c.b16 %v1510, %v1509
  %v1544 = vpack.c.b16 %v1512, %v1511
  %v1547 = vunpack.c.l.b16 %v278
  %v1548 = vunpack.c.l.b16 %v279
  %v1549 = vpack.c.b16 %v1548, %v1547
  %v1552 = vsel %vm448, %v1513, 0
  %v1555 = vsel %vm448, %v1514, 0
  %v1558 = vsel %vm448, %v1515, 0
  %v1561 = vsel %vm448, %v1516, 0
  %v1564 = vsel %vm448, %v1517, 0
  %v1567 = vsel %vm448, %v1518, 0
  %v1570 = vsel %vm448, %v1519, 0
  %v1573 = vsel %vm448, %v1520, 0
  %v1576 = vsel %vm448, %v1521, 0
  %v1579 = vsel %vm448, %v1522, 0
  %v1582 = vsel %vm448, %v1523, 0
  %v1585 = vsel %vm448, %v1524, 0
  %v1588 = vsel %vm448, %v1525, 0
  %v1591 = vsel %vm448, %v1526, 0
  %v1594 = vsel %vm448, %v1527, 0
  %v1597 = vsel %vm448, %v1528, 0
  %v1600 = vsel %vm448, %v1529, 0
  %v1603 = vsel %vm448, %v1530, 0
  %v1606 = vsel %vm448, %v1531, 0
  %v1609 = vsel %vm448, %v1532, 0
  %v1612 = vsel %vm448, %v1533, 0
  %v1615 = vsel %vm448, %v1534, 0
  %v1618 = vsel %vm448, %v1535, 0
  %v1621 = vsel %vm448, %v1536, 0
  %v1624 = vsel %vm448, %v1537, 0
  %v1627 = vsel %vm448, %v1538, 0
  %v1630 = vsel %vm448, %v1539, 0
  %v1633 = vsel %vm448, %v1540, 0
  %v1636 = vsel %vm448, %v1541, 0
  %v1639 = vsel %vm448, %v1542, 0
  %v1642 = vsel %vm448, %v1543, 0
  %v1645 = vsel %vm448, %v1544, 0
  %1647 = vmatprep.subr.bf16.mxu0 0
  %1648 = vmatpush1.bf16.msra.mxu0 %v1549
  %1649 = vmatprep.subr.bf16.mxu0 0
  %1650 = vmatpush1.bf16.msra.mxu0 0
  %1651 = vmatprep.subr.bf16.mxu0 0
  %1652 = vmatpush1.bf16.msra.mxu0 0
  %1653 = vmatprep.subr.bf16.mxu0 0
  %1654 = vmatpush1.bf16.msra.mxu0 0
  %1655 = vmatprep.subr.bf16.mxu0 0
  %1656 = vmatpush1.bf16.msra.mxu0 0
  %1657 = vmatprep.subr.bf16.mxu0 0
  %1658 = vmatpush1.bf16.msra.mxu0 0
  %1659 = vmatprep.subr.bf16.mxu0 0
  %1660 = vmatpush1.bf16.msra.mxu0 0
  %1661 = vmatprep.subr.bf16.mxu0 0
  %1662 = vmatpush1.bf16.msra.mxu0 0
  %1663 = vmatprep.subr.bf16.mxu0 0
  %1664 = vmatpush1.bf16.msra.mxu0 0
  %1665 = vmatprep.subr.bf16.mxu0 0
  %1666 = vmatpush1.bf16.msra.mxu0 0
  %1667 = vmatprep.subr.bf16.mxu0 0
  %1668 = vmatpush1.bf16.msra.mxu0 0
  %1669 = vmatprep.subr.bf16.mxu0 0
  %1670 = vmatpush1.bf16.msra.mxu0 0
  %1671 = vmatprep.subr.bf16.mxu0 0
  %1672 = vmatpush1.bf16.msra.mxu0 0
  %1673 = vmatprep.subr.bf16.mxu0 0
  %1674 = vmatpush1.bf16.msra.mxu0 0
  %1675 = vmatprep.subr.bf16.mxu0 0
  %1676 = vmatpush1.bf16.msra.mxu0 0
  %1677 = vmatprep.subr.bf16.mxu0 0
  %1678 = vmatpush1.bf16.msra.mxu0 0
  %1679 = vmatprep.mubr.bf16.mxu0 0
  %1680 = vmatmul.mubr.bf16.gmra.mrb[0].mxu0 %v1552
  %v1681 = vpop.f32.mrb[0].mxu0
  %v1682 = vadd.f32 0.0, %v1681
  %v1683 = vpop.f32.mrb[0].mxu0
  %v1684 = vpop.f32.mrb[0].mxu0
  %v1685 = vadd.f32 0.0, %v1684
  %v1686 = vpop.f32.mrb[0].mxu0
  %1687 = vmatprep.mubr.bf16.mxu0 0
  %1688 = vmatmul.mubr.bf16.gmra.mrb[0].mxu0 %v1555
  %v1689 = vpop.f32.mrb[0].mxu0
  %v1690 = vadd.f32 0.0, %v1689
  %v1691 = vpop.f32.mrb[0].mxu0
  %v1692 = vpop.f32.mrb[0].mxu0
  %v1693 = vadd.f32 0.0, %v1692
  %v1694 = vpop.f32.mrb[0].mxu0
  %1695 = vmatprep.mubr.bf16.mxu0 0
  %1696 = vmatmul.mubr.bf16.gmra.mrb[0].mxu0 %v1558
  %v1697 = vpop.f32.mrb[0].mxu0
  %v1698 = vadd.f32 0.0, %v1697
  %v1699 = vpop.f32.mrb[0].mxu0
  %v1700 = vpop.f32.mrb[0].mxu0
  %v1701 = vadd.f32 0.0, %v1700
  %v1702 = vpop.f32.mrb[0].mxu0
  %1703 = vmatprep.mubr.bf16.mxu0 0
  %1704 = vmatmul.mubr.bf16.gmra.mrb[0].mxu0 %v1561
  %v1705 = vpop.f32.mrb[0].mxu0
  %v1706 = vadd.f32 0.0, %v1705
  %v1707 = vpop.f32.mrb[0].mxu0
  %v1708 = vpop.f32.mrb[0].mxu0
  %v1709 = vadd.f32 0.0, %v1708
  %v1710 = vpop.f32.mrb[0].mxu0
  %1711 = vmatprep.mubr.bf16.mxu0 0
  %1712 = vmatmul.mubr.bf16.gmra.mrb[0].mxu0 %v1564
  %v1713 = vpop.f32.mrb[0].mxu0
  %v1714 = vadd.f32 0.0, %v1713
  %v1715 = vpop.f32.mrb[0].mxu0
  %v1716 = vpop.f32.mrb[0].mxu0
  %v1717 = vadd.f32 0.0, %v1716
  %v1718 = vpop.f32.mrb[0].mxu0
  %1719 = vmatprep.mubr.bf16.mxu0 0
  %1720 = vmatmul.mubr.bf16.gmra.mrb[0].mxu0 %v1567
  %v1721 = vpop.f32.mrb[0].mxu0
  %v1722 = vadd.f32 0.0, %v1721
  %v1723 = vpop.f32.mrb[0].mxu0
  %v1724 = vpop.f32.mrb[0].mxu0
  %v1725 = vadd.f32 0.0, %v1724
  %v1726 = vpop.f32.mrb[0].mxu0
  %1727 = vmatprep.mubr.bf16.mxu0 0
  %1728 = vmatmul.mubr.bf16.gmra.mrb[0].mxu0 %v1570
  %v1729 = vpop.f32.mrb[0].mxu0
  %v1730 = vadd.f32 0.0, %v1729
  %v1731 = vpop.f32.mrb[0].mxu0
  %v1732 = vpop.f32.mrb[0].mxu0
  %v1733 = vadd.f32 0.0, %v1732
  %v1734 = vpop.f32.mrb[0].mxu0
  %1735 = vmatprep.mubr.bf16.mxu0 0
  %1736 = vmatmul.mubr.bf16.gmra.mrb[0].mxu0 %v1573
  %v1737 = vpop.f32.mrb[0].mxu0
  %v1738 = vadd.f32 0.0, %v1737
  %v1739 = vpop.f32.mrb[0].mxu0
  %v1740 = vpop.f32.mrb[0].mxu0
  %v1741 = vadd.f32 0.0, %v1740
  %v1742 = vpop.f32.mrb[0].mxu0
  %1743 = vmatprep.mubr.bf16.mxu0 0
  %1744 = vmatmul.mubr.bf16.gmra.mrb[0].mxu0 %v1576
  %v1745 = vpop.f32.mrb[0].mxu0
  %v1746 = vadd.f32 0.0, %v1745
  %v1747 = vpop.f32.mrb[0].mxu0
  %v1748 = vpop.f32.mrb[0].mxu0
  %v1749 = vadd.f32 0.0, %v1748
  %v1750 = vpop.f32.mrb[0].mxu0
  %1751 = vmatprep.mubr.bf16.mxu0 0
  %1752 = vmatmul.mubr.bf16.gmra.mrb[0].mxu0 %v1579
  %v1753 = vpop.f32.mrb[0].mxu0
  %v1754 = vadd.f32 0.0, %v1753
  %v1755 = vpop.f32.mrb[0].mxu0
  %v1756 = vpop.f32.mrb[0].mxu0
  %v1757 = vadd.f32 0.0, %v1756
  %v1758 = vpop.f32.mrb[0].mxu0
  %1759 = vmatprep.mubr.bf16.mxu0 0
  %1760 = vmatmul.mubr.bf16.gmra.mrb[0].mxu0 %v1582
  %v1761 = vpop.f32.mrb[0].mxu0
  %v1762 = vadd.f32 0.0, %v1761
  %v1763 = vpop.f32.mrb[0].mxu0
  %v1764 = vpop.f32.mrb[0].mxu0
  %v1765 = vadd.f32 0.0, %v1764
  %v1766 = vpop.f32.mrb[0].mxu0
  %1767 = vmatprep.mubr.bf16.mxu0 0
  %1768 = vmatmul.mubr.bf16.gmra.mrb[0].mxu0 %v1585
  %v1769 = vpop.f32.mrb[0].mxu0
  %v1770 = vadd.f32 0.0, %v1769
  %v1771 = vpop.f32.mrb[0].mxu0
  %v1772 = vpop.f32.mrb[0].mxu0
  %v1773 = vadd.f32 0.0, %v1772
  %v1774 = vpop.f32.mrb[0].mxu0
  %1775 = vmatprep.mubr.bf16.mxu0 0
  %1776 = vmatmul.mubr.bf16.gmra.mrb[0].mxu0 %v1588
  %v1777 = vpop.f32.mrb[0].mxu0
  %v1778 = vadd.f32 0.0, %v1777
  %v1779 = vpop.f32.mrb[0].mxu0
  %v1780 = vpop.f32.mrb[0].mxu0
  %v1781 = vadd.f32 0.0, %v1780
  %v1782 = vpop.f32.mrb[0].mxu0
  %1783 = vmatprep.mubr.bf16.mxu0 0
  %1784 = vmatmul.mubr.bf16.gmra.mrb[0].mxu0 %v1591
  %v1785 = vpop.f32.mrb[0].mxu0
  %v1786 = vadd.f32 0.0, %v1785
  %v1787 = vpop.f32.mrb[0].mxu0
  %v1788 = vpop.f32.mrb[0].mxu0
  %v1789 = vadd.f32 0.0, %v1788
  %v1790 = vpop.f32.mrb[0].mxu0
  %1791 = vmatprep.mubr.bf16.mxu0 0
  %1792 = vmatmul.mubr.bf16.gmra.mrb[0].mxu0 %v1594
  %v1793 = vpop.f32.mrb[0].mxu0
  %v1794 = vadd.f32 0.0, %v1793
  %v1795 = vpop.f32.mrb[0].mxu0
  %v1796 = vpop.f32.mrb[0].mxu0
  %v1797 = vadd.f32 0.0, %v1796
  %v1798 = vpop.f32.mrb[0].mxu0
  %1799 = vmatprep.mubr.bf16.mxu0 0
  %1800 = vmatmul.mubr.bf16.gmra.mrb[0].mxu0 %v1597
  %v1801 = vpop.f32.mrb[0].mxu0
  %v1802 = vadd.f32 0.0, %v1801
  %v1803 = vpop.f32.mrb[0].mxu0
  %v1804 = vpop.f32.mrb[0].mxu0
  %v1805 = vadd.f32 0.0, %v1804
  %v1806 = vpop.f32.mrb[0].mxu0
  %1807 = vmatprep.mubr.bf16.mxu0 0
  %1808 = vmatmul.mubr.bf16.gmra.mrb[0].mxu0 %v1600
  %v1809 = vpop.f32.mrb[0].mxu0
  %v1810 = vadd.f32 0.0, %v1809
  %v1811 = vpop.f32.mrb[0].mxu0
  %v1812 = vpop.f32.mrb[0].mxu0
  %v1813 = vadd.f32 0.0, %v1812
  %v1814 = vpop.f32.mrb[0].mxu0
  %1815 = vmatprep.mubr.bf16.mxu0 0
  %1816 = vmatmul.mubr.bf16.gmra.mrb[0].mxu0 %v1603
  %v1817 = vpop.f32.mrb[0].mxu0
  %v1818 = vadd.f32 0.0, %v1817
  %v1819 = vpop.f32.mrb[0].mxu0
  %v1820 = vpop.f32.mrb[0].mxu0
  %v1821 = vadd.f32 0.0, %v1820
  %v1822 = vpop.f32.mrb[0].mxu0
  %1823 = vmatprep.mubr.bf16.mxu0 0
  %1824 = vmatmul.mubr.bf16.gmra.mrb[0].mxu0 %v1606
  %v1825 = vpop.f32.mrb[0].mxu0
  %v1826 = vadd.f32 0.0, %v1825
  %v1827 = vpop.f32.mrb[0].mxu0
  %v1828 = vpop.f32.mrb[0].mxu0
  %v1829 = vadd.f32 0.0, %v1828
  %v1830 = vpop.f32.mrb[0].mxu0
  %1831 = vmatprep.mubr.bf16.mxu0 0
  %1832 = vmatmul.mubr.bf16.gmra.mrb[0].mxu0 %v1609
  %v1833 = vpop.f32.mrb[0].mxu0
  %v1834 = vadd.f32 0.0, %v1833
  %v1835 = vpop.f32.mrb[0].mxu0
  %v1836 = vpop.f32.mrb[0].mxu0
  %v1837 = vadd.f32 0.0, %v1836
  %v1838 = vpop.f32.mrb[0].mxu0
  %1839 = vmatprep.mubr.bf16.mxu0 0
  %1840 = vmatmul.mubr.bf16.gmra.mrb[0].mxu0 %v1612
  %v1841 = vpop.f32.mrb[0].mxu0
  %v1842 = vadd.f32 0.0, %v1841
  %v1843 = vpop.f32.mrb[0].mxu0
  %v1844 = vpop.f32.mrb[0].mxu0
  %v1845 = vadd.f32 0.0, %v1844
  %v1846 = vpop.f32.mrb[0].mxu0
  %1847 = vmatprep.mubr.bf16.mxu0 0
  %1848 = vmatmul.mubr.bf16.gmra.mrb[0].mxu0 %v1615
  %v1849 = vpop.f32.mrb[0].mxu0
  %v1850 = vadd.f32 0.0, %v1849
  %v1851 = vpop.f32.mrb[0].mxu0
  %v1852 = vpop.f32.mrb[0].mxu0
  %v1853 = vadd.f32 0.0, %v1852
  %v1854 = vpop.f32.mrb[0].mxu0
  %1855 = vmatprep.mubr.bf16.mxu0 0
  %1856 = vmatmul.mubr.bf16.gmra.mrb[0].mxu0 %v1618
  %v1857 = vpop.f32.mrb[0].mxu0
  %v1858 = vadd.f32 0.0, %v1857
  %v1859 = vpop.f32.mrb[0].mxu0
  %v1860 = vpop.f32.mrb[0].mxu0
  %v1861 = vadd.f32 0.0, %v1860
  %v1862 = vpop.f32.mrb[0].mxu0
  %1863 = vmatprep.mubr.bf16.mxu0 0
  %1864 = vmatmul.mubr.bf16.gmra.mrb[0].mxu0 %v1621
  %v1865 = vpop.f32.mrb[0].mxu0
  %v1866 = vadd.f32 0.0, %v1865
  %v1867 = vpop.f32.mrb[0].mxu0
  %v1868 = vpop.f32.mrb[0].mxu0
  %v1869 = vadd.f32 0.0, %v1868
  %v1870 = vpop.f32.mrb[0].mxu0
  %1871 = vmatprep.mubr.bf16.mxu0 0
  %1872 = vmatmul.mubr.bf16.gmra.mrb[0].mxu0 %v1624
  %v1873 = vpop.f32.mrb[0].mxu0
  %v1874 = vadd.f32 0.0, %v1873
  %v1875 = vpop.f32.mrb[0].mxu0
  %v1876 = vpop.f32.mrb[0].mxu0
  %v1877 = vadd.f32 0.0, %v1876
  %v1878 = vpop.f32.mrb[0].mxu0
  %1879 = vmatprep.mubr.bf16.mxu0 0
  %1880 = vmatmul.mubr.bf16.gmra.mrb[0].mxu0 %v1627
  %v1881 = vpop.f32.mrb[0].mxu0
  %v1882 = vadd.f32 0.0, %v1881
  %v1883 = vpop.f32.mrb[0].mxu0
  %v1884 = vpop.f32.mrb[0].mxu0
  %v1885 = vadd.f32 0.0, %v1884
  %v1886 = vpop.f32.mrb[0].mxu0
  %1887 = vmatprep.mubr.bf16.mxu0 0
  %1888 = vmatmul.mubr.bf16.gmra.mrb[0].mxu0 %v1630
  %v1889 = vpop.f32.mrb[0].mxu0
  %v1890 = vadd.f32 0.0, %v1889
  %v1891 = vpop.f32.mrb[0].mxu0
  %v1892 = vpop.f32.mrb[0].mxu0
  %v1893 = vadd.f32 0.0, %v1892
  %v1894 = vpop.f32.mrb[0].mxu0
  %1895 = vmatprep.mubr.bf16.mxu0 0
  %1896 = vmatmul.mubr.bf16.gmra.mrb[0].mxu0 %v1633
  %v1897 = vpop.f32.mrb[0].mxu0
  %v1898 = vadd.f32 0.0, %v1897
  %v1899 = vpop.f32.mrb[0].mxu0
  %v1900 = vpop.f32.mrb[0].mxu0
  %v1901 = vadd.f32 0.0, %v1900
  %v1902 = vpop.f32.mrb[0].mxu0
  %1903 = vmatprep.mubr.bf16.mxu0 0
  %1904 = vmatmul.mubr.bf16.gmra.mrb[0].mxu0 %v1636
  %v1905 = vpop.f32.mrb[0].mxu0
  %v1906 = vadd.f32 0.0, %v1905
  %v1907 = vpop.f32.mrb[0].mxu0
  %v1908 = vpop.f32.mrb[0].mxu0
  %v1909 = vadd.f32 0.0, %v1908
  %v1910 = vpop.f32.mrb[0].mxu0
  %1911 = vmatprep.mubr.bf16.mxu0 0
  %1912 = vmatmul.mubr.bf16.gmra.mrb[0].mxu0 %v1639
  %v1913 = vpop.f32.mrb[0].mxu0
  %v1914 = vadd.f32 0.0, %v1913
  %v1915 = vpop.f32.mrb[0].mxu0
  %v1916 = vpop.f32.mrb[0].mxu0
  %v1917 = vadd.f32 0.0, %v1916
  %v1918 = vpop.f32.mrb[0].mxu0
  %1919 = vmatprep.mubr.bf16.mxu0 0
  %1920 = vmatmul.mubr.bf16.gmra.mrb[0].mxu0 %v1642
  %v1921 = vpop.f32.mrb[0].mxu0
  %v1922 = vadd.f32 0.0, %v1921
  %v1923 = vpop.f32.mrb[0].mxu0
  %v1924 = vpop.f32.mrb[0].mxu0
  %v1925 = vadd.f32 0.0, %v1924
  %v1926 = vpop.f32.mrb[0].mxu0
  %1927 = vmatprep.mubr.bf16.mxu0 0
  %1928 = vmatmul.mubr.bf16.gmra.mrb[0].mxu0 %v1645
  %v1929 = vpop.f32.mrb[0].mxu0
  %v1930 = vadd.f32 0.0, %v1929
  %v1931 = vpop.f32.mrb[0].mxu0
  %v1932 = vpop.f32.mrb[0].mxu0
  %v1933 = vadd.f32 0.0, %v1932
  %v1934 = vpop.f32.mrb[0].mxu0
  %1935 = vdwg.mxu0
  %v2000 = vunpack.c.l.b16 %v210
  %v2001 = vunpack.c.l.b16 %v211
  %v2002 = vunpack.c.l.b16 %v212
  %v2003 = vunpack.c.l.b16 %v213
  %v2004 = vunpack.c.l.b16 %v214
  %v2005 = vunpack.c.l.b16 %v215
  %v2006 = vunpack.c.l.b16 %v216
  %v2007 = vunpack.c.l.b16 %v217
  %v2008 = vunpack.c.l.b16 %v218
  %v2009 = vunpack.c.l.b16 %v219
  %v2010 = vunpack.c.l.b16 %v220
  %v2011 = vunpack.c.l.b16 %v221
  %v2012 = vunpack.c.l.b16 %v222
  %v2013 = vunpack.c.l.b16 %v223
  %v2014 = vunpack.c.l.b16 %v224
  %v2015 = vunpack.c.l.b16 %v225
  %v2016 = vunpack.c.l.b16 %v226
  %v2017 = vunpack.c.l.b16 %v227
  %v2018 = vunpack.c.l.b16 %v228
  %v2019 = vunpack.c.l.b16 %v229
  %v2020 = vunpack.c.l.b16 %v230
  %v2021 = vunpack.c.l.b16 %v231
  %v2022 = vunpack.c.l.b16 %v232
  %v2023 = vunpack.c.l.b16 %v233
  %v2024 = vunpack.c.l.b16 %v234
  %v2025 = vunpack.c.l.b16 %v235
  %v2026 = vunpack.c.l.b16 %v236
  %v2027 = vunpack.c.l.b16 %v237
  %v2028 = vunpack.c.l.b16 %v238
  %v2029 = vunpack.c.l.b16 %v239
  %v2030 = vunpack.c.l.b16 %v240
  %v2031 = vunpack.c.l.b16 %v241
  %v2032 = vunpack.c.l.b16 %v242
  %v2033 = vunpack.c.l.b16 %v243
  %v2034 = vunpack.c.l.b16 %v244
  %v2035 = vunpack.c.l.b16 %v245
  %v2036 = vunpack.c.l.b16 %v246
  %v2037 = vunpack.c.l.b16 %v247
  %v2038 = vunpack.c.l.b16 %v248
  %v2039 = vunpack.c.l.b16 %v249
  %v2040 = vunpack.c.l.b16 %v250
  %v2041 = vunpack.c.l.b16 %v251
  %v2042 = vunpack.c.l.b16 %v252
  %v2043 = vunpack.c.l.b16 %v253
  %v2044 = vunpack.c.l.b16 %v254
  %v2045 = vunpack.c.l.b16 %v255
  %v2046 = vunpack.c.l.b16 %v256
  %v2047 = vunpack.c.l.b16 %v257
  %v2048 = vunpack.c.l.b16 %v258
  %v2049 = vunpack.c.l.b16 %v259
  %v2050 = vunpack.c.l.b16 %v260
  %v2051 = vunpack.c.l.b16 %v261
  %v2052 = vunpack.c.l.b16 %v262
  %v2053 = vunpack.c.l.b16 %v263
  %v2054 = vunpack.c.l.b16 %v264
  %v2055 = vunpack.c.l.b16 %v265
  %v2056 = vunpack.c.l.b16 %v266
  %v2057 = vunpack.c.l.b16 %v267
  %v2058 = vunpack.c.l.b16 %v268
  %v2059 = vunpack.c.l.b16 %v269
  %v2060 = vunpack.c.l.b16 %v270
  %v2061 = vunpack.c.l.b16 %v271
  %v2062 = vunpack.c.l.b16 %v272
  %v2063 = vunpack.c.l.b16 %v273
  %v2064 = vpack.c.b16 %v2001, %v2000
  %v2065 = vpack.c.b16 %v2003, %v2002
  %v2066 = vpack.c.b16 %v2005, %v2004
  %v2067 = vpack.c.b16 %v2007, %v2006
  %v2068 = vpack.c.b16 %v2009, %v2008
  %v2069 = vpack.c.b16 %v2011, %v2010
  %v2070 = vpack.c.b16 %v2013, %v2012
  %v2071 = vpack.c.b16 %v2015, %v2014
  %v2072 = vpack.c.b16 %v2017, %v2016
  %v2073 = vpack.c.b16 %v2019, %v2018
  %v2074 = vpack.c.b16 %v2021, %v2020
  %v2075 = vpack.c.b16 %v2023, %v2022
  %v2076 = vpack.c.b16 %v2025, %v2024
  %v2077 = vpack.c.b16 %v2027, %v2026
  %v2078 = vpack.c.b16 %v2029, %v2028
  %v2079 = vpack.c.b16 %v2031, %v2030
  %v2080 = vpack.c.b16 %v2033, %v2032
  %v2081 = vpack.c.b16 %v2035, %v2034
  %v2082 = vpack.c.b16 %v2037, %v2036
  %v2083 = vpack.c.b16 %v2039, %v2038
  %v2084 = vpack.c.b16 %v2041, %v2040
  %v2085 = vpack.c.b16 %v2043, %v2042
  %v2086 = vpack.c.b16 %v2045, %v2044
  %v2087 = vpack.c.b16 %v2047, %v2046
  %v2088 = vpack.c.b16 %v2049, %v2048
  %v2089 = vpack.c.b16 %v2051, %v2050
  %v2090 = vpack.c.b16 %v2053, %v2052
  %v2091 = vpack.c.b16 %v2055, %v2054
  %v2092 = vpack.c.b16 %v2057, %v2056
  %v2093 = vpack.c.b16 %v2059, %v2058
  %v2094 = vpack.c.b16 %v2061, %v2060
  %v2095 = vpack.c.b16 %v2063, %v2062
  %v2098 = vunpack.c.l.b16 %v280
  %v2099 = vunpack.c.l.b16 %v281
  %v2100 = vpack.c.b16 %v2099, %v2098
  %v2103 = vsel %vm448, %v2064, 0
  %v2106 = vsel %vm448, %v2065, 0
  %v2109 = vsel %vm448, %v2066, 0
  %v2112 = vsel %vm448, %v2067, 0
  %v2115 = vsel %vm448, %v2068, 0
  %v2118 = vsel %vm448, %v2069, 0
  %v2121 = vsel %vm448, %v2070, 0
  %v2124 = vsel %vm448, %v2071, 0
  %v2127 = vsel %vm448, %v2072, 0
  %v2130 = vsel %vm448, %v2073, 0
  %v2133 = vsel %vm448, %v2074, 0
  %v2136 = vsel %vm448, %v2075, 0
  %v2139 = vsel %vm448, %v2076, 0
  %v2142 = vsel %vm448, %v2077, 0
  %v2145 = vsel %vm448, %v2078, 0
  %v2148 = vsel %vm448, %v2079, 0
  %v2151 = vsel %vm448, %v2080, 0
  %v2154 = vsel %vm448, %v2081, 0
  %v2157 = vsel %vm448, %v2082, 0
  %v2160 = vsel %vm448, %v2083, 0
  %v2163 = vsel %vm448, %v2084, 0
  %v2166 = vsel %vm448, %v2085, 0
  %v2169 = vsel %vm448, %v2086, 0
  %v2172 = vsel %vm448, %v2087, 0
  %v2175 = vsel %vm448, %v2088, 0
  %v2178 = vsel %vm448, %v2089, 0
  %v2181 = vsel %vm448, %v2090, 0
  %v2184 = vsel %vm448, %v2091, 0
  %v2187 = vsel %vm448, %v2092, 0
  %v2190 = vsel %vm448, %v2093, 0
  %v2193 = vsel %vm448, %v2094, 0
  %v2196 = vsel %vm448, %v2095, 0
  %2198 = vmatprep.subr.bf16.mxu0 0
  %2199 = vmatpush1.bf16.msra.mxu0 %v2100
  %2200 = vmatprep.subr.bf16.mxu0 0
  %2201 = vmatpush1.bf16.msra.mxu0 0
  %2202 = vmatprep.subr.bf16.mxu0 0
  %2203 = vmatpush1.bf16.msra.mxu0 0
  %2204 = vmatprep.subr.bf16.mxu0 0
  %2205 = vmatpush1.bf16.msra.mxu0 0
  %2206 = vmatprep.subr.bf16.mxu0 0
  %2207 = vmatpush1.bf16.msra.mxu0 0
  %2208 = vmatprep.subr.bf16.mxu0 0
  %2209 = vmatpush1.bf16.msra.mxu0 0
  %2210 = vmatprep.subr.bf16.mxu0 0
  %2211 = vmatpush1.bf16.msra.mxu0 0
  %2212 = vmatprep.subr.bf16.mxu0 0
  %2213 = vmatpush1.bf16.msra.mxu0 0
  %2214 = vmatprep.subr.bf16.mxu0 0
  %2215 = vmatpush1.bf16.msra.mxu0 0
  %2216 = vmatprep.subr.bf16.mxu0 0
  %2217 = vmatpush1.bf16.msra.mxu0 0
  %2218 = vmatprep.subr.bf16.mxu0 0
  %2219 = vmatpush1.bf16.msra.mxu0 0
  %2220 = vmatprep.subr.bf16.mxu0 0
  %2221 = vmatpush1.bf16.msra.mxu0 0
  %2222 = vmatprep.subr.bf16.mxu0 0
  %2223 = vmatpush1.bf16.msra.mxu0 0
  %2224 = vmatprep.subr.bf16.mxu0 0
  %2225 = vmatpush1.bf16.msra.mxu0 0
  %2226 = vmatprep.subr.bf16.mxu0 0
  %2227 = vmatpush1.bf16.msra.mxu0 0
  %2228 = vmatprep.subr.bf16.mxu0 0
  %2229 = vmatpush1.bf16.msra.mxu0 0
  %2230 = vmatprep.mubr.bf16.mxu0 0
  %2231 = vmatmul.mubr.bf16.gmra.mrb[0].mxu0 %v2103
  %v2232 = vpop.f32.mrb[0].mxu0
  %v2233 = vadd.f32 0.0, %v2232
  %v2234 = vpop.f32.mrb[0].mxu0
  %v2235 = vpop.f32.mrb[0].mxu0
  %v2236 = vadd.f32 0.0, %v2235
  %v2237 = vpop.f32.mrb[0].mxu0
  %2238 = vmatprep.mubr.bf16.mxu0 0
  %2239 = vmatmul.mubr.bf16.gmra.mrb[0].mxu0 %v2106
  %v2240 = vpop.f32.mrb[0].mxu0
  %v2241 = vadd.f32 0.0, %v2240
  %v2242 = vpop.f32.mrb[0].mxu0
  %v2243 = vpop.f32.mrb[0].mxu0
  %v2244 = vadd.f32 0.0, %v2243
  %v2245 = vpop.f32.mrb[0].mxu0
  %2246 = vmatprep.mubr.bf16.mxu0 0
  %2247 = vmatmul.mubr.bf16.gmra.mrb[0].mxu0 %v2109
  %v2248 = vpop.f32.mrb[0].mxu0
  %v2249 = vadd.f32 0.0, %v2248
  %v2250 = vpop.f32.mrb[0].mxu0
  %v2251 = vpop.f32.mrb[0].mxu0
  %v2252 = vadd.f32 0.0, %v2251
  %v2253 = vpop.f32.mrb[0].mxu0
  %2254 = vmatprep.mubr.bf16.mxu0 0
  %2255 = vmatmul.mubr.bf16.gmra.mrb[0].mxu0 %v2112
  %v2256 = vpop.f32.mrb[0].mxu0
  %v2257 = vadd.f32 0.0, %v2256
  %v2258 = vpop.f32.mrb[0].mxu0
  %v2259 = vpop.f32.mrb[0].mxu0
  %v2260 = vadd.f32 0.0, %v2259
  %v2261 = vpop.f32.mrb[0].mxu0
  %2262 = vmatprep.mubr.bf16.mxu0 0
  %2263 = vmatmul.mubr.bf16.gmra.mrb[0].mxu0 %v2115
  %v2264 = vpop.f32.mrb[0].mxu0
  %v2265 = vadd.f32 0.0, %v2264
  %v2266 = vpop.f32.mrb[0].mxu0
  %v2267 = vpop.f32.mrb[0].mxu0
  %v2268 = vadd.f32 0.0, %v2267
  %v2269 = vpop.f32.mrb[0].mxu0
  %2270 = vmatprep.mubr.bf16.mxu0 0
  %2271 = vmatmul.mubr.bf16.gmra.mrb[0].mxu0 %v2118
  %v2272 = vpop.f32.mrb[0].mxu0
  %v2273 = vadd.f32 0.0, %v2272
  %v2274 = vpop.f32.mrb[0].mxu0
  %v2275 = vpop.f32.mrb[0].mxu0
  %v2276 = vadd.f32 0.0, %v2275
  %v2277 = vpop.f32.mrb[0].mxu0
  %2278 = vmatprep.mubr.bf16.mxu0 0
  %2279 = vmatmul.mubr.bf16.gmra.mrb[0].mxu0 %v2121
  %v2280 = vpop.f32.mrb[0].mxu0
  %v2281 = vadd.f32 0.0, %v2280
  %v2282 = vpop.f32.mrb[0].mxu0
  %v2283 = vpop.f32.mrb[0].mxu0
  %v2284 = vadd.f32 0.0, %v2283
  %v2285 = vpop.f32.mrb[0].mxu0
  %2286 = vmatprep.mubr.bf16.mxu0 0
  %2287 = vmatmul.mubr.bf16.gmra.mrb[0].mxu0 %v2124
  %v2288 = vpop.f32.mrb[0].mxu0
  %v2289 = vadd.f32 0.0, %v2288
  %v2290 = vpop.f32.mrb[0].mxu0
  %v2291 = vpop.f32.mrb[0].mxu0
  %v2292 = vadd.f32 0.0, %v2291
  %v2293 = vpop.f32.mrb[0].mxu0
  %2294 = vmatprep.mubr.bf16.mxu0 0
  %2295 = vmatmul.mubr.bf16.gmra.mrb[0].mxu0 %v2127
  %v2296 = vpop.f32.mrb[0].mxu0
  %v2297 = vadd.f32 0.0, %v2296
  %v2298 = vpop.f32.mrb[0].mxu0
  %v2299 = vpop.f32.mrb[0].mxu0
  %v2300 = vadd.f32 0.0, %v2299
  %v2301 = vpop.f32.mrb[0].mxu0
  %2302 = vmatprep.mubr.bf16.mxu0 0
  %2303 = vmatmul.mubr.bf16.gmra.mrb[0].mxu0 %v2130
  %v2304 = vpop.f32.mrb[0].mxu0
  %v2305 = vadd.f32 0.0, %v2304
  %v2306 = vpop.f32.mrb[0].mxu0
  %v2307 = vpop.f32.mrb[0].mxu0
  %v2308 = vadd.f32 0.0, %v2307
  %v2309 = vpop.f32.mrb[0].mxu0
  %2310 = vmatprep.mubr.bf16.mxu0 0
  %2311 = vmatmul.mubr.bf16.gmra.mrb[0].mxu0 %v2133
  %v2312 = vpop.f32.mrb[0].mxu0
  %v2313 = vadd.f32 0.0, %v2312
  %v2314 = vpop.f32.mrb[0].mxu0
  %v2315 = vpop.f32.mrb[0].mxu0
  %v2316 = vadd.f32 0.0, %v2315
  %v2317 = vpop.f32.mrb[0].mxu0
  %2318 = vmatprep.mubr.bf16.mxu0 0
  %2319 = vmatmul.mubr.bf16.gmra.mrb[0].mxu0 %v2136
  %v2320 = vpop.f32.mrb[0].mxu0
  %v2321 = vadd.f32 0.0, %v2320
  %v2322 = vpop.f32.mrb[0].mxu0
  %v2323 = vpop.f32.mrb[0].mxu0
  %v2324 = vadd.f32 0.0, %v2323
  %v2325 = vpop.f32.mrb[0].mxu0
  %2326 = vmatprep.mubr.bf16.mxu0 0
  %2327 = vmatmul.mubr.bf16.gmra.mrb[0].mxu0 %v2139
  %v2328 = vpop.f32.mrb[0].mxu0
  %v2329 = vadd.f32 0.0, %v2328
  %v2330 = vpop.f32.mrb[0].mxu0
  %v2331 = vpop.f32.mrb[0].mxu0
  %v2332 = vadd.f32 0.0, %v2331
  %v2333 = vpop.f32.mrb[0].mxu0
  %2334 = vmatprep.mubr.bf16.mxu0 0
  %2335 = vmatmul.mubr.bf16.gmra.mrb[0].mxu0 %v2142
  %v2336 = vpop.f32.mrb[0].mxu0
  %v2337 = vadd.f32 0.0, %v2336
  %v2338 = vpop.f32.mrb[0].mxu0
  %v2339 = vpop.f32.mrb[0].mxu0
  %v2340 = vadd.f32 0.0, %v2339
  %v2341 = vpop.f32.mrb[0].mxu0
  %2342 = vmatprep.mubr.bf16.mxu0 0
  %2343 = vmatmul.mubr.bf16.gmra.mrb[0].mxu0 %v2145
  %v2344 = vpop.f32.mrb[0].mxu0
  %v2345 = vadd.f32 0.0, %v2344
  %v2346 = vpop.f32.mrb[0].mxu0
  %v2347 = vpop.f32.mrb[0].mxu0
  %v2348 = vadd.f32 0.0, %v2347
  %v2349 = vpop.f32.mrb[0].mxu0
  %2350 = vmatprep.mubr.bf16.mxu0 0
  %2351 = vmatmul.mubr.bf16.gmra.mrb[0].mxu0 %v2148
  %v2352 = vpop.f32.mrb[0].mxu0
  %v2353 = vadd.f32 0.0, %v2352
  %v2354 = vpop.f32.mrb[0].mxu0
  %v2355 = vpop.f32.mrb[0].mxu0
  %v2356 = vadd.f32 0.0, %v2355
  %v2357 = vpop.f32.mrb[0].mxu0
  %2358 = vmatprep.mubr.bf16.mxu0 0
  %2359 = vmatmul.mubr.bf16.gmra.mrb[0].mxu0 %v2151
  %v2360 = vpop.f32.mrb[0].mxu0
  %v2361 = vadd.f32 0.0, %v2360
  %v2362 = vpop.f32.mrb[0].mxu0
  %v2363 = vpop.f32.mrb[0].mxu0
  %v2364 = vadd.f32 0.0, %v2363
  %v2365 = vpop.f32.mrb[0].mxu0
  %2366 = vmatprep.mubr.bf16.mxu0 0
  %2367 = vmatmul.mubr.bf16.gmra.mrb[0].mxu0 %v2154
  %v2368 = vpop.f32.mrb[0].mxu0
  %v2369 = vadd.f32 0.0, %v2368
  %v2370 = vpop.f32.mrb[0].mxu0
  %v2371 = vpop.f32.mrb[0].mxu0
  %v2372 = vadd.f32 0.0, %v2371
  %v2373 = vpop.f32.mrb[0].mxu0
  %2374 = vmatprep.mubr.bf16.mxu0 0
  %2375 = vmatmul.mubr.bf16.gmra.mrb[0].mxu0 %v2157
  %v2376 = vpop.f32.mrb[0].mxu0
  %v2377 = vadd.f32 0.0, %v2376
  %v2378 = vpop.f32.mrb[0].mxu0
  %v2379 = vpop.f32.mrb[0].mxu0
  %v2380 = vadd.f32 0.0, %v2379
  %v2381 = vpop.f32.mrb[0].mxu0
  %2382 = vmatprep.mubr.bf16.mxu0 0
  %2383 = vmatmul.mubr.bf16.gmra.mrb[0].mxu0 %v2160
  %v2384 = vpop.f32.mrb[0].mxu0
  %v2385 = vadd.f32 0.0, %v2384
  %v2386 = vpop.f32.mrb[0].mxu0
  %v2387 = vpop.f32.mrb[0].mxu0
  %v2388 = vadd.f32 0.0, %v2387
  %v2389 = vpop.f32.mrb[0].mxu0
  %2390 = vmatprep.mubr.bf16.mxu0 0
  %2391 = vmatmul.mubr.bf16.gmra.mrb[0].mxu0 %v2163
  %v2392 = vpop.f32.mrb[0].mxu0
  %v2393 = vadd.f32 0.0, %v2392
  %v2394 = vpop.f32.mrb[0].mxu0
  %v2395 = vpop.f32.mrb[0].mxu0
  %v2396 = vadd.f32 0.0, %v2395
  %v2397 = vpop.f32.mrb[0].mxu0
  %2398 = vmatprep.mubr.bf16.mxu0 0
  %2399 = vmatmul.mubr.bf16.gmra.mrb[0].mxu0 %v2166
  %v2400 = vpop.f32.mrb[0].mxu0
  %v2401 = vadd.f32 0.0, %v2400
  %v2402 = vpop.f32.mrb[0].mxu0
  %v2403 = vpop.f32.mrb[0].mxu0
  %v2404 = vadd.f32 0.0, %v2403
  %v2405 = vpop.f32.mrb[0].mxu0
  %2406 = vmatprep.mubr.bf16.mxu0 0
  %2407 = vmatmul.mubr.bf16.gmra.mrb[0].mxu0 %v2169
  %v2408 = vpop.f32.mrb[0].mxu0
  %v2409 = vadd.f32 0.0, %v2408
  %v2410 = vpop.f32.mrb[0].mxu0
  %v2411 = vpop.f32.mrb[0].mxu0
  %v2412 = vadd.f32 0.0, %v2411
  %v2413 = vpop.f32.mrb[0].mxu0
  %2414 = vmatprep.mubr.bf16.mxu0 0
  %2415 = vmatmul.mubr.bf16.gmra.mrb[0].mxu0 %v2172
  %v2416 = vpop.f32.mrb[0].mxu0
  %v2417 = vadd.f32 0.0, %v2416
  %v2418 = vpop.f32.mrb[0].mxu0
  %v2419 = vpop.f32.mrb[0].mxu0
  %v2420 = vadd.f32 0.0, %v2419
  %v2421 = vpop.f32.mrb[0].mxu0
  %2422 = vmatprep.mubr.bf16.mxu0 0
  %2423 = vmatmul.mubr.bf16.gmra.mrb[0].mxu0 %v2175
  %v2424 = vpop.f32.mrb[0].mxu0
  %v2425 = vadd.f32 0.0, %v2424
  %v2426 = vpop.f32.mrb[0].mxu0
  %v2427 = vpop.f32.mrb[0].mxu0
  %v2428 = vadd.f32 0.0, %v2427
  %v2429 = vpop.f32.mrb[0].mxu0
  %2430 = vmatprep.mubr.bf16.mxu0 0
  %2431 = vmatmul.mubr.bf16.gmra.mrb[0].mxu0 %v2178
  %v2432 = vpop.f32.mrb[0].mxu0
  %v2433 = vadd.f32 0.0, %v2432
  %v2434 = vpop.f32.mrb[0].mxu0
  %v2435 = vpop.f32.mrb[0].mxu0
  %v2436 = vadd.f32 0.0, %v2435
  %v2437 = vpop.f32.mrb[0].mxu0
  %2438 = vmatprep.mubr.bf16.mxu0 0
  %2439 = vmatmul.mubr.bf16.gmra.mrb[0].mxu0 %v2181
  %v2440 = vpop.f32.mrb[0].mxu0
  %v2441 = vadd.f32 0.0, %v2440
  %v2442 = vpop.f32.mrb[0].mxu0
  %v2443 = vpop.f32.mrb[0].mxu0
  %v2444 = vadd.f32 0.0, %v2443
  %v2445 = vpop.f32.mrb[0].mxu0
  %2446 = vmatprep.mubr.bf16.mxu0 0
  %2447 = vmatmul.mubr.bf16.gmra.mrb[0].mxu0 %v2184
  %v2448 = vpop.f32.mrb[0].mxu0
  %v2449 = vadd.f32 0.0, %v2448
  %v2450 = vpop.f32.mrb[0].mxu0
  %v2451 = vpop.f32.mrb[0].mxu0
  %v2452 = vadd.f32 0.0, %v2451
  %v2453 = vpop.f32.mrb[0].mxu0
  %2454 = vmatprep.mubr.bf16.mxu0 0
  %2455 = vmatmul.mubr.bf16.gmra.mrb[0].mxu0 %v2187
  %v2456 = vpop.f32.mrb[0].mxu0
  %v2457 = vadd.f32 0.0, %v2456
  %v2458 = vpop.f32.mrb[0].mxu0
  %v2459 = vpop.f32.mrb[0].mxu0
  %v2460 = vadd.f32 0.0, %v2459
  %v2461 = vpop.f32.mrb[0].mxu0
  %2462 = vmatprep.mubr.bf16.mxu0 0
  %2463 = vmatmul.mubr.bf16.gmra.mrb[0].mxu0 %v2190
  %v2464 = vpop.f32.mrb[0].mxu0
  %v2465 = vadd.f32 0.0, %v2464
  %v2466 = vpop.f32.mrb[0].mxu0
  %v2467 = vpop.f32.mrb[0].mxu0
  %v2468 = vadd.f32 0.0, %v2467
  %v2469 = vpop.f32.mrb[0].mxu0
  %2470 = vmatprep.mubr.bf16.mxu0 0
  %2471 = vmatmul.mubr.bf16.gmra.mrb[0].mxu0 %v2193
  %v2472 = vpop.f32.mrb[0].mxu0
  %v2473 = vadd.f32 0.0, %v2472
  %v2474 = vpop.f32.mrb[0].mxu0
  %v2475 = vpop.f32.mrb[0].mxu0
  %v2476 = vadd.f32 0.0, %v2475
  %v2477 = vpop.f32.mrb[0].mxu0
  %2478 = vmatprep.mubr.bf16.mxu0 0
  %2479 = vmatmul.mubr.bf16.gmra.mrb[0].mxu0 %v2196
  %v2480 = vpop.f32.mrb[0].mxu0
  %v2481 = vadd.f32 0.0, %v2480
  %v2482 = vpop.f32.mrb[0].mxu0
  %v2483 = vpop.f32.mrb[0].mxu0
  %v2484 = vadd.f32 0.0, %v2483
  %v2485 = vpop.f32.mrb[0].mxu0
  %2486 = vdwg.mxu0
  %v2487 = vtanh.pop %v580
  %v2488 = vtanh.pop %v583
  %v2489 = vtanh.pop %v588
  %v2490 = vtanh.pop %v591
  %v2491 = vtanh.pop %v596
  %v2492 = vtanh.pop %v599
  %v2493 = vtanh.pop %v604
  %v2494 = vtanh.pop %v607
  %v2495 = vtanh.pop %v612
  %v2496 = vtanh.pop %v615
  %v2497 = vtanh.pop %v620
  %v2498 = vtanh.pop %v623
  %v2499 = vtanh.pop %v628
  %v2500 = vtanh.pop %v631
  %v2501 = vtanh.pop %v636
  %v2502 = vtanh.pop %v639
  %v2503 = vtanh.pop %v644
  %v2504 = vtanh.pop %v647
  %v2505 = vtanh.pop %v652
  %v2506 = vtanh.pop %v655
  %v2507 = vtanh.pop %v660
  %v2508 = vtanh.pop %v663
  %v2509 = vtanh.pop %v668
  %v2510 = vtanh.pop %v671
  %v2511 = vtanh.pop %v676
  %v2512 = vtanh.pop %v679
  %v2513 = vtanh.pop %v684
  %v2514 = vtanh.pop %v687
  %v2515 = vtanh.pop %v692
  %v2516 = vtanh.pop %v695
  %v2517 = vtanh.pop %v700
  %v2518 = vtanh.pop %v703
  %v2519 = vtanh.pop %v708
  %v2520 = vtanh.pop %v711
  %v2521 = vtanh.pop %v716
  %v2522 = vtanh.pop %v719
  %v2523 = vtanh.pop %v724
  %v2524 = vtanh.pop %v727
  %v2525 = vtanh.pop %v732
  %v2526 = vtanh.pop %v735
  %v2527 = vtanh.pop %v740
  %v2528 = vtanh.pop %v743
  %v2529 = vtanh.pop %v748
  %v2530 = vtanh.pop %v751
  %v2531 = vtanh.pop %v756
  %v2532 = vtanh.pop %v759
  %v2533 = vtanh.pop %v764
  %v2534 = vtanh.pop %v767
  %v2535 = vtanh.pop %v772
  %v2536 = vtanh.pop %v775
  %v2537 = vtanh.pop %v780
  %v2538 = vtanh.pop %v783
  %v2539 = vtanh.pop %v788
  %v2540 = vtanh.pop %v791
  %v2541 = vtanh.pop %v796
  %v2542 = vtanh.pop %v799
  %v2543 = vtanh.pop %v804
  %v2544 = vtanh.pop %v807
  %v2545 = vtanh.pop %v812
  %v2546 = vtanh.pop %v815
  %v2547 = vtanh.pop %v820
  %v2548 = vtanh.pop %v823
  %v2549 = vtanh.pop %v828
  %v2550 = vtanh.pop %v831
  %v2551 = vtanh.pop %v1131
  %v2552 = vtanh.pop %v1134
  %v2553 = vtanh.pop %v1139
  %v2554 = vtanh.pop %v1142
  %v2555 = vtanh.pop %v1147
  %v2556 = vtanh.pop %v1150
  %v2557 = vtanh.pop %v1155
  %v2558 = vtanh.pop %v1158
  %v2559 = vtanh.pop %v1163
  %v2560 = vtanh.pop %v1166
  %v2561 = vtanh.pop %v1171
  %v2562 = vtanh.pop %v1174
  %v2563 = vtanh.pop %v1179
  %v2564 = vtanh.pop %v1182
  %v2565 = vtanh.pop %v1187
  %v2566 = vtanh.pop %v1190
  %v2567 = vtanh.pop %v1195
  %v2568 = vtanh.pop %v1198
  %v2569 = vtanh.pop %v1203
  %v2570 = vtanh.pop %v1206
  %v2571 = vtanh.pop %v1211
  %v2572 = vtanh.pop %v1214
  %v2573 = vtanh.pop %v1219
  %v2574 = vtanh.pop %v1222
  %v2575 = vtanh.pop %v1227
  %v2576 = vtanh.pop %v1230
  %v2577 = vtanh.pop %v1235
  %v2578 = vtanh.pop %v1238
  %v2579 = vtanh.pop %v1243
  %v2580 = vtanh.pop %v1246
  %v2581 = vtanh.pop %v1251
  %v2582 = vtanh.pop %v1254
  %v2583 = vtanh.pop %v1259
  %v2584 = vtanh.pop %v1262
  %v2585 = vtanh.pop %v1267
  %v2586 = vtanh.pop %v1270
  %v2587 = vtanh.pop %v1275
  %v2588 = vtanh.pop %v1278
  %v2589 = vtanh.pop %v1283
  %v2590 = vtanh.pop %v1286
  %v2591 = vtanh.pop %v1291
  %v2592 = vtanh.pop %v1294
  %v2593 = vtanh.pop %v1299
  %v2594 = vtanh.pop %v1302
  %v2595 = vtanh.pop %v1307
  %v2596 = vtanh.pop %v1310
  %v2597 = vtanh.pop %v1315
  %v2598 = vtanh.pop %v1318
  %v2599 = vtanh.pop %v1323
  %v2600 = vtanh.pop %v1326
  %v2601 = vtanh.pop %v1331
  %v2602 = vtanh.pop %v1334
  %v2603 = vtanh.pop %v1339
  %v2604 = vtanh.pop %v1342
  %v2605 = vtanh.pop %v1347
  %v2606 = vtanh.pop %v1350
  %v2607 = vtanh.pop %v1355
  %v2608 = vtanh.pop %v1358
  %v2609 = vtanh.pop %v1363
  %v2610 = vtanh.pop %v1366
  %v2611 = vtanh.pop %v1371
  %v2612 = vtanh.pop %v1374
  %v2613 = vtanh.pop %v1379
  %v2614 = vtanh.pop %v1382
  %v2615 = vtanh.pop %v1682
  %v2616 = vtanh.pop %v1685
  %v2617 = vtanh.pop %v1690
  %v2618 = vtanh.pop %v1693
  %v2619 = vtanh.pop %v1698
  %v2620 = vtanh.pop %v1701
  %v2621 = vtanh.pop %v1706
  %v2622 = vtanh.pop %v1709
  %v2623 = vtanh.pop %v1714
  %v2624 = vtanh.pop %v1717
  %v2625 = vtanh.pop %v1722
  %v2626 = vtanh.pop %v1725
  %v2627 = vtanh.pop %v1730
  %v2628 = vtanh.pop %v1733
  %v2629 = vtanh.pop %v1738
  %v2630 = vtanh.pop %v1741
  %v2631 = vtanh.pop %v1746
  %v2632 = vtanh.pop %v1749
  %v2633 = vtanh.pop %v1754
  %v2634 = vtanh.pop %v1757
  %v2635 = vtanh.pop %v1762
  %v2636 = vtanh.pop %v1765
  %v2637 = vtanh.pop %v1770
  %v2638 = vtanh.pop %v1773
  %v2639 = vtanh.pop %v1778
  %v2640 = vtanh.pop %v1781
  %v2641 = vtanh.pop %v1786
  %v2642 = vtanh.pop %v1789
  %v2643 = vtanh.pop %v1794
  %v2644 = vtanh.pop %v1797
  %v2645 = vtanh.pop %v1802
  %v2646 = vtanh.pop %v1805
  %v2647 = vtanh.pop %v1810
  %v2648 = vtanh.pop %v1813
  %v2649 = vtanh.pop %v1818
  %v2650 = vtanh.pop %v1821
  %v2651 = vtanh.pop %v1826
  %v2652 = vtanh.pop %v1829
  %v2653 = vtanh.pop %v1834
  %v2654 = vtanh.pop %v1837
  %v2655 = vtanh.pop %v1842
  %v2656 = vtanh.pop %v1845
  %v2657 = vtanh.pop %v1850
  %v2658 = vtanh.pop %v1853
  %v2659 = vtanh.pop %v1858
  %v2660 = vtanh.pop %v1861
  %v2661 = vtanh.pop %v1866
  %v2662 = vtanh.pop %v1869
  %v2663 = vtanh.pop %v1874
  %v2664 = vtanh.pop %v1877
  %v2665 = vtanh.pop %v1882
  %v2666 = vtanh.pop %v1885
  %v2667 = vtanh.pop %v1890
  %v2668 = vtanh.pop %v1893
  %v2669 = vtanh.pop %v1898
  %v2670 = vtanh.pop %v1901
  %v2671 = vtanh.pop %v1906
  %v2672 = vtanh.pop %v1909
  %v2673 = vtanh.pop %v1914
  %v2674 = vtanh.pop %v1917
  %v2675 = vtanh.pop %v1922
  %v2676 = vtanh.pop %v1925
  %v2677 = vtanh.pop %v1930
  %v2678 = vtanh.pop %v1933
  %v2679 = vtanh.pop %v2233
  %v2680 = vtanh.pop %v2236
  %v2681 = vtanh.pop %v2241
  %v2682 = vtanh.pop %v2244
  %v2683 = vtanh.pop %v2249
  %v2684 = vtanh.pop %v2252
  %v2685 = vtanh.pop %v2257
  %v2686 = vtanh.pop %v2260
  %v2687 = vtanh.pop %v2265
  %v2688 = vtanh.pop %v2268
  %v2689 = vtanh.pop %v2273
  %v2690 = vtanh.pop %v2276
  %v2691 = vtanh.pop %v2281
  %v2692 = vtanh.pop %v2284
  %v2693 = vtanh.pop %v2289
  %v2694 = vtanh.pop %v2292
  %v2695 = vtanh.pop %v2297
  %v2696 = vtanh.pop %v2300
  %v2697 = vtanh.pop %v2305
  %v2698 = vtanh.pop %v2308
  %v2699 = vtanh.pop %v2313
  %v2700 = vtanh.pop %v2316
  %v2701 = vtanh.pop %v2321
  %v2702 = vtanh.pop %v2324
  %v2703 = vtanh.pop %v2329
  %v2704 = vtanh.pop %v2332
  %v2705 = vtanh.pop %v2337
  %v2706 = vtanh.pop %v2340
  %v2707 = vtanh.pop %v2345
  %v2708 = vtanh.pop %v2348
  %v2709 = vtanh.pop %v2353
  %v2710 = vtanh.pop %v2356
  %v2711 = vtanh.pop %v2361
  %v2712 = vtanh.pop %v2364
  %v2713 = vtanh.pop %v2369
  %v2714 = vtanh.pop %v2372
  %v2715 = vtanh.pop %v2377
  %v2716 = vtanh.pop %v2380
  %v2717 = vtanh.pop %v2385
  %v2718 = vtanh.pop %v2388
  %v2719 = vtanh.pop %v2393
  %v2720 = vtanh.pop %v2396
  %v2721 = vtanh.pop %v2401
  %v2722 = vtanh.pop %v2404
  %v2723 = vtanh.pop %v2409
  %v2724 = vtanh.pop %v2412
  %v2725 = vtanh.pop %v2417
  %v2726 = vtanh.pop %v2420
  %v2727 = vtanh.pop %v2425
  %v2728 = vtanh.pop %v2428
  %v2729 = vtanh.pop %v2433
  %v2730 = vtanh.pop %v2436
  %v2731 = vtanh.pop %v2441
  %v2732 = vtanh.pop %v2444
  %v2733 = vtanh.pop %v2449
  %v2734 = vtanh.pop %v2452
  %v2735 = vtanh.pop %v2457
  %v2736 = vtanh.pop %v2460
  %v2737 = vtanh.pop %v2465
  %v2738 = vtanh.pop %v2468
  %v2739 = vtanh.pop %v2473
  %v2740 = vtanh.pop %v2476
  %v2741 = vtanh.pop %v2481
  %v2742 = vtanh.pop %v2484
  %v2743 = vld [vmem:[%s2] sm:$0x1]
  %v2744 = vld [vmem:[%s3] sm:$0x1]
  %v2745 = vadd.f32 %v2487, %v2488
  %v2746 = vadd.f32 %v2745, %v2489
  %v2747 = vadd.f32 %v2746, %v2490
  %v2748 = vadd.f32 %v2747, %v2491
  %v2749 = vadd.f32 %v2748, %v2492
  %v2750 = vadd.f32 %v2749, %v2493
  %v2751 = vadd.f32 %v2750, %v2494
  %v2752 = vadd.f32 %v2751, %v2495
  %v2753 = vadd.f32 %v2752, %v2496
  %v2754 = vadd.f32 %v2753, %v2497
  %v2755 = vadd.f32 %v2754, %v2498
  %v2756 = vadd.f32 %v2755, %v2499
  %v2757 = vadd.f32 %v2756, %v2500
  %v2758 = vadd.f32 %v2757, %v2501
  %v2759 = vadd.f32 %v2758, %v2502
  %v2760 = vadd.f32 %v2759, %v2503
  %v2761 = vadd.f32 %v2760, %v2504
  %v2762 = vadd.f32 %v2761, %v2505
  %v2763 = vadd.f32 %v2762, %v2506
  %v2764 = vadd.f32 %v2763, %v2507
  %v2765 = vadd.f32 %v2764, %v2508
  %v2766 = vadd.f32 %v2765, %v2509
  %v2767 = vadd.f32 %v2766, %v2510
  %v2768 = vadd.f32 %v2767, %v2511
  %v2769 = vadd.f32 %v2768, %v2512
  %v2770 = vadd.f32 %v2769, %v2513
  %v2771 = vadd.f32 %v2770, %v2514
  %v2772 = vadd.f32 %v2771, %v2515
  %v2773 = vadd.f32 %v2772, %v2516
  %v2774 = vadd.f32 %v2773, %v2517
  %v2775 = vadd.f32 %v2774, %v2518
  %v2776 = vadd.f32 %v2775, %v2519
  %v2777 = vadd.f32 %v2776, %v2520
  %v2778 = vadd.f32 %v2777, %v2521
  %v2779 = vadd.f32 %v2778, %v2522
  %v2780 = vadd.f32 %v2779, %v2523
  %v2781 = vadd.f32 %v2780, %v2524
  %v2782 = vadd.f32 %v2781, %v2525
  %v2783 = vadd.f32 %v2782, %v2526
  %v2784 = vadd.f32 %v2783, %v2527
  %v2785 = vadd.f32 %v2784, %v2528
  %v2786 = vadd.f32 %v2785, %v2529
  %v2787 = vadd.f32 %v2786, %v2530
  %v2788 = vadd.f32 %v2787, %v2531
  %v2789 = vadd.f32 %v2788, %v2532
  %v2790 = vadd.f32 %v2789, %v2533
  %v2791 = vadd.f32 %v2790, %v2534
  %v2792 = vadd.f32 %v2791, %v2535
  %v2793 = vadd.f32 %v2792, %v2536
  %v2794 = vadd.f32 %v2793, %v2537
  %v2795 = vadd.f32 %v2794, %v2538
  %v2796 = vadd.f32 %v2795, %v2539
  %v2797 = vadd.f32 %v2796, %v2540
  %v2798 = vadd.f32 %v2797, %v2541
  %v2799 = vadd.f32 %v2798, %v2542
  %v2800 = vadd.f32 %v2799, %v2543
  %v2801 = vadd.f32 %v2800, %v2544
  %v2802 = vadd.f32 %v2801, %v2545
  %v2803 = vadd.f32 %v2802, %v2546
  %v2804 = vadd.f32 %v2803, %v2547
  %v2805 = vadd.f32 %v2804, %v2548
  %v2806 = vadd.f32 %v2805, %v2549
  %v2807 = vadd.f32 %v2806, %v2550
  %v2808 = vadd.f32 %v2807, %v2551
  %v2809 = vadd.f32 %v2808, %v2552
  %v2810 = vadd.f32 %v2809, %v2553
  %v2811 = vadd.f32 %v2810, %v2554
  %v2812 = vadd.f32 %v2811, %v2555
  %v2813 = vadd.f32 %v2812, %v2556
  %v2814 = vadd.f32 %v2813, %v2557
  %v2815 = vadd.f32 %v2814, %v2558
  %v2816 = vadd.f32 %v2815, %v2559
  %v2817 = vadd.f32 %v2816, %v2560
  %v2818 = vadd.f32 %v2817, %v2561
  %v2819 = vadd.f32 %v2818, %v2562
  %v2820 = vadd.f32 %v2819, %v2563
  %v2821 = vadd.f32 %v2820, %v2564
  %v2822 = vadd.f32 %v2821, %v2565
  %v2823 = vadd.f32 %v2822, %v2566
  %v2824 = vadd.f32 %v2823, %v2567
  %v2825 = vadd.f32 %v2824, %v2568
  %v2826 = vadd.f32 %v2825, %v2569
  %v2827 = vadd.f32 %v2826, %v2570
  %v2828 = vadd.f32 %v2827, %v2571
  %v2829 = vadd.f32 %v2828, %v2572
  %v2830 = vadd.f32 %v2829, %v2573
  %v2831 = vadd.f32 %v2830, %v2574
  %v2832 = vadd.f32 %v2831, %v2575
  %v2833 = vadd.f32 %v2832, %v2576
  %v2834 = vadd.f32 %v2833, %v2577
  %v2835 = vadd.f32 %v2834, %v2578
  %v2836 = vadd.f32 %v2835, %v2579
  %v2837 = vadd.f32 %v2836, %v2580
  %v2838 = vadd.f32 %v2837, %v2581
  %v2839 = vadd.f32 %v2838, %v2582
  %v2840 = vadd.f32 %v2839, %v2583
  %v2841 = vadd.f32 %v2840, %v2584
  %v2842 = vadd.f32 %v2841, %v2585
  %v2843 = vadd.f32 %v2842, %v2586
  %v2844 = vadd.f32 %v2843, %v2587
  %v2845 = vadd.f32 %v2844, %v2588
  %v2846 = vadd.f32 %v2845, %v2589
  %v2847 = vadd.f32 %v2846, %v2590
  %v2848 = vadd.f32 %v2847, %v2591
  %v2849 = vadd.f32 %v2848, %v2592
  %v2850 = vadd.f32 %v2849, %v2593
  %v2851 = vadd.f32 %v2850, %v2594
  %v2852 = vadd.f32 %v2851, %v2595
  %v2853 = vadd.f32 %v2852, %v2596
  %v2854 = vadd.f32 %v2853, %v2597
  %v2855 = vadd.f32 %v2854, %v2598
  %v2856 = vadd.f32 %v2855, %v2599
  %v2857 = vadd.f32 %v2856, %v2600
  %v2858 = vadd.f32 %v2857, %v2601
  %v2859 = vadd.f32 %v2858, %v2602
  %v2860 = vadd.f32 %v2859, %v2603
  %v2861 = vadd.f32 %v2860, %v2604
  %v2862 = vadd.f32 %v2861, %v2605
  %v2863 = vadd.f32 %v2862, %v2606
  %v2864 = vadd.f32 %v2863, %v2607
  %v2865 = vadd.f32 %v2864, %v2608
  %v2866 = vadd.f32 %v2865, %v2609
  %v2867 = vadd.f32 %v2866, %v2610
  %v2868 = vadd.f32 %v2867, %v2611
  %v2869 = vadd.f32 %v2868, %v2612
  %v2870 = vadd.f32 %v2869, %v2613
  %v2871 = vadd.f32 %v2870, %v2614
  %v2872 = vadd.f32 %v2871, %v2615
  %v2873 = vadd.f32 %v2872, %v2616
  %v2874 = vadd.f32 %v2873, %v2617
  %v2875 = vadd.f32 %v2874, %v2618
  %v2876 = vadd.f32 %v2875, %v2619
  %v2877 = vadd.f32 %v2876, %v2620
  %v2878 = vadd.f32 %v2877, %v2621
  %v2879 = vadd.f32 %v2878, %v2622
  %v2880 = vadd.f32 %v2879, %v2623
  %v2881 = vadd.f32 %v2880, %v2624
  %v2882 = vadd.f32 %v2881, %v2625
  %v2883 = vadd.f32 %v2882, %v2626
  %v2884 = vadd.f32 %v2883, %v2627
  %v2885 = vadd.f32 %v2884, %v2628
  %v2886 = vadd.f32 %v2885, %v2629
  %v2887 = vadd.f32 %v2886, %v2630
  %v2888 = vadd.f32 %v2887, %v2631
  %v2889 = vadd.f32 %v2888, %v2632
  %v2890 = vadd.f32 %v2889, %v2633
  %v2891 = vadd.f32 %v2890, %v2634
  %v2892 = vadd.f32 %v2891, %v2635
  %v2893 = vadd.f32 %v2892, %v2636
  %v2894 = vadd.f32 %v2893, %v2637
  %v2895 = vadd.f32 %v2894, %v2638
  %v2896 = vadd.f32 %v2895, %v2639
  %v2897 = vadd.f32 %v2896, %v2640
  %v2898 = vadd.f32 %v2897, %v2641
  %v2899 = vadd.f32 %v2898, %v2642
  %v2900 = vadd.f32 %v2899, %v2643
  %v2901 = vadd.f32 %v2900, %v2644
  %v2902 = vadd.f32 %v2901, %v2645
  %v2903 = vadd.f32 %v2902, %v2646
  %v2904 = vadd.f32 %v2903, %v2647
  %v2905 = vadd.f32 %v2904, %v2648
  %v2906 = vadd.f32 %v2905, %v2649
  %v2907 = vadd.f32 %v2906, %v2650
  %v2908 = vadd.f32 %v2907, %v2651
  %v2909 = vadd.f32 %v2908, %v2652
  %v2910 = vadd.f32 %v2909, %v2653
  %v2911 = vadd.f32 %v2910, %v2654
  %v2912 = vadd.f32 %v2911, %v2655
  %v2913 = vadd.f32 %v2912, %v2656
  %v2914 = vadd.f32 %v2913, %v2657
  %v2915 = vadd.f32 %v2914, %v2658
  %v2916 = vadd.f32 %v2915, %v2659
  %v2917 = vadd.f32 %v2916, %v2660
  %v2918 = vadd.f32 %v2917, %v2661
  %v2919 = vadd.f32 %v2918, %v2662
  %v2920 = vadd.f32 %v2919, %v2663
  %v2921 = vadd.f32 %v2920, %v2664
  %v2922 = vadd.f32 %v2921, %v2665
  %v2923 = vadd.f32 %v2922, %v2666
  %v2924 = vadd.f32 %v2923, %v2667
  %v2925 = vadd.f32 %v2924, %v2668
  %v2926 = vadd.f32 %v2925, %v2669
  %v2927 = vadd.f32 %v2926, %v2670
  %v2928 = vadd.f32 %v2927, %v2671
  %v2929 = vadd.f32 %v2928, %v2672
  %v2930 = vadd.f32 %v2929, %v2673
  %v2931 = vadd.f32 %v2930, %v2674
  %v2932 = vadd.f32 %v2931, %v2675
  %v2933 = vadd.f32 %v2932, %v2676
  %v2934 = vadd.f32 %v2933, %v2677
  %v2935 = vadd.f32 %v2934, %v2678
  %v2936 = vadd.f32 %v2935, %v2679
  %v2937 = vadd.f32 %v2936, %v2680
  %v2938 = vadd.f32 %v2937, %v2681
  %v2939 = vadd.f32 %v2938, %v2682
  %v2940 = vadd.f32 %v2939, %v2683
  %v2941 = vadd.f32 %v2940, %v2684
  %v2942 = vadd.f32 %v2941, %v2685
  %v2943 = vadd.f32 %v2942, %v2686
  %v2944 = vadd.f32 %v2943, %v2687
  %v2945 = vadd.f32 %v2944, %v2688
  %v2946 = vadd.f32 %v2945, %v2689
  %v2947 = vadd.f32 %v2946, %v2690
  %v2948 = vadd.f32 %v2947, %v2691
  %v2949 = vadd.f32 %v2948, %v2692
  %v2950 = vadd.f32 %v2949, %v2693
  %v2951 = vadd.f32 %v2950, %v2694
  %v2952 = vadd.f32 %v2951, %v2695
  %v2953 = vadd.f32 %v2952, %v2696
  %v2954 = vadd.f32 %v2953, %v2697
  %v2955 = vadd.f32 %v2954, %v2698
  %v2956 = vadd.f32 %v2955, %v2699
  %v2957 = vadd.f32 %v2956, %v2700
  %v2958 = vadd.f32 %v2957, %v2701
  %v2959 = vadd.f32 %v2958, %v2702
  %v2960 = vadd.f32 %v2959, %v2703
  %v2961 = vadd.f32 %v2960, %v2704
  %v2962 = vadd.f32 %v2961, %v2705
  %v2963 = vadd.f32 %v2962, %v2706
  %v2964 = vadd.f32 %v2963, %v2707
  %v2965 = vadd.f32 %v2964, %v2708
  %v2966 = vadd.f32 %v2965, %v2709
  %v2967 = vadd.f32 %v2966, %v2710
  %v2968 = vadd.f32 %v2967, %v2711
  %v2969 = vadd.f32 %v2968, %v2712
  %v2970 = vadd.f32 %v2969, %v2713
  %v2971 = vadd.f32 %v2970, %v2714
  %v2972 = vadd.f32 %v2971, %v2715
  %v2973 = vadd.f32 %v2972, %v2716
  %v2974 = vadd.f32 %v2973, %v2717
  %v2975 = vadd.f32 %v2974, %v2718
  %v2976 = vadd.f32 %v2975, %v2719
  %v2977 = vadd.f32 %v2976, %v2720
  %v2978 = vadd.f32 %v2977, %v2721
  %v2979 = vadd.f32 %v2978, %v2722
  %v2980 = vadd.f32 %v2979, %v2723
  %v2981 = vadd.f32 %v2980, %v2724
  %v2982 = vadd.f32 %v2981, %v2725
  %v2983 = vadd.f32 %v2982, %v2726
  %v2984 = vadd.f32 %v2983, %v2727
  %v2985 = vadd.f32 %v2984, %v2728
  %v2986 = vadd.f32 %v2985, %v2729
  %v2987 = vadd.f32 %v2986, %v2730
  %v2988 = vadd.f32 %v2987, %v2731
  %v2989 = vadd.f32 %v2988, %v2732
  %v2990 = vadd.f32 %v2989, %v2733
  %v2991 = vadd.f32 %v2990, %v2734
  %v2992 = vadd.f32 %v2991, %v2735
  %v2993 = vadd.f32 %v2992, %v2736
  %v2994 = vadd.f32 %v2993, %v2737
  %v2995 = vadd.f32 %v2994, %v2738
  %v2996 = vadd.f32 %v2995, %v2739
  %v2997 = vadd.f32 %v2996, %v2740
  %v2998 = vadd.f32 %v2997, %v2741
  %v2999 = vadd.f32 %v2998, %v2742
  %v3000 = vrot.slane %v2999, 4
  %v3001 = vadd.f32 %v2999, %v3000
  %v3002 = vrot.slane %v3001, 2
  %v3003 = vadd.f32 %v3001, %v3002
  %v3004 = vrot.slane %v3003, 1
  %v3005 = vadd.f32 %v3003, %v3004
  %v3006 = vrcp.pop 2048.0
  %v3007 = vmul.f32 %v3005, %v3006
  %v3008 = vsub.f32 %v2487, %v3007
  %v3009 = vsub.f32 %v2488, %v3007
  %v3010 = vsub.f32 %v2489, %v3007
  %v3011 = vsub.f32 %v2490, %v3007
  %v3012 = vsub.f32 %v2491, %v3007
  %v3013 = vsub.f32 %v2492, %v3007
  %v3014 = vsub.f32 %v2493, %v3007
  %v3015 = vsub.f32 %v2494, %v3007
  %v3016 = vsub.f32 %v2495, %v3007
  %v3017 = vsub.f32 %v2496, %v3007
  %v3018 = vsub.f32 %v2497, %v3007
  %v3019 = vsub.f32 %v2498, %v3007
  %v3020 = vsub.f32 %v2499, %v3007
  %v3021 = vsub.f32 %v2500, %v3007
  %v3022 = vsub.f32 %v2501, %v3007
  %v3023 = vsub.f32 %v2502, %v3007
  %v3024 = vsub.f32 %v2503, %v3007
  %v3025 = vsub.f32 %v2504, %v3007
  %v3026 = vsub.f32 %v2505, %v3007
  %v3027 = vsub.f32 %v2506, %v3007
  %v3028 = vsub.f32 %v2507, %v3007
  %v3029 = vsub.f32 %v2508, %v3007
  %v3030 = vsub.f32 %v2509, %v3007
  %v3031 = vsub.f32 %v2510, %v3007
  %v3032 = vsub.f32 %v2511, %v3007
  %v3033 = vsub.f32 %v2512, %v3007
  %v3034 = vsub.f32 %v2513, %v3007
  %v3035 = vsub.f32 %v2514, %v3007
  %v3036 = vsub.f32 %v2515, %v3007
  %v3037 = vsub.f32 %v2516, %v3007
  %v3038 = vsub.f32 %v2517, %v3007
  %v3039 = vsub.f32 %v2518, %v3007
  %v3040 = vsub.f32 %v2519, %v3007
  %v3041 = vsub.f32 %v2520, %v3007
  %v3042 = vsub.f32 %v2521, %v3007
  %v3043 = vsub.f32 %v2522, %v3007
  %v3044 = vsub.f32 %v2523, %v3007
  %v3045 = vsub.f32 %v2524, %v3007
  %v3046 = vsub.f32 %v2525, %v3007
  %v3047 = vsub.f32 %v2526, %v3007
  %v3048 = vsub.f32 %v2527, %v3007
  %v3049 = vsub.f32 %v2528, %v3007
  %v3050 = vsub.f32 %v2529, %v3007
  %v3051 = vsub.f32 %v2530, %v3007
  %v3052 = vsub.f32 %v2531, %v3007
  %v3053 = vsub.f32 %v2532, %v3007
  %v3054 = vsub.f32 %v2533, %v3007
  %v3055 = vsub.f32 %v2534, %v3007
  %v3056 = vsub.f32 %v2535, %v3007
  %v3057 = vsub.f32 %v2536, %v3007
  %v3058 = vsub.f32 %v2537, %v3007
  %v3059 = vsub.f32 %v2538, %v3007
  %v3060 = vsub.f32 %v2539, %v3007
  %v3061 = vsub.f32 %v2540, %v3007
  %v3062 = vsub.f32 %v2541, %v3007
  %v3063 = vsub.f32 %v2542, %v3007
  %v3064 = vsub.f32 %v2543, %v3007
  %v3065 = vsub.f32 %v2544, %v3007
  %v3066 = vsub.f32 %v2545, %v3007
  %v3067 = vsub.f32 %v2546, %v3007
  %v3068 = vsub.f32 %v2547, %v3007
  %v3069 = vsub.f32 %v2548, %v3007
  %v3070 = vsub.f32 %v2549, %v3007
  %v3071 = vsub.f32 %v2550, %v3007
  %v3072 = vsub.f32 %v2551, %v3007
  %v3073 = vsub.f32 %v2552, %v3007
  %v3074 = vsub.f32 %v2553, %v3007
  %v3075 = vsub.f32 %v2554, %v3007
  %v3076 = vsub.f32 %v2555, %v3007
  %v3077 = vsub.f32 %v2556, %v3007
  %v3078 = vsub.f32 %v2557, %v3007
  %v3079 = vsub.f32 %v2558, %v3007
  %v3080 = vsub.f32 %v2559, %v3007
  %v3081 = vsub.f32 %v2560, %v3007
  %v3082 = vsub.f32 %v2561, %v3007
  %v3083 = vsub.f32 %v2562, %v3007
  %v3084 = vsub.f32 %v2563, %v3007
  %v3085 = vsub.f32 %v2564, %v3007
  %v3086 = vsub.f32 %v2565, %v3007
  %v3087 = vsub.f32 %v2566, %v3007
  %v3088 = vsub.f32 %v2567, %v3007
  %v3089 = vsub.f32 %v2568, %v3007
  %v3090 = vsub.f32 %v2569, %v3007
  %v3091 = vsub.f32 %v2570, %v3007
  %v3092 = vsub.f32 %v2571, %v3007
  %v3093 = vsub.f32 %v2572, %v3007
  %v3094 = vsub.f32 %v2573, %v3007
  %v3095 = vsub.f32 %v2574, %v3007
  %v3096 = vsub.f32 %v2575, %v3007
  %v3097 = vsub.f32 %v2576, %v3007
  %v3098 = vsub.f32 %v2577, %v3007
  %v3099 = vsub.f32 %v2578, %v3007
  %v3100 = vsub.f32 %v2579, %v3007
  %v3101 = vsub.f32 %v2580, %v3007
  %v3102 = vsub.f32 %v2581, %v3007
  %v3103 = vsub.f32 %v2582, %v3007
  %v3104 = vsub.f32 %v2583, %v3007
  %v3105 = vsub.f32 %v2584, %v3007
  %v3106 = vsub.f32 %v2585, %v3007
  %v3107 = vsub.f32 %v2586, %v3007
  %v3108 = vsub.f32 %v2587, %v3007
  %v3109 = vsub.f32 %v2588, %v3007
  %v3110 = vsub.f32 %v2589, %v3007
  %v3111 = vsub.f32 %v2590, %v3007
  %v3112 = vsub.f32 %v2591, %v3007
  %v3113 = vsub.f32 %v2592, %v3007
  %v3114 = vsub.f32 %v2593, %v3007
  %v3115 = vsub.f32 %v2594, %v3007
  %v3116 = vsub.f32 %v2595, %v3007
  %v3117 = vsub.f32 %v2596, %v3007
  %v3118 = vsub.f32 %v2597, %v3007
  %v3119 = vsub.f32 %v2598, %v3007
  %v3120 = vsub.f32 %v2599, %v3007
  %v3121 = vsub.f32 %v2600, %v3007
  %v3122 = vsub.f32 %v2601, %v3007
  %v3123 = vsub.f32 %v2602, %v3007
  %v3124 = vsub.f32 %v2603, %v3007
  %v3125 = vsub.f32 %v2604, %v3007
  %v3126 = vsub.f32 %v2605, %v3007
  %v3127 = vsub.f32 %v2606, %v3007
  %v3128 = vsub.f32 %v2607, %v3007
  %v3129 = vsub.f32 %v2608, %v3007
  %v3130 = vsub.f32 %v2609, %v3007
  %v3131 = vsub.f32 %v2610, %v3007
  %v3132 = vsub.f32 %v2611, %v3007
  %v3133 = vsub.f32 %v2612, %v3007
  %v3134 = vsub.f32 %v2613, %v3007
  %v3135 = vsub.f32 %v2614, %v3007
  %v3136 = vsub.f32 %v2615, %v3007
  %v3137 = vsub.f32 %v2616, %v3007
  %v3138 = vsub.f32 %v2617, %v3007
  %v3139 = vsub.f32 %v2618, %v3007
  %v3140 = vsub.f32 %v2619, %v3007
  %v3141 = vsub.f32 %v2620, %v3007
  %v3142 = vsub.f32 %v2621, %v3007
  %v3143 = vsub.f32 %v2622, %v3007
  %v3144 = vsub.f32 %v2623, %v3007
  %v3145 = vsub.f32 %v2624, %v3007
  %v3146 = vsub.f32 %v2625, %v3007
  %v3147 = vsub.f32 %v2626, %v3007
  %v3148 = vsub.f32 %v2627, %v3007
  %v3149 = vsub.f32 %v2628, %v3007
  %v3150 = vsub.f32 %v2629, %v3007
  %v3151 = vsub.f32 %v2630, %v3007
  %v3152 = vsub.f32 %v2631, %v3007
  %v3153 = vsub.f32 %v2632, %v3007
  %v3154 = vsub.f32 %v2633, %v3007
  %v3155 = vsub.f32 %v2634, %v3007
  %v3156 = vsub.f32 %v2635, %v3007
  %v3157 = vsub.f32 %v2636, %v3007
  %v3158 = vsub.f32 %v2637, %v3007
  %v3159 = vsub.f32 %v2638, %v3007
  %v3160 = vsub.f32 %v2639, %v3007
  %v3161 = vsub.f32 %v2640, %v3007
  %v3162 = vsub.f32 %v2641, %v3007
  %v3163 = vsub.f32 %v2642, %v3007
  %v3164 = vsub.f32 %v2643, %v3007
  %v3165 = vsub.f32 %v2644, %v3007
  %v3166 = vsub.f32 %v2645, %v3007
  %v3167 = vsub.f32 %v2646, %v3007
  %v3168 = vsub.f32 %v2647, %v3007
  %v3169 = vsub.f32 %v2648, %v3007
  %v3170 = vsub.f32 %v2649, %v3007
  %v3171 = vsub.f32 %v2650, %v3007
  %v3172 = vsub.f32 %v2651, %v3007
  %v3173 = vsub.f32 %v2652, %v3007
  %v3174 = vsub.f32 %v2653, %v3007
  %v3175 = vsub.f32 %v2654, %v3007
  %v3176 = vsub.f32 %v2655, %v3007
  %v3177 = vsub.f32 %v2656, %v3007
  %v3178 = vsub.f32 %v2657, %v3007
  %v3179 = vsub.f32 %v2658, %v3007
  %v3180 = vsub.f32 %v2659, %v3007
  %v3181 = vsub.f32 %v2660, %v3007
  %v3182 = vsub.f32 %v2661, %v3007
  %v3183 = vsub.f32 %v2662, %v3007
  %v3184 = vsub.f32 %v2663, %v3007
  %v3185 = vsub.f32 %v2664, %v3007
  %v3186 = vsub.f32 %v2665, %v3007
  %v3187 = vsub.f32 %v2666, %v3007
  %v3188 = vsub.f32 %v2667, %v3007
  %v3189 = vsub.f32 %v2668, %v3007
  %v3190 = vsub.f32 %v2669, %v3007
  %v3191 = vsub.f32 %v2670, %v3007
  %v3192 = vsub.f32 %v2671, %v3007
  %v3193 = vsub.f32 %v2672, %v3007
  %v3194 = vsub.f32 %v2673, %v3007
  %v3195 = vsub.f32 %v2674, %v3007
  %v3196 = vsub.f32 %v2675, %v3007
  %v3197 = vsub.f32 %v2676, %v3007
  %v3198 = vsub.f32 %v2677, %v3007
  %v3199 = vsub.f32 %v2678, %v3007
  %v3200 = vsub.f32 %v2679, %v3007
  %v3201 = vsub.f32 %v2680, %v3007
  %v3202 = vsub.f32 %v2681, %v3007
  %v3203 = vsub.f32 %v2682, %v3007
  %v3204 = vsub.f32 %v2683, %v3007
  %v3205 = vsub.f32 %v2684, %v3007
  %v3206 = vsub.f32 %v2685, %v3007
  %v3207 = vsub.f32 %v2686, %v3007
  %v3208 = vsub.f32 %v2687, %v3007
  %v3209 = vsub.f32 %v2688, %v3007
  %v3210 = vsub.f32 %v2689, %v3007
  %v3211 = vsub.f32 %v2690, %v3007
  %v3212 = vsub.f32 %v2691, %v3007
  %v3213 = vsub.f32 %v2692, %v3007
  %v3214 = vsub.f32 %v2693, %v3007
  %v3215 = vsub.f32 %v2694, %v3007
  %v3216 = vsub.f32 %v2695, %v3007
  %v3217 = vsub.f32 %v2696, %v3007
  %v3218 = vsub.f32 %v2697, %v3007
  %v3219 = vsub.f32 %v2698, %v3007
  %v3220 = vsub.f32 %v2699, %v3007
  %v3221 = vsub.f32 %v2700, %v3007
  %v3222 = vsub.f32 %v2701, %v3007
  %v3223 = vsub.f32 %v2702, %v3007
  %v3224 = vsub.f32 %v2703, %v3007
  %v3225 = vsub.f32 %v2704, %v3007
  %v3226 = vsub.f32 %v2705, %v3007
  %v3227 = vsub.f32 %v2706, %v3007
  %v3228 = vsub.f32 %v2707, %v3007
  %v3229 = vsub.f32 %v2708, %v3007
  %v3230 = vsub.f32 %v2709, %v3007
  %v3231 = vsub.f32 %v2710, %v3007
  %v3232 = vsub.f32 %v2711, %v3007
  %v3233 = vsub.f32 %v2712, %v3007
  %v3234 = vsub.f32 %v2713, %v3007
  %v3235 = vsub.f32 %v2714, %v3007
  %v3236 = vsub.f32 %v2715, %v3007
  %v3237 = vsub.f32 %v2716, %v3007
  %v3238 = vsub.f32 %v2717, %v3007
  %v3239 = vsub.f32 %v2718, %v3007
  %v3240 = vsub.f32 %v2719, %v3007
  %v3241 = vsub.f32 %v2720, %v3007
  %v3242 = vsub.f32 %v2721, %v3007
  %v3243 = vsub.f32 %v2722, %v3007
  %v3244 = vsub.f32 %v2723, %v3007
  %v3245 = vsub.f32 %v2724, %v3007
  %v3246 = vsub.f32 %v2725, %v3007
  %v3247 = vsub.f32 %v2726, %v3007
  %v3248 = vsub.f32 %v2727, %v3007
  %v3249 = vsub.f32 %v2728, %v3007
  %v3250 = vsub.f32 %v2729, %v3007
  %v3251 = vsub.f32 %v2730, %v3007
  %v3252 = vsub.f32 %v2731, %v3007
  %v3253 = vsub.f32 %v2732, %v3007
  %v3254 = vsub.f32 %v2733, %v3007
  %v3255 = vsub.f32 %v2734, %v3007
  %v3256 = vsub.f32 %v2735, %v3007
  %v3257 = vsub.f32 %v2736, %v3007
  %v3258 = vsub.f32 %v2737, %v3007
  %v3259 = vsub.f32 %v2738, %v3007
  %v3260 = vsub.f32 %v2739, %v3007
  %v3261 = vsub.f32 %v2740, %v3007
  %v3262 = vsub.f32 %v2741, %v3007
  %v3263 = vsub.f32 %v2742, %v3007
  %v3264 = vmul.f32 %v3008, %v3008
  %v3265 = vmul.f32 %v3009, %v3009
  %v3266 = vmul.f32 %v3010, %v3010
  %v3267 = vmul.f32 %v3011, %v3011
  %v3268 = vmul.f32 %v3012, %v3012
  %v3269 = vmul.f32 %v3013, %v3013
  %v3270 = vmul.f32 %v3014, %v3014
  %v3271 = vmul.f32 %v3015, %v3015
  %v3272 = vmul.f32 %v3016, %v3016
  %v3273 = vmul.f32 %v3017, %v3017
  %v3274 = vmul.f32 %v3018, %v3018
  %v3275 = vmul.f32 %v3019, %v3019
  %v3276 = vmul.f32 %v3020, %v3020
  %v3277 = vmul.f32 %v3021, %v3021
  %v3278 = vmul.f32 %v3022, %v3022
  %v3279 = vmul.f32 %v3023, %v3023
  %v3280 = vmul.f32 %v3024, %v3024
  %v3281 = vmul.f32 %v3025, %v3025
  %v3282 = vmul.f32 %v3026, %v3026
  %v3283 = vmul.f32 %v3027, %v3027
  %v3284 = vmul.f32 %v3028, %v3028
  %v3285 = vmul.f32 %v3029, %v3029
  %v3286 = vmul.f32 %v3030, %v3030
  %v3287 = vmul.f32 %v3031, %v3031
  %v3288 = vmul.f32 %v3032, %v3032
  %v3289 = vmul.f32 %v3033, %v3033
  %v3290 = vmul.f32 %v3034, %v3034
  %v3291 = vmul.f32 %v3035, %v3035
  %v3292 = vmul.f32 %v3036, %v3036
  %v3293 = vmul.f32 %v3037, %v3037
  %v3294 = vmul.f32 %v3038, %v3038
  %v3295 = vmul.f32 %v3039, %v3039
  %v3296 = vmul.f32 %v3040, %v3040
  %v3297 = vmul.f32 %v3041, %v3041
  %v3298 = vmul.f32 %v3042, %v3042
  %v3299 = vmul.f32 %v3043, %v3043
  %v3300 = vmul.f32 %v3044, %v3044
  %v3301 = vmul.f32 %v3045, %v3045
  %v3302 = vmul.f32 %v3046, %v3046
  %v3303 = vmul.f32 %v3047, %v3047
  %v3304 = vmul.f32 %v3048, %v3048
  %v3305 = vmul.f32 %v3049, %v3049
  %v3306 = vmul.f32 %v3050, %v3050
  %v3307 = vmul.f32 %v3051, %v3051
  %v3308 = vmul.f32 %v3052, %v3052
  %v3309 = vmul.f32 %v3053, %v3053
  %v3310 = vmul.f32 %v3054, %v3054
  %v3311 = vmul.f32 %v3055, %v3055
  %v3312 = vmul.f32 %v3056, %v3056
  %v3313 = vmul.f32 %v3057, %v3057
  %v3314 = vmul.f32 %v3058, %v3058
  %v3315 = vmul.f32 %v3059, %v3059
  %v3316 = vmul.f32 %v3060, %v3060
  %v3317 = vmul.f32 %v3061, %v3061
  %v3318 = vmul.f32 %v3062, %v3062
  %v3319 = vmul.f32 %v3063, %v3063
  %v3320 = vmul.f32 %v3064, %v3064
  %v3321 = vmul.f32 %v3065, %v3065
  %v3322 = vmul.f32 %v3066, %v3066
  %v3323 = vmul.f32 %v3067, %v3067
  %v3324 = vmul.f32 %v3068, %v3068
  %v3325 = vmul.f32 %v3069, %v3069
  %v3326 = vmul.f32 %v3070, %v3070
  %v3327 = vmul.f32 %v3071, %v3071
  %v3328 = vmul.f32 %v3072, %v3072
  %v3329 = vmul.f32 %v3073, %v3073
  %v3330 = vmul.f32 %v3074, %v3074
  %v3331 = vmul.f32 %v3075, %v3075
  %v3332 = vmul.f32 %v3076, %v3076
  %v3333 = vmul.f32 %v3077, %v3077
  %v3334 = vmul.f32 %v3078, %v3078
  %v3335 = vmul.f32 %v3079, %v3079
  %v3336 = vmul.f32 %v3080, %v3080
  %v3337 = vmul.f32 %v3081, %v3081
  %v3338 = vmul.f32 %v3082, %v3082
  %v3339 = vmul.f32 %v3083, %v3083
  %v3340 = vmul.f32 %v3084, %v3084
  %v3341 = vmul.f32 %v3085, %v3085
  %v3342 = vmul.f32 %v3086, %v3086
  %v3343 = vmul.f32 %v3087, %v3087
  %v3344 = vmul.f32 %v3088, %v3088
  %v3345 = vmul.f32 %v3089, %v3089
  %v3346 = vmul.f32 %v3090, %v3090
  %v3347 = vmul.f32 %v3091, %v3091
  %v3348 = vmul.f32 %v3092, %v3092
  %v3349 = vmul.f32 %v3093, %v3093
  %v3350 = vmul.f32 %v3094, %v3094
  %v3351 = vmul.f32 %v3095, %v3095
  %v3352 = vmul.f32 %v3096, %v3096
  %v3353 = vmul.f32 %v3097, %v3097
  %v3354 = vmul.f32 %v3098, %v3098
  %v3355 = vmul.f32 %v3099, %v3099
  %v3356 = vmul.f32 %v3100, %v3100
  %v3357 = vmul.f32 %v3101, %v3101
  %v3358 = vmul.f32 %v3102, %v3102
  %v3359 = vmul.f32 %v3103, %v3103
  %v3360 = vmul.f32 %v3104, %v3104
  %v3361 = vmul.f32 %v3105, %v3105
  %v3362 = vmul.f32 %v3106, %v3106
  %v3363 = vmul.f32 %v3107, %v3107
  %v3364 = vmul.f32 %v3108, %v3108
  %v3365 = vmul.f32 %v3109, %v3109
  %v3366 = vmul.f32 %v3110, %v3110
  %v3367 = vmul.f32 %v3111, %v3111
  %v3368 = vmul.f32 %v3112, %v3112
  %v3369 = vmul.f32 %v3113, %v3113
  %v3370 = vmul.f32 %v3114, %v3114
  %v3371 = vmul.f32 %v3115, %v3115
  %v3372 = vmul.f32 %v3116, %v3116
  %v3373 = vmul.f32 %v3117, %v3117
  %v3374 = vmul.f32 %v3118, %v3118
  %v3375 = vmul.f32 %v3119, %v3119
  %v3376 = vmul.f32 %v3120, %v3120
  %v3377 = vmul.f32 %v3121, %v3121
  %v3378 = vmul.f32 %v3122, %v3122
  %v3379 = vmul.f32 %v3123, %v3123
  %v3380 = vmul.f32 %v3124, %v3124
  %v3381 = vmul.f32 %v3125, %v3125
  %v3382 = vmul.f32 %v3126, %v3126
  %v3383 = vmul.f32 %v3127, %v3127
  %v3384 = vmul.f32 %v3128, %v3128
  %v3385 = vmul.f32 %v3129, %v3129
  %v3386 = vmul.f32 %v3130, %v3130
  %v3387 = vmul.f32 %v3131, %v3131
  %v3388 = vmul.f32 %v3132, %v3132
  %v3389 = vmul.f32 %v3133, %v3133
  %v3390 = vmul.f32 %v3134, %v3134
  %v3391 = vmul.f32 %v3135, %v3135
  %v3392 = vmul.f32 %v3136, %v3136
  %v3393 = vmul.f32 %v3137, %v3137
  %v3394 = vmul.f32 %v3138, %v3138
  %v3395 = vmul.f32 %v3139, %v3139
  %v3396 = vmul.f32 %v3140, %v3140
  %v3397 = vmul.f32 %v3141, %v3141
  %v3398 = vmul.f32 %v3142, %v3142
  %v3399 = vmul.f32 %v3143, %v3143
  %v3400 = vmul.f32 %v3144, %v3144
  %v3401 = vmul.f32 %v3145, %v3145
  %v3402 = vmul.f32 %v3146, %v3146
  %v3403 = vmul.f32 %v3147, %v3147
  %v3404 = vmul.f32 %v3148, %v3148
  %v3405 = vmul.f32 %v3149, %v3149
  %v3406 = vmul.f32 %v3150, %v3150
  %v3407 = vmul.f32 %v3151, %v3151
  %v3408 = vmul.f32 %v3152, %v3152
  %v3409 = vmul.f32 %v3153, %v3153
  %v3410 = vmul.f32 %v3154, %v3154
  %v3411 = vmul.f32 %v3155, %v3155
  %v3412 = vmul.f32 %v3156, %v3156
  %v3413 = vmul.f32 %v3157, %v3157
  %v3414 = vmul.f32 %v3158, %v3158
  %v3415 = vmul.f32 %v3159, %v3159
  %v3416 = vmul.f32 %v3160, %v3160
  %v3417 = vmul.f32 %v3161, %v3161
  %v3418 = vmul.f32 %v3162, %v3162
  %v3419 = vmul.f32 %v3163, %v3163
  %v3420 = vmul.f32 %v3164, %v3164
  %v3421 = vmul.f32 %v3165, %v3165
  %v3422 = vmul.f32 %v3166, %v3166
  %v3423 = vmul.f32 %v3167, %v3167
  %v3424 = vmul.f32 %v3168, %v3168
  %v3425 = vmul.f32 %v3169, %v3169
  %v3426 = vmul.f32 %v3170, %v3170
  %v3427 = vmul.f32 %v3171, %v3171
  %v3428 = vmul.f32 %v3172, %v3172
  %v3429 = vmul.f32 %v3173, %v3173
  %v3430 = vmul.f32 %v3174, %v3174
  %v3431 = vmul.f32 %v3175, %v3175
  %v3432 = vmul.f32 %v3176, %v3176
  %v3433 = vmul.f32 %v3177, %v3177
  %v3434 = vmul.f32 %v3178, %v3178
  %v3435 = vmul.f32 %v3179, %v3179
  %v3436 = vmul.f32 %v3180, %v3180
  %v3437 = vmul.f32 %v3181, %v3181
  %v3438 = vmul.f32 %v3182, %v3182
  %v3439 = vmul.f32 %v3183, %v3183
  %v3440 = vmul.f32 %v3184, %v3184
  %v3441 = vmul.f32 %v3185, %v3185
  %v3442 = vmul.f32 %v3186, %v3186
  %v3443 = vmul.f32 %v3187, %v3187
  %v3444 = vmul.f32 %v3188, %v3188
  %v3445 = vmul.f32 %v3189, %v3189
  %v3446 = vmul.f32 %v3190, %v3190
  %v3447 = vmul.f32 %v3191, %v3191
  %v3448 = vmul.f32 %v3192, %v3192
  %v3449 = vmul.f32 %v3193, %v3193
  %v3450 = vmul.f32 %v3194, %v3194
  %v3451 = vmul.f32 %v3195, %v3195
  %v3452 = vmul.f32 %v3196, %v3196
  %v3453 = vmul.f32 %v3197, %v3197
  %v3454 = vmul.f32 %v3198, %v3198
  %v3455 = vmul.f32 %v3199, %v3199
  %v3456 = vmul.f32 %v3200, %v3200
  %v3457 = vmul.f32 %v3201, %v3201
  %v3458 = vmul.f32 %v3202, %v3202
  %v3459 = vmul.f32 %v3203, %v3203
  %v3460 = vmul.f32 %v3204, %v3204
  %v3461 = vmul.f32 %v3205, %v3205
  %v3462 = vmul.f32 %v3206, %v3206
  %v3463 = vmul.f32 %v3207, %v3207
  %v3464 = vmul.f32 %v3208, %v3208
  %v3465 = vmul.f32 %v3209, %v3209
  %v3466 = vmul.f32 %v3210, %v3210
  %v3467 = vmul.f32 %v3211, %v3211
  %v3468 = vmul.f32 %v3212, %v3212
  %v3469 = vmul.f32 %v3213, %v3213
  %v3470 = vmul.f32 %v3214, %v3214
  %v3471 = vmul.f32 %v3215, %v3215
  %v3472 = vmul.f32 %v3216, %v3216
  %v3473 = vmul.f32 %v3217, %v3217
  %v3474 = vmul.f32 %v3218, %v3218
  %v3475 = vmul.f32 %v3219, %v3219
  %v3476 = vmul.f32 %v3220, %v3220
  %v3477 = vmul.f32 %v3221, %v3221
  %v3478 = vmul.f32 %v3222, %v3222
  %v3479 = vmul.f32 %v3223, %v3223
  %v3480 = vmul.f32 %v3224, %v3224
  %v3481 = vmul.f32 %v3225, %v3225
  %v3482 = vmul.f32 %v3226, %v3226
  %v3483 = vmul.f32 %v3227, %v3227
  %v3484 = vmul.f32 %v3228, %v3228
  %v3485 = vmul.f32 %v3229, %v3229
  %v3486 = vmul.f32 %v3230, %v3230
  %v3487 = vmul.f32 %v3231, %v3231
  %v3488 = vmul.f32 %v3232, %v3232
  %v3489 = vmul.f32 %v3233, %v3233
  %v3490 = vmul.f32 %v3234, %v3234
  %v3491 = vmul.f32 %v3235, %v3235
  %v3492 = vmul.f32 %v3236, %v3236
  %v3493 = vmul.f32 %v3237, %v3237
  %v3494 = vmul.f32 %v3238, %v3238
  %v3495 = vmul.f32 %v3239, %v3239
  %v3496 = vmul.f32 %v3240, %v3240
  %v3497 = vmul.f32 %v3241, %v3241
  %v3498 = vmul.f32 %v3242, %v3242
  %v3499 = vmul.f32 %v3243, %v3243
  %v3500 = vmul.f32 %v3244, %v3244
  %v3501 = vmul.f32 %v3245, %v3245
  %v3502 = vmul.f32 %v3246, %v3246
  %v3503 = vmul.f32 %v3247, %v3247
  %v3504 = vmul.f32 %v3248, %v3248
  %v3505 = vmul.f32 %v3249, %v3249
  %v3506 = vmul.f32 %v3250, %v3250
  %v3507 = vmul.f32 %v3251, %v3251
  %v3508 = vmul.f32 %v3252, %v3252
  %v3509 = vmul.f32 %v3253, %v3253
  %v3510 = vmul.f32 %v3254, %v3254
  %v3511 = vmul.f32 %v3255, %v3255
  %v3512 = vmul.f32 %v3256, %v3256
  %v3513 = vmul.f32 %v3257, %v3257
  %v3514 = vmul.f32 %v3258, %v3258
  %v3515 = vmul.f32 %v3259, %v3259
  %v3516 = vmul.f32 %v3260, %v3260
  %v3517 = vmul.f32 %v3261, %v3261
  %v3518 = vmul.f32 %v3262, %v3262
  %v3519 = vmul.f32 %v3263, %v3263
  %v3520 = vadd.f32 %v3264, %v3265
  %v3521 = vadd.f32 %v3520, %v3266
  %v3522 = vadd.f32 %v3521, %v3267
  %v3523 = vadd.f32 %v3522, %v3268
  %v3524 = vadd.f32 %v3523, %v3269
  %v3525 = vadd.f32 %v3524, %v3270
  %v3526 = vadd.f32 %v3525, %v3271
  %v3527 = vadd.f32 %v3526, %v3272
  %v3528 = vadd.f32 %v3527, %v3273
  %v3529 = vadd.f32 %v3528, %v3274
  %v3530 = vadd.f32 %v3529, %v3275
  %v3531 = vadd.f32 %v3530, %v3276
  %v3532 = vadd.f32 %v3531, %v3277
  %v3533 = vadd.f32 %v3532, %v3278
  %v3534 = vadd.f32 %v3533, %v3279
  %v3535 = vadd.f32 %v3534, %v3280
  %v3536 = vadd.f32 %v3535, %v3281
  %v3537 = vadd.f32 %v3536, %v3282
  %v3538 = vadd.f32 %v3537, %v3283
  %v3539 = vadd.f32 %v3538, %v3284
  %v3540 = vadd.f32 %v3539, %v3285
  %v3541 = vadd.f32 %v3540, %v3286
  %v3542 = vadd.f32 %v3541, %v3287
  %v3543 = vadd.f32 %v3542, %v3288
  %v3544 = vadd.f32 %v3543, %v3289
  %v3545 = vadd.f32 %v3544, %v3290
  %v3546 = vadd.f32 %v3545, %v3291
  %v3547 = vadd.f32 %v3546, %v3292
  %v3548 = vadd.f32 %v3547, %v3293
  %v3549 = vadd.f32 %v3548, %v3294
  %v3550 = vadd.f32 %v3549, %v3295
  %v3551 = vadd.f32 %v3550, %v3296
  %v3552 = vadd.f32 %v3551, %v3297
  %v3553 = vadd.f32 %v3552, %v3298
  %v3554 = vadd.f32 %v3553, %v3299
  %v3555 = vadd.f32 %v3554, %v3300
  %v3556 = vadd.f32 %v3555, %v3301
  %v3557 = vadd.f32 %v3556, %v3302
  %v3558 = vadd.f32 %v3557, %v3303
  %v3559 = vadd.f32 %v3558, %v3304
  %v3560 = vadd.f32 %v3559, %v3305
  %v3561 = vadd.f32 %v3560, %v3306
  %v3562 = vadd.f32 %v3561, %v3307
  %v3563 = vadd.f32 %v3562, %v3308
  %v3564 = vadd.f32 %v3563, %v3309
  %v3565 = vadd.f32 %v3564, %v3310
  %v3566 = vadd.f32 %v3565, %v3311
  %v3567 = vadd.f32 %v3566, %v3312
  %v3568 = vadd.f32 %v3567, %v3313
  %v3569 = vadd.f32 %v3568, %v3314
  %v3570 = vadd.f32 %v3569, %v3315
  %v3571 = vadd.f32 %v3570, %v3316
  %v3572 = vadd.f32 %v3571, %v3317
  %v3573 = vadd.f32 %v3572, %v3318
  %v3574 = vadd.f32 %v3573, %v3319
  %v3575 = vadd.f32 %v3574, %v3320
  %v3576 = vadd.f32 %v3575, %v3321
  %v3577 = vadd.f32 %v3576, %v3322
  %v3578 = vadd.f32 %v3577, %v3323
  %v3579 = vadd.f32 %v3578, %v3324
  %v3580 = vadd.f32 %v3579, %v3325
  %v3581 = vadd.f32 %v3580, %v3326
  %v3582 = vadd.f32 %v3581, %v3327
  %v3583 = vadd.f32 %v3582, %v3328
  %v3584 = vadd.f32 %v3583, %v3329
  %v3585 = vadd.f32 %v3584, %v3330
  %v3586 = vadd.f32 %v3585, %v3331
  %v3587 = vadd.f32 %v3586, %v3332
  %v3588 = vadd.f32 %v3587, %v3333
  %v3589 = vadd.f32 %v3588, %v3334
  %v3590 = vadd.f32 %v3589, %v3335
  %v3591 = vadd.f32 %v3590, %v3336
  %v3592 = vadd.f32 %v3591, %v3337
  %v3593 = vadd.f32 %v3592, %v3338
  %v3594 = vadd.f32 %v3593, %v3339
  %v3595 = vadd.f32 %v3594, %v3340
  %v3596 = vadd.f32 %v3595, %v3341
  %v3597 = vadd.f32 %v3596, %v3342
  %v3598 = vadd.f32 %v3597, %v3343
  %v3599 = vadd.f32 %v3598, %v3344
  %v3600 = vadd.f32 %v3599, %v3345
  %v3601 = vadd.f32 %v3600, %v3346
  %v3602 = vadd.f32 %v3601, %v3347
  %v3603 = vadd.f32 %v3602, %v3348
  %v3604 = vadd.f32 %v3603, %v3349
  %v3605 = vadd.f32 %v3604, %v3350
  %v3606 = vadd.f32 %v3605, %v3351
  %v3607 = vadd.f32 %v3606, %v3352
  %v3608 = vadd.f32 %v3607, %v3353
  %v3609 = vadd.f32 %v3608, %v3354
  %v3610 = vadd.f32 %v3609, %v3355
  %v3611 = vadd.f32 %v3610, %v3356
  %v3612 = vadd.f32 %v3611, %v3357
  %v3613 = vadd.f32 %v3612, %v3358
  %v3614 = vadd.f32 %v3613, %v3359
  %v3615 = vadd.f32 %v3614, %v3360
  %v3616 = vadd.f32 %v3615, %v3361
  %v3617 = vadd.f32 %v3616, %v3362
  %v3618 = vadd.f32 %v3617, %v3363
  %v3619 = vadd.f32 %v3618, %v3364
  %v3620 = vadd.f32 %v3619, %v3365
  %v3621 = vadd.f32 %v3620, %v3366
  %v3622 = vadd.f32 %v3621, %v3367
  %v3623 = vadd.f32 %v3622, %v3368
  %v3624 = vadd.f32 %v3623, %v3369
  %v3625 = vadd.f32 %v3624, %v3370
  %v3626 = vadd.f32 %v3625, %v3371
  %v3627 = vadd.f32 %v3626, %v3372
  %v3628 = vadd.f32 %v3627, %v3373
  %v3629 = vadd.f32 %v3628, %v3374
  %v3630 = vadd.f32 %v3629, %v3375
  %v3631 = vadd.f32 %v3630, %v3376
  %v3632 = vadd.f32 %v3631, %v3377
  %v3633 = vadd.f32 %v3632, %v3378
  %v3634 = vadd.f32 %v3633, %v3379
  %v3635 = vadd.f32 %v3634, %v3380
  %v3636 = vadd.f32 %v3635, %v3381
  %v3637 = vadd.f32 %v3636, %v3382
  %v3638 = vadd.f32 %v3637, %v3383
  %v3639 = vadd.f32 %v3638, %v3384
  %v3640 = vadd.f32 %v3639, %v3385
  %v3641 = vadd.f32 %v3640, %v3386
  %v3642 = vadd.f32 %v3641, %v3387
  %v3643 = vadd.f32 %v3642, %v3388
  %v3644 = vadd.f32 %v3643, %v3389
  %v3645 = vadd.f32 %v3644, %v3390
  %v3646 = vadd.f32 %v3645, %v3391
  %v3647 = vadd.f32 %v3646, %v3392
  %v3648 = vadd.f32 %v3647, %v3393
  %v3649 = vadd.f32 %v3648, %v3394
  %v3650 = vadd.f32 %v3649, %v3395
  %v3651 = vadd.f32 %v3650, %v3396
  %v3652 = vadd.f32 %v3651, %v3397
  %v3653 = vadd.f32 %v3652, %v3398
  %v3654 = vadd.f32 %v3653, %v3399
  %v3655 = vadd.f32 %v3654, %v3400
  %v3656 = vadd.f32 %v3655, %v3401
  %v3657 = vadd.f32 %v3656, %v3402
  %v3658 = vadd.f32 %v3657, %v3403
  %v3659 = vadd.f32 %v3658, %v3404
  %v3660 = vadd.f32 %v3659, %v3405
  %v3661 = vadd.f32 %v3660, %v3406
  %v3662 = vadd.f32 %v3661, %v3407
  %v3663 = vadd.f32 %v3662, %v3408
  %v3664 = vadd.f32 %v3663, %v3409
  %v3665 = vadd.f32 %v3664, %v3410
  %v3666 = vadd.f32 %v3665, %v3411
  %v3667 = vadd.f32 %v3666, %v3412
  %v3668 = vadd.f32 %v3667, %v3413
  %v3669 = vadd.f32 %v3668, %v3414
  %v3670 = vadd.f32 %v3669, %v3415
  %v3671 = vadd.f32 %v3670, %v3416
  %v3672 = vadd.f32 %v3671, %v3417
  %v3673 = vadd.f32 %v3672, %v3418
  %v3674 = vadd.f32 %v3673, %v3419
  %v3675 = vadd.f32 %v3674, %v3420
  %v3676 = vadd.f32 %v3675, %v3421
  %v3677 = vadd.f32 %v3676, %v3422
  %v3678 = vadd.f32 %v3677, %v3423
  %v3679 = vadd.f32 %v3678, %v3424
  %v3680 = vadd.f32 %v3679, %v3425
  %v3681 = vadd.f32 %v3680, %v3426
  %v3682 = vadd.f32 %v3681, %v3427
  %v3683 = vadd.f32 %v3682, %v3428
  %v3684 = vadd.f32 %v3683, %v3429
  %v3685 = vadd.f32 %v3684, %v3430
  %v3686 = vadd.f32 %v3685, %v3431
  %v3687 = vadd.f32 %v3686, %v3432
  %v3688 = vadd.f32 %v3687, %v3433
  %v3689 = vadd.f32 %v3688, %v3434
  %v3690 = vadd.f32 %v3689, %v3435
  %v3691 = vadd.f32 %v3690, %v3436
  %v3692 = vadd.f32 %v3691, %v3437
  %v3693 = vadd.f32 %v3692, %v3438
  %v3694 = vadd.f32 %v3693, %v3439
  %v3695 = vadd.f32 %v3694, %v3440
  %v3696 = vadd.f32 %v3695, %v3441
  %v3697 = vadd.f32 %v3696, %v3442
  %v3698 = vadd.f32 %v3697, %v3443
  %v3699 = vadd.f32 %v3698, %v3444
  %v3700 = vadd.f32 %v3699, %v3445
  %v3701 = vadd.f32 %v3700, %v3446
  %v3702 = vadd.f32 %v3701, %v3447
  %v3703 = vadd.f32 %v3702, %v3448
  %v3704 = vadd.f32 %v3703, %v3449
  %v3705 = vadd.f32 %v3704, %v3450
  %v3706 = vadd.f32 %v3705, %v3451
  %v3707 = vadd.f32 %v3706, %v3452
  %v3708 = vadd.f32 %v3707, %v3453
  %v3709 = vadd.f32 %v3708, %v3454
  %v3710 = vadd.f32 %v3709, %v3455
  %v3711 = vadd.f32 %v3710, %v3456
  %v3712 = vadd.f32 %v3711, %v3457
  %v3713 = vadd.f32 %v3712, %v3458
  %v3714 = vadd.f32 %v3713, %v3459
  %v3715 = vadd.f32 %v3714, %v3460
  %v3716 = vadd.f32 %v3715, %v3461
  %v3717 = vadd.f32 %v3716, %v3462
  %v3718 = vadd.f32 %v3717, %v3463
  %v3719 = vadd.f32 %v3718, %v3464
  %v3720 = vadd.f32 %v3719, %v3465
  %v3721 = vadd.f32 %v3720, %v3466
  %v3722 = vadd.f32 %v3721, %v3467
  %v3723 = vadd.f32 %v3722, %v3468
  %v3724 = vadd.f32 %v3723, %v3469
  %v3725 = vadd.f32 %v3724, %v3470
  %v3726 = vadd.f32 %v3725, %v3471
  %v3727 = vadd.f32 %v3726, %v3472
  %v3728 = vadd.f32 %v3727, %v3473
  %v3729 = vadd.f32 %v3728, %v3474
  %v3730 = vadd.f32 %v3729, %v3475
  %v3731 = vadd.f32 %v3730, %v3476
  %v3732 = vadd.f32 %v3731, %v3477
  %v3733 = vadd.f32 %v3732, %v3478
  %v3734 = vadd.f32 %v3733, %v3479
  %v3735 = vadd.f32 %v3734, %v3480
  %v3736 = vadd.f32 %v3735, %v3481
  %v3737 = vadd.f32 %v3736, %v3482
  %v3738 = vadd.f32 %v3737, %v3483
  %v3739 = vadd.f32 %v3738, %v3484
  %v3740 = vadd.f32 %v3739, %v3485
  %v3741 = vadd.f32 %v3740, %v3486
  %v3742 = vadd.f32 %v3741, %v3487
  %v3743 = vadd.f32 %v3742, %v3488
  %v3744 = vadd.f32 %v3743, %v3489
  %v3745 = vadd.f32 %v3744, %v3490
  %v3746 = vadd.f32 %v3745, %v3491
  %v3747 = vadd.f32 %v3746, %v3492
  %v3748 = vadd.f32 %v3747, %v3493
  %v3749 = vadd.f32 %v3748, %v3494
  %v3750 = vadd.f32 %v3749, %v3495
  %v3751 = vadd.f32 %v3750, %v3496
  %v3752 = vadd.f32 %v3751, %v3497
  %v3753 = vadd.f32 %v3752, %v3498
  %v3754 = vadd.f32 %v3753, %v3499
  %v3755 = vadd.f32 %v3754, %v3500
  %v3756 = vadd.f32 %v3755, %v3501
  %v3757 = vadd.f32 %v3756, %v3502
  %v3758 = vadd.f32 %v3757, %v3503
  %v3759 = vadd.f32 %v3758, %v3504
  %v3760 = vadd.f32 %v3759, %v3505
  %v3761 = vadd.f32 %v3760, %v3506
  %v3762 = vadd.f32 %v3761, %v3507
  %v3763 = vadd.f32 %v3762, %v3508
  %v3764 = vadd.f32 %v3763, %v3509
  %v3765 = vadd.f32 %v3764, %v3510
  %v3766 = vadd.f32 %v3765, %v3511
  %v3767 = vadd.f32 %v3766, %v3512
  %v3768 = vadd.f32 %v3767, %v3513
  %v3769 = vadd.f32 %v3768, %v3514
  %v3770 = vadd.f32 %v3769, %v3515
  %v3771 = vadd.f32 %v3770, %v3516
  %v3772 = vadd.f32 %v3771, %v3517
  %v3773 = vadd.f32 %v3772, %v3518
  %v3774 = vadd.f32 %v3773, %v3519
  %v3775 = vrot.slane %v3774, 4
  %v3776 = vadd.f32 %v3774, %v3775
  %v3777 = vrot.slane %v3776, 2
  %v3778 = vadd.f32 %v3776, %v3777
  %v3779 = vrot.slane %v3778, 1
  %v3780 = vadd.f32 %v3778, %v3779
  %v3781 = vmul.f32 %v3780, %v3006
  %v3782 = vadd.f32 %v3781, 1e-05
  %v3783 = vrsqrt.pop %v3782
  %v3784 = vmul.f32 %v3008, %v3783
  %v3785 = vmul.f32 %v3009, %v3783
  %v3786 = vmul.f32 %v3010, %v3783
  %v3787 = vmul.f32 %v3011, %v3783
  %v3788 = vmul.f32 %v3012, %v3783
  %v3789 = vmul.f32 %v3013, %v3783
  %v3790 = vmul.f32 %v3014, %v3783
  %v3791 = vmul.f32 %v3015, %v3783
  %v3792 = vmul.f32 %v3016, %v3783
  %v3793 = vmul.f32 %v3017, %v3783
  %v3794 = vmul.f32 %v3018, %v3783
  %v3795 = vmul.f32 %v3019, %v3783
  %v3796 = vmul.f32 %v3020, %v3783
  %v3797 = vmul.f32 %v3021, %v3783
  %v3798 = vmul.f32 %v3022, %v3783
  %v3799 = vmul.f32 %v3023, %v3783
  %v3800 = vmul.f32 %v3024, %v3783
  %v3801 = vmul.f32 %v3025, %v3783
  %v3802 = vmul.f32 %v3026, %v3783
  %v3803 = vmul.f32 %v3027, %v3783
  %v3804 = vmul.f32 %v3028, %v3783
  %v3805 = vmul.f32 %v3029, %v3783
  %v3806 = vmul.f32 %v3030, %v3783
  %v3807 = vmul.f32 %v3031, %v3783
  %v3808 = vmul.f32 %v3032, %v3783
  %v3809 = vmul.f32 %v3033, %v3783
  %v3810 = vmul.f32 %v3034, %v3783
  %v3811 = vmul.f32 %v3035, %v3783
  %v3812 = vmul.f32 %v3036, %v3783
  %v3813 = vmul.f32 %v3037, %v3783
  %v3814 = vmul.f32 %v3038, %v3783
  %v3815 = vmul.f32 %v3039, %v3783
  %v3816 = vmul.f32 %v3040, %v3783
  %v3817 = vmul.f32 %v3041, %v3783
  %v3818 = vmul.f32 %v3042, %v3783
  %v3819 = vmul.f32 %v3043, %v3783
  %v3820 = vmul.f32 %v3044, %v3783
  %v3821 = vmul.f32 %v3045, %v3783
  %v3822 = vmul.f32 %v3046, %v3783
  %v3823 = vmul.f32 %v3047, %v3783
  %v3824 = vmul.f32 %v3048, %v3783
  %v3825 = vmul.f32 %v3049, %v3783
  %v3826 = vmul.f32 %v3050, %v3783
  %v3827 = vmul.f32 %v3051, %v3783
  %v3828 = vmul.f32 %v3052, %v3783
  %v3829 = vmul.f32 %v3053, %v3783
  %v3830 = vmul.f32 %v3054, %v3783
  %v3831 = vmul.f32 %v3055, %v3783
  %v3832 = vmul.f32 %v3056, %v3783
  %v3833 = vmul.f32 %v3057, %v3783
  %v3834 = vmul.f32 %v3058, %v3783
  %v3835 = vmul.f32 %v3059, %v3783
  %v3836 = vmul.f32 %v3060, %v3783
  %v3837 = vmul.f32 %v3061, %v3783
  %v3838 = vmul.f32 %v3062, %v3783
  %v3839 = vmul.f32 %v3063, %v3783
  %v3840 = vmul.f32 %v3064, %v3783
  %v3841 = vmul.f32 %v3065, %v3783
  %v3842 = vmul.f32 %v3066, %v3783
  %v3843 = vmul.f32 %v3067, %v3783
  %v3844 = vmul.f32 %v3068, %v3783
  %v3845 = vmul.f32 %v3069, %v3783
  %v3846 = vmul.f32 %v3070, %v3783
  %v3847 = vmul.f32 %v3071, %v3783
  %v3848 = vmul.f32 %v3072, %v3783
  %v3849 = vmul.f32 %v3073, %v3783
  %v3850 = vmul.f32 %v3074, %v3783
  %v3851 = vmul.f32 %v3075, %v3783
  %v3852 = vmul.f32 %v3076, %v3783
  %v3853 = vmul.f32 %v3077, %v3783
  %v3854 = vmul.f32 %v3078, %v3783
  %v3855 = vmul.f32 %v3079, %v3783
  %v3856 = vmul.f32 %v3080, %v3783
  %v3857 = vmul.f32 %v3081, %v3783
  %v3858 = vmul.f32 %v3082, %v3783
  %v3859 = vmul.f32 %v3083, %v3783
  %v3860 = vmul.f32 %v3084, %v3783
  %v3861 = vmul.f32 %v3085, %v3783
  %v3862 = vmul.f32 %v3086, %v3783
  %v3863 = vmul.f32 %v3087, %v3783
  %v3864 = vmul.f32 %v3088, %v3783
  %v3865 = vmul.f32 %v3089, %v3783
  %v3866 = vmul.f32 %v3090, %v3783
  %v3867 = vmul.f32 %v3091, %v3783
  %v3868 = vmul.f32 %v3092, %v3783
  %v3869 = vmul.f32 %v3093, %v3783
  %v3870 = vmul.f32 %v3094, %v3783
  %v3871 = vmul.f32 %v3095, %v3783
  %v3872 = vmul.f32 %v3096, %v3783
  %v3873 = vmul.f32 %v3097, %v3783
  %v3874 = vmul.f32 %v3098, %v3783
  %v3875 = vmul.f32 %v3099, %v3783
  %v3876 = vmul.f32 %v3100, %v3783
  %v3877 = vmul.f32 %v3101, %v3783
  %v3878 = vmul.f32 %v3102, %v3783
  %v3879 = vmul.f32 %v3103, %v3783
  %v3880 = vmul.f32 %v3104, %v3783
  %v3881 = vmul.f32 %v3105, %v3783
  %v3882 = vmul.f32 %v3106, %v3783
  %v3883 = vmul.f32 %v3107, %v3783
  %v3884 = vmul.f32 %v3108, %v3783
  %v3885 = vmul.f32 %v3109, %v3783
  %v3886 = vmul.f32 %v3110, %v3783
  %v3887 = vmul.f32 %v3111, %v3783
  %v3888 = vmul.f32 %v3112, %v3783
  %v3889 = vmul.f32 %v3113, %v3783
  %v3890 = vmul.f32 %v3114, %v3783
  %v3891 = vmul.f32 %v3115, %v3783
  %v3892 = vmul.f32 %v3116, %v3783
  %v3893 = vmul.f32 %v3117, %v3783
  %v3894 = vmul.f32 %v3118, %v3783
  %v3895 = vmul.f32 %v3119, %v3783
  %v3896 = vmul.f32 %v3120, %v3783
  %v3897 = vmul.f32 %v3121, %v3783
  %v3898 = vmul.f32 %v3122, %v3783
  %v3899 = vmul.f32 %v3123, %v3783
  %v3900 = vmul.f32 %v3124, %v3783
  %v3901 = vmul.f32 %v3125, %v3783
  %v3902 = vmul.f32 %v3126, %v3783
  %v3903 = vmul.f32 %v3127, %v3783
  %v3904 = vmul.f32 %v3128, %v3783
  %v3905 = vmul.f32 %v3129, %v3783
  %v3906 = vmul.f32 %v3130, %v3783
  %v3907 = vmul.f32 %v3131, %v3783
  %v3908 = vmul.f32 %v3132, %v3783
  %v3909 = vmul.f32 %v3133, %v3783
  %v3910 = vmul.f32 %v3134, %v3783
  %v3911 = vmul.f32 %v3135, %v3783
  %v3912 = vmul.f32 %v3136, %v3783
  %v3913 = vmul.f32 %v3137, %v3783
  %v3914 = vmul.f32 %v3138, %v3783
  %v3915 = vmul.f32 %v3139, %v3783
  %v3916 = vmul.f32 %v3140, %v3783
  %v3917 = vmul.f32 %v3141, %v3783
  %v3918 = vmul.f32 %v3142, %v3783
  %v3919 = vmul.f32 %v3143, %v3783
  %v3920 = vmul.f32 %v3144, %v3783
  %v3921 = vmul.f32 %v3145, %v3783
  %v3922 = vmul.f32 %v3146, %v3783
  %v3923 = vmul.f32 %v3147, %v3783
  %v3924 = vmul.f32 %v3148, %v3783
  %v3925 = vmul.f32 %v3149, %v3783
  %v3926 = vmul.f32 %v3150, %v3783
  %v3927 = vmul.f32 %v3151, %v3783
  %v3928 = vmul.f32 %v3152, %v3783
  %v3929 = vmul.f32 %v3153, %v3783
  %v3930 = vmul.f32 %v3154, %v3783
  %v3931 = vmul.f32 %v3155, %v3783
  %v3932 = vmul.f32 %v3156, %v3783
  %v3933 = vmul.f32 %v3157, %v3783
  %v3934 = vmul.f32 %v3158, %v3783
  %v3935 = vmul.f32 %v3159, %v3783
  %v3936 = vmul.f32 %v3160, %v3783
  %v3937 = vmul.f32 %v3161, %v3783
  %v3938 = vmul.f32 %v3162, %v3783
  %v3939 = vmul.f32 %v3163, %v3783
  %v3940 = vmul.f32 %v3164, %v3783
  %v3941 = vmul.f32 %v3165, %v3783
  %v3942 = vmul.f32 %v3166, %v3783
  %v3943 = vmul.f32 %v3167, %v3783
  %v3944 = vmul.f32 %v3168, %v3783
  %v3945 = vmul.f32 %v3169, %v3783
  %v3946 = vmul.f32 %v3170, %v3783
  %v3947 = vmul.f32 %v3171, %v3783
  %v3948 = vmul.f32 %v3172, %v3783
  %v3949 = vmul.f32 %v3173, %v3783
  %v3950 = vmul.f32 %v3174, %v3783
  %v3951 = vmul.f32 %v3175, %v3783
  %v3952 = vmul.f32 %v3176, %v3783
  %v3953 = vmul.f32 %v3177, %v3783
  %v3954 = vmul.f32 %v3178, %v3783
  %v3955 = vmul.f32 %v3179, %v3783
  %v3956 = vmul.f32 %v3180, %v3783
  %v3957 = vmul.f32 %v3181, %v3783
  %v3958 = vmul.f32 %v3182, %v3783
  %v3959 = vmul.f32 %v3183, %v3783
  %v3960 = vmul.f32 %v3184, %v3783
  %v3961 = vmul.f32 %v3185, %v3783
  %v3962 = vmul.f32 %v3186, %v3783
  %v3963 = vmul.f32 %v3187, %v3783
  %v3964 = vmul.f32 %v3188, %v3783
  %v3965 = vmul.f32 %v3189, %v3783
  %v3966 = vmul.f32 %v3190, %v3783
  %v3967 = vmul.f32 %v3191, %v3783
  %v3968 = vmul.f32 %v3192, %v3783
  %v3969 = vmul.f32 %v3193, %v3783
  %v3970 = vmul.f32 %v3194, %v3783
  %v3971 = vmul.f32 %v3195, %v3783
  %v3972 = vmul.f32 %v3196, %v3783
  %v3973 = vmul.f32 %v3197, %v3783
  %v3974 = vmul.f32 %v3198, %v3783
  %v3975 = vmul.f32 %v3199, %v3783
  %v3976 = vmul.f32 %v3200, %v3783
  %v3977 = vmul.f32 %v3201, %v3783
  %v3978 = vmul.f32 %v3202, %v3783
  %v3979 = vmul.f32 %v3203, %v3783
  %v3980 = vmul.f32 %v3204, %v3783
  %v3981 = vmul.f32 %v3205, %v3783
  %v3982 = vmul.f32 %v3206, %v3783
  %v3983 = vmul.f32 %v3207, %v3783
  %v3984 = vmul.f32 %v3208, %v3783
  %v3985 = vmul.f32 %v3209, %v3783
  %v3986 = vmul.f32 %v3210, %v3783
  %v3987 = vmul.f32 %v3211, %v3783
  %v3988 = vmul.f32 %v3212, %v3783
  %v3989 = vmul.f32 %v3213, %v3783
  %v3990 = vmul.f32 %v3214, %v3783
  %v3991 = vmul.f32 %v3215, %v3783
  %v3992 = vmul.f32 %v3216, %v3783
  %v3993 = vmul.f32 %v3217, %v3783
  %v3994 = vmul.f32 %v3218, %v3783
  %v3995 = vmul.f32 %v3219, %v3783
  %v3996 = vmul.f32 %v3220, %v3783
  %v3997 = vmul.f32 %v3221, %v3783
  %v3998 = vmul.f32 %v3222, %v3783
  %v3999 = vmul.f32 %v3223, %v3783
  %v4000 = vmul.f32 %v3224, %v3783
  %v4001 = vmul.f32 %v3225, %v3783
  %v4002 = vmul.f32 %v3226, %v3783
  %v4003 = vmul.f32 %v3227, %v3783
  %v4004 = vmul.f32 %v3228, %v3783
  %v4005 = vmul.f32 %v3229, %v3783
  %v4006 = vmul.f32 %v3230, %v3783
  %v4007 = vmul.f32 %v3231, %v3783
  %v4008 = vmul.f32 %v3232, %v3783
  %v4009 = vmul.f32 %v3233, %v3783
  %v4010 = vmul.f32 %v3234, %v3783
  %v4011 = vmul.f32 %v3235, %v3783
  %v4012 = vmul.f32 %v3236, %v3783
  %v4013 = vmul.f32 %v3237, %v3783
  %v4014 = vmul.f32 %v3238, %v3783
  %v4015 = vmul.f32 %v3239, %v3783
  %v4016 = vmul.f32 %v3240, %v3783
  %v4017 = vmul.f32 %v3241, %v3783
  %v4018 = vmul.f32 %v3242, %v3783
  %v4019 = vmul.f32 %v3243, %v3783
  %v4020 = vmul.f32 %v3244, %v3783
  %v4021 = vmul.f32 %v3245, %v3783
  %v4022 = vmul.f32 %v3246, %v3783
  %v4023 = vmul.f32 %v3247, %v3783
  %v4024 = vmul.f32 %v3248, %v3783
  %v4025 = vmul.f32 %v3249, %v3783
  %v4026 = vmul.f32 %v3250, %v3783
  %v4027 = vmul.f32 %v3251, %v3783
  %v4028 = vmul.f32 %v3252, %v3783
  %v4029 = vmul.f32 %v3253, %v3783
  %v4030 = vmul.f32 %v3254, %v3783
  %v4031 = vmul.f32 %v3255, %v3783
  %v4032 = vmul.f32 %v3256, %v3783
  %v4033 = vmul.f32 %v3257, %v3783
  %v4034 = vmul.f32 %v3258, %v3783
  %v4035 = vmul.f32 %v3259, %v3783
  %v4036 = vmul.f32 %v3260, %v3783
  %v4037 = vmul.f32 %v3261, %v3783
  %v4038 = vmul.f32 %v3262, %v3783
  %v4039 = vmul.f32 %v3263, %v3783
  %v4041 = vlaneseq
  %v4042 = vshrl.u32 %v4041, 7
  %v4043 = vsub.s32 0, %v4042
  %v4044 = vrot.slane %v2743, %v4043
  %v4046 = vmul.f32 %v3784, %v4044
  %v4047 = vmul.f32 %v3785, %v4044
  %v4048 = vmul.f32 %v3786, %v4044
  %v4049 = vmul.f32 %v3787, %v4044
  %v4050 = vmul.f32 %v3788, %v4044
  %v4051 = vmul.f32 %v3789, %v4044
  %v4052 = vmul.f32 %v3790, %v4044
  %v4053 = vmul.f32 %v3791, %v4044
  %v4054 = vmul.f32 %v3792, %v4044
  %v4055 = vmul.f32 %v3793, %v4044
  %v4056 = vmul.f32 %v3794, %v4044
  %v4057 = vmul.f32 %v3795, %v4044
  %v4058 = vmul.f32 %v3796, %v4044
  %v4059 = vmul.f32 %v3797, %v4044
  %v4060 = vmul.f32 %v3798, %v4044
  %v4061 = vmul.f32 %v3799, %v4044
  %v4062 = vmul.f32 %v3800, %v4044
  %v4063 = vmul.f32 %v3801, %v4044
  %v4064 = vmul.f32 %v3802, %v4044
  %v4065 = vmul.f32 %v3803, %v4044
  %v4066 = vmul.f32 %v3804, %v4044
  %v4067 = vmul.f32 %v3805, %v4044
  %v4068 = vmul.f32 %v3806, %v4044
  %v4069 = vmul.f32 %v3807, %v4044
  %v4070 = vmul.f32 %v3808, %v4044
  %v4071 = vmul.f32 %v3809, %v4044
  %v4072 = vmul.f32 %v3810, %v4044
  %v4073 = vmul.f32 %v3811, %v4044
  %v4074 = vmul.f32 %v3812, %v4044
  %v4075 = vmul.f32 %v3813, %v4044
  %v4076 = vmul.f32 %v3814, %v4044
  %v4077 = vmul.f32 %v3815, %v4044
  %v4078 = vmul.f32 %v3816, %v4044
  %v4079 = vmul.f32 %v3817, %v4044
  %v4080 = vmul.f32 %v3818, %v4044
  %v4081 = vmul.f32 %v3819, %v4044
  %v4082 = vmul.f32 %v3820, %v4044
  %v4083 = vmul.f32 %v3821, %v4044
  %v4084 = vmul.f32 %v3822, %v4044
  %v4085 = vmul.f32 %v3823, %v4044
  %v4086 = vmul.f32 %v3824, %v4044
  %v4087 = vmul.f32 %v3825, %v4044
  %v4088 = vmul.f32 %v3826, %v4044
  %v4089 = vmul.f32 %v3827, %v4044
  %v4090 = vmul.f32 %v3828, %v4044
  %v4091 = vmul.f32 %v3829, %v4044
  %v4092 = vmul.f32 %v3830, %v4044
  %v4093 = vmul.f32 %v3831, %v4044
  %v4094 = vmul.f32 %v3832, %v4044
  %v4095 = vmul.f32 %v3833, %v4044
  %v4096 = vmul.f32 %v3834, %v4044
  %v4097 = vmul.f32 %v3835, %v4044
  %v4098 = vmul.f32 %v3836, %v4044
  %v4099 = vmul.f32 %v3837, %v4044
  %v4100 = vmul.f32 %v3838, %v4044
  %v4101 = vmul.f32 %v3839, %v4044
  %v4102 = vmul.f32 %v3840, %v4044
  %v4103 = vmul.f32 %v3841, %v4044
  %v4104 = vmul.f32 %v3842, %v4044
  %v4105 = vmul.f32 %v3843, %v4044
  %v4106 = vmul.f32 %v3844, %v4044
  %v4107 = vmul.f32 %v3845, %v4044
  %v4108 = vmul.f32 %v3846, %v4044
  %v4109 = vmul.f32 %v3847, %v4044
  %v4110 = vmul.f32 %v3848, %v4044
  %v4111 = vmul.f32 %v3849, %v4044
  %v4112 = vmul.f32 %v3850, %v4044
  %v4113 = vmul.f32 %v3851, %v4044
  %v4114 = vmul.f32 %v3852, %v4044
  %v4115 = vmul.f32 %v3853, %v4044
  %v4116 = vmul.f32 %v3854, %v4044
  %v4117 = vmul.f32 %v3855, %v4044
  %v4118 = vmul.f32 %v3856, %v4044
  %v4119 = vmul.f32 %v3857, %v4044
  %v4120 = vmul.f32 %v3858, %v4044
  %v4121 = vmul.f32 %v3859, %v4044
  %v4122 = vmul.f32 %v3860, %v4044
  %v4123 = vmul.f32 %v3861, %v4044
  %v4124 = vmul.f32 %v3862, %v4044
  %v4125 = vmul.f32 %v3863, %v4044
  %v4126 = vmul.f32 %v3864, %v4044
  %v4127 = vmul.f32 %v3865, %v4044
  %v4128 = vmul.f32 %v3866, %v4044
  %v4129 = vmul.f32 %v3867, %v4044
  %v4130 = vmul.f32 %v3868, %v4044
  %v4131 = vmul.f32 %v3869, %v4044
  %v4132 = vmul.f32 %v3870, %v4044
  %v4133 = vmul.f32 %v3871, %v4044
  %v4134 = vmul.f32 %v3872, %v4044
  %v4135 = vmul.f32 %v3873, %v4044
  %v4136 = vmul.f32 %v3874, %v4044
  %v4137 = vmul.f32 %v3875, %v4044
  %v4138 = vmul.f32 %v3876, %v4044
  %v4139 = vmul.f32 %v3877, %v4044
  %v4140 = vmul.f32 %v3878, %v4044
  %v4141 = vmul.f32 %v3879, %v4044
  %v4142 = vmul.f32 %v3880, %v4044
  %v4143 = vmul.f32 %v3881, %v4044
  %v4144 = vmul.f32 %v3882, %v4044
  %v4145 = vmul.f32 %v3883, %v4044
  %v4146 = vmul.f32 %v3884, %v4044
  %v4147 = vmul.f32 %v3885, %v4044
  %v4148 = vmul.f32 %v3886, %v4044
  %v4149 = vmul.f32 %v3887, %v4044
  %v4150 = vmul.f32 %v3888, %v4044
  %v4151 = vmul.f32 %v3889, %v4044
  %v4152 = vmul.f32 %v3890, %v4044
  %v4153 = vmul.f32 %v3891, %v4044
  %v4154 = vmul.f32 %v3892, %v4044
  %v4155 = vmul.f32 %v3893, %v4044
  %v4156 = vmul.f32 %v3894, %v4044
  %v4157 = vmul.f32 %v3895, %v4044
  %v4158 = vmul.f32 %v3896, %v4044
  %v4159 = vmul.f32 %v3897, %v4044
  %v4160 = vmul.f32 %v3898, %v4044
  %v4161 = vmul.f32 %v3899, %v4044
  %v4162 = vmul.f32 %v3900, %v4044
  %v4163 = vmul.f32 %v3901, %v4044
  %v4164 = vmul.f32 %v3902, %v4044
  %v4165 = vmul.f32 %v3903, %v4044
  %v4166 = vmul.f32 %v3904, %v4044
  %v4167 = vmul.f32 %v3905, %v4044
  %v4168 = vmul.f32 %v3906, %v4044
  %v4169 = vmul.f32 %v3907, %v4044
  %v4170 = vmul.f32 %v3908, %v4044
  %v4171 = vmul.f32 %v3909, %v4044
  %v4172 = vmul.f32 %v3910, %v4044
  %v4173 = vmul.f32 %v3911, %v4044
  %v4174 = vmul.f32 %v3912, %v4044
  %v4175 = vmul.f32 %v3913, %v4044
  %v4176 = vmul.f32 %v3914, %v4044
  %v4177 = vmul.f32 %v3915, %v4044
  %v4178 = vmul.f32 %v3916, %v4044
  %v4179 = vmul.f32 %v3917, %v4044
  %v4180 = vmul.f32 %v3918, %v4044
  %v4181 = vmul.f32 %v3919, %v4044
  %v4182 = vmul.f32 %v3920, %v4044
  %v4183 = vmul.f32 %v3921, %v4044
  %v4184 = vmul.f32 %v3922, %v4044
  %v4185 = vmul.f32 %v3923, %v4044
  %v4186 = vmul.f32 %v3924, %v4044
  %v4187 = vmul.f32 %v3925, %v4044
  %v4188 = vmul.f32 %v3926, %v4044
  %v4189 = vmul.f32 %v3927, %v4044
  %v4190 = vmul.f32 %v3928, %v4044
  %v4191 = vmul.f32 %v3929, %v4044
  %v4192 = vmul.f32 %v3930, %v4044
  %v4193 = vmul.f32 %v3931, %v4044
  %v4194 = vmul.f32 %v3932, %v4044
  %v4195 = vmul.f32 %v3933, %v4044
  %v4196 = vmul.f32 %v3934, %v4044
  %v4197 = vmul.f32 %v3935, %v4044
  %v4198 = vmul.f32 %v3936, %v4044
  %v4199 = vmul.f32 %v3937, %v4044
  %v4200 = vmul.f32 %v3938, %v4044
  %v4201 = vmul.f32 %v3939, %v4044
  %v4202 = vmul.f32 %v3940, %v4044
  %v4203 = vmul.f32 %v3941, %v4044
  %v4204 = vmul.f32 %v3942, %v4044
  %v4205 = vmul.f32 %v3943, %v4044
  %v4206 = vmul.f32 %v3944, %v4044
  %v4207 = vmul.f32 %v3945, %v4044
  %v4208 = vmul.f32 %v3946, %v4044
  %v4209 = vmul.f32 %v3947, %v4044
  %v4210 = vmul.f32 %v3948, %v4044
  %v4211 = vmul.f32 %v3949, %v4044
  %v4212 = vmul.f32 %v3950, %v4044
  %v4213 = vmul.f32 %v3951, %v4044
  %v4214 = vmul.f32 %v3952, %v4044
  %v4215 = vmul.f32 %v3953, %v4044
  %v4216 = vmul.f32 %v3954, %v4044
  %v4217 = vmul.f32 %v3955, %v4044
  %v4218 = vmul.f32 %v3956, %v4044
  %v4219 = vmul.f32 %v3957, %v4044
  %v4220 = vmul.f32 %v3958, %v4044
  %v4221 = vmul.f32 %v3959, %v4044
  %v4222 = vmul.f32 %v3960, %v4044
  %v4223 = vmul.f32 %v3961, %v4044
  %v4224 = vmul.f32 %v3962, %v4044
  %v4225 = vmul.f32 %v3963, %v4044
  %v4226 = vmul.f32 %v3964, %v4044
  %v4227 = vmul.f32 %v3965, %v4044
  %v4228 = vmul.f32 %v3966, %v4044
  %v4229 = vmul.f32 %v3967, %v4044
  %v4230 = vmul.f32 %v3968, %v4044
  %v4231 = vmul.f32 %v3969, %v4044
  %v4232 = vmul.f32 %v3970, %v4044
  %v4233 = vmul.f32 %v3971, %v4044
  %v4234 = vmul.f32 %v3972, %v4044
  %v4235 = vmul.f32 %v3973, %v4044
  %v4236 = vmul.f32 %v3974, %v4044
  %v4237 = vmul.f32 %v3975, %v4044
  %v4238 = vmul.f32 %v3976, %v4044
  %v4239 = vmul.f32 %v3977, %v4044
  %v4240 = vmul.f32 %v3978, %v4044
  %v4241 = vmul.f32 %v3979, %v4044
  %v4242 = vmul.f32 %v3980, %v4044
  %v4243 = vmul.f32 %v3981, %v4044
  %v4244 = vmul.f32 %v3982, %v4044
  %v4245 = vmul.f32 %v3983, %v4044
  %v4246 = vmul.f32 %v3984, %v4044
  %v4247 = vmul.f32 %v3985, %v4044
  %v4248 = vmul.f32 %v3986, %v4044
  %v4249 = vmul.f32 %v3987, %v4044
  %v4250 = vmul.f32 %v3988, %v4044
  %v4251 = vmul.f32 %v3989, %v4044
  %v4252 = vmul.f32 %v3990, %v4044
  %v4253 = vmul.f32 %v3991, %v4044
  %v4254 = vmul.f32 %v3992, %v4044
  %v4255 = vmul.f32 %v3993, %v4044
  %v4256 = vmul.f32 %v3994, %v4044
  %v4257 = vmul.f32 %v3995, %v4044
  %v4258 = vmul.f32 %v3996, %v4044
  %v4259 = vmul.f32 %v3997, %v4044
  %v4260 = vmul.f32 %v3998, %v4044
  %v4261 = vmul.f32 %v3999, %v4044
  %v4262 = vmul.f32 %v4000, %v4044
  %v4263 = vmul.f32 %v4001, %v4044
  %v4264 = vmul.f32 %v4002, %v4044
  %v4265 = vmul.f32 %v4003, %v4044
  %v4266 = vmul.f32 %v4004, %v4044
  %v4267 = vmul.f32 %v4005, %v4044
  %v4268 = vmul.f32 %v4006, %v4044
  %v4269 = vmul.f32 %v4007, %v4044
  %v4270 = vmul.f32 %v4008, %v4044
  %v4271 = vmul.f32 %v4009, %v4044
  %v4272 = vmul.f32 %v4010, %v4044
  %v4273 = vmul.f32 %v4011, %v4044
  %v4274 = vmul.f32 %v4012, %v4044
  %v4275 = vmul.f32 %v4013, %v4044
  %v4276 = vmul.f32 %v4014, %v4044
  %v4277 = vmul.f32 %v4015, %v4044
  %v4278 = vmul.f32 %v4016, %v4044
  %v4279 = vmul.f32 %v4017, %v4044
  %v4280 = vmul.f32 %v4018, %v4044
  %v4281 = vmul.f32 %v4019, %v4044
  %v4282 = vmul.f32 %v4020, %v4044
  %v4283 = vmul.f32 %v4021, %v4044
  %v4284 = vmul.f32 %v4022, %v4044
  %v4285 = vmul.f32 %v4023, %v4044
  %v4286 = vmul.f32 %v4024, %v4044
  %v4287 = vmul.f32 %v4025, %v4044
  %v4288 = vmul.f32 %v4026, %v4044
  %v4289 = vmul.f32 %v4027, %v4044
  %v4290 = vmul.f32 %v4028, %v4044
  %v4291 = vmul.f32 %v4029, %v4044
  %v4292 = vmul.f32 %v4030, %v4044
  %v4293 = vmul.f32 %v4031, %v4044
  %v4294 = vmul.f32 %v4032, %v4044
  %v4295 = vmul.f32 %v4033, %v4044
  %v4296 = vmul.f32 %v4034, %v4044
  %v4297 = vmul.f32 %v4035, %v4044
  %v4298 = vmul.f32 %v4036, %v4044
  %v4299 = vmul.f32 %v4037, %v4044
  %v4300 = vmul.f32 %v4038, %v4044
  %v4301 = vmul.f32 %v4039, %v4044
  %v4303 = vlaneseq
  %v4304 = vshrl.u32 %v4303, 7
  %v4305 = vsub.s32 0, %v4304
  %v4306 = vrot.slane %v2744, %v4305
  %v4308 = vadd.f32 %v4046, %v4306
  %v4309 = vadd.f32 %v4047, %v4306
  %v4310 = vadd.f32 %v4048, %v4306
  %v4311 = vadd.f32 %v4049, %v4306
  %v4312 = vadd.f32 %v4050, %v4306
  %v4313 = vadd.f32 %v4051, %v4306
  %v4314 = vadd.f32 %v4052, %v4306
  %v4315 = vadd.f32 %v4053, %v4306
  %v4316 = vadd.f32 %v4054, %v4306
  %v4317 = vadd.f32 %v4055, %v4306
  %v4318 = vadd.f32 %v4056, %v4306
  %v4319 = vadd.f32 %v4057, %v4306
  %v4320 = vadd.f32 %v4058, %v4306
  %v4321 = vadd.f32 %v4059, %v4306
  %v4322 = vadd.f32 %v4060, %v4306
  %v4323 = vadd.f32 %v4061, %v4306
  %v4324 = vadd.f32 %v4062, %v4306
  %v4325 = vadd.f32 %v4063, %v4306
  %v4326 = vadd.f32 %v4064, %v4306
  %v4327 = vadd.f32 %v4065, %v4306
  %v4328 = vadd.f32 %v4066, %v4306
  %v4329 = vadd.f32 %v4067, %v4306
  %v4330 = vadd.f32 %v4068, %v4306
  %v4331 = vadd.f32 %v4069, %v4306
  %v4332 = vadd.f32 %v4070, %v4306
  %v4333 = vadd.f32 %v4071, %v4306
  %v4334 = vadd.f32 %v4072, %v4306
  %v4335 = vadd.f32 %v4073, %v4306
  %v4336 = vadd.f32 %v4074, %v4306
  %v4337 = vadd.f32 %v4075, %v4306
  %v4338 = vadd.f32 %v4076, %v4306
  %v4339 = vadd.f32 %v4077, %v4306
  %v4340 = vadd.f32 %v4078, %v4306
  %v4341 = vadd.f32 %v4079, %v4306
  %v4342 = vadd.f32 %v4080, %v4306
  %v4343 = vadd.f32 %v4081, %v4306
  %v4344 = vadd.f32 %v4082, %v4306
  %v4345 = vadd.f32 %v4083, %v4306
  %v4346 = vadd.f32 %v4084, %v4306
  %v4347 = vadd.f32 %v4085, %v4306
  %v4348 = vadd.f32 %v4086, %v4306
  %v4349 = vadd.f32 %v4087, %v4306
  %v4350 = vadd.f32 %v4088, %v4306
  %v4351 = vadd.f32 %v4089, %v4306
  %v4352 = vadd.f32 %v4090, %v4306
  %v4353 = vadd.f32 %v4091, %v4306
  %v4354 = vadd.f32 %v4092, %v4306
  %v4355 = vadd.f32 %v4093, %v4306
  %v4356 = vadd.f32 %v4094, %v4306
  %v4357 = vadd.f32 %v4095, %v4306
  %v4358 = vadd.f32 %v4096, %v4306
  %v4359 = vadd.f32 %v4097, %v4306
  %v4360 = vadd.f32 %v4098, %v4306
  %v4361 = vadd.f32 %v4099, %v4306
  %v4362 = vadd.f32 %v4100, %v4306
  %v4363 = vadd.f32 %v4101, %v4306
  %v4364 = vadd.f32 %v4102, %v4306
  %v4365 = vadd.f32 %v4103, %v4306
  %v4366 = vadd.f32 %v4104, %v4306
  %v4367 = vadd.f32 %v4105, %v4306
  %v4368 = vadd.f32 %v4106, %v4306
  %v4369 = vadd.f32 %v4107, %v4306
  %v4370 = vadd.f32 %v4108, %v4306
  %v4371 = vadd.f32 %v4109, %v4306
  %v4372 = vadd.f32 %v4110, %v4306
  %v4373 = vadd.f32 %v4111, %v4306
  %v4374 = vadd.f32 %v4112, %v4306
  %v4375 = vadd.f32 %v4113, %v4306
  %v4376 = vadd.f32 %v4114, %v4306
  %v4377 = vadd.f32 %v4115, %v4306
  %v4378 = vadd.f32 %v4116, %v4306
  %v4379 = vadd.f32 %v4117, %v4306
  %v4380 = vadd.f32 %v4118, %v4306
  %v4381 = vadd.f32 %v4119, %v4306
  %v4382 = vadd.f32 %v4120, %v4306
  %v4383 = vadd.f32 %v4121, %v4306
  %v4384 = vadd.f32 %v4122, %v4306
  %v4385 = vadd.f32 %v4123, %v4306
  %v4386 = vadd.f32 %v4124, %v4306
  %v4387 = vadd.f32 %v4125, %v4306
  %v4388 = vadd.f32 %v4126, %v4306
  %v4389 = vadd.f32 %v4127, %v4306
  %v4390 = vadd.f32 %v4128, %v4306
  %v4391 = vadd.f32 %v4129, %v4306
  %v4392 = vadd.f32 %v4130, %v4306
  %v4393 = vadd.f32 %v4131, %v4306
  %v4394 = vadd.f32 %v4132, %v4306
  %v4395 = vadd.f32 %v4133, %v4306
  %v4396 = vadd.f32 %v4134, %v4306
  %v4397 = vadd.f32 %v4135, %v4306
  %v4398 = vadd.f32 %v4136, %v4306
  %v4399 = vadd.f32 %v4137, %v4306
  %v4400 = vadd.f32 %v4138, %v4306
  %v4401 = vadd.f32 %v4139, %v4306
  %v4402 = vadd.f32 %v4140, %v4306
  %v4403 = vadd.f32 %v4141, %v4306
  %v4404 = vadd.f32 %v4142, %v4306
  %v4405 = vadd.f32 %v4143, %v4306
  %v4406 = vadd.f32 %v4144, %v4306
  %v4407 = vadd.f32 %v4145, %v4306
  %v4408 = vadd.f32 %v4146, %v4306
  %v4409 = vadd.f32 %v4147, %v4306
  %v4410 = vadd.f32 %v4148, %v4306
  %v4411 = vadd.f32 %v4149, %v4306
  %v4412 = vadd.f32 %v4150, %v4306
  %v4413 = vadd.f32 %v4151, %v4306
  %v4414 = vadd.f32 %v4152, %v4306
  %v4415 = vadd.f32 %v4153, %v4306
  %v4416 = vadd.f32 %v4154, %v4306
  %v4417 = vadd.f32 %v4155, %v4306
  %v4418 = vadd.f32 %v4156, %v4306
  %v4419 = vadd.f32 %v4157, %v4306
  %v4420 = vadd.f32 %v4158, %v4306
  %v4421 = vadd.f32 %v4159, %v4306
  %v4422 = vadd.f32 %v4160, %v4306
  %v4423 = vadd.f32 %v4161, %v4306
  %v4424 = vadd.f32 %v4162, %v4306
  %v4425 = vadd.f32 %v4163, %v4306
  %v4426 = vadd.f32 %v4164, %v4306
  %v4427 = vadd.f32 %v4165, %v4306
  %v4428 = vadd.f32 %v4166, %v4306
  %v4429 = vadd.f32 %v4167, %v4306
  %v4430 = vadd.f32 %v4168, %v4306
  %v4431 = vadd.f32 %v4169, %v4306
  %v4432 = vadd.f32 %v4170, %v4306
  %v4433 = vadd.f32 %v4171, %v4306
  %v4434 = vadd.f32 %v4172, %v4306
  %v4435 = vadd.f32 %v4173, %v4306
  %v4436 = vadd.f32 %v4174, %v4306
  %v4437 = vadd.f32 %v4175, %v4306
  %v4438 = vadd.f32 %v4176, %v4306
  %v4439 = vadd.f32 %v4177, %v4306
  %v4440 = vadd.f32 %v4178, %v4306
  %v4441 = vadd.f32 %v4179, %v4306
  %v4442 = vadd.f32 %v4180, %v4306
  %v4443 = vadd.f32 %v4181, %v4306
  %v4444 = vadd.f32 %v4182, %v4306
  %v4445 = vadd.f32 %v4183, %v4306
  %v4446 = vadd.f32 %v4184, %v4306
  %v4447 = vadd.f32 %v4185, %v4306
  %v4448 = vadd.f32 %v4186, %v4306
  %v4449 = vadd.f32 %v4187, %v4306
  %v4450 = vadd.f32 %v4188, %v4306
  %v4451 = vadd.f32 %v4189, %v4306
  %v4452 = vadd.f32 %v4190, %v4306
  %v4453 = vadd.f32 %v4191, %v4306
  %v4454 = vadd.f32 %v4192, %v4306
  %v4455 = vadd.f32 %v4193, %v4306
  %v4456 = vadd.f32 %v4194, %v4306
  %v4457 = vadd.f32 %v4195, %v4306
  %v4458 = vadd.f32 %v4196, %v4306
  %v4459 = vadd.f32 %v4197, %v4306
  %v4460 = vadd.f32 %v4198, %v4306
  %v4461 = vadd.f32 %v4199, %v4306
  %v4462 = vadd.f32 %v4200, %v4306
  %v4463 = vadd.f32 %v4201, %v4306
  %v4464 = vadd.f32 %v4202, %v4306
  %v4465 = vadd.f32 %v4203, %v4306
  %v4466 = vadd.f32 %v4204, %v4306
  %v4467 = vadd.f32 %v4205, %v4306
  %v4468 = vadd.f32 %v4206, %v4306
  %v4469 = vadd.f32 %v4207, %v4306
  %v4470 = vadd.f32 %v4208, %v4306
  %v4471 = vadd.f32 %v4209, %v4306
  %v4472 = vadd.f32 %v4210, %v4306
  %v4473 = vadd.f32 %v4211, %v4306
  %v4474 = vadd.f32 %v4212, %v4306
  %v4475 = vadd.f32 %v4213, %v4306
  %v4476 = vadd.f32 %v4214, %v4306
  %v4477 = vadd.f32 %v4215, %v4306
  %v4478 = vadd.f32 %v4216, %v4306
  %v4479 = vadd.f32 %v4217, %v4306
  %v4480 = vadd.f32 %v4218, %v4306
  %v4481 = vadd.f32 %v4219, %v4306
  %v4482 = vadd.f32 %v4220, %v4306
  %v4483 = vadd.f32 %v4221, %v4306
  %v4484 = vadd.f32 %v4222, %v4306
  %v4485 = vadd.f32 %v4223, %v4306
  %v4486 = vadd.f32 %v4224, %v4306
  %v4487 = vadd.f32 %v4225, %v4306
  %v4488 = vadd.f32 %v4226, %v4306
  %v4489 = vadd.f32 %v4227, %v4306
  %v4490 = vadd.f32 %v4228, %v4306
  %v4491 = vadd.f32 %v4229, %v4306
  %v4492 = vadd.f32 %v4230, %v4306
  %v4493 = vadd.f32 %v4231, %v4306
  %v4494 = vadd.f32 %v4232, %v4306
  %v4495 = vadd.f32 %v4233, %v4306
  %v4496 = vadd.f32 %v4234, %v4306
  %v4497 = vadd.f32 %v4235, %v4306
  %v4498 = vadd.f32 %v4236, %v4306
  %v4499 = vadd.f32 %v4237, %v4306
  %v4500 = vadd.f32 %v4238, %v4306
  %v4501 = vadd.f32 %v4239, %v4306
  %v4502 = vadd.f32 %v4240, %v4306
  %v4503 = vadd.f32 %v4241, %v4306
  %v4504 = vadd.f32 %v4242, %v4306
  %v4505 = vadd.f32 %v4243, %v4306
  %v4506 = vadd.f32 %v4244, %v4306
  %v4507 = vadd.f32 %v4245, %v4306
  %v4508 = vadd.f32 %v4246, %v4306
  %v4509 = vadd.f32 %v4247, %v4306
  %v4510 = vadd.f32 %v4248, %v4306
  %v4511 = vadd.f32 %v4249, %v4306
  %v4512 = vadd.f32 %v4250, %v4306
  %v4513 = vadd.f32 %v4251, %v4306
  %v4514 = vadd.f32 %v4252, %v4306
  %v4515 = vadd.f32 %v4253, %v4306
  %v4516 = vadd.f32 %v4254, %v4306
  %v4517 = vadd.f32 %v4255, %v4306
  %v4518 = vadd.f32 %v4256, %v4306
  %v4519 = vadd.f32 %v4257, %v4306
  %v4520 = vadd.f32 %v4258, %v4306
  %v4521 = vadd.f32 %v4259, %v4306
  %v4522 = vadd.f32 %v4260, %v4306
  %v4523 = vadd.f32 %v4261, %v4306
  %v4524 = vadd.f32 %v4262, %v4306
  %v4525 = vadd.f32 %v4263, %v4306
  %v4526 = vadd.f32 %v4264, %v4306
  %v4527 = vadd.f32 %v4265, %v4306
  %v4528 = vadd.f32 %v4266, %v4306
  %v4529 = vadd.f32 %v4267, %v4306
  %v4530 = vadd.f32 %v4268, %v4306
  %v4531 = vadd.f32 %v4269, %v4306
  %v4532 = vadd.f32 %v4270, %v4306
  %v4533 = vadd.f32 %v4271, %v4306
  %v4534 = vadd.f32 %v4272, %v4306
  %v4535 = vadd.f32 %v4273, %v4306
  %v4536 = vadd.f32 %v4274, %v4306
  %v4537 = vadd.f32 %v4275, %v4306
  %v4538 = vadd.f32 %v4276, %v4306
  %v4539 = vadd.f32 %v4277, %v4306
  %v4540 = vadd.f32 %v4278, %v4306
  %v4541 = vadd.f32 %v4279, %v4306
  %v4542 = vadd.f32 %v4280, %v4306
  %v4543 = vadd.f32 %v4281, %v4306
  %v4544 = vadd.f32 %v4282, %v4306
  %v4545 = vadd.f32 %v4283, %v4306
  %v4546 = vadd.f32 %v4284, %v4306
  %v4547 = vadd.f32 %v4285, %v4306
  %v4548 = vadd.f32 %v4286, %v4306
  %v4549 = vadd.f32 %v4287, %v4306
  %v4550 = vadd.f32 %v4288, %v4306
  %v4551 = vadd.f32 %v4289, %v4306
  %v4552 = vadd.f32 %v4290, %v4306
  %v4553 = vadd.f32 %v4291, %v4306
  %v4554 = vadd.f32 %v4292, %v4306
  %v4555 = vadd.f32 %v4293, %v4306
  %v4556 = vadd.f32 %v4294, %v4306
  %v4557 = vadd.f32 %v4295, %v4306
  %v4558 = vadd.f32 %v4296, %v4306
  %v4559 = vadd.f32 %v4297, %v4306
  %v4560 = vadd.f32 %v4298, %v4306
  %v4561 = vadd.f32 %v4299, %v4306
  %v4562 = vadd.f32 %v4300, %v4306
  %v4563 = vadd.f32 %v4301, %v4306
  %4564 = vst [vmem:[%s4] sm:$0xff] %v4308
  %4565 = vst [vmem:[%s4 + $0x8] sm:$0xff] %v4309
  %4566 = vst [vmem:[%s4 + $0x10] sm:$0xff] %v4310
  %4567 = vst [vmem:[%s4 + $0x18] sm:$0xff] %v4311
  %4568 = vst [vmem:[%s4 + $0x20] sm:$0xff] %v4312
  %4569 = vst [vmem:[%s4 + $0x28] sm:$0xff] %v4313
  %4570 = vst [vmem:[%s4 + $0x30] sm:$0xff] %v4314
  %4571 = vst [vmem:[%s4 + $0x38] sm:$0xff] %v4315
  %4572 = vst [vmem:[%s4 + $0x40] sm:$0xff] %v4316
  %4573 = vst [vmem:[%s4 + $0x48] sm:$0xff] %v4317
  %4574 = vst [vmem:[%s4 + $0x50] sm:$0xff] %v4318
  %4575 = vst [vmem:[%s4 + $0x58] sm:$0xff] %v4319
  %4576 = vst [vmem:[%s4 + $0x60] sm:$0xff] %v4320
  %4577 = vst [vmem:[%s4 + $0x68] sm:$0xff] %v4321
  %4578 = vst [vmem:[%s4 + $0x70] sm:$0xff] %v4322
  %4579 = vst [vmem:[%s4 + $0x78] sm:$0xff] %v4323
  %4580 = vst [vmem:[%s4 + $0x80] sm:$0xff] %v4324
  %4581 = vst [vmem:[%s4 + $0x88] sm:$0xff] %v4325
  %4582 = vst [vmem:[%s4 + $0x90] sm:$0xff] %v4326
  %4583 = vst [vmem:[%s4 + $0x98] sm:$0xff] %v4327
  %4584 = vst [vmem:[%s4 + $0xa0] sm:$0xff] %v4328
  %4585 = vst [vmem:[%s4 + $0xa8] sm:$0xff] %v4329
  %4586 = vst [vmem:[%s4 + $0xb0] sm:$0xff] %v4330
  %4587 = vst [vmem:[%s4 + $0xb8] sm:$0xff] %v4331
  %4588 = vst [vmem:[%s4 + $0xc0] sm:$0xff] %v4332
  %4589 = vst [vmem:[%s4 + $0xc8] sm:$0xff] %v4333
  %4590 = vst [vmem:[%s4 + $0xd0] sm:$0xff] %v4334
  %4591 = vst [vmem:[%s4 + $0xd8] sm:$0xff] %v4335
  %4592 = vst [vmem:[%s4 + $0xe0] sm:$0xff] %v4336
  %4593 = vst [vmem:[%s4 + $0xe8] sm:$0xff] %v4337
  %4594 = vst [vmem:[%s4 + $0xf0] sm:$0xff] %v4338
  %4595 = vst [vmem:[%s4 + $0xf8] sm:$0xff] %v4339
  %4596 = vst [vmem:[%s4 + $0x100] sm:$0xff] %v4340
  %4597 = vst [vmem:[%s4 + $0x108] sm:$0xff] %v4341
  %4598 = vst [vmem:[%s4 + $0x110] sm:$0xff] %v4342
  %4599 = vst [vmem:[%s4 + $0x118] sm:$0xff] %v4343
  %4600 = vst [vmem:[%s4 + $0x120] sm:$0xff] %v4344
  %4601 = vst [vmem:[%s4 + $0x128] sm:$0xff] %v4345
  %4602 = vst [vmem:[%s4 + $0x130] sm:$0xff] %v4346
  %4603 = vst [vmem:[%s4 + $0x138] sm:$0xff] %v4347
  %4604 = vst [vmem:[%s4 + $0x140] sm:$0xff] %v4348
  %4605 = vst [vmem:[%s4 + $0x148] sm:$0xff] %v4349
  %4606 = vst [vmem:[%s4 + $0x150] sm:$0xff] %v4350
  %4607 = vst [vmem:[%s4 + $0x158] sm:$0xff] %v4351
  %4608 = vst [vmem:[%s4 + $0x160] sm:$0xff] %v4352
  %4609 = vst [vmem:[%s4 + $0x168] sm:$0xff] %v4353
  %4610 = vst [vmem:[%s4 + $0x170] sm:$0xff] %v4354
  %4611 = vst [vmem:[%s4 + $0x178] sm:$0xff] %v4355
  %4612 = vst [vmem:[%s4 + $0x180] sm:$0xff] %v4356
  %4613 = vst [vmem:[%s4 + $0x188] sm:$0xff] %v4357
  %4614 = vst [vmem:[%s4 + $0x190] sm:$0xff] %v4358
  %4615 = vst [vmem:[%s4 + $0x198] sm:$0xff] %v4359
  %4616 = vst [vmem:[%s4 + $0x1a0] sm:$0xff] %v4360
  %4617 = vst [vmem:[%s4 + $0x1a8] sm:$0xff] %v4361
  %4618 = vst [vmem:[%s4 + $0x1b0] sm:$0xff] %v4362
  %4619 = vst [vmem:[%s4 + $0x1b8] sm:$0xff] %v4363
  %4620 = vst [vmem:[%s4 + $0x1c0] sm:$0xff] %v4364
  %4621 = vst [vmem:[%s4 + $0x1c8] sm:$0xff] %v4365
  %4622 = vst [vmem:[%s4 + $0x1d0] sm:$0xff] %v4366
  %4623 = vst [vmem:[%s4 + $0x1d8] sm:$0xff] %v4367
  %4624 = vst [vmem:[%s4 + $0x1e0] sm:$0xff] %v4368
  %4625 = vst [vmem:[%s4 + $0x1e8] sm:$0xff] %v4369
  %4626 = vst [vmem:[%s4 + $0x1f0] sm:$0xff] %v4370
  %4627 = vst [vmem:[%s4 + $0x1f8] sm:$0xff] %v4371
  %4628 = vst [vmem:[%s4 + $0x200] sm:$0xff] %v4372
  %4629 = vst [vmem:[%s4 + $0x208] sm:$0xff] %v4373
  %4630 = vst [vmem:[%s4 + $0x210] sm:$0xff] %v4374
  %4631 = vst [vmem:[%s4 + $0x218] sm:$0xff] %v4375
  %4632 = vst [vmem:[%s4 + $0x220] sm:$0xff] %v4376
  %4633 = vst [vmem:[%s4 + $0x228] sm:$0xff] %v4377
  %4634 = vst [vmem:[%s4 + $0x230] sm:$0xff] %v4378
  %4635 = vst [vmem:[%s4 + $0x238] sm:$0xff] %v4379
  %4636 = vst [vmem:[%s4 + $0x240] sm:$0xff] %v4380
  %4637 = vst [vmem:[%s4 + $0x248] sm:$0xff] %v4381
  %4638 = vst [vmem:[%s4 + $0x250] sm:$0xff] %v4382
  %4639 = vst [vmem:[%s4 + $0x258] sm:$0xff] %v4383
  %4640 = vst [vmem:[%s4 + $0x260] sm:$0xff] %v4384
  %4641 = vst [vmem:[%s4 + $0x268] sm:$0xff] %v4385
  %4642 = vst [vmem:[%s4 + $0x270] sm:$0xff] %v4386
  %4643 = vst [vmem:[%s4 + $0x278] sm:$0xff] %v4387
  %4644 = vst [vmem:[%s4 + $0x280] sm:$0xff] %v4388
  %4645 = vst [vmem:[%s4 + $0x288] sm:$0xff] %v4389
  %4646 = vst [vmem:[%s4 + $0x290] sm:$0xff] %v4390
  %4647 = vst [vmem:[%s4 + $0x298] sm:$0xff] %v4391
  %4648 = vst [vmem:[%s4 + $0x2a0] sm:$0xff] %v4392
  %4649 = vst [vmem:[%s4 + $0x2a8] sm:$0xff] %v4393
  %4650 = vst [vmem:[%s4 + $0x2b0] sm:$0xff] %v4394
  %4651 = vst [vmem:[%s4 + $0x2b8] sm:$0xff] %v4395
  %4652 = vst [vmem:[%s4 + $0x2c0] sm:$0xff] %v4396
  %4653 = vst [vmem:[%s4 + $0x2c8] sm:$0xff] %v4397
  %4654 = vst [vmem:[%s4 + $0x2d0] sm:$0xff] %v4398
  %4655 = vst [vmem:[%s4 + $0x2d8] sm:$0xff] %v4399
  %4656 = vst [vmem:[%s4 + $0x2e0] sm:$0xff] %v4400
  %4657 = vst [vmem:[%s4 + $0x2e8] sm:$0xff] %v4401
  %4658 = vst [vmem:[%s4 + $0x2f0] sm:$0xff] %v4402
  %4659 = vst [vmem:[%s4 + $0x2f8] sm:$0xff] %v4403
  %4660 = vst [vmem:[%s4 + $0x300] sm:$0xff] %v4404
  %4661 = vst [vmem:[%s4 + $0x308] sm:$0xff] %v4405
  %4662 = vst [vmem:[%s4 + $0x310] sm:$0xff] %v4406
  %4663 = vst [vmem:[%s4 + $0x318] sm:$0xff] %v4407
  %4664 = vst [vmem:[%s4 + $0x320] sm:$0xff] %v4408
  %4665 = vst [vmem:[%s4 + $0x328] sm:$0xff] %v4409
  %4666 = vst [vmem:[%s4 + $0x330] sm:$0xff] %v4410
  %4667 = vst [vmem:[%s4 + $0x338] sm:$0xff] %v4411
  %4668 = vst [vmem:[%s4 + $0x340] sm:$0xff] %v4412
  %4669 = vst [vmem:[%s4 + $0x348] sm:$0xff] %v4413
  %4670 = vst [vmem:[%s4 + $0x350] sm:$0xff] %v4414
  %4671 = vst [vmem:[%s4 + $0x358] sm:$0xff] %v4415
  %4672 = vst [vmem:[%s4 + $0x360] sm:$0xff] %v4416
  %4673 = vst [vmem:[%s4 + $0x368] sm:$0xff] %v4417
  %4674 = vst [vmem:[%s4 + $0x370] sm:$0xff] %v4418
  %4675 = vst [vmem:[%s4 + $0x378] sm:$0xff] %v4419
  %4676 = vst [vmem:[%s4 + $0x380] sm:$0xff] %v4420
  %4677 = vst [vmem:[%s4 + $0x388] sm:$0xff] %v4421
  %4678 = vst [vmem:[%s4 + $0x390] sm:$0xff] %v4422
  %4679 = vst [vmem:[%s4 + $0x398] sm:$0xff] %v4423
  %4680 = vst [vmem:[%s4 + $0x3a0] sm:$0xff] %v4424
  %4681 = vst [vmem:[%s4 + $0x3a8] sm:$0xff] %v4425
  %4682 = vst [vmem:[%s4 + $0x3b0] sm:$0xff] %v4426
  %4683 = vst [vmem:[%s4 + $0x3b8] sm:$0xff] %v4427
  %4684 = vst [vmem:[%s4 + $0x3c0] sm:$0xff] %v4428
  %4685 = vst [vmem:[%s4 + $0x3c8] sm:$0xff] %v4429
  %4686 = vst [vmem:[%s4 + $0x3d0] sm:$0xff] %v4430
  %4687 = vst [vmem:[%s4 + $0x3d8] sm:$0xff] %v4431
  %4688 = vst [vmem:[%s4 + $0x3e0] sm:$0xff] %v4432
  %4689 = vst [vmem:[%s4 + $0x3e8] sm:$0xff] %v4433
  %4690 = vst [vmem:[%s4 + $0x3f0] sm:$0xff] %v4434
  %4691 = vst [vmem:[%s4 + $0x3f8] sm:$0xff] %v4435
  %4692 = vst [vmem:[%s4 + $0x400] sm:$0xff] %v4436
  %4693 = vst [vmem:[%s4 + $0x408] sm:$0xff] %v4437
  %4694 = vst [vmem:[%s4 + $0x410] sm:$0xff] %v4438
  %4695 = vst [vmem:[%s4 + $0x418] sm:$0xff] %v4439
  %4696 = vst [vmem:[%s4 + $0x420] sm:$0xff] %v4440
  %4697 = vst [vmem:[%s4 + $0x428] sm:$0xff] %v4441
  %4698 = vst [vmem:[%s4 + $0x430] sm:$0xff] %v4442
  %4699 = vst [vmem:[%s4 + $0x438] sm:$0xff] %v4443
  %4700 = vst [vmem:[%s4 + $0x440] sm:$0xff] %v4444
  %4701 = vst [vmem:[%s4 + $0x448] sm:$0xff] %v4445
  %4702 = vst [vmem:[%s4 + $0x450] sm:$0xff] %v4446
  %4703 = vst [vmem:[%s4 + $0x458] sm:$0xff] %v4447
  %4704 = vst [vmem:[%s4 + $0x460] sm:$0xff] %v4448
  %4705 = vst [vmem:[%s4 + $0x468] sm:$0xff] %v4449
  %4706 = vst [vmem:[%s4 + $0x470] sm:$0xff] %v4450
  %4707 = vst [vmem:[%s4 + $0x478] sm:$0xff] %v4451
  %4708 = vst [vmem:[%s4 + $0x480] sm:$0xff] %v4452
  %4709 = vst [vmem:[%s4 + $0x488] sm:$0xff] %v4453
  %4710 = vst [vmem:[%s4 + $0x490] sm:$0xff] %v4454
  %4711 = vst [vmem:[%s4 + $0x498] sm:$0xff] %v4455
  %4712 = vst [vmem:[%s4 + $0x4a0] sm:$0xff] %v4456
  %4713 = vst [vmem:[%s4 + $0x4a8] sm:$0xff] %v4457
  %4714 = vst [vmem:[%s4 + $0x4b0] sm:$0xff] %v4458
  %4715 = vst [vmem:[%s4 + $0x4b8] sm:$0xff] %v4459
  %4716 = vst [vmem:[%s4 + $0x4c0] sm:$0xff] %v4460
  %4717 = vst [vmem:[%s4 + $0x4c8] sm:$0xff] %v4461
  %4718 = vst [vmem:[%s4 + $0x4d0] sm:$0xff] %v4462
  %4719 = vst [vmem:[%s4 + $0x4d8] sm:$0xff] %v4463
  %4720 = vst [vmem:[%s4 + $0x4e0] sm:$0xff] %v4464
  %4721 = vst [vmem:[%s4 + $0x4e8] sm:$0xff] %v4465
  %4722 = vst [vmem:[%s4 + $0x4f0] sm:$0xff] %v4466
  %4723 = vst [vmem:[%s4 + $0x4f8] sm:$0xff] %v4467
  %4724 = vst [vmem:[%s4 + $0x500] sm:$0xff] %v4468
  %4725 = vst [vmem:[%s4 + $0x508] sm:$0xff] %v4469
  %4726 = vst [vmem:[%s4 + $0x510] sm:$0xff] %v4470
  %4727 = vst [vmem:[%s4 + $0x518] sm:$0xff] %v4471
  %4728 = vst [vmem:[%s4 + $0x520] sm:$0xff] %v4472
  %4729 = vst [vmem:[%s4 + $0x528] sm:$0xff] %v4473
  %4730 = vst [vmem:[%s4 + $0x530] sm:$0xff] %v4474
  %4731 = vst [vmem:[%s4 + $0x538] sm:$0xff] %v4475
  %4732 = vst [vmem:[%s4 + $0x540] sm:$0xff] %v4476
  %4733 = vst [vmem:[%s4 + $0x548] sm:$0xff] %v4477
  %4734 = vst [vmem:[%s4 + $0x550] sm:$0xff] %v4478
  %4735 = vst [vmem:[%s4 + $0x558] sm:$0xff] %v4479
  %4736 = vst [vmem:[%s4 + $0x560] sm:$0xff] %v4480
  %4737 = vst [vmem:[%s4 + $0x568] sm:$0xff] %v4481
  %4738 = vst [vmem:[%s4 + $0x570] sm:$0xff] %v4482
  %4739 = vst [vmem:[%s4 + $0x578] sm:$0xff] %v4483
  %4740 = vst [vmem:[%s4 + $0x580] sm:$0xff] %v4484
  %4741 = vst [vmem:[%s4 + $0x588] sm:$0xff] %v4485
  %4742 = vst [vmem:[%s4 + $0x590] sm:$0xff] %v4486
  %4743 = vst [vmem:[%s4 + $0x598] sm:$0xff] %v4487
  %4744 = vst [vmem:[%s4 + $0x5a0] sm:$0xff] %v4488
  %4745 = vst [vmem:[%s4 + $0x5a8] sm:$0xff] %v4489
  %4746 = vst [vmem:[%s4 + $0x5b0] sm:$0xff] %v4490
  %4747 = vst [vmem:[%s4 + $0x5b8] sm:$0xff] %v4491
  %4748 = vst [vmem:[%s4 + $0x5c0] sm:$0xff] %v4492
  %4749 = vst [vmem:[%s4 + $0x5c8] sm:$0xff] %v4493
  %4750 = vst [vmem:[%s4 + $0x5d0] sm:$0xff] %v4494
  %4751 = vst [vmem:[%s4 + $0x5d8] sm:$0xff] %v4495
  %4752 = vst [vmem:[%s4 + $0x5e0] sm:$0xff] %v4496
  %4753 = vst [vmem:[%s4 + $0x5e8] sm:$0xff] %v4497
  %4754 = vst [vmem:[%s4 + $0x5f0] sm:$0xff] %v4498
  %4755 = vst [vmem:[%s4 + $0x5f8] sm:$0xff] %v4499
  %4756 = vst [vmem:[%s4 + $0x600] sm:$0xff] %v4500
  %4757 = vst [vmem:[%s4 + $0x608] sm:$0xff] %v4501
  %4758 = vst [vmem:[%s4 + $0x610] sm:$0xff] %v4502
  %4759 = vst [vmem:[%s4 + $0x618] sm:$0xff] %v4503
  %4760 = vst [vmem:[%s4 + $0x620] sm:$0xff] %v4504
  %4761 = vst [vmem:[%s4 + $0x628] sm:$0xff] %v4505
  %4762 = vst [vmem:[%s4 + $0x630] sm:$0xff] %v4506
  %4763 = vst [vmem:[%s4 + $0x638] sm:$0xff] %v4507
  %4764 = vst [vmem:[%s4 + $0x640] sm:$0xff] %v4508
  %4765 = vst [vmem:[%s4 + $0x648] sm:$0xff] %v4509
  %4766 = vst [vmem:[%s4 + $0x650] sm:$0xff] %v4510
  %4767 = vst [vmem:[%s4 + $0x658] sm:$0xff] %v4511
  %4768 = vst [vmem:[%s4 + $0x660] sm:$0xff] %v4512
  %4769 = vst [vmem:[%s4 + $0x668] sm:$0xff] %v4513
  %4770 = vst [vmem:[%s4 + $0x670] sm:$0xff] %v4514
  %4771 = vst [vmem:[%s4 + $0x678] sm:$0xff] %v4515
  %4772 = vst [vmem:[%s4 + $0x680] sm:$0xff] %v4516
  %4773 = vst [vmem:[%s4 + $0x688] sm:$0xff] %v4517
  %4774 = vst [vmem:[%s4 + $0x690] sm:$0xff] %v4518
  %4775 = vst [vmem:[%s4 + $0x698] sm:$0xff] %v4519
  %4776 = vst [vmem:[%s4 + $0x6a0] sm:$0xff] %v4520
  %4777 = vst [vmem:[%s4 + $0x6a8] sm:$0xff] %v4521
  %4778 = vst [vmem:[%s4 + $0x6b0] sm:$0xff] %v4522
  %4779 = vst [vmem:[%s4 + $0x6b8] sm:$0xff] %v4523
  %4780 = vst [vmem:[%s4 + $0x6c0] sm:$0xff] %v4524
  %4781 = vst [vmem:[%s4 + $0x6c8] sm:$0xff] %v4525
  %4782 = vst [vmem:[%s4 + $0x6d0] sm:$0xff] %v4526
  %4783 = vst [vmem:[%s4 + $0x6d8] sm:$0xff] %v4527
  %4784 = vst [vmem:[%s4 + $0x6e0] sm:$0xff] %v4528
  %4785 = vst [vmem:[%s4 + $0x6e8] sm:$0xff] %v4529
  %4786 = vst [vmem:[%s4 + $0x6f0] sm:$0xff] %v4530
  %4787 = vst [vmem:[%s4 + $0x6f8] sm:$0xff] %v4531
  %4788 = vst [vmem:[%s4 + $0x700] sm:$0xff] %v4532
  %4789 = vst [vmem:[%s4 + $0x708] sm:$0xff] %v4533
  %4790 = vst [vmem:[%s4 + $0x710] sm:$0xff] %v4534
  %4791 = vst [vmem:[%s4 + $0x718] sm:$0xff] %v4535
  %4792 = vst [vmem:[%s4 + $0x720] sm:$0xff] %v4536
  %4793 = vst [vmem:[%s4 + $0x728] sm:$0xff] %v4537
  %4794 = vst [vmem:[%s4 + $0x730] sm:$0xff] %v4538
  %4795 = vst [vmem:[%s4 + $0x738] sm:$0xff] %v4539
  %4796 = vst [vmem:[%s4 + $0x740] sm:$0xff] %v4540
  %4797 = vst [vmem:[%s4 + $0x748] sm:$0xff] %v4541
  %4798 = vst [vmem:[%s4 + $0x750] sm:$0xff] %v4542
  %4799 = vst [vmem:[%s4 + $0x758] sm:$0xff] %v4543
  %4800 = vst [vmem:[%s4 + $0x760] sm:$0xff] %v4544
  %4801 = vst [vmem:[%s4 + $0x768] sm:$0xff] %v4545
  %4802 = vst [vmem:[%s4 + $0x770] sm:$0xff] %v4546
  %4803 = vst [vmem:[%s4 + $0x778] sm:$0xff] %v4547
  %4804 = vst [vmem:[%s4 + $0x780] sm:$0xff] %v4548
  %4805 = vst [vmem:[%s4 + $0x788] sm:$0xff] %v4549
  %4806 = vst [vmem:[%s4 + $0x790] sm:$0xff] %v4550
  %4807 = vst [vmem:[%s4 + $0x798] sm:$0xff] %v4551
  %4808 = vst [vmem:[%s4 + $0x7a0] sm:$0xff] %v4552
  %4809 = vst [vmem:[%s4 + $0x7a8] sm:$0xff] %v4553
  %4810 = vst [vmem:[%s4 + $0x7b0] sm:$0xff] %v4554
  %4811 = vst [vmem:[%s4 + $0x7b8] sm:$0xff] %v4555
  %4812 = vst [vmem:[%s4 + $0x7c0] sm:$0xff] %v4556
  %4813 = vst [vmem:[%s4 + $0x7c8] sm:$0xff] %v4557
  %4814 = vst [vmem:[%s4 + $0x7d0] sm:$0xff] %v4558
  %4815 = vst [vmem:[%s4 + $0x7d8] sm:$0xff] %v4559
  %4816 = vst [vmem:[%s4 + $0x7e0] sm:$0xff] %v4560
  %4817 = vst [vmem:[%s4 + $0x7e8] sm:$0xff] %v4561
  %4818 = vst [vmem:[%s4 + $0x7f0] sm:$0xff] %v4562
  %4819 = vst [vmem:[%s4 + $0x7f8] sm:$0xff] %v4563
  // Predicated region
  $region18: #{gan_forward.15} parent=0 // pred_check
    _
  $region19: #{gan_forward.15} parent=0 // pred_check_branch
    %4821 = sbr.rel (0) target = $region21
  $region20: #{gan_forward.15} parent=0 // pred_region
    _
  $region21: #{gan_forward.15} parent=0 // pred_fallthru
    _
  // Predicated region
  $region22: #{gan_forward.15} parent=0 // pred_check
    _
  $region23: #{gan_forward.15} parent=0 // pred_check_branch
    %4823 = sbr.rel (0) target = $region25
  $region24: #{gan_forward.15} parent=0 // pred_region
    _
  $region25: #{gan_forward.15} parent=0 // pred_fallthru
    _

</llo_original>
